<compile_context>
chip_gen: v7x
topology: tpu7x:2x2x1
jax: 0.10.0
libtpu: 0.0.40
codegen_flags: <defaults>
</compile_context>

<pallas_src>
import functools

import jax
import jax.numpy as jnp
from jax.experimental import pallas as pl
from jax.experimental.pallas import tpu as pltpu

BETA = 0.95
THRESHOLD = 1.0
NUM_BITS = 8
NUM_INPUTS = 28 * 28
NUM_HIDDEN = 1000
NUM_OUTPUTS = 10
NUM_STEPS = 25

# Padded (lane/sublane-friendly) sizes used inside the kernel.
H_PAD = 1024          # 8 * 128 lanes
O_PAD = 128           # lane-dense outputs
B_ALIGN = 8           # sublane count

# snnTorch quant.state_quant(num_bits=8, uniform=True, threshold=1) defaults:
# lower_limit=0, upper_limit=0.2 -> 256 uniform levels spanning [-1.0, 1.2].
_NUM_LEVELS = 2 ** NUM_BITS
_Q_LO = -THRESHOLD * (1.0 + 0.0)
_Q_HI = THRESHOLD * (1.0 + 0.2)
_Q_STEP = (_Q_HI - _Q_LO) / (_NUM_LEVELS - 1)
_Q_INV_STEP = 1.0 / _Q_STEP                      # precomputed: no divide in hot path


def _state_quant(x):
    """Round-to-nearest uniform level in [_Q_LO, _Q_HI] (clamped at the ends)."""
    idx = jnp.clip(jnp.round((x - _Q_LO) * _Q_INV_STEP), 0.0, float(_NUM_LEVELS - 1))
    return _Q_LO + idx * _Q_STEP


def _leaky_step(cur, mem_prev):
    """snn.Leaky forward (subtract reset, quantized state)."""
    mem = BETA * mem_prev + cur - jnp.where(mem_prev > THRESHOLD, THRESHOLD, 0.0)
    mem = _state_quant(mem)
    spk = (mem > THRESHOLD).astype(jnp.float32)
    return spk, mem


def snn_kernel(x_ref, w1_ref, b1_ref, w2_ref, b2_ref,
               spk_rec_ref, mem_rec_ref,
               spk1_buf_ref, cur2_buf_ref):
    num_steps = spk_rec_ref.shape[0]
    bp = x_ref.shape[0]          # padded batch (multiple of 8)
    hp = w1_ref.shape[1]         # padded hidden (1024)
    op = w2_ref.shape[1]         # padded outputs (128)

    # --- fc1: time-invariant -> compute once (bf16 x bf16 -> f32 accumulate).
    cur1 = jnp.dot(x_ref[...], w1_ref[...],
                   preferred_element_type=jnp.float32) + b1_ref[...]

    # --- Phase 1: lif1 temporal scan; record spk1 for every step into VMEM.
    #     Static Python loop -> fully static, 8-sublane-aligned, unmasked stores.
    mem1 = jnp.zeros((bp, hp), jnp.float32)
    for t in range(num_steps):
        spk1, mem1 = _leaky_step(cur1, mem1)
        spk1_buf_ref[pl.ds(t * bp, bp), :] = spk1

    # --- Phase 2: ONE batched fc2 over all (time, batch) rows (MXU-friendly M).
    spk1_all = spk1_buf_ref[...].astype(jnp.bfloat16)   # {0,1}: lossless bf16 cast
    cur2_buf_ref[...] = jnp.dot(spk1_all, w2_ref[...],
                                preferred_element_type=jnp.float32) + b2_ref[...]

    # --- Phase 3: lif2 temporal scan (single-vreg state), lane-dense output stores.
    mem2 = jnp.zeros((bp, op), jnp.float32)
    for t in range(num_steps):
        cur2 = cur2_buf_ref[pl.ds(t * bp, bp), :]
        spk2, mem2 = _leaky_step(cur2, mem2)
        spk_rec_ref[t] = spk2
        mem_rec_ref[t] = mem2


@functools.partial(jax.jit, static_argnames=("num_steps",))
def quantized_snn_forward(x, w1_t, b1, w2_t, b2, num_steps=NUM_STEPS):
    """x: (B, num_inputs) f32; w1_t: (num_inputs, H); b1: (1, H); w2_t: (H, O); b2: (1, O)."""
    B, _ = x.shape
    H = w1_t.shape[1]
    O = w2_t.shape[1]
    b_pad = max(B_ALIGN, -(-B // B_ALIGN) * B_ALIGN)

    # Glue (plain JAX): pad batch -> 8 sublanes, H -> 1024, O -> 128; weights -> bf16.
    # Zero-padded w2 rows / b1 columns keep padded lanes inert; padded outputs are
    # sliced off below.
    x_p = jnp.pad(x, ((0, b_pad - B), (0, 0))).astype(jnp.bfloat16)
    w1_p = jnp.pad(w1_t, ((0, 0), (0, H_PAD - H))).astype(jnp.bfloat16)
    b1_p = jnp.pad(b1, ((0, 0), (0, H_PAD - H))).astype(jnp.float32)
    w2_p = jnp.pad(w2_t, ((0, H_PAD - H), (0, O_PAD - O))).astype(jnp.bfloat16)
    b2_p = jnp.pad(b2, ((0, 0), (0, O_PAD - O))).astype(jnp.float32)

    def vmem():
        return pl.BlockSpec(memory_space=pltpu.MemorySpace.VMEM)

    spk_rec_p, mem_rec_p = pl.pallas_call(
        snn_kernel,
        out_shape=(
            jax.ShapeDtypeStruct((num_steps, b_pad, O_PAD), jnp.float32),
            jax.ShapeDtypeStruct((num_steps, b_pad, O_PAD), jnp.float32),
        ),
        in_specs=[vmem() for _ in range(5)],
        out_specs=(vmem(), vmem()),
        scratch_shapes=[
            pltpu.VMEM((num_steps * b_pad, H_PAD), jnp.float32),   # spk1 record
            pltpu.VMEM((num_steps * b_pad, O_PAD), jnp.float32),   # batched cur2
        ],
        compiler_params=pltpu.CompilerParams(
            vmem_limit_bytes=16 * 1024 * 1024),
    )(x_p, w1_p, b1_p, w2_p, b2_p)

    # Strip padding (glue slice in plain JAX).
    return spk_rec_p[:, :B, :O], mem_rec_p[:, :B, :O]


def init_params(key):
    """Deterministic nn.Linear-style init: U(-1/sqrt(fan_in), 1/sqrt(fan_in))."""
    k1, k2, k3, k4 = jax.random.split(key, 4)
    bound1 = 1.0 / (NUM_INPUTS ** 0.5)
    bound2 = 1.0 / (NUM_HIDDEN ** 0.5)
    # Weights stored already transposed to (in, out) for the kernel layout.
    w1_t = jax.random.uniform(k1, (NUM_INPUTS, NUM_HIDDEN), jnp.float32, -bound1, bound1)
    b1 = jax.random.uniform(k2, (1, NUM_HIDDEN), jnp.float32, -bound1, bound1)
    w2_t = jax.random.uniform(k3, (NUM_HIDDEN, NUM_OUTPUTS), jnp.float32, -bound2, bound2)
    b2 = jax.random.uniform(k4, (1, NUM_OUTPUTS), jnp.float32, -bound2, bound2)
    return w1_t, b1, w2_t, b2


if __name__ == "__main__":
    key = jax.random.PRNGKey(0)
    kx, kp = jax.random.split(key)

    batch = 2
    # MNIST-like input (B, 1, 28, 28); the module flattens it with x.view(B, -1).
    x_img = jax.random.uniform(kx, (batch, 1, 28, 28), jnp.float32)
    x = x_img.reshape(batch, -1)        # glue reshape in plain JAX

    w1_t, b1, w2_t, b2 = init_params(kp)

    spk2_rec, mem2_rec = quantized_snn_forward(x, w1_t, b1, w2_t, b2)
    jax.block_until_ready((spk2_rec, mem2_rec))

    assert spk2_rec.shape == (NUM_STEPS, batch, NUM_OUTPUTS)
    assert mem2_rec.shape == (NUM_STEPS, batch, NUM_OUTPUTS)
    print("KERNEL_OK")
</pallas_src>

<mosaic_0001>
module attributes {stable_mosaic.version = 11 : i64} {
  func.func @snn_kernel(%arg0: memref<8x784xbf16, #tpu.memory_space<vmem>>, %arg1: memref<784x1024xbf16, #tpu.memory_space<vmem>>, %arg2: memref<1x1024xf32, #tpu.memory_space<vmem>>, %arg3: memref<1024x128xbf16, #tpu.memory_space<vmem>>, %arg4: memref<1x128xf32, #tpu.memory_space<vmem>>, %arg5: memref<25x8x128xf32, #tpu.memory_space<vmem>>, %arg6: memref<25x8x128xf32, #tpu.memory_space<vmem>>, %arg7: memref<200x1024xf32, #tpu.memory_space<vmem>>, %arg8: memref<200x128xf32, #tpu.memory_space<vmem>>) attributes {dimension_semantics = [], scalar_prefetch = 0 : i64, scratch_operands = 2 : i64, tpu.core_type = #tpu.core_type<tc>} {
    %c0 = arith.constant 0 : index
    %c0_0 = arith.constant 0 : index
    %0 = vector.load %arg0[%c0, %c0_0] : memref<8x784xbf16, #tpu.memory_space<vmem>>, vector<8x784xbf16>
    %c0_1 = arith.constant 0 : index
    %c0_2 = arith.constant 0 : index
    %1 = vector.load %arg1[%c0_1, %c0_2] : memref<784x1024xbf16, #tpu.memory_space<vmem>>, vector<784x1024xbf16>
    %cst = arith.constant dense<0.000000e+00> : vector<8x1024xf32>
    %2 = tpu.matmul %0, %1, %cst {dimension_numbers = #tpu.dot_dimension_numbers<[1], [0], [0], [1], [0, 0, 1, 1], [], []>} : vector<8x784xbf16>, vector<784x1024xbf16>, vector<8x1024xf32> -> vector<8x1024xf32>
    %c0_3 = arith.constant 0 : index
    %c0_4 = arith.constant 0 : index
    %3 = vector.load %arg2[%c0_3, %c0_4] : memref<1x1024xf32, #tpu.memory_space<vmem>>, vector<1x1024xf32>
    %4 = vector.broadcast %3 : vector<1x1024xf32> to vector<8x1024xf32>
    %5 = arith.addf %2, %4 : vector<8x1024xf32>
    %cst_5 = arith.constant 0.000000e+00 : f32
    %6 = vector.broadcast %cst_5 : f32 to vector<8x1024xf32>
    %cst_6 = arith.constant 0.949999988 : f32
    %7 = vector.broadcast %cst_6 : f32 to vector<8x1024xf32>
    %8 = arith.mulf %7, %6 : vector<8x1024xf32>
    %9 = arith.addf %8, %5 : vector<8x1024xf32>
    %cst_7 = arith.constant 1.000000e+00 : f32
    %10 = vector.broadcast %cst_7 : f32 to vector<8x1024xf32>
    %11 = arith.cmpf ogt, %6, %10 : vector<8x1024xf32>
    %cst_8 = arith.constant 1.000000e+00 : f32
    %cst_9 = arith.constant 0.000000e+00 : f32
    %12 = vector.broadcast %cst_8 : f32 to vector<8x1024xf32>
    %13 = vector.broadcast %cst_9 : f32 to vector<8x1024xf32>
    %14 = arith.select %11, %12, %13 : vector<8x1024xi1>, vector<8x1024xf32>
    %15 = arith.subf %9, %14 : vector<8x1024xf32>
    %cst_10 = arith.constant -1.000000e+00 : f32
    %16 = vector.broadcast %cst_10 : f32 to vector<8x1024xf32>
    %17 = arith.subf %15, %16 : vector<8x1024xf32>
    %cst_11 = arith.constant 115.909088 : f32
    %18 = vector.broadcast %cst_11 : f32 to vector<8x1024xf32>
    %19 = arith.mulf %17, %18 : vector<8x1024xf32>
    %20 = math.roundeven %19 : vector<8x1024xf32>
    %cst_12 = arith.constant 0.000000e+00 : f32
    %cst_13 = arith.constant 2.550000e+02 : f32
    %21 = vector.broadcast %cst_12 : f32 to vector<8x1024xf32>
    %22 = arith.maximumf %21, %20 : vector<8x1024xf32>
    %23 = vector.broadcast %cst_13 : f32 to vector<8x1024xf32>
    %24 = arith.minimumf %23, %22 : vector<8x1024xf32>
    %cst_14 = arith.constant 0.00862745102 : f32
    %25 = vector.broadcast %cst_14 : f32 to vector<8x1024xf32>
    %26 = arith.mulf %24, %25 : vector<8x1024xf32>
    %cst_15 = arith.constant -1.000000e+00 : f32
    %27 = vector.broadcast %cst_15 : f32 to vector<8x1024xf32>
    %28 = arith.addf %27, %26 : vector<8x1024xf32>
    %cst_16 = arith.constant 1.000000e+00 : f32
    %29 = vector.broadcast %cst_16 : f32 to vector<8x1024xf32>
    %30 = arith.cmpf ogt, %28, %29 : vector<8x1024xf32>
    %31 = arith.extui %30 : vector<8x1024xi1> to vector<8x1024xi32>
    %32 = arith.sitofp %31 : vector<8x1024xi32> to vector<8x1024xf32>
    %c0_17 = arith.constant 0 : index
    %c0_18 = arith.constant 0 : index
    %33 = vector.load %arg7[%c0_17, %c0_18] : memref<200x1024xf32, #tpu.memory_space<vmem>>, vector<8x1024xf32>
    tpu.vector_store %arg7[%c0_17, %c0_18], %32 {strides = array<i32>} : memref<200x1024xf32, #tpu.memory_space<vmem>>, vector<8x1024xf32>,
    %cst_19 = arith.constant 0.949999988 : f32
    %34 = vector.broadcast %cst_19 : f32 to vector<8x1024xf32>
    %35 = arith.mulf %34, %28 : vector<8x1024xf32>
    %36 = arith.addf %35, %5 : vector<8x1024xf32>
    %cst_20 = arith.constant 1.000000e+00 : f32
    %37 = vector.broadcast %cst_20 : f32 to vector<8x1024xf32>
    %38 = arith.cmpf ogt, %28, %37 : vector<8x1024xf32>
    %cst_21 = arith.constant 1.000000e+00 : f32
    %cst_22 = arith.constant 0.000000e+00 : f32
    %39 = vector.broadcast %cst_21 : f32 to vector<8x1024xf32>
    %40 = vector.broadcast %cst_22 : f32 to vector<8x1024xf32>
    %41 = arith.select %38, %39, %40 : vector<8x1024xi1>, vector<8x1024xf32>
    %42 = arith.subf %36, %41 : vector<8x1024xf32>
    %cst_23 = arith.constant -1.000000e+00 : f32
    %43 = vector.broadcast %cst_23 : f32 to vector<8x1024xf32>
    %44 = arith.subf %42, %43 : vector<8x1024xf32>
    %cst_24 = arith.constant 115.909088 : f32
    %45 = vector.broadcast %cst_24 : f32 to vector<8x1024xf32>
    %46 = arith.mulf %44, %45 : vector<8x1024xf32>
    %47 = math.roundeven %46 : vector<8x1024xf32>
    %cst_25 = arith.constant 0.000000e+00 : f32
    %cst_26 = arith.constant 2.550000e+02 : f32
    %48 = vector.broadcast %cst_25 : f32 to vector<8x1024xf32>
    %49 = arith.maximumf %48, %47 : vector<8x1024xf32>
    %50 = vector.broadcast %cst_26 : f32 to vector<8x1024xf32>
    %51 = arith.minimumf %50, %49 : vector<8x1024xf32>
    %cst_27 = arith.constant 0.00862745102 : f32
    %52 = vector.broadcast %cst_27 : f32 to vector<8x1024xf32>
    %53 = arith.mulf %51, %52 : vector<8x1024xf32>
    %cst_28 = arith.constant -1.000000e+00 : f32
    %54 = vector.broadcast %cst_28 : f32 to vector<8x1024xf32>
    %55 = arith.addf %54, %53 : vector<8x1024xf32>
    %cst_29 = arith.constant 1.000000e+00 : f32
    %56 = vector.broadcast %cst_29 : f32 to vector<8x1024xf32>
    %57 = arith.cmpf ogt, %55, %56 : vector<8x1024xf32>
    %58 = arith.extui %57 : vector<8x1024xi1> to vector<8x1024xi32>
    %59 = arith.sitofp %58 : vector<8x1024xi32> to vector<8x1024xf32>
    %c8 = arith.constant 8 : index
    %c0_30 = arith.constant 0 : index
    %60 = vector.load %arg7[%c8, %c0_30] : memref<200x1024xf32, #tpu.memory_space<vmem>>, vector<8x1024xf32>
    tpu.vector_store %arg7[%c8, %c0_30], %59 {strides = array<i32>} : memref<200x1024xf32, #tpu.memory_space<vmem>>, vector<8x1024xf32>,
    %cst_31 = arith.constant 0.949999988 : f32
    %61 = vector.broadcast %cst_31 : f32 to vector<8x1024xf32>
    %62 = arith.mulf %61, %55 : vector<8x1024xf32>
    %63 = arith.addf %62, %5 : vector<8x1024xf32>
    %cst_32 = arith.constant 1.000000e+00 : f32
    %64 = vector.broadcast %cst_32 : f32 to vector<8x1024xf32>
    %65 = arith.cmpf ogt, %55, %64 : vector<8x1024xf32>
    %cst_33 = arith.constant 1.000000e+00 : f32
    %cst_34 = arith.constant 0.000000e+00 : f32
    %66 = vector.broadcast %cst_33 : f32 to vector<8x1024xf32>
    %67 = vector.broadcast %cst_34 : f32 to vector<8x1024xf32>
    %68 = arith.select %65, %66, %67 : vector<8x1024xi1>, vector<8x1024xf32>
    %69 = arith.subf %63, %68 : vector<8x1024xf32>
    %cst_35 = arith.constant -1.000000e+00 : f32
    %70 = vector.broadcast %cst_35 : f32 to vector<8x1024xf32>
    %71 = arith.subf %69, %70 : vector<8x1024xf32>
    %cst_36 = arith.constant 115.909088 : f32
    %72 = vector.broadcast %cst_36 : f32 to vector<8x1024xf32>
    %73 = arith.mulf %71, %72 : vector<8x1024xf32>
    %74 = math.roundeven %73 : vector<8x1024xf32>
    %cst_37 = arith.constant 0.000000e+00 : f32
    %cst_38 = arith.constant 2.550000e+02 : f32
    %75 = vector.broadcast %cst_37 : f32 to vector<8x1024xf32>
    %76 = arith.maximumf %75, %74 : vector<8x1024xf32>
    %77 = vector.broadcast %cst_38 : f32 to vector<8x1024xf32>
    %78 = arith.minimumf %77, %76 : vector<8x1024xf32>
    %cst_39 = arith.constant 0.00862745102 : f32
    %79 = vector.broadcast %cst_39 : f32 to vector<8x1024xf32>
    %80 = arith.mulf %78, %79 : vector<8x1024xf32>
    %cst_40 = arith.constant -1.000000e+00 : f32
    %81 = vector.broadcast %cst_40 : f32 to vector<8x1024xf32>
    %82 = arith.addf %81, %80 : vector<8x1024xf32>
    %cst_41 = arith.constant 1.000000e+00 : f32
    %83 = vector.broadcast %cst_41 : f32 to vector<8x1024xf32>
    %84 = arith.cmpf ogt, %82, %83 : vector<8x1024xf32>
    %85 = arith.extui %84 : vector<8x1024xi1> to vector<8x1024xi32>
    %86 = arith.sitofp %85 : vector<8x1024xi32> to vector<8x1024xf32>
    %c16 = arith.constant 16 : index
    %c0_42 = arith.constant 0 : index
    %87 = vector.load %arg7[%c16, %c0_42] : memref<200x1024xf32, #tpu.memory_space<vmem>>, vector<8x1024xf32>
    tpu.vector_store %arg7[%c16, %c0_42], %86 {strides = array<i32>} : memref<200x1024xf32, #tpu.memory_space<vmem>>, vector<8x1024xf32>,
    %cst_43 = arith.constant 0.949999988 : f32
    %88 = vector.broadcast %cst_43 : f32 to vector<8x1024xf32>
    %89 = arith.mulf %88, %82 : vector<8x1024xf32>
    %90 = arith.addf %89, %5 : vector<8x1024xf32>
    %cst_44 = arith.constant 1.000000e+00 : f32
    %91 = vector.broadcast %cst_44 : f32 to vector<8x1024xf32>
    %92 = arith.cmpf ogt, %82, %91 : vector<8x1024xf32>
    %cst_45 = arith.constant 1.000000e+00 : f32
    %cst_46 = arith.constant 0.000000e+00 : f32
    %93 = vector.broadcast %cst_45 : f32 to vector<8x1024xf32>
    %94 = vector.broadcast %cst_46 : f32 to vector<8x1024xf32>
    %95 = arith.select %92, %93, %94 : vector<8x1024xi1>, vector<8x1024xf32>
    %96 = arith.subf %90, %95 : vector<8x1024xf32>
    %cst_47 = arith.constant -1.000000e+00 : f32
    %97 = vector.broadcast %cst_47 : f32 to vector<8x1024xf32>
    %98 = arith.subf %96, %97 : vector<8x1024xf32>
    %cst_48 = arith.constant 115.909088 : f32
    %99 = vector.broadcast %cst_48 : f32 to vector<8x1024xf32>
    %100 = arith.mulf %98, %99 : vector<8x1024xf32>
    %101 = math.roundeven %100 : vector<8x1024xf32>
    %cst_49 = arith.constant 0.000000e+00 : f32
    %cst_50 = arith.constant 2.550000e+02 : f32
    %102 = vector.broadcast %cst_49 : f32 to vector<8x1024xf32>
    %103 = arith.maximumf %102, %101 : vector<8x1024xf32>
    %104 = vector.broadcast %cst_50 : f32 to vector<8x1024xf32>
    %105 = arith.minimumf %104, %103 : vector<8x1024xf32>
    %cst_51 = arith.constant 0.00862745102 : f32
    %106 = vector.broadcast %cst_51 : f32 to vector<8x1024xf32>
    %107 = arith.mulf %105, %106 : vector<8x1024xf32>
    %cst_52 = arith.constant -1.000000e+00 : f32
    %108 = vector.broadcast %cst_52 : f32 to vector<8x1024xf32>
    %109 = arith.addf %108, %107 : vector<8x1024xf32>
    %cst_53 = arith.constant 1.000000e+00 : f32
    %110 = vector.broadcast %cst_53 : f32 to vector<8x1024xf32>
    %111 = arith.cmpf ogt, %109, %110 : vector<8x1024xf32>
    %112 = arith.extui %111 : vector<8x1024xi1> to vector<8x1024xi32>
    %113 = arith.sitofp %112 : vector<8x1024xi32> to vector<8x1024xf32>
    %c24 = arith.constant 24 : index
    %c0_54 = arith.constant 0 : index
    %114 = vector.load %arg7[%c24, %c0_54] : memref<200x1024xf32, #tpu.memory_space<vmem>>, vector<8x1024xf32>
    tpu.vector_store %arg7[%c24, %c0_54], %113 {strides = array<i32>} : memref<200x1024xf32, #tpu.memory_space<vmem>>, vector<8x1024xf32>,
    %cst_55 = arith.constant 0.949999988 : f32
    %115 = vector.broadcast %cst_55 : f32 to vector<8x1024xf32>
    %116 = arith.mulf %115, %109 : vector<8x1024xf32>
    %117 = arith.addf %116, %5 : vector<8x1024xf32>
    %cst_56 = arith.constant 1.000000e+00 : f32
    %118 = vector.broadcast %cst_56 : f32 to vector<8x1024xf32>
    %119 = arith.cmpf ogt, %109, %118 : vector<8x1024xf32>
    %cst_57 = arith.constant 1.000000e+00 : f32
    %cst_58 = arith.constant 0.000000e+00 : f32
    %120 = vector.broadcast %cst_57 : f32 to vector<8x1024xf32>
    %121 = vector.broadcast %cst_58 : f32 to vector<8x1024xf32>
    %122 = arith.select %119, %120, %121 : vector<8x1024xi1>, vector<8x1024xf32>
    %123 = arith.subf %117, %122 : vector<8x1024xf32>
    %cst_59 = arith.constant -1.000000e+00 : f32
    %124 = vector.broadcast %cst_59 : f32 to vector<8x1024xf32>
    %125 = arith.subf %123, %124 : vector<8x1024xf32>
    %cst_60 = arith.constant 115.909088 : f32
    %126 = vector.broadcast %cst_60 : f32 to vector<8x1024xf32>
    %127 = arith.mulf %125, %126 : vector<8x1024xf32>
    %128 = math.roundeven %127 : vector<8x1024xf32>
    %cst_61 = arith.constant 0.000000e+00 : f32
    %cst_62 = arith.constant 2.550000e+02 : f32
    %129 = vector.broadcast %cst_61 : f32 to vector<8x1024xf32>
    %130 = arith.maximumf %129, %128 : vector<8x1024xf32>
    %131 = vector.broadcast %cst_62 : f32 to vector<8x1024xf32>
    %132 = arith.minimumf %131, %130 : vector<8x1024xf32>
    %cst_63 = arith.constant 0.00862745102 : f32
    %133 = vector.broadcast %cst_63 : f32 to vector<8x1024xf32>
    %134 = arith.mulf %132, %133 : vector<8x1024xf32>
    %cst_64 = arith.constant -1.000000e+00 : f32
    %135 = vector.broadcast %cst_64 : f32 to vector<8x1024xf32>
    %136 = arith.addf %135, %134 : vector<8x1024xf32>
    %cst_65 = arith.constant 1.000000e+00 : f32
    %137 = vector.broadcast %cst_65 : f32 to vector<8x1024xf32>
    %138 = arith.cmpf ogt, %136, %137 : vector<8x1024xf32>
    %139 = arith.extui %138 : vector<8x1024xi1> to vector<8x1024xi32>
    %140 = arith.sitofp %139 : vector<8x1024xi32> to vector<8x1024xf32>
    %c32 = arith.constant 32 : index
    %c0_66 = arith.constant 0 : index
    %141 = vector.load %arg7[%c32, %c0_66] : memref<200x1024xf32, #tpu.memory_space<vmem>>, vector<8x1024xf32>
    tpu.vector_store %arg7[%c32, %c0_66], %140 {strides = array<i32>} : memref<200x1024xf32, #tpu.memory_space<vmem>>, vector<8x1024xf32>,
    %cst_67 = arith.constant 0.949999988 : f32
    %142 = vector.broadcast %cst_67 : f32 to vector<8x1024xf32>
    %143 = arith.mulf %142, %136 : vector<8x1024xf32>
    %144 = arith.addf %143, %5 : vector<8x1024xf32>
    %cst_68 = arith.constant 1.000000e+00 : f32
    %145 = vector.broadcast %cst_68 : f32 to vector<8x1024xf32>
    %146 = arith.cmpf ogt, %136, %145 : vector<8x1024xf32>
    %cst_69 = arith.constant 1.000000e+00 : f32
    %cst_70 = arith.constant 0.000000e+00 : f32
    %147 = vector.broadcast %cst_69 : f32 to vector<8x1024xf32>
    %148 = vector.broadcast %cst_70 : f32 to vector<8x1024xf32>
    %149 = arith.select %146, %147, %148 : vector<8x1024xi1>, vector<8x1024xf32>
    %150 = arith.subf %144, %149 : vector<8x1024xf32>
    %cst_71 = arith.constant -1.000000e+00 : f32
    %151 = vector.broadcast %cst_71 : f32 to vector<8x1024xf32>
    %152 = arith.subf %150, %151 : vector<8x1024xf32>
    %cst_72 = arith.constant 115.909088 : f32
    %153 = vector.broadcast %cst_72 : f32 to vector<8x1024xf32>
    %154 = arith.mulf %152, %153 : vector<8x1024xf32>
    %155 = math.roundeven %154 : vector<8x1024xf32>
    %cst_73 = arith.constant 0.000000e+00 : f32
    %cst_74 = arith.constant 2.550000e+02 : f32
    %156 = vector.broadcast %cst_73 : f32 to vector<8x1024xf32>
    %157 = arith.maximumf %156, %155 : vector<8x1024xf32>
    %158 = vector.broadcast %cst_74 : f32 to vector<8x1024xf32>
    %159 = arith.minimumf %158, %157 : vector<8x1024xf32>
    %cst_75 = arith.constant 0.00862745102 : f32
    %160 = vector.broadcast %cst_75 : f32 to vector<8x1024xf32>
    %161 = arith.mulf %159, %160 : vector<8x1024xf32>
    %cst_76 = arith.constant -1.000000e+00 : f32
    %162 = vector.broadcast %cst_76 : f32 to vector<8x1024xf32>
    %163 = arith.addf %162, %161 : vector<8x1024xf32>
    %cst_77 = arith.constant 1.000000e+00 : f32
    %164 = vector.broadcast %cst_77 : f32 to vector<8x1024xf32>
    %165 = arith.cmpf ogt, %163, %164 : vector<8x1024xf32>
    %166 = arith.extui %165 : vector<8x1024xi1> to vector<8x1024xi32>
    %167 = arith.sitofp %166 : vector<8x1024xi32> to vector<8x1024xf32>
    %c40 = arith.constant 40 : index
    %c0_78 = arith.constant 0 : index
    %168 = vector.load %arg7[%c40, %c0_78] : memref<200x1024xf32, #tpu.memory_space<vmem>>, vector<8x1024xf32>
    tpu.vector_store %arg7[%c40, %c0_78], %167 {strides = array<i32>} : memref<200x1024xf32, #tpu.memory_space<vmem>>, vector<8x1024xf32>,
    %cst_79 = arith.constant 0.949999988 : f32
    %169 = vector.broadcast %cst_79 : f32 to vector<8x1024xf32>
    %170 = arith.mulf %169, %163 : vector<8x1024xf32>
    %171 = arith.addf %170, %5 : vector<8x1024xf32>
    %cst_80 = arith.constant 1.000000e+00 : f32
    %172 = vector.broadcast %cst_80 : f32 to vector<8x1024xf32>
    %173 = arith.cmpf ogt, %163, %172 : vector<8x1024xf32>
    %cst_81 = arith.constant 1.000000e+00 : f32
    %cst_82 = arith.constant 0.000000e+00 : f32
    %174 = vector.broadcast %cst_81 : f32 to vector<8x1024xf32>
    %175 = vector.broadcast %cst_82 : f32 to vector<8x1024xf32>
    %176 = arith.select %173, %174, %175 : vector<8x1024xi1>, vector<8x1024xf32>
    %177 = arith.subf %171, %176 : vector<8x1024xf32>
    %cst_83 = arith.constant -1.000000e+00 : f32
    %178 = vector.broadcast %cst_83 : f32 to vector<8x1024xf32>
    %179 = arith.subf %177, %178 : vector<8x1024xf32>
    %cst_84 = arith.constant 115.909088 : f32
    %180 = vector.broadcast %cst_84 : f32 to vector<8x1024xf32>
    %181 = arith.mulf %179, %180 : vector<8x1024xf32>
    %182 = math.roundeven %181 : vector<8x1024xf32>
    %cst_85 = arith.constant 0.000000e+00 : f32
    %cst_86 = arith.constant 2.550000e+02 : f32
    %183 = vector.broadcast %cst_85 : f32 to vector<8x1024xf32>
    %184 = arith.maximumf %183, %182 : vector<8x1024xf32>
    %185 = vector.broadcast %cst_86 : f32 to vector<8x1024xf32>
    %186 = arith.minimumf %185, %184 : vector<8x1024xf32>
    %cst_87 = arith.constant 0.00862745102 : f32
    %187 = vector.broadcast %cst_87 : f32 to vector<8x1024xf32>
    %188 = arith.mulf %186, %187 : vector<8x1024xf32>
    %cst_88 = arith.constant -1.000000e+00 : f32
    %189 = vector.broadcast %cst_88 : f32 to vector<8x1024xf32>
    %190 = arith.addf %189, %188 : vector<8x1024xf32>
    %cst_89 = arith.constant 1.000000e+00 : f32
    %191 = vector.broadcast %cst_89 : f32 to vector<8x1024xf32>
    %192 = arith.cmpf ogt, %190, %191 : vector<8x1024xf32>
    %193 = arith.extui %192 : vector<8x1024xi1> to vector<8x1024xi32>
    %194 = arith.sitofp %193 : vector<8x1024xi32> to vector<8x1024xf32>
    %c48 = arith.constant 48 : index
    %c0_90 = arith.constant 0 : index
    %195 = vector.load %arg7[%c48, %c0_90] : memref<200x1024xf32, #tpu.memory_space<vmem>>, vector<8x1024xf32>
    tpu.vector_store %arg7[%c48, %c0_90], %194 {strides = array<i32>} : memref<200x1024xf32, #tpu.memory_space<vmem>>, vector<8x1024xf32>,
    %cst_91 = arith.constant 0.949999988 : f32
    %196 = vector.broadcast %cst_91 : f32 to vector<8x1024xf32>
    %197 = arith.mulf %196, %190 : vector<8x1024xf32>
    %198 = arith.addf %197, %5 : vector<8x1024xf32>
    %cst_92 = arith.constant 1.000000e+00 : f32
    %199 = vector.broadcast %cst_92 : f32 to vector<8x1024xf32>
    %200 = arith.cmpf ogt, %190, %199 : vector<8x1024xf32>
    %cst_93 = arith.constant 1.000000e+00 : f32
    %cst_94 = arith.constant 0.000000e+00 : f32
    %201 = vector.broadcast %cst_93 : f32 to vector<8x1024xf32>
    %202 = vector.broadcast %cst_94 : f32 to vector<8x1024xf32>
    %203 = arith.select %200, %201, %202 : vector<8x1024xi1>, vector<8x1024xf32>
    %204 = arith.subf %198, %203 : vector<8x1024xf32>
    %cst_95 = arith.constant -1.000000e+00 : f32
    %205 = vector.broadcast %cst_95 : f32 to vector<8x1024xf32>
    %206 = arith.subf %204, %205 : vector<8x1024xf32>
    %cst_96 = arith.constant 115.909088 : f32
    %207 = vector.broadcast %cst_96 : f32 to vector<8x1024xf32>
    %208 = arith.mulf %206, %207 : vector<8x1024xf32>
    %209 = math.roundeven %208 : vector<8x1024xf32>
    %cst_97 = arith.constant 0.000000e+00 : f32
    %cst_98 = arith.constant 2.550000e+02 : f32
    %210 = vector.broadcast %cst_97 : f32 to vector<8x1024xf32>
    %211 = arith.maximumf %210, %209 : vector<8x1024xf32>
    %212 = vector.broadcast %cst_98 : f32 to vector<8x1024xf32>
    %213 = arith.minimumf %212, %211 : vector<8x1024xf32>
    %cst_99 = arith.constant 0.00862745102 : f32
    %214 = vector.broadcast %cst_99 : f32 to vector<8x1024xf32>
    %215 = arith.mulf %213, %214 : vector<8x1024xf32>
    %cst_100 = arith.constant -1.000000e+00 : f32
    %216 = vector.broadcast %cst_100 : f32 to vector<8x1024xf32>
    %217 = arith.addf %216, %215 : vector<8x1024xf32>
    %cst_101 = arith.constant 1.000000e+00 : f32
    %218 = vector.broadcast %cst_101 : f32 to vector<8x1024xf32>
    %219 = arith.cmpf ogt, %217, %218 : vector<8x1024xf32>
    %220 = arith.extui %219 : vector<8x1024xi1> to vector<8x1024xi32>
    %221 = arith.sitofp %220 : vector<8x1024xi32> to vector<8x1024xf32>
    %c56 = arith.constant 56 : index
    %c0_102 = arith.constant 0 : index
    %222 = vector.load %arg7[%c56, %c0_102] : memref<200x1024xf32, #tpu.memory_space<vmem>>, vector<8x1024xf32>
    tpu.vector_store %arg7[%c56, %c0_102], %221 {strides = array<i32>} : memref<200x1024xf32, #tpu.memory_space<vmem>>, vector<8x1024xf32>,
    %cst_103 = arith.constant 0.949999988 : f32
    %223 = vector.broadcast %cst_103 : f32 to vector<8x1024xf32>
    %224 = arith.mulf %223, %217 : vector<8x1024xf32>
    %225 = arith.addf %224, %5 : vector<8x1024xf32>
    %cst_104 = arith.constant 1.000000e+00 : f32
    %226 = vector.broadcast %cst_104 : f32 to vector<8x1024xf32>
    %227 = arith.cmpf ogt, %217, %226 : vector<8x1024xf32>
    %cst_105 = arith.constant 1.000000e+00 : f32
    %cst_106 = arith.constant 0.000000e+00 : f32
    %228 = vector.broadcast %cst_105 : f32 to vector<8x1024xf32>
    %229 = vector.broadcast %cst_106 : f32 to vector<8x1024xf32>
    %230 = arith.select %227, %228, %229 : vector<8x1024xi1>, vector<8x1024xf32>
    %231 = arith.subf %225, %230 : vector<8x1024xf32>
    %cst_107 = arith.constant -1.000000e+00 : f32
    %232 = vector.broadcast %cst_107 : f32 to vector<8x1024xf32>
    %233 = arith.subf %231, %232 : vector<8x1024xf32>
    %cst_108 = arith.constant 115.909088 : f32
    %234 = vector.broadcast %cst_108 : f32 to vector<8x1024xf32>
    %235 = arith.mulf %233, %234 : vector<8x1024xf32>
    %236 = math.roundeven %235 : vector<8x1024xf32>
    %cst_109 = arith.constant 0.000000e+00 : f32
    %cst_110 = arith.constant 2.550000e+02 : f32
    %237 = vector.broadcast %cst_109 : f32 to vector<8x1024xf32>
    %238 = arith.maximumf %237, %236 : vector<8x1024xf32>
    %239 = vector.broadcast %cst_110 : f32 to vector<8x1024xf32>
    %240 = arith.minimumf %239, %238 : vector<8x1024xf32>
    %cst_111 = arith.constant 0.00862745102 : f32
    %241 = vector.broadcast %cst_111 : f32 to vector<8x1024xf32>
    %242 = arith.mulf %240, %241 : vector<8x1024xf32>
    %cst_112 = arith.constant -1.000000e+00 : f32
    %243 = vector.broadcast %cst_112 : f32 to vector<8x1024xf32>
    %244 = arith.addf %243, %242 : vector<8x1024xf32>
    %cst_113 = arith.constant 1.000000e+00 : f32
    %245 = vector.broadcast %cst_113 : f32 to vector<8x1024xf32>
    %246 = arith.cmpf ogt, %244, %245 : vector<8x1024xf32>
    %247 = arith.extui %246 : vector<8x1024xi1> to vector<8x1024xi32>
    %248 = arith.sitofp %247 : vector<8x1024xi32> to vector<8x1024xf32>
    %c64 = arith.constant 64 : index
    %c0_114 = arith.constant 0 : index
    %249 = vector.load %arg7[%c64, %c0_114] : memref<200x1024xf32, #tpu.memory_space<vmem>>, vector<8x1024xf32>
    tpu.vector_store %arg7[%c64, %c0_114], %248 {strides = array<i32>} : memref<200x1024xf32, #tpu.memory_space<vmem>>, vector<8x1024xf32>,
    %cst_115 = arith.constant 0.949999988 : f32
    %250 = vector.broadcast %cst_115 : f32 to vector<8x1024xf32>
    %251 = arith.mulf %250, %244 : vector<8x1024xf32>
    %252 = arith.addf %251, %5 : vector<8x1024xf32>
    %cst_116 = arith.constant 1.000000e+00 : f32
    %253 = vector.broadcast %cst_116 : f32 to vector<8x1024xf32>
    %254 = arith.cmpf ogt, %244, %253 : vector<8x1024xf32>
    %cst_117 = arith.constant 1.000000e+00 : f32
    %cst_118 = arith.constant 0.000000e+00 : f32
    %255 = vector.broadcast %cst_117 : f32 to vector<8x1024xf32>
    %256 = vector.broadcast %cst_118 : f32 to vector<8x1024xf32>
    %257 = arith.select %254, %255, %256 : vector<8x1024xi1>, vector<8x1024xf32>
    %258 = arith.subf %252, %257 : vector<8x1024xf32>
    %cst_119 = arith.constant -1.000000e+00 : f32
    %259 = vector.broadcast %cst_119 : f32 to vector<8x1024xf32>
    %260 = arith.subf %258, %259 : vector<8x1024xf32>
    %cst_120 = arith.constant 115.909088 : f32
    %261 = vector.broadcast %cst_120 : f32 to vector<8x1024xf32>
    %262 = arith.mulf %260, %261 : vector<8x1024xf32>
    %263 = math.roundeven %262 : vector<8x1024xf32>
    %cst_121 = arith.constant 0.000000e+00 : f32
    %cst_122 = arith.constant 2.550000e+02 : f32
    %264 = vector.broadcast %cst_121 : f32 to vector<8x1024xf32>
    %265 = arith.maximumf %264, %263 : vector<8x1024xf32>
    %266 = vector.broadcast %cst_122 : f32 to vector<8x1024xf32>
    %267 = arith.minimumf %266, %265 : vector<8x1024xf32>
    %cst_123 = arith.constant 0.00862745102 : f32
    %268 = vector.broadcast %cst_123 : f32 to vector<8x1024xf32>
    %269 = arith.mulf %267, %268 : vector<8x1024xf32>
    %cst_124 = arith.constant -1.000000e+00 : f32
    %270 = vector.broadcast %cst_124 : f32 to vector<8x1024xf32>
    %271 = arith.addf %270, %269 : vector<8x1024xf32>
    %cst_125 = arith.constant 1.000000e+00 : f32
    %272 = vector.broadcast %cst_125 : f32 to vector<8x1024xf32>
    %273 = arith.cmpf ogt, %271, %272 : vector<8x1024xf32>
    %274 = arith.extui %273 : vector<8x1024xi1> to vector<8x1024xi32>
    %275 = arith.sitofp %274 : vector<8x1024xi32> to vector<8x1024xf32>
    %c72 = arith.constant 72 : index
    %c0_126 = arith.constant 0 : index
    %276 = vector.load %arg7[%c72, %c0_126] : memref<200x1024xf32, #tpu.memory_space<vmem>>, vector<8x1024xf32>
    tpu.vector_store %arg7[%c72, %c0_126], %275 {strides = array<i32>} : memref<200x1024xf32, #tpu.memory_space<vmem>>, vector<8x1024xf32>,
    %cst_127 = arith.constant 0.949999988 : f32
    %277 = vector.broadcast %cst_127 : f32 to vector<8x1024xf32>
    %278 = arith.mulf %277, %271 : vector<8x1024xf32>
    %279 = arith.addf %278, %5 : vector<8x1024xf32>
    %cst_128 = arith.constant 1.000000e+00 : f32
    %280 = vector.broadcast %cst_128 : f32 to vector<8x1024xf32>
    %281 = arith.cmpf ogt, %271, %280 : vector<8x1024xf32>
    %cst_129 = arith.constant 1.000000e+00 : f32
    %cst_130 = arith.constant 0.000000e+00 : f32
    %282 = vector.broadcast %cst_129 : f32 to vector<8x1024xf32>
    %283 = vector.broadcast %cst_130 : f32 to vector<8x1024xf32>
    %284 = arith.select %281, %282, %283 : vector<8x1024xi1>, vector<8x1024xf32>
    %285 = arith.subf %279, %284 : vector<8x1024xf32>
    %cst_131 = arith.constant -1.000000e+00 : f32
    %286 = vector.broadcast %cst_131 : f32 to vector<8x1024xf32>
    %287 = arith.subf %285, %286 : vector<8x1024xf32>
    %cst_132 = arith.constant 115.909088 : f32
    %288 = vector.broadcast %cst_132 : f32 to vector<8x1024xf32>
    %289 = arith.mulf %287, %288 : vector<8x1024xf32>
    %290 = math.roundeven %289 : vector<8x1024xf32>
    %cst_133 = arith.constant 0.000000e+00 : f32
    %cst_134 = arith.constant 2.550000e+02 : f32
    %291 = vector.broadcast %cst_133 : f32 to vector<8x1024xf32>
    %292 = arith.maximumf %291, %290 : vector<8x1024xf32>
    %293 = vector.broadcast %cst_134 : f32 to vector<8x1024xf32>
    %294 = arith.minimumf %293, %292 : vector<8x1024xf32>
    %cst_135 = arith.constant 0.00862745102 : f32
    %295 = vector.broadcast %cst_135 : f32 to vector<8x1024xf32>
    %296 = arith.mulf %294, %295 : vector<8x1024xf32>
    %cst_136 = arith.constant -1.000000e+00 : f32
    %297 = vector.broadcast %cst_136 : f32 to vector<8x1024xf32>
    %298 = arith.addf %297, %296 : vector<8x1024xf32>
    %cst_137 = arith.constant 1.000000e+00 : f32
    %299 = vector.broadcast %cst_137 : f32 to vector<8x1024xf32>
    %300 = arith.cmpf ogt, %298, %299 : vector<8x1024xf32>
    %301 = arith.extui %300 : vector<8x1024xi1> to vector<8x1024xi32>
    %302 = arith.sitofp %301 : vector<8x1024xi32> to vector<8x1024xf32>
    %c80 = arith.constant 80 : index
    %c0_138 = arith.constant 0 : index
    %303 = vector.load %arg7[%c80, %c0_138] : memref<200x1024xf32, #tpu.memory_space<vmem>>, vector<8x1024xf32>
    tpu.vector_store %arg7[%c80, %c0_138], %302 {strides = array<i32>} : memref<200x1024xf32, #tpu.memory_space<vmem>>, vector<8x1024xf32>,
    %cst_139 = arith.constant 0.949999988 : f32
    %304 = vector.broadcast %cst_139 : f32 to vector<8x1024xf32>
    %305 = arith.mulf %304, %298 : vector<8x1024xf32>
    %306 = arith.addf %305, %5 : vector<8x1024xf32>
    %cst_140 = arith.constant 1.000000e+00 : f32
    %307 = vector.broadcast %cst_140 : f32 to vector<8x1024xf32>
    %308 = arith.cmpf ogt, %298, %307 : vector<8x1024xf32>
    %cst_141 = arith.constant 1.000000e+00 : f32
    %cst_142 = arith.constant 0.000000e+00 : f32
    %309 = vector.broadcast %cst_141 : f32 to vector<8x1024xf32>
    %310 = vector.broadcast %cst_142 : f32 to vector<8x1024xf32>
    %311 = arith.select %308, %309, %310 : vector<8x1024xi1>, vector<8x1024xf32>
    %312 = arith.subf %306, %311 : vector<8x1024xf32>
    %cst_143 = arith.constant -1.000000e+00 : f32
    %313 = vector.broadcast %cst_143 : f32 to vector<8x1024xf32>
    %314 = arith.subf %312, %313 : vector<8x1024xf32>
    %cst_144 = arith.constant 115.909088 : f32
    %315 = vector.broadcast %cst_144 : f32 to vector<8x1024xf32>
    %316 = arith.mulf %314, %315 : vector<8x1024xf32>
    %317 = math.roundeven %316 : vector<8x1024xf32>
    %cst_145 = arith.constant 0.000000e+00 : f32
    %cst_146 = arith.constant 2.550000e+02 : f32
    %318 = vector.broadcast %cst_145 : f32 to vector<8x1024xf32>
    %319 = arith.maximumf %318, %317 : vector<8x1024xf32>
    %320 = vector.broadcast %cst_146 : f32 to vector<8x1024xf32>
    %321 = arith.minimumf %320, %319 : vector<8x1024xf32>
    %cst_147 = arith.constant 0.00862745102 : f32
    %322 = vector.broadcast %cst_147 : f32 to vector<8x1024xf32>
    %323 = arith.mulf %321, %322 : vector<8x1024xf32>
    %cst_148 = arith.constant -1.000000e+00 : f32
    %324 = vector.broadcast %cst_148 : f32 to vector<8x1024xf32>
    %325 = arith.addf %324, %323 : vector<8x1024xf32>
    %cst_149 = arith.constant 1.000000e+00 : f32
    %326 = vector.broadcast %cst_149 : f32 to vector<8x1024xf32>
    %327 = arith.cmpf ogt, %325, %326 : vector<8x1024xf32>
    %328 = arith.extui %327 : vector<8x1024xi1> to vector<8x1024xi32>
    %329 = arith.sitofp %328 : vector<8x1024xi32> to vector<8x1024xf32>
    %c88 = arith.constant 88 : index
    %c0_150 = arith.constant 0 : index
    %330 = vector.load %arg7[%c88, %c0_150] : memref<200x1024xf32, #tpu.memory_space<vmem>>, vector<8x1024xf32>
    tpu.vector_store %arg7[%c88, %c0_150], %329 {strides = array<i32>} : memref<200x1024xf32, #tpu.memory_space<vmem>>, vector<8x1024xf32>,
    %cst_151 = arith.constant 0.949999988 : f32
    %331 = vector.broadcast %cst_151 : f32 to vector<8x1024xf32>
    %332 = arith.mulf %331, %325 : vector<8x1024xf32>
    %333 = arith.addf %332, %5 : vector<8x1024xf32>
    %cst_152 = arith.constant 1.000000e+00 : f32
    %334 = vector.broadcast %cst_152 : f32 to vector<8x1024xf32>
    %335 = arith.cmpf ogt, %325, %334 : vector<8x1024xf32>
    %cst_153 = arith.constant 1.000000e+00 : f32
    %cst_154 = arith.constant 0.000000e+00 : f32
    %336 = vector.broadcast %cst_153 : f32 to vector<8x1024xf32>
    %337 = vector.broadcast %cst_154 : f32 to vector<8x1024xf32>
    %338 = arith.select %335, %336, %337 : vector<8x1024xi1>, vector<8x1024xf32>
    %339 = arith.subf %333, %338 : vector<8x1024xf32>
    %cst_155 = arith.constant -1.000000e+00 : f32
    %340 = vector.broadcast %cst_155 : f32 to vector<8x1024xf32>
    %341 = arith.subf %339, %340 : vector<8x1024xf32>
    %cst_156 = arith.constant 115.909088 : f32
    %342 = vector.broadcast %cst_156 : f32 to vector<8x1024xf32>
    %343 = arith.mulf %341, %342 : vector<8x1024xf32>
    %344 = math.roundeven %343 : vector<8x1024xf32>
    %cst_157 = arith.constant 0.000000e+00 : f32
    %cst_158 = arith.constant 2.550000e+02 : f32
    %345 = vector.broadcast %cst_157 : f32 to vector<8x1024xf32>
    %346 = arith.maximumf %345, %344 : vector<8x1024xf32>
    %347 = vector.broadcast %cst_158 : f32 to vector<8x1024xf32>
    %348 = arith.minimumf %347, %346 : vector<8x1024xf32>
    %cst_159 = arith.constant 0.00862745102 : f32
    %349 = vector.broadcast %cst_159 : f32 to vector<8x1024xf32>
    %350 = arith.mulf %348, %349 : vector<8x1024xf32>
    %cst_160 = arith.constant -1.000000e+00 : f32
    %351 = vector.broadcast %cst_160 : f32 to vector<8x1024xf32>
    %352 = arith.addf %351, %350 : vector<8x1024xf32>
    %cst_161 = arith.constant 1.000000e+00 : f32
    %353 = vector.broadcast %cst_161 : f32 to vector<8x1024xf32>
    %354 = arith.cmpf ogt, %352, %353 : vector<8x1024xf32>
    %355 = arith.extui %354 : vector<8x1024xi1> to vector<8x1024xi32>
    %356 = arith.sitofp %355 : vector<8x1024xi32> to vector<8x1024xf32>
    %c96 = arith.constant 96 : index
    %c0_162 = arith.constant 0 : index
    %357 = vector.load %arg7[%c96, %c0_162] : memref<200x1024xf32, #tpu.memory_space<vmem>>, vector<8x1024xf32>
    tpu.vector_store %arg7[%c96, %c0_162], %356 {strides = array<i32>} : memref<200x1024xf32, #tpu.memory_space<vmem>>, vector<8x1024xf32>,
    %cst_163 = arith.constant 0.949999988 : f32
    %358 = vector.broadcast %cst_163 : f32 to vector<8x1024xf32>
    %359 = arith.mulf %358, %352 : vector<8x1024xf32>
    %360 = arith.addf %359, %5 : vector<8x1024xf32>
    %cst_164 = arith.constant 1.000000e+00 : f32
    %361 = vector.broadcast %cst_164 : f32 to vector<8x1024xf32>
    %362 = arith.cmpf ogt, %352, %361 : vector<8x1024xf32>
    %cst_165 = arith.constant 1.000000e+00 : f32
    %cst_166 = arith.constant 0.000000e+00 : f32
    %363 = vector.broadcast %cst_165 : f32 to vector<8x1024xf32>
    %364 = vector.broadcast %cst_166 : f32 to vector<8x1024xf32>
    %365 = arith.select %362, %363, %364 : vector<8x1024xi1>, vector<8x1024xf32>
    %366 = arith.subf %360, %365 : vector<8x1024xf32>
    %cst_167 = arith.constant -1.000000e+00 : f32
    %367 = vector.broadcast %cst_167 : f32 to vector<8x1024xf32>
    %368 = arith.subf %366, %367 : vector<8x1024xf32>
    %cst_168 = arith.constant 115.909088 : f32
    %369 = vector.broadcast %cst_168 : f32 to vector<8x1024xf32>
    %370 = arith.mulf %368, %369 : vector<8x1024xf32>
    %371 = math.roundeven %370 : vector<8x1024xf32>
    %cst_169 = arith.constant 0.000000e+00 : f32
    %cst_170 = arith.constant 2.550000e+02 : f32
    %372 = vector.broadcast %cst_169 : f32 to vector<8x1024xf32>
    %373 = arith.maximumf %372, %371 : vector<8x1024xf32>
    %374 = vector.broadcast %cst_170 : f32 to vector<8x1024xf32>
    %375 = arith.minimumf %374, %373 : vector<8x1024xf32>
    %cst_171 = arith.constant 0.00862745102 : f32
    %376 = vector.broadcast %cst_171 : f32 to vector<8x1024xf32>
    %377 = arith.mulf %375, %376 : vector<8x1024xf32>
    %cst_172 = arith.constant -1.000000e+00 : f32
    %378 = vector.broadcast %cst_172 : f32 to vector<8x1024xf32>
    %379 = arith.addf %378, %377 : vector<8x1024xf32>
    %cst_173 = arith.constant 1.000000e+00 : f32
    %380 = vector.broadcast %cst_173 : f32 to vector<8x1024xf32>
    %381 = arith.cmpf ogt, %379, %380 : vector<8x1024xf32>
    %382 = arith.extui %381 : vector<8x1024xi1> to vector<8x1024xi32>
    %383 = arith.sitofp %382 : vector<8x1024xi32> to vector<8x1024xf32>
    %c104 = arith.constant 104 : index
    %c0_174 = arith.constant 0 : index
    %384 = vector.load %arg7[%c104, %c0_174] : memref<200x1024xf32, #tpu.memory_space<vmem>>, vector<8x1024xf32>
    tpu.vector_store %arg7[%c104, %c0_174], %383 {strides = array<i32>} : memref<200x1024xf32, #tpu.memory_space<vmem>>, vector<8x1024xf32>,
    %cst_175 = arith.constant 0.949999988 : f32
    %385 = vector.broadcast %cst_175 : f32 to vector<8x1024xf32>
    %386 = arith.mulf %385, %379 : vector<8x1024xf32>
    %387 = arith.addf %386, %5 : vector<8x1024xf32>
    %cst_176 = arith.constant 1.000000e+00 : f32
    %388 = vector.broadcast %cst_176 : f32 to vector<8x1024xf32>
    %389 = arith.cmpf ogt, %379, %388 : vector<8x1024xf32>
    %cst_177 = arith.constant 1.000000e+00 : f32
    %cst_178 = arith.constant 0.000000e+00 : f32
    %390 = vector.broadcast %cst_177 : f32 to vector<8x1024xf32>
    %391 = vector.broadcast %cst_178 : f32 to vector<8x1024xf32>
    %392 = arith.select %389, %390, %391 : vector<8x1024xi1>, vector<8x1024xf32>
    %393 = arith.subf %387, %392 : vector<8x1024xf32>
    %cst_179 = arith.constant -1.000000e+00 : f32
    %394 = vector.broadcast %cst_179 : f32 to vector<8x1024xf32>
    %395 = arith.subf %393, %394 : vector<8x1024xf32>
    %cst_180 = arith.constant 115.909088 : f32
    %396 = vector.broadcast %cst_180 : f32 to vector<8x1024xf32>
    %397 = arith.mulf %395, %396 : vector<8x1024xf32>
    %398 = math.roundeven %397 : vector<8x1024xf32>
    %cst_181 = arith.constant 0.000000e+00 : f32
    %cst_182 = arith.constant 2.550000e+02 : f32
    %399 = vector.broadcast %cst_181 : f32 to vector<8x1024xf32>
    %400 = arith.maximumf %399, %398 : vector<8x1024xf32>
    %401 = vector.broadcast %cst_182 : f32 to vector<8x1024xf32>
    %402 = arith.minimumf %401, %400 : vector<8x1024xf32>
    %cst_183 = arith.constant 0.00862745102 : f32
    %403 = vector.broadcast %cst_183 : f32 to vector<8x1024xf32>
    %404 = arith.mulf %402, %403 : vector<8x1024xf32>
    %cst_184 = arith.constant -1.000000e+00 : f32
    %405 = vector.broadcast %cst_184 : f32 to vector<8x1024xf32>
    %406 = arith.addf %405, %404 : vector<8x1024xf32>
    %cst_185 = arith.constant 1.000000e+00 : f32
    %407 = vector.broadcast %cst_185 : f32 to vector<8x1024xf32>
    %408 = arith.cmpf ogt, %406, %407 : vector<8x1024xf32>
    %409 = arith.extui %408 : vector<8x1024xi1> to vector<8x1024xi32>
    %410 = arith.sitofp %409 : vector<8x1024xi32> to vector<8x1024xf32>
    %c112 = arith.constant 112 : index
    %c0_186 = arith.constant 0 : index
    %411 = vector.load %arg7[%c112, %c0_186] : memref<200x1024xf32, #tpu.memory_space<vmem>>, vector<8x1024xf32>
    tpu.vector_store %arg7[%c112, %c0_186], %410 {strides = array<i32>} : memref<200x1024xf32, #tpu.memory_space<vmem>>, vector<8x1024xf32>,
    %cst_187 = arith.constant 0.949999988 : f32
    %412 = vector.broadcast %cst_187 : f32 to vector<8x1024xf32>
    %413 = arith.mulf %412, %406 : vector<8x1024xf32>
    %414 = arith.addf %413, %5 : vector<8x1024xf32>
    %cst_188 = arith.constant 1.000000e+00 : f32
    %415 = vector.broadcast %cst_188 : f32 to vector<8x1024xf32>
    %416 = arith.cmpf ogt, %406, %415 : vector<8x1024xf32>
    %cst_189 = arith.constant 1.000000e+00 : f32
    %cst_190 = arith.constant 0.000000e+00 : f32
    %417 = vector.broadcast %cst_189 : f32 to vector<8x1024xf32>
    %418 = vector.broadcast %cst_190 : f32 to vector<8x1024xf32>
    %419 = arith.select %416, %417, %418 : vector<8x1024xi1>, vector<8x1024xf32>
    %420 = arith.subf %414, %419 : vector<8x1024xf32>
    %cst_191 = arith.constant -1.000000e+00 : f32
    %421 = vector.broadcast %cst_191 : f32 to vector<8x1024xf32>
    %422 = arith.subf %420, %421 : vector<8x1024xf32>
    %cst_192 = arith.constant 115.909088 : f32
    %423 = vector.broadcast %cst_192 : f32 to vector<8x1024xf32>
    %424 = arith.mulf %422, %423 : vector<8x1024xf32>
    %425 = math.roundeven %424 : vector<8x1024xf32>
    %cst_193 = arith.constant 0.000000e+00 : f32
    %cst_194 = arith.constant 2.550000e+02 : f32
    %426 = vector.broadcast %cst_193 : f32 to vector<8x1024xf32>
    %427 = arith.maximumf %426, %425 : vector<8x1024xf32>
    %428 = vector.broadcast %cst_194 : f32 to vector<8x1024xf32>
    %429 = arith.minimumf %428, %427 : vector<8x1024xf32>
    %cst_195 = arith.constant 0.00862745102 : f32
    %430 = vector.broadcast %cst_195 : f32 to vector<8x1024xf32>
    %431 = arith.mulf %429, %430 : vector<8x1024xf32>
    %cst_196 = arith.constant -1.000000e+00 : f32
    %432 = vector.broadcast %cst_196 : f32 to vector<8x1024xf32>
    %433 = arith.addf %432, %431 : vector<8x1024xf32>
    %cst_197 = arith.constant 1.000000e+00 : f32
    %434 = vector.broadcast %cst_197 : f32 to vector<8x1024xf32>
    %435 = arith.cmpf ogt, %433, %434 : vector<8x1024xf32>
    %436 = arith.extui %435 : vector<8x1024xi1> to vector<8x1024xi32>
    %437 = arith.sitofp %436 : vector<8x1024xi32> to vector<8x1024xf32>
    %c120 = arith.constant 120 : index
    %c0_198 = arith.constant 0 : index
    %438 = vector.load %arg7[%c120, %c0_198] : memref<200x1024xf32, #tpu.memory_space<vmem>>, vector<8x1024xf32>
    tpu.vector_store %arg7[%c120, %c0_198], %437 {strides = array<i32>} : memref<200x1024xf32, #tpu.memory_space<vmem>>, vector<8x1024xf32>,
    %cst_199 = arith.constant 0.949999988 : f32
    %439 = vector.broadcast %cst_199 : f32 to vector<8x1024xf32>
    %440 = arith.mulf %439, %433 : vector<8x1024xf32>
    %441 = arith.addf %440, %5 : vector<8x1024xf32>
    %cst_200 = arith.constant 1.000000e+00 : f32
    %442 = vector.broadcast %cst_200 : f32 to vector<8x1024xf32>
    %443 = arith.cmpf ogt, %433, %442 : vector<8x1024xf32>
    %cst_201 = arith.constant 1.000000e+00 : f32
    %cst_202 = arith.constant 0.000000e+00 : f32
    %444 = vector.broadcast %cst_201 : f32 to vector<8x1024xf32>
    %445 = vector.broadcast %cst_202 : f32 to vector<8x1024xf32>
    %446 = arith.select %443, %444, %445 : vector<8x1024xi1>, vector<8x1024xf32>
    %447 = arith.subf %441, %446 : vector<8x1024xf32>
    %cst_203 = arith.constant -1.000000e+00 : f32
    %448 = vector.broadcast %cst_203 : f32 to vector<8x1024xf32>
    %449 = arith.subf %447, %448 : vector<8x1024xf32>
    %cst_204 = arith.constant 115.909088 : f32
    %450 = vector.broadcast %cst_204 : f32 to vector<8x1024xf32>
    %451 = arith.mulf %449, %450 : vector<8x1024xf32>
    %452 = math.roundeven %451 : vector<8x1024xf32>
    %cst_205 = arith.constant 0.000000e+00 : f32
    %cst_206 = arith.constant 2.550000e+02 : f32
    %453 = vector.broadcast %cst_205 : f32 to vector<8x1024xf32>
    %454 = arith.maximumf %453, %452 : vector<8x1024xf32>
    %455 = vector.broadcast %cst_206 : f32 to vector<8x1024xf32>
    %456 = arith.minimumf %455, %454 : vector<8x1024xf32>
    %cst_207 = arith.constant 0.00862745102 : f32
    %457 = vector.broadcast %cst_207 : f32 to vector<8x1024xf32>
    %458 = arith.mulf %456, %457 : vector<8x1024xf32>
    %cst_208 = arith.constant -1.000000e+00 : f32
    %459 = vector.broadcast %cst_208 : f32 to vector<8x1024xf32>
    %460 = arith.addf %459, %458 : vector<8x1024xf32>
    %cst_209 = arith.constant 1.000000e+00 : f32
    %461 = vector.broadcast %cst_209 : f32 to vector<8x1024xf32>
    %462 = arith.cmpf ogt, %460, %461 : vector<8x1024xf32>
    %463 = arith.extui %462 : vector<8x1024xi1> to vector<8x1024xi32>
    %464 = arith.sitofp %463 : vector<8x1024xi32> to vector<8x1024xf32>
    %c128 = arith.constant 128 : index
    %c0_210 = arith.constant 0 : index
    %465 = vector.load %arg7[%c128, %c0_210] : memref<200x1024xf32, #tpu.memory_space<vmem>>, vector<8x1024xf32>
    tpu.vector_store %arg7[%c128, %c0_210], %464 {strides = array<i32>} : memref<200x1024xf32, #tpu.memory_space<vmem>>, vector<8x1024xf32>,
    %cst_211 = arith.constant 0.949999988 : f32
    %466 = vector.broadcast %cst_211 : f32 to vector<8x1024xf32>
    %467 = arith.mulf %466, %460 : vector<8x1024xf32>
    %468 = arith.addf %467, %5 : vector<8x1024xf32>
    %cst_212 = arith.constant 1.000000e+00 : f32
    %469 = vector.broadcast %cst_212 : f32 to vector<8x1024xf32>
    %470 = arith.cmpf ogt, %460, %469 : vector<8x1024xf32>
    %cst_213 = arith.constant 1.000000e+00 : f32
    %cst_214 = arith.constant 0.000000e+00 : f32
    %471 = vector.broadcast %cst_213 : f32 to vector<8x1024xf32>
    %472 = vector.broadcast %cst_214 : f32 to vector<8x1024xf32>
    %473 = arith.select %470, %471, %472 : vector<8x1024xi1>, vector<8x1024xf32>
    %474 = arith.subf %468, %473 : vector<8x1024xf32>
    %cst_215 = arith.constant -1.000000e+00 : f32
    %475 = vector.broadcast %cst_215 : f32 to vector<8x1024xf32>
    %476 = arith.subf %474, %475 : vector<8x1024xf32>
    %cst_216 = arith.constant 115.909088 : f32
    %477 = vector.broadcast %cst_216 : f32 to vector<8x1024xf32>
    %478 = arith.mulf %476, %477 : vector<8x1024xf32>
    %479 = math.roundeven %478 : vector<8x1024xf32>
    %cst_217 = arith.constant 0.000000e+00 : f32
    %cst_218 = arith.constant 2.550000e+02 : f32
    %480 = vector.broadcast %cst_217 : f32 to vector<8x1024xf32>
    %481 = arith.maximumf %480, %479 : vector<8x1024xf32>
    %482 = vector.broadcast %cst_218 : f32 to vector<8x1024xf32>
    %483 = arith.minimumf %482, %481 : vector<8x1024xf32>
    %cst_219 = arith.constant 0.00862745102 : f32
    %484 = vector.broadcast %cst_219 : f32 to vector<8x1024xf32>
    %485 = arith.mulf %483, %484 : vector<8x1024xf32>
    %cst_220 = arith.constant -1.000000e+00 : f32
    %486 = vector.broadcast %cst_220 : f32 to vector<8x1024xf32>
    %487 = arith.addf %486, %485 : vector<8x1024xf32>
    %cst_221 = arith.constant 1.000000e+00 : f32
    %488 = vector.broadcast %cst_221 : f32 to vector<8x1024xf32>
    %489 = arith.cmpf ogt, %487, %488 : vector<8x1024xf32>
    %490 = arith.extui %489 : vector<8x1024xi1> to vector<8x1024xi32>
    %491 = arith.sitofp %490 : vector<8x1024xi32> to vector<8x1024xf32>
    %c136 = arith.constant 136 : index
    %c0_222 = arith.constant 0 : index
    %492 = vector.load %arg7[%c136, %c0_222] : memref<200x1024xf32, #tpu.memory_space<vmem>>, vector<8x1024xf32>
    tpu.vector_store %arg7[%c136, %c0_222], %491 {strides = array<i32>} : memref<200x1024xf32, #tpu.memory_space<vmem>>, vector<8x1024xf32>,
    %cst_223 = arith.constant 0.949999988 : f32
    %493 = vector.broadcast %cst_223 : f32 to vector<8x1024xf32>
    %494 = arith.mulf %493, %487 : vector<8x1024xf32>
    %495 = arith.addf %494, %5 : vector<8x1024xf32>
    %cst_224 = arith.constant 1.000000e+00 : f32
    %496 = vector.broadcast %cst_224 : f32 to vector<8x1024xf32>
    %497 = arith.cmpf ogt, %487, %496 : vector<8x1024xf32>
    %cst_225 = arith.constant 1.000000e+00 : f32
    %cst_226 = arith.constant 0.000000e+00 : f32
    %498 = vector.broadcast %cst_225 : f32 to vector<8x1024xf32>
    %499 = vector.broadcast %cst_226 : f32 to vector<8x1024xf32>
    %500 = arith.select %497, %498, %499 : vector<8x1024xi1>, vector<8x1024xf32>
    %501 = arith.subf %495, %500 : vector<8x1024xf32>
    %cst_227 = arith.constant -1.000000e+00 : f32
    %502 = vector.broadcast %cst_227 : f32 to vector<8x1024xf32>
    %503 = arith.subf %501, %502 : vector<8x1024xf32>
    %cst_228 = arith.constant 115.909088 : f32
    %504 = vector.broadcast %cst_228 : f32 to vector<8x1024xf32>
    %505 = arith.mulf %503, %504 : vector<8x1024xf32>
    %506 = math.roundeven %505 : vector<8x1024xf32>
    %cst_229 = arith.constant 0.000000e+00 : f32
    %cst_230 = arith.constant 2.550000e+02 : f32
    %507 = vector.broadcast %cst_229 : f32 to vector<8x1024xf32>
    %508 = arith.maximumf %507, %506 : vector<8x1024xf32>
    %509 = vector.broadcast %cst_230 : f32 to vector<8x1024xf32>
    %510 = arith.minimumf %509, %508 : vector<8x1024xf32>
    %cst_231 = arith.constant 0.00862745102 : f32
    %511 = vector.broadcast %cst_231 : f32 to vector<8x1024xf32>
    %512 = arith.mulf %510, %511 : vector<8x1024xf32>
    %cst_232 = arith.constant -1.000000e+00 : f32
    %513 = vector.broadcast %cst_232 : f32 to vector<8x1024xf32>
    %514 = arith.addf %513, %512 : vector<8x1024xf32>
    %cst_233 = arith.constant 1.000000e+00 : f32
    %515 = vector.broadcast %cst_233 : f32 to vector<8x1024xf32>
    %516 = arith.cmpf ogt, %514, %515 : vector<8x1024xf32>
    %517 = arith.extui %516 : vector<8x1024xi1> to vector<8x1024xi32>
    %518 = arith.sitofp %517 : vector<8x1024xi32> to vector<8x1024xf32>
    %c144 = arith.constant 144 : index
    %c0_234 = arith.constant 0 : index
    %519 = vector.load %arg7[%c144, %c0_234] : memref<200x1024xf32, #tpu.memory_space<vmem>>, vector<8x1024xf32>
    tpu.vector_store %arg7[%c144, %c0_234], %518 {strides = array<i32>} : memref<200x1024xf32, #tpu.memory_space<vmem>>, vector<8x1024xf32>,
    %cst_235 = arith.constant 0.949999988 : f32
    %520 = vector.broadcast %cst_235 : f32 to vector<8x1024xf32>
    %521 = arith.mulf %520, %514 : vector<8x1024xf32>
    %522 = arith.addf %521, %5 : vector<8x1024xf32>
    %cst_236 = arith.constant 1.000000e+00 : f32
    %523 = vector.broadcast %cst_236 : f32 to vector<8x1024xf32>
    %524 = arith.cmpf ogt, %514, %523 : vector<8x1024xf32>
    %cst_237 = arith.constant 1.000000e+00 : f32
    %cst_238 = arith.constant 0.000000e+00 : f32
    %525 = vector.broadcast %cst_237 : f32 to vector<8x1024xf32>
    %526 = vector.broadcast %cst_238 : f32 to vector<8x1024xf32>
    %527 = arith.select %524, %525, %526 : vector<8x1024xi1>, vector<8x1024xf32>
    %528 = arith.subf %522, %527 : vector<8x1024xf32>
    %cst_239 = arith.constant -1.000000e+00 : f32
    %529 = vector.broadcast %cst_239 : f32 to vector<8x1024xf32>
    %530 = arith.subf %528, %529 : vector<8x1024xf32>
    %cst_240 = arith.constant 115.909088 : f32
    %531 = vector.broadcast %cst_240 : f32 to vector<8x1024xf32>
    %532 = arith.mulf %530, %531 : vector<8x1024xf32>
    %533 = math.roundeven %532 : vector<8x1024xf32>
    %cst_241 = arith.constant 0.000000e+00 : f32
    %cst_242 = arith.constant 2.550000e+02 : f32
    %534 = vector.broadcast %cst_241 : f32 to vector<8x1024xf32>
    %535 = arith.maximumf %534, %533 : vector<8x1024xf32>
    %536 = vector.broadcast %cst_242 : f32 to vector<8x1024xf32>
    %537 = arith.minimumf %536, %535 : vector<8x1024xf32>
    %cst_243 = arith.constant 0.00862745102 : f32
    %538 = vector.broadcast %cst_243 : f32 to vector<8x1024xf32>
    %539 = arith.mulf %537, %538 : vector<8x1024xf32>
    %cst_244 = arith.constant -1.000000e+00 : f32
    %540 = vector.broadcast %cst_244 : f32 to vector<8x1024xf32>
    %541 = arith.addf %540, %539 : vector<8x1024xf32>
    %cst_245 = arith.constant 1.000000e+00 : f32
    %542 = vector.broadcast %cst_245 : f32 to vector<8x1024xf32>
    %543 = arith.cmpf ogt, %541, %542 : vector<8x1024xf32>
    %544 = arith.extui %543 : vector<8x1024xi1> to vector<8x1024xi32>
    %545 = arith.sitofp %544 : vector<8x1024xi32> to vector<8x1024xf32>
    %c152 = arith.constant 152 : index
    %c0_246 = arith.constant 0 : index
    %546 = vector.load %arg7[%c152, %c0_246] : memref<200x1024xf32, #tpu.memory_space<vmem>>, vector<8x1024xf32>
    tpu.vector_store %arg7[%c152, %c0_246], %545 {strides = array<i32>} : memref<200x1024xf32, #tpu.memory_space<vmem>>, vector<8x1024xf32>,
    %cst_247 = arith.constant 0.949999988 : f32
    %547 = vector.broadcast %cst_247 : f32 to vector<8x1024xf32>
    %548 = arith.mulf %547, %541 : vector<8x1024xf32>
    %549 = arith.addf %548, %5 : vector<8x1024xf32>
    %cst_248 = arith.constant 1.000000e+00 : f32
    %550 = vector.broadcast %cst_248 : f32 to vector<8x1024xf32>
    %551 = arith.cmpf ogt, %541, %550 : vector<8x1024xf32>
    %cst_249 = arith.constant 1.000000e+00 : f32
    %cst_250 = arith.constant 0.000000e+00 : f32
    %552 = vector.broadcast %cst_249 : f32 to vector<8x1024xf32>
    %553 = vector.broadcast %cst_250 : f32 to vector<8x1024xf32>
    %554 = arith.select %551, %552, %553 : vector<8x1024xi1>, vector<8x1024xf32>
    %555 = arith.subf %549, %554 : vector<8x1024xf32>
    %cst_251 = arith.constant -1.000000e+00 : f32
    %556 = vector.broadcast %cst_251 : f32 to vector<8x1024xf32>
    %557 = arith.subf %555, %556 : vector<8x1024xf32>
    %cst_252 = arith.constant 115.909088 : f32
    %558 = vector.broadcast %cst_252 : f32 to vector<8x1024xf32>
    %559 = arith.mulf %557, %558 : vector<8x1024xf32>
    %560 = math.roundeven %559 : vector<8x1024xf32>
    %cst_253 = arith.constant 0.000000e+00 : f32
    %cst_254 = arith.constant 2.550000e+02 : f32
    %561 = vector.broadcast %cst_253 : f32 to vector<8x1024xf32>
    %562 = arith.maximumf %561, %560 : vector<8x1024xf32>
    %563 = vector.broadcast %cst_254 : f32 to vector<8x1024xf32>
    %564 = arith.minimumf %563, %562 : vector<8x1024xf32>
    %cst_255 = arith.constant 0.00862745102 : f32
    %565 = vector.broadcast %cst_255 : f32 to vector<8x1024xf32>
    %566 = arith.mulf %564, %565 : vector<8x1024xf32>
    %cst_256 = arith.constant -1.000000e+00 : f32
    %567 = vector.broadcast %cst_256 : f32 to vector<8x1024xf32>
    %568 = arith.addf %567, %566 : vector<8x1024xf32>
    %cst_257 = arith.constant 1.000000e+00 : f32
    %569 = vector.broadcast %cst_257 : f32 to vector<8x1024xf32>
    %570 = arith.cmpf ogt, %568, %569 : vector<8x1024xf32>
    %571 = arith.extui %570 : vector<8x1024xi1> to vector<8x1024xi32>
    %572 = arith.sitofp %571 : vector<8x1024xi32> to vector<8x1024xf32>
    %c160 = arith.constant 160 : index
    %c0_258 = arith.constant 0 : index
    %573 = vector.load %arg7[%c160, %c0_258] : memref<200x1024xf32, #tpu.memory_space<vmem>>, vector<8x1024xf32>
    tpu.vector_store %arg7[%c160, %c0_258], %572 {strides = array<i32>} : memref<200x1024xf32, #tpu.memory_space<vmem>>, vector<8x1024xf32>,
    %cst_259 = arith.constant 0.949999988 : f32
    %574 = vector.broadcast %cst_259 : f32 to vector<8x1024xf32>
    %575 = arith.mulf %574, %568 : vector<8x1024xf32>
    %576 = arith.addf %575, %5 : vector<8x1024xf32>
    %cst_260 = arith.constant 1.000000e+00 : f32
    %577 = vector.broadcast %cst_260 : f32 to vector<8x1024xf32>
    %578 = arith.cmpf ogt, %568, %577 : vector<8x1024xf32>
    %cst_261 = arith.constant 1.000000e+00 : f32
    %cst_262 = arith.constant 0.000000e+00 : f32
    %579 = vector.broadcast %cst_261 : f32 to vector<8x1024xf32>
    %580 = vector.broadcast %cst_262 : f32 to vector<8x1024xf32>
    %581 = arith.select %578, %579, %580 : vector<8x1024xi1>, vector<8x1024xf32>
    %582 = arith.subf %576, %581 : vector<8x1024xf32>
    %cst_263 = arith.constant -1.000000e+00 : f32
    %583 = vector.broadcast %cst_263 : f32 to vector<8x1024xf32>
    %584 = arith.subf %582, %583 : vector<8x1024xf32>
    %cst_264 = arith.constant 115.909088 : f32
    %585 = vector.broadcast %cst_264 : f32 to vector<8x1024xf32>
    %586 = arith.mulf %584, %585 : vector<8x1024xf32>
    %587 = math.roundeven %586 : vector<8x1024xf32>
    %cst_265 = arith.constant 0.000000e+00 : f32
    %cst_266 = arith.constant 2.550000e+02 : f32
    %588 = vector.broadcast %cst_265 : f32 to vector<8x1024xf32>
    %589 = arith.maximumf %588, %587 : vector<8x1024xf32>
    %590 = vector.broadcast %cst_266 : f32 to vector<8x1024xf32>
    %591 = arith.minimumf %590, %589 : vector<8x1024xf32>
    %cst_267 = arith.constant 0.00862745102 : f32
    %592 = vector.broadcast %cst_267 : f32 to vector<8x1024xf32>
    %593 = arith.mulf %591, %592 : vector<8x1024xf32>
    %cst_268 = arith.constant -1.000000e+00 : f32
    %594 = vector.broadcast %cst_268 : f32 to vector<8x1024xf32>
    %595 = arith.addf %594, %593 : vector<8x1024xf32>
    %cst_269 = arith.constant 1.000000e+00 : f32
    %596 = vector.broadcast %cst_269 : f32 to vector<8x1024xf32>
    %597 = arith.cmpf ogt, %595, %596 : vector<8x1024xf32>
    %598 = arith.extui %597 : vector<8x1024xi1> to vector<8x1024xi32>
    %599 = arith.sitofp %598 : vector<8x1024xi32> to vector<8x1024xf32>
    %c168 = arith.constant 168 : index
    %c0_270 = arith.constant 0 : index
    %600 = vector.load %arg7[%c168, %c0_270] : memref<200x1024xf32, #tpu.memory_space<vmem>>, vector<8x1024xf32>
    tpu.vector_store %arg7[%c168, %c0_270], %599 {strides = array<i32>} : memref<200x1024xf32, #tpu.memory_space<vmem>>, vector<8x1024xf32>,
    %cst_271 = arith.constant 0.949999988 : f32
    %601 = vector.broadcast %cst_271 : f32 to vector<8x1024xf32>
    %602 = arith.mulf %601, %595 : vector<8x1024xf32>
    %603 = arith.addf %602, %5 : vector<8x1024xf32>
    %cst_272 = arith.constant 1.000000e+00 : f32
    %604 = vector.broadcast %cst_272 : f32 to vector<8x1024xf32>
    %605 = arith.cmpf ogt, %595, %604 : vector<8x1024xf32>
    %cst_273 = arith.constant 1.000000e+00 : f32
    %cst_274 = arith.constant 0.000000e+00 : f32
    %606 = vector.broadcast %cst_273 : f32 to vector<8x1024xf32>
    %607 = vector.broadcast %cst_274 : f32 to vector<8x1024xf32>
    %608 = arith.select %605, %606, %607 : vector<8x1024xi1>, vector<8x1024xf32>
    %609 = arith.subf %603, %608 : vector<8x1024xf32>
    %cst_275 = arith.constant -1.000000e+00 : f32
    %610 = vector.broadcast %cst_275 : f32 to vector<8x1024xf32>
    %611 = arith.subf %609, %610 : vector<8x1024xf32>
    %cst_276 = arith.constant 115.909088 : f32
    %612 = vector.broadcast %cst_276 : f32 to vector<8x1024xf32>
    %613 = arith.mulf %611, %612 : vector<8x1024xf32>
    %614 = math.roundeven %613 : vector<8x1024xf32>
    %cst_277 = arith.constant 0.000000e+00 : f32
    %cst_278 = arith.constant 2.550000e+02 : f32
    %615 = vector.broadcast %cst_277 : f32 to vector<8x1024xf32>
    %616 = arith.maximumf %615, %614 : vector<8x1024xf32>
    %617 = vector.broadcast %cst_278 : f32 to vector<8x1024xf32>
    %618 = arith.minimumf %617, %616 : vector<8x1024xf32>
    %cst_279 = arith.constant 0.00862745102 : f32
    %619 = vector.broadcast %cst_279 : f32 to vector<8x1024xf32>
    %620 = arith.mulf %618, %619 : vector<8x1024xf32>
    %cst_280 = arith.constant -1.000000e+00 : f32
    %621 = vector.broadcast %cst_280 : f32 to vector<8x1024xf32>
    %622 = arith.addf %621, %620 : vector<8x1024xf32>
    %cst_281 = arith.constant 1.000000e+00 : f32
    %623 = vector.broadcast %cst_281 : f32 to vector<8x1024xf32>
    %624 = arith.cmpf ogt, %622, %623 : vector<8x1024xf32>
    %625 = arith.extui %624 : vector<8x1024xi1> to vector<8x1024xi32>
    %626 = arith.sitofp %625 : vector<8x1024xi32> to vector<8x1024xf32>
    %c176 = arith.constant 176 : index
    %c0_282 = arith.constant 0 : index
    %627 = vector.load %arg7[%c176, %c0_282] : memref<200x1024xf32, #tpu.memory_space<vmem>>, vector<8x1024xf32>
    tpu.vector_store %arg7[%c176, %c0_282], %626 {strides = array<i32>} : memref<200x1024xf32, #tpu.memory_space<vmem>>, vector<8x1024xf32>,
    %cst_283 = arith.constant 0.949999988 : f32
    %628 = vector.broadcast %cst_283 : f32 to vector<8x1024xf32>
    %629 = arith.mulf %628, %622 : vector<8x1024xf32>
    %630 = arith.addf %629, %5 : vector<8x1024xf32>
    %cst_284 = arith.constant 1.000000e+00 : f32
    %631 = vector.broadcast %cst_284 : f32 to vector<8x1024xf32>
    %632 = arith.cmpf ogt, %622, %631 : vector<8x1024xf32>
    %cst_285 = arith.constant 1.000000e+00 : f32
    %cst_286 = arith.constant 0.000000e+00 : f32
    %633 = vector.broadcast %cst_285 : f32 to vector<8x1024xf32>
    %634 = vector.broadcast %cst_286 : f32 to vector<8x1024xf32>
    %635 = arith.select %632, %633, %634 : vector<8x1024xi1>, vector<8x1024xf32>
    %636 = arith.subf %630, %635 : vector<8x1024xf32>
    %cst_287 = arith.constant -1.000000e+00 : f32
    %637 = vector.broadcast %cst_287 : f32 to vector<8x1024xf32>
    %638 = arith.subf %636, %637 : vector<8x1024xf32>
    %cst_288 = arith.constant 115.909088 : f32
    %639 = vector.broadcast %cst_288 : f32 to vector<8x1024xf32>
    %640 = arith.mulf %638, %639 : vector<8x1024xf32>
    %641 = math.roundeven %640 : vector<8x1024xf32>
    %cst_289 = arith.constant 0.000000e+00 : f32
    %cst_290 = arith.constant 2.550000e+02 : f32
    %642 = vector.broadcast %cst_289 : f32 to vector<8x1024xf32>
    %643 = arith.maximumf %642, %641 : vector<8x1024xf32>
    %644 = vector.broadcast %cst_290 : f32 to vector<8x1024xf32>
    %645 = arith.minimumf %644, %643 : vector<8x1024xf32>
    %cst_291 = arith.constant 0.00862745102 : f32
    %646 = vector.broadcast %cst_291 : f32 to vector<8x1024xf32>
    %647 = arith.mulf %645, %646 : vector<8x1024xf32>
    %cst_292 = arith.constant -1.000000e+00 : f32
    %648 = vector.broadcast %cst_292 : f32 to vector<8x1024xf32>
    %649 = arith.addf %648, %647 : vector<8x1024xf32>
    %cst_293 = arith.constant 1.000000e+00 : f32
    %650 = vector.broadcast %cst_293 : f32 to vector<8x1024xf32>
    %651 = arith.cmpf ogt, %649, %650 : vector<8x1024xf32>
    %652 = arith.extui %651 : vector<8x1024xi1> to vector<8x1024xi32>
    %653 = arith.sitofp %652 : vector<8x1024xi32> to vector<8x1024xf32>
    %c184 = arith.constant 184 : index
    %c0_294 = arith.constant 0 : index
    %654 = vector.load %arg7[%c184, %c0_294] : memref<200x1024xf32, #tpu.memory_space<vmem>>, vector<8x1024xf32>
    tpu.vector_store %arg7[%c184, %c0_294], %653 {strides = array<i32>} : memref<200x1024xf32, #tpu.memory_space<vmem>>, vector<8x1024xf32>,
    %cst_295 = arith.constant 0.949999988 : f32
    %655 = vector.broadcast %cst_295 : f32 to vector<8x1024xf32>
    %656 = arith.mulf %655, %649 : vector<8x1024xf32>
    %657 = arith.addf %656, %5 : vector<8x1024xf32>
    %cst_296 = arith.constant 1.000000e+00 : f32
    %658 = vector.broadcast %cst_296 : f32 to vector<8x1024xf32>
    %659 = arith.cmpf ogt, %649, %658 : vector<8x1024xf32>
    %cst_297 = arith.constant 1.000000e+00 : f32
    %cst_298 = arith.constant 0.000000e+00 : f32
    %660 = vector.broadcast %cst_297 : f32 to vector<8x1024xf32>
    %661 = vector.broadcast %cst_298 : f32 to vector<8x1024xf32>
    %662 = arith.select %659, %660, %661 : vector<8x1024xi1>, vector<8x1024xf32>
    %663 = arith.subf %657, %662 : vector<8x1024xf32>
    %cst_299 = arith.constant -1.000000e+00 : f32
    %664 = vector.broadcast %cst_299 : f32 to vector<8x1024xf32>
    %665 = arith.subf %663, %664 : vector<8x1024xf32>
    %cst_300 = arith.constant 115.909088 : f32
    %666 = vector.broadcast %cst_300 : f32 to vector<8x1024xf32>
    %667 = arith.mulf %665, %666 : vector<8x1024xf32>
    %668 = math.roundeven %667 : vector<8x1024xf32>
    %cst_301 = arith.constant 0.000000e+00 : f32
    %cst_302 = arith.constant 2.550000e+02 : f32
    %669 = vector.broadcast %cst_301 : f32 to vector<8x1024xf32>
    %670 = arith.maximumf %669, %668 : vector<8x1024xf32>
    %671 = vector.broadcast %cst_302 : f32 to vector<8x1024xf32>
    %672 = arith.minimumf %671, %670 : vector<8x1024xf32>
    %cst_303 = arith.constant 0.00862745102 : f32
    %673 = vector.broadcast %cst_303 : f32 to vector<8x1024xf32>
    %674 = arith.mulf %672, %673 : vector<8x1024xf32>
    %cst_304 = arith.constant -1.000000e+00 : f32
    %675 = vector.broadcast %cst_304 : f32 to vector<8x1024xf32>
    %676 = arith.addf %675, %674 : vector<8x1024xf32>
    %cst_305 = arith.constant 1.000000e+00 : f32
    %677 = vector.broadcast %cst_305 : f32 to vector<8x1024xf32>
    %678 = arith.cmpf ogt, %676, %677 : vector<8x1024xf32>
    %679 = arith.extui %678 : vector<8x1024xi1> to vector<8x1024xi32>
    %680 = arith.sitofp %679 : vector<8x1024xi32> to vector<8x1024xf32>
    %c192 = arith.constant 192 : index
    %c0_306 = arith.constant 0 : index
    %681 = vector.load %arg7[%c192, %c0_306] : memref<200x1024xf32, #tpu.memory_space<vmem>>, vector<8x1024xf32>
    tpu.vector_store %arg7[%c192, %c0_306], %680 {strides = array<i32>} : memref<200x1024xf32, #tpu.memory_space<vmem>>, vector<8x1024xf32>,
    %c0_307 = arith.constant 0 : index
    %c0_308 = arith.constant 0 : index
    %682 = vector.load %arg7[%c0_307, %c0_308] : memref<200x1024xf32, #tpu.memory_space<vmem>>, vector<200x1024xf32>
    %683 = arith.truncf %682 : vector<200x1024xf32> to vector<200x1024xbf16>
    %c0_309 = arith.constant 0 : index
    %c0_310 = arith.constant 0 : index
    %684 = vector.load %arg3[%c0_309, %c0_310] : memref<1024x128xbf16, #tpu.memory_space<vmem>>, vector<1024x128xbf16>
    %cst_311 = arith.constant dense<0.000000e+00> : vector<200x128xf32>
    %685 = tpu.matmul %683, %684, %cst_311 {dimension_numbers = #tpu.dot_dimension_numbers<[1], [0], [0], [1], [0, 0, 1, 1], [], []>} : vector<200x1024xbf16>, vector<1024x128xbf16>, vector<200x128xf32> -> vector<200x128xf32>
    %c0_312 = arith.constant 0 : index
    %c0_313 = arith.constant 0 : index
    %686 = vector.load %arg4[%c0_312, %c0_313] : memref<1x128xf32, #tpu.memory_space<vmem>>, vector<1x128xf32>
    %687 = vector.broadcast %686 : vector<1x128xf32> to vector<200x128xf32>
    %688 = arith.addf %685, %687 : vector<200x128xf32>
    %c0_314 = arith.constant 0 : index
    %c0_315 = arith.constant 0 : index
    %689 = vector.load %arg8[%c0_314, %c0_315] : memref<200x128xf32, #tpu.memory_space<vmem>>, vector<200x128xf32>
    tpu.vector_store %arg8[%c0_314, %c0_315], %688 {strides = array<i32>} : memref<200x128xf32, #tpu.memory_space<vmem>>, vector<200x128xf32>,
    %cst_316 = arith.constant 0.000000e+00 : f32
    %690 = vector.broadcast %cst_316 : f32 to vector<8x128xf32>
    %c0_317 = arith.constant 0 : index
    %c0_318 = arith.constant 0 : index
    %691 = vector.load %arg8[%c0_317, %c0_318] : memref<200x128xf32, #tpu.memory_space<vmem>>, vector<8x128xf32>
    %cst_319 = arith.constant 0.949999988 : f32
    %692 = vector.broadcast %cst_319 : f32 to vector<8x128xf32>
    %693 = arith.mulf %692, %690 : vector<8x128xf32>
    %694 = arith.addf %693, %691 : vector<8x128xf32>
    %cst_320 = arith.constant 1.000000e+00 : f32
    %695 = vector.broadcast %cst_320 : f32 to vector<8x128xf32>
    %696 = arith.cmpf ogt, %690, %695 : vector<8x128xf32>
    %cst_321 = arith.constant 1.000000e+00 : f32
    %cst_322 = arith.constant 0.000000e+00 : f32
    %697 = vector.broadcast %cst_321 : f32 to vector<8x128xf32>
    %698 = vector.broadcast %cst_322 : f32 to vector<8x128xf32>
    %699 = arith.select %696, %697, %698 : vector<8x128xi1>, vector<8x128xf32>
    %700 = arith.subf %694, %699 : vector<8x128xf32>
    %cst_323 = arith.constant -1.000000e+00 : f32
    %701 = vector.broadcast %cst_323 : f32 to vector<8x128xf32>
    %702 = arith.subf %700, %701 : vector<8x128xf32>
    %cst_324 = arith.constant 115.909088 : f32
    %703 = vector.broadcast %cst_324 : f32 to vector<8x128xf32>
    %704 = arith.mulf %702, %703 : vector<8x128xf32>
    %705 = math.roundeven %704 : vector<8x128xf32>
    %cst_325 = arith.constant 0.000000e+00 : f32
    %cst_326 = arith.constant 2.550000e+02 : f32
    %706 = vector.broadcast %cst_325 : f32 to vector<8x128xf32>
    %707 = arith.maximumf %706, %705 : vector<8x128xf32>
    %708 = vector.broadcast %cst_326 : f32 to vector<8x128xf32>
    %709 = arith.minimumf %708, %707 : vector<8x128xf32>
    %cst_327 = arith.constant 0.00862745102 : f32
    %710 = vector.broadcast %cst_327 : f32 to vector<8x128xf32>
    %711 = arith.mulf %709, %710 : vector<8x128xf32>
    %cst_328 = arith.constant -1.000000e+00 : f32
    %712 = vector.broadcast %cst_328 : f32 to vector<8x128xf32>
    %713 = arith.addf %712, %711 : vector<8x128xf32>
    %cst_329 = arith.constant 1.000000e+00 : f32
    %714 = vector.broadcast %cst_329 : f32 to vector<8x128xf32>
    %715 = arith.cmpf ogt, %713, %714 : vector<8x128xf32>
    %716 = arith.extui %715 : vector<8x128xi1> to vector<8x128xi32>
    %717 = arith.sitofp %716 : vector<8x128xi32> to vector<8x128xf32>
    %c0_330 = arith.constant 0 : index
    %c0_331 = arith.constant 0 : index
    %c0_332 = arith.constant 0 : index
    %718 = vector.load %arg5[%c0_330, %c0_331, %c0_332] : memref<25x8x128xf32, #tpu.memory_space<vmem>>, vector<1x8x128xf32>
    %719 = vector.shape_cast %718 : vector<1x8x128xf32> to vector<8x128xf32>
    %720 = vector.shape_cast %717 : vector<8x128xf32> to vector<1x8x128xf32>
    tpu.vector_store %arg5[%c0_330, %c0_331, %c0_332], %720 {strides = array<i32>} : memref<25x8x128xf32, #tpu.memory_space<vmem>>, vector<1x8x128xf32>,
    %c0_333 = arith.constant 0 : index
    %c0_334 = arith.constant 0 : index
    %c0_335 = arith.constant 0 : index
    %721 = vector.load %arg6[%c0_333, %c0_334, %c0_335] : memref<25x8x128xf32, #tpu.memory_space<vmem>>, vector<1x8x128xf32>
    %722 = vector.shape_cast %721 : vector<1x8x128xf32> to vector<8x128xf32>
    %723 = vector.shape_cast %713 : vector<8x128xf32> to vector<1x8x128xf32>
    tpu.vector_store %arg6[%c0_333, %c0_334, %c0_335], %723 {strides = array<i32>} : memref<25x8x128xf32, #tpu.memory_space<vmem>>, vector<1x8x128xf32>,
    %c8_336 = arith.constant 8 : index
    %c0_337 = arith.constant 0 : index
    %724 = vector.load %arg8[%c8_336, %c0_337] : memref<200x128xf32, #tpu.memory_space<vmem>>, vector<8x128xf32>
    %cst_338 = arith.constant 0.949999988 : f32
    %725 = vector.broadcast %cst_338 : f32 to vector<8x128xf32>
    %726 = arith.mulf %725, %713 : vector<8x128xf32>
    %727 = arith.addf %726, %724 : vector<8x128xf32>
    %cst_339 = arith.constant 1.000000e+00 : f32
    %728 = vector.broadcast %cst_339 : f32 to vector<8x128xf32>
    %729 = arith.cmpf ogt, %713, %728 : vector<8x128xf32>
    %cst_340 = arith.constant 1.000000e+00 : f32
    %cst_341 = arith.constant 0.000000e+00 : f32
    %730 = vector.broadcast %cst_340 : f32 to vector<8x128xf32>
    %731 = vector.broadcast %cst_341 : f32 to vector<8x128xf32>
    %732 = arith.select %729, %730, %731 : vector<8x128xi1>, vector<8x128xf32>
    %733 = arith.subf %727, %732 : vector<8x128xf32>
    %cst_342 = arith.constant -1.000000e+00 : f32
    %734 = vector.broadcast %cst_342 : f32 to vector<8x128xf32>
    %735 = arith.subf %733, %734 : vector<8x128xf32>
    %cst_343 = arith.constant 115.909088 : f32
    %736 = vector.broadcast %cst_343 : f32 to vector<8x128xf32>
    %737 = arith.mulf %735, %736 : vector<8x128xf32>
    %738 = math.roundeven %737 : vector<8x128xf32>
    %cst_344 = arith.constant 0.000000e+00 : f32
    %cst_345 = arith.constant 2.550000e+02 : f32
    %739 = vector.broadcast %cst_344 : f32 to vector<8x128xf32>
    %740 = arith.maximumf %739, %738 : vector<8x128xf32>
    %741 = vector.broadcast %cst_345 : f32 to vector<8x128xf32>
    %742 = arith.minimumf %741, %740 : vector<8x128xf32>
    %cst_346 = arith.constant 0.00862745102 : f32
    %743 = vector.broadcast %cst_346 : f32 to vector<8x128xf32>
    %744 = arith.mulf %742, %743 : vector<8x128xf32>
    %cst_347 = arith.constant -1.000000e+00 : f32
    %745 = vector.broadcast %cst_347 : f32 to vector<8x128xf32>
    %746 = arith.addf %745, %744 : vector<8x128xf32>
    %cst_348 = arith.constant 1.000000e+00 : f32
    %747 = vector.broadcast %cst_348 : f32 to vector<8x128xf32>
    %748 = arith.cmpf ogt, %746, %747 : vector<8x128xf32>
    %749 = arith.extui %748 : vector<8x128xi1> to vector<8x128xi32>
    %750 = arith.sitofp %749 : vector<8x128xi32> to vector<8x128xf32>
    %c1 = arith.constant 1 : index
    %c0_349 = arith.constant 0 : index
    %c0_350 = arith.constant 0 : index
    %751 = vector.load %arg5[%c1, %c0_349, %c0_350] : memref<25x8x128xf32, #tpu.memory_space<vmem>>, vector<1x8x128xf32>
    %752 = vector.shape_cast %751 : vector<1x8x128xf32> to vector<8x128xf32>
    %753 = vector.shape_cast %750 : vector<8x128xf32> to vector<1x8x128xf32>
    tpu.vector_store %arg5[%c1, %c0_349, %c0_350], %753 {strides = array<i32>} : memref<25x8x128xf32, #tpu.memory_space<vmem>>, vector<1x8x128xf32>,
    %c1_351 = arith.constant 1 : index
    %c0_352 = arith.constant 0 : index
    %c0_353 = arith.constant 0 : index
    %754 = vector.load %arg6[%c1_351, %c0_352, %c0_353] : memref<25x8x128xf32, #tpu.memory_space<vmem>>, vector<1x8x128xf32>
    %755 = vector.shape_cast %754 : vector<1x8x128xf32> to vector<8x128xf32>
    %756 = vector.shape_cast %746 : vector<8x128xf32> to vector<1x8x128xf32>
    tpu.vector_store %arg6[%c1_351, %c0_352, %c0_353], %756 {strides = array<i32>} : memref<25x8x128xf32, #tpu.memory_space<vmem>>, vector<1x8x128xf32>,
    %c16_354 = arith.constant 16 : index
    %c0_355 = arith.constant 0 : index
    %757 = vector.load %arg8[%c16_354, %c0_355] : memref<200x128xf32, #tpu.memory_space<vmem>>, vector<8x128xf32>
    %cst_356 = arith.constant 0.949999988 : f32
    %758 = vector.broadcast %cst_356 : f32 to vector<8x128xf32>
    %759 = arith.mulf %758, %746 : vector<8x128xf32>
    %760 = arith.addf %759, %757 : vector<8x128xf32>
    %cst_357 = arith.constant 1.000000e+00 : f32
    %761 = vector.broadcast %cst_357 : f32 to vector<8x128xf32>
    %762 = arith.cmpf ogt, %746, %761 : vector<8x128xf32>
    %cst_358 = arith.constant 1.000000e+00 : f32
    %cst_359 = arith.constant 0.000000e+00 : f32
    %763 = vector.broadcast %cst_358 : f32 to vector<8x128xf32>
    %764 = vector.broadcast %cst_359 : f32 to vector<8x128xf32>
    %765 = arith.select %762, %763, %764 : vector<8x128xi1>, vector<8x128xf32>
    %766 = arith.subf %760, %765 : vector<8x128xf32>
    %cst_360 = arith.constant -1.000000e+00 : f32
    %767 = vector.broadcast %cst_360 : f32 to vector<8x128xf32>
    %768 = arith.subf %766, %767 : vector<8x128xf32>
    %cst_361 = arith.constant 115.909088 : f32
    %769 = vector.broadcast %cst_361 : f32 to vector<8x128xf32>
    %770 = arith.mulf %768, %769 : vector<8x128xf32>
    %771 = math.roundeven %770 : vector<8x128xf32>
    %cst_362 = arith.constant 0.000000e+00 : f32
    %cst_363 = arith.constant 2.550000e+02 : f32
    %772 = vector.broadcast %cst_362 : f32 to vector<8x128xf32>
    %773 = arith.maximumf %772, %771 : vector<8x128xf32>
    %774 = vector.broadcast %cst_363 : f32 to vector<8x128xf32>
    %775 = arith.minimumf %774, %773 : vector<8x128xf32>
    %cst_364 = arith.constant 0.00862745102 : f32
    %776 = vector.broadcast %cst_364 : f32 to vector<8x128xf32>
    %777 = arith.mulf %775, %776 : vector<8x128xf32>
    %cst_365 = arith.constant -1.000000e+00 : f32
    %778 = vector.broadcast %cst_365 : f32 to vector<8x128xf32>
    %779 = arith.addf %778, %777 : vector<8x128xf32>
    %cst_366 = arith.constant 1.000000e+00 : f32
    %780 = vector.broadcast %cst_366 : f32 to vector<8x128xf32>
    %781 = arith.cmpf ogt, %779, %780 : vector<8x128xf32>
    %782 = arith.extui %781 : vector<8x128xi1> to vector<8x128xi32>
    %783 = arith.sitofp %782 : vector<8x128xi32> to vector<8x128xf32>
    %c2 = arith.constant 2 : index
    %c0_367 = arith.constant 0 : index
    %c0_368 = arith.constant 0 : index
    %784 = vector.load %arg5[%c2, %c0_367, %c0_368] : memref<25x8x128xf32, #tpu.memory_space<vmem>>, vector<1x8x128xf32>
    %785 = vector.shape_cast %784 : vector<1x8x128xf32> to vector<8x128xf32>
    %786 = vector.shape_cast %783 : vector<8x128xf32> to vector<1x8x128xf32>
    tpu.vector_store %arg5[%c2, %c0_367, %c0_368], %786 {strides = array<i32>} : memref<25x8x128xf32, #tpu.memory_space<vmem>>, vector<1x8x128xf32>,
    %c2_369 = arith.constant 2 : index
    %c0_370 = arith.constant 0 : index
    %c0_371 = arith.constant 0 : index
    %787 = vector.load %arg6[%c2_369, %c0_370, %c0_371] : memref<25x8x128xf32, #tpu.memory_space<vmem>>, vector<1x8x128xf32>
    %788 = vector.shape_cast %787 : vector<1x8x128xf32> to vector<8x128xf32>
    %789 = vector.shape_cast %779 : vector<8x128xf32> to vector<1x8x128xf32>
    tpu.vector_store %arg6[%c2_369, %c0_370, %c0_371], %789 {strides = array<i32>} : memref<25x8x128xf32, #tpu.memory_space<vmem>>, vector<1x8x128xf32>,
    %c24_372 = arith.constant 24 : index
    %c0_373 = arith.constant 0 : index
    %790 = vector.load %arg8[%c24_372, %c0_373] : memref<200x128xf32, #tpu.memory_space<vmem>>, vector<8x128xf32>
    %cst_374 = arith.constant 0.949999988 : f32
    %791 = vector.broadcast %cst_374 : f32 to vector<8x128xf32>
    %792 = arith.mulf %791, %779 : vector<8x128xf32>
    %793 = arith.addf %792, %790 : vector<8x128xf32>
    %cst_375 = arith.constant 1.000000e+00 : f32
    %794 = vector.broadcast %cst_375 : f32 to vector<8x128xf32>
    %795 = arith.cmpf ogt, %779, %794 : vector<8x128xf32>
    %cst_376 = arith.constant 1.000000e+00 : f32
    %cst_377 = arith.constant 0.000000e+00 : f32
    %796 = vector.broadcast %cst_376 : f32 to vector<8x128xf32>
    %797 = vector.broadcast %cst_377 : f32 to vector<8x128xf32>
    %798 = arith.select %795, %796, %797 : vector<8x128xi1>, vector<8x128xf32>
    %799 = arith.subf %793, %798 : vector<8x128xf32>
    %cst_378 = arith.constant -1.000000e+00 : f32
    %800 = vector.broadcast %cst_378 : f32 to vector<8x128xf32>
    %801 = arith.subf %799, %800 : vector<8x128xf32>
    %cst_379 = arith.constant 115.909088 : f32
    %802 = vector.broadcast %cst_379 : f32 to vector<8x128xf32>
    %803 = arith.mulf %801, %802 : vector<8x128xf32>
    %804 = math.roundeven %803 : vector<8x128xf32>
    %cst_380 = arith.constant 0.000000e+00 : f32
    %cst_381 = arith.constant 2.550000e+02 : f32
    %805 = vector.broadcast %cst_380 : f32 to vector<8x128xf32>
    %806 = arith.maximumf %805, %804 : vector<8x128xf32>
    %807 = vector.broadcast %cst_381 : f32 to vector<8x128xf32>
    %808 = arith.minimumf %807, %806 : vector<8x128xf32>
    %cst_382 = arith.constant 0.00862745102 : f32
    %809 = vector.broadcast %cst_382 : f32 to vector<8x128xf32>
    %810 = arith.mulf %808, %809 : vector<8x128xf32>
    %cst_383 = arith.constant -1.000000e+00 : f32
    %811 = vector.broadcast %cst_383 : f32 to vector<8x128xf32>
    %812 = arith.addf %811, %810 : vector<8x128xf32>
    %cst_384 = arith.constant 1.000000e+00 : f32
    %813 = vector.broadcast %cst_384 : f32 to vector<8x128xf32>
    %814 = arith.cmpf ogt, %812, %813 : vector<8x128xf32>
    %815 = arith.extui %814 : vector<8x128xi1> to vector<8x128xi32>
    %816 = arith.sitofp %815 : vector<8x128xi32> to vector<8x128xf32>
    %c3 = arith.constant 3 : index
    %c0_385 = arith.constant 0 : index
    %c0_386 = arith.constant 0 : index
    %817 = vector.load %arg5[%c3, %c0_385, %c0_386] : memref<25x8x128xf32, #tpu.memory_space<vmem>>, vector<1x8x128xf32>
    %818 = vector.shape_cast %817 : vector<1x8x128xf32> to vector<8x128xf32>
    %819 = vector.shape_cast %816 : vector<8x128xf32> to vector<1x8x128xf32>
    tpu.vector_store %arg5[%c3, %c0_385, %c0_386], %819 {strides = array<i32>} : memref<25x8x128xf32, #tpu.memory_space<vmem>>, vector<1x8x128xf32>,
    %c3_387 = arith.constant 3 : index
    %c0_388 = arith.constant 0 : index
    %c0_389 = arith.constant 0 : index
    %820 = vector.load %arg6[%c3_387, %c0_388, %c0_389] : memref<25x8x128xf32, #tpu.memory_space<vmem>>, vector<1x8x128xf32>
    %821 = vector.shape_cast %820 : vector<1x8x128xf32> to vector<8x128xf32>
    %822 = vector.shape_cast %812 : vector<8x128xf32> to vector<1x8x128xf32>
    tpu.vector_store %arg6[%c3_387, %c0_388, %c0_389], %822 {strides = array<i32>} : memref<25x8x128xf32, #tpu.memory_space<vmem>>, vector<1x8x128xf32>,
    %c32_390 = arith.constant 32 : index
    %c0_391 = arith.constant 0 : index
    %823 = vector.load %arg8[%c32_390, %c0_391] : memref<200x128xf32, #tpu.memory_space<vmem>>, vector<8x128xf32>
    %cst_392 = arith.constant 0.949999988 : f32
    %824 = vector.broadcast %cst_392 : f32 to vector<8x128xf32>
    %825 = arith.mulf %824, %812 : vector<8x128xf32>
    %826 = arith.addf %825, %823 : vector<8x128xf32>
    %cst_393 = arith.constant 1.000000e+00 : f32
    %827 = vector.broadcast %cst_393 : f32 to vector<8x128xf32>
    %828 = arith.cmpf ogt, %812, %827 : vector<8x128xf32>
    %cst_394 = arith.constant 1.000000e+00 : f32
    %cst_395 = arith.constant 0.000000e+00 : f32
    %829 = vector.broadcast %cst_394 : f32 to vector<8x128xf32>
    %830 = vector.broadcast %cst_395 : f32 to vector<8x128xf32>
    %831 = arith.select %828, %829, %830 : vector<8x128xi1>, vector<8x128xf32>
    %832 = arith.subf %826, %831 : vector<8x128xf32>
    %cst_396 = arith.constant -1.000000e+00 : f32
    %833 = vector.broadcast %cst_396 : f32 to vector<8x128xf32>
    %834 = arith.subf %832, %833 : vector<8x128xf32>
    %cst_397 = arith.constant 115.909088 : f32
    %835 = vector.broadcast %cst_397 : f32 to vector<8x128xf32>
    %836 = arith.mulf %834, %835 : vector<8x128xf32>
    %837 = math.roundeven %836 : vector<8x128xf32>
    %cst_398 = arith.constant 0.000000e+00 : f32
    %cst_399 = arith.constant 2.550000e+02 : f32
    %838 = vector.broadcast %cst_398 : f32 to vector<8x128xf32>
    %839 = arith.maximumf %838, %837 : vector<8x128xf32>
    %840 = vector.broadcast %cst_399 : f32 to vector<8x128xf32>
    %841 = arith.minimumf %840, %839 : vector<8x128xf32>
    %cst_400 = arith.constant 0.00862745102 : f32
    %842 = vector.broadcast %cst_400 : f32 to vector<8x128xf32>
    %843 = arith.mulf %841, %842 : vector<8x128xf32>
    %cst_401 = arith.constant -1.000000e+00 : f32
    %844 = vector.broadcast %cst_401 : f32 to vector<8x128xf32>
    %845 = arith.addf %844, %843 : vector<8x128xf32>
    %cst_402 = arith.constant 1.000000e+00 : f32
    %846 = vector.broadcast %cst_402 : f32 to vector<8x128xf32>
    %847 = arith.cmpf ogt, %845, %846 : vector<8x128xf32>
    %848 = arith.extui %847 : vector<8x128xi1> to vector<8x128xi32>
    %849 = arith.sitofp %848 : vector<8x128xi32> to vector<8x128xf32>
    %c4 = arith.constant 4 : index
    %c0_403 = arith.constant 0 : index
    %c0_404 = arith.constant 0 : index
    %850 = vector.load %arg5[%c4, %c0_403, %c0_404] : memref<25x8x128xf32, #tpu.memory_space<vmem>>, vector<1x8x128xf32>
    %851 = vector.shape_cast %850 : vector<1x8x128xf32> to vector<8x128xf32>
    %852 = vector.shape_cast %849 : vector<8x128xf32> to vector<1x8x128xf32>
    tpu.vector_store %arg5[%c4, %c0_403, %c0_404], %852 {strides = array<i32>} : memref<25x8x128xf32, #tpu.memory_space<vmem>>, vector<1x8x128xf32>,
    %c4_405 = arith.constant 4 : index
    %c0_406 = arith.constant 0 : index
    %c0_407 = arith.constant 0 : index
    %853 = vector.load %arg6[%c4_405, %c0_406, %c0_407] : memref<25x8x128xf32, #tpu.memory_space<vmem>>, vector<1x8x128xf32>
    %854 = vector.shape_cast %853 : vector<1x8x128xf32> to vector<8x128xf32>
    %855 = vector.shape_cast %845 : vector<8x128xf32> to vector<1x8x128xf32>
    tpu.vector_store %arg6[%c4_405, %c0_406, %c0_407], %855 {strides = array<i32>} : memref<25x8x128xf32, #tpu.memory_space<vmem>>, vector<1x8x128xf32>,
    %c40_408 = arith.constant 40 : index
    %c0_409 = arith.constant 0 : index
    %856 = vector.load %arg8[%c40_408, %c0_409] : memref<200x128xf32, #tpu.memory_space<vmem>>, vector<8x128xf32>
    %cst_410 = arith.constant 0.949999988 : f32
    %857 = vector.broadcast %cst_410 : f32 to vector<8x128xf32>
    %858 = arith.mulf %857, %845 : vector<8x128xf32>
    %859 = arith.addf %858, %856 : vector<8x128xf32>
    %cst_411 = arith.constant 1.000000e+00 : f32
    %860 = vector.broadcast %cst_411 : f32 to vector<8x128xf32>
    %861 = arith.cmpf ogt, %845, %860 : vector<8x128xf32>
    %cst_412 = arith.constant 1.000000e+00 : f32
    %cst_413 = arith.constant 0.000000e+00 : f32
    %862 = vector.broadcast %cst_412 : f32 to vector<8x128xf32>
    %863 = vector.broadcast %cst_413 : f32 to vector<8x128xf32>
    %864 = arith.select %861, %862, %863 : vector<8x128xi1>, vector<8x128xf32>
    %865 = arith.subf %859, %864 : vector<8x128xf32>
    %cst_414 = arith.constant -1.000000e+00 : f32
    %866 = vector.broadcast %cst_414 : f32 to vector<8x128xf32>
    %867 = arith.subf %865, %866 : vector<8x128xf32>
    %cst_415 = arith.constant 115.909088 : f32
    %868 = vector.broadcast %cst_415 : f32 to vector<8x128xf32>
    %869 = arith.mulf %867, %868 : vector<8x128xf32>
    %870 = math.roundeven %869 : vector<8x128xf32>
    %cst_416 = arith.constant 0.000000e+00 : f32
    %cst_417 = arith.constant 2.550000e+02 : f32
    %871 = vector.broadcast %cst_416 : f32 to vector<8x128xf32>
    %872 = arith.maximumf %871, %870 : vector<8x128xf32>
    %873 = vector.broadcast %cst_417 : f32 to vector<8x128xf32>
    %874 = arith.minimumf %873, %872 : vector<8x128xf32>
    %cst_418 = arith.constant 0.00862745102 : f32
    %875 = vector.broadcast %cst_418 : f32 to vector<8x128xf32>
    %876 = arith.mulf %874, %875 : vector<8x128xf32>
    %cst_419 = arith.constant -1.000000e+00 : f32
    %877 = vector.broadcast %cst_419 : f32 to vector<8x128xf32>
    %878 = arith.addf %877, %876 : vector<8x128xf32>
    %cst_420 = arith.constant 1.000000e+00 : f32
    %879 = vector.broadcast %cst_420 : f32 to vector<8x128xf32>
    %880 = arith.cmpf ogt, %878, %879 : vector<8x128xf32>
    %881 = arith.extui %880 : vector<8x128xi1> to vector<8x128xi32>
    %882 = arith.sitofp %881 : vector<8x128xi32> to vector<8x128xf32>
    %c5 = arith.constant 5 : index
    %c0_421 = arith.constant 0 : index
    %c0_422 = arith.constant 0 : index
    %883 = vector.load %arg5[%c5, %c0_421, %c0_422] : memref<25x8x128xf32, #tpu.memory_space<vmem>>, vector<1x8x128xf32>
    %884 = vector.shape_cast %883 : vector<1x8x128xf32> to vector<8x128xf32>
    %885 = vector.shape_cast %882 : vector<8x128xf32> to vector<1x8x128xf32>
    tpu.vector_store %arg5[%c5, %c0_421, %c0_422], %885 {strides = array<i32>} : memref<25x8x128xf32, #tpu.memory_space<vmem>>, vector<1x8x128xf32>,
    %c5_423 = arith.constant 5 : index
    %c0_424 = arith.constant 0 : index
    %c0_425 = arith.constant 0 : index
    %886 = vector.load %arg6[%c5_423, %c0_424, %c0_425] : memref<25x8x128xf32, #tpu.memory_space<vmem>>, vector<1x8x128xf32>
    %887 = vector.shape_cast %886 : vector<1x8x128xf32> to vector<8x128xf32>
    %888 = vector.shape_cast %878 : vector<8x128xf32> to vector<1x8x128xf32>
    tpu.vector_store %arg6[%c5_423, %c0_424, %c0_425], %888 {strides = array<i32>} : memref<25x8x128xf32, #tpu.memory_space<vmem>>, vector<1x8x128xf32>,
    %c48_426 = arith.constant 48 : index
    %c0_427 = arith.constant 0 : index
    %889 = vector.load %arg8[%c48_426, %c0_427] : memref<200x128xf32, #tpu.memory_space<vmem>>, vector<8x128xf32>
    %cst_428 = arith.constant 0.949999988 : f32
    %890 = vector.broadcast %cst_428 : f32 to vector<8x128xf32>
    %891 = arith.mulf %890, %878 : vector<8x128xf32>
    %892 = arith.addf %891, %889 : vector<8x128xf32>
    %cst_429 = arith.constant 1.000000e+00 : f32
    %893 = vector.broadcast %cst_429 : f32 to vector<8x128xf32>
    %894 = arith.cmpf ogt, %878, %893 : vector<8x128xf32>
    %cst_430 = arith.constant 1.000000e+00 : f32
    %cst_431 = arith.constant 0.000000e+00 : f32
    %895 = vector.broadcast %cst_430 : f32 to vector<8x128xf32>
    %896 = vector.broadcast %cst_431 : f32 to vector<8x128xf32>
    %897 = arith.select %894, %895, %896 : vector<8x128xi1>, vector<8x128xf32>
    %898 = arith.subf %892, %897 : vector<8x128xf32>
    %cst_432 = arith.constant -1.000000e+00 : f32
    %899 = vector.broadcast %cst_432 : f32 to vector<8x128xf32>
    %900 = arith.subf %898, %899 : vector<8x128xf32>
    %cst_433 = arith.constant 115.909088 : f32
    %901 = vector.broadcast %cst_433 : f32 to vector<8x128xf32>
    %902 = arith.mulf %900, %901 : vector<8x128xf32>
    %903 = math.roundeven %902 : vector<8x128xf32>
    %cst_434 = arith.constant 0.000000e+00 : f32
    %cst_435 = arith.constant 2.550000e+02 : f32
    %904 = vector.broadcast %cst_434 : f32 to vector<8x128xf32>
    %905 = arith.maximumf %904, %903 : vector<8x128xf32>
    %906 = vector.broadcast %cst_435 : f32 to vector<8x128xf32>
    %907 = arith.minimumf %906, %905 : vector<8x128xf32>
    %cst_436 = arith.constant 0.00862745102 : f32
    %908 = vector.broadcast %cst_436 : f32 to vector<8x128xf32>
    %909 = arith.mulf %907, %908 : vector<8x128xf32>
    %cst_437 = arith.constant -1.000000e+00 : f32
    %910 = vector.broadcast %cst_437 : f32 to vector<8x128xf32>
    %911 = arith.addf %910, %909 : vector<8x128xf32>
    %cst_438 = arith.constant 1.000000e+00 : f32
    %912 = vector.broadcast %cst_438 : f32 to vector<8x128xf32>
    %913 = arith.cmpf ogt, %911, %912 : vector<8x128xf32>
    %914 = arith.extui %913 : vector<8x128xi1> to vector<8x128xi32>
    %915 = arith.sitofp %914 : vector<8x128xi32> to vector<8x128xf32>
    %c6 = arith.constant 6 : index
    %c0_439 = arith.constant 0 : index
    %c0_440 = arith.constant 0 : index
    %916 = vector.load %arg5[%c6, %c0_439, %c0_440] : memref<25x8x128xf32, #tpu.memory_space<vmem>>, vector<1x8x128xf32>
    %917 = vector.shape_cast %916 : vector<1x8x128xf32> to vector<8x128xf32>
    %918 = vector.shape_cast %915 : vector<8x128xf32> to vector<1x8x128xf32>
    tpu.vector_store %arg5[%c6, %c0_439, %c0_440], %918 {strides = array<i32>} : memref<25x8x128xf32, #tpu.memory_space<vmem>>, vector<1x8x128xf32>,
    %c6_441 = arith.constant 6 : index
    %c0_442 = arith.constant 0 : index
    %c0_443 = arith.constant 0 : index
    %919 = vector.load %arg6[%c6_441, %c0_442, %c0_443] : memref<25x8x128xf32, #tpu.memory_space<vmem>>, vector<1x8x128xf32>
    %920 = vector.shape_cast %919 : vector<1x8x128xf32> to vector<8x128xf32>
    %921 = vector.shape_cast %911 : vector<8x128xf32> to vector<1x8x128xf32>
    tpu.vector_store %arg6[%c6_441, %c0_442, %c0_443], %921 {strides = array<i32>} : memref<25x8x128xf32, #tpu.memory_space<vmem>>, vector<1x8x128xf32>,
    %c56_444 = arith.constant 56 : index
    %c0_445 = arith.constant 0 : index
    %922 = vector.load %arg8[%c56_444, %c0_445] : memref<200x128xf32, #tpu.memory_space<vmem>>, vector<8x128xf32>
    %cst_446 = arith.constant 0.949999988 : f32
    %923 = vector.broadcast %cst_446 : f32 to vector<8x128xf32>
    %924 = arith.mulf %923, %911 : vector<8x128xf32>
    %925 = arith.addf %924, %922 : vector<8x128xf32>
    %cst_447 = arith.constant 1.000000e+00 : f32
    %926 = vector.broadcast %cst_447 : f32 to vector<8x128xf32>
    %927 = arith.cmpf ogt, %911, %926 : vector<8x128xf32>
    %cst_448 = arith.constant 1.000000e+00 : f32
    %cst_449 = arith.constant 0.000000e+00 : f32
    %928 = vector.broadcast %cst_448 : f32 to vector<8x128xf32>
    %929 = vector.broadcast %cst_449 : f32 to vector<8x128xf32>
    %930 = arith.select %927, %928, %929 : vector<8x128xi1>, vector<8x128xf32>
    %931 = arith.subf %925, %930 : vector<8x128xf32>
    %cst_450 = arith.constant -1.000000e+00 : f32
    %932 = vector.broadcast %cst_450 : f32 to vector<8x128xf32>
    %933 = arith.subf %931, %932 : vector<8x128xf32>
    %cst_451 = arith.constant 115.909088 : f32
    %934 = vector.broadcast %cst_451 : f32 to vector<8x128xf32>
    %935 = arith.mulf %933, %934 : vector<8x128xf32>
    %936 = math.roundeven %935 : vector<8x128xf32>
    %cst_452 = arith.constant 0.000000e+00 : f32
    %cst_453 = arith.constant 2.550000e+02 : f32
    %937 = vector.broadcast %cst_452 : f32 to vector<8x128xf32>
    %938 = arith.maximumf %937, %936 : vector<8x128xf32>
    %939 = vector.broadcast %cst_453 : f32 to vector<8x128xf32>
    %940 = arith.minimumf %939, %938 : vector<8x128xf32>
    %cst_454 = arith.constant 0.00862745102 : f32
    %941 = vector.broadcast %cst_454 : f32 to vector<8x128xf32>
    %942 = arith.mulf %940, %941 : vector<8x128xf32>
    %cst_455 = arith.constant -1.000000e+00 : f32
    %943 = vector.broadcast %cst_455 : f32 to vector<8x128xf32>
    %944 = arith.addf %943, %942 : vector<8x128xf32>
    %cst_456 = arith.constant 1.000000e+00 : f32
    %945 = vector.broadcast %cst_456 : f32 to vector<8x128xf32>
    %946 = arith.cmpf ogt, %944, %945 : vector<8x128xf32>
    %947 = arith.extui %946 : vector<8x128xi1> to vector<8x128xi32>
    %948 = arith.sitofp %947 : vector<8x128xi32> to vector<8x128xf32>
    %c7 = arith.constant 7 : index
    %c0_457 = arith.constant 0 : index
    %c0_458 = arith.constant 0 : index
    %949 = vector.load %arg5[%c7, %c0_457, %c0_458] : memref<25x8x128xf32, #tpu.memory_space<vmem>>, vector<1x8x128xf32>
    %950 = vector.shape_cast %949 : vector<1x8x128xf32> to vector<8x128xf32>
    %951 = vector.shape_cast %948 : vector<8x128xf32> to vector<1x8x128xf32>
    tpu.vector_store %arg5[%c7, %c0_457, %c0_458], %951 {strides = array<i32>} : memref<25x8x128xf32, #tpu.memory_space<vmem>>, vector<1x8x128xf32>,
    %c7_459 = arith.constant 7 : index
    %c0_460 = arith.constant 0 : index
    %c0_461 = arith.constant 0 : index
    %952 = vector.load %arg6[%c7_459, %c0_460, %c0_461] : memref<25x8x128xf32, #tpu.memory_space<vmem>>, vector<1x8x128xf32>
    %953 = vector.shape_cast %952 : vector<1x8x128xf32> to vector<8x128xf32>
    %954 = vector.shape_cast %944 : vector<8x128xf32> to vector<1x8x128xf32>
    tpu.vector_store %arg6[%c7_459, %c0_460, %c0_461], %954 {strides = array<i32>} : memref<25x8x128xf32, #tpu.memory_space<vmem>>, vector<1x8x128xf32>,
    %c64_462 = arith.constant 64 : index
    %c0_463 = arith.constant 0 : index
    %955 = vector.load %arg8[%c64_462, %c0_463] : memref<200x128xf32, #tpu.memory_space<vmem>>, vector<8x128xf32>
    %cst_464 = arith.constant 0.949999988 : f32
    %956 = vector.broadcast %cst_464 : f32 to vector<8x128xf32>
    %957 = arith.mulf %956, %944 : vector<8x128xf32>
    %958 = arith.addf %957, %955 : vector<8x128xf32>
    %cst_465 = arith.constant 1.000000e+00 : f32
    %959 = vector.broadcast %cst_465 : f32 to vector<8x128xf32>
    %960 = arith.cmpf ogt, %944, %959 : vector<8x128xf32>
    %cst_466 = arith.constant 1.000000e+00 : f32
    %cst_467 = arith.constant 0.000000e+00 : f32
    %961 = vector.broadcast %cst_466 : f32 to vector<8x128xf32>
    %962 = vector.broadcast %cst_467 : f32 to vector<8x128xf32>
    %963 = arith.select %960, %961, %962 : vector<8x128xi1>, vector<8x128xf32>
    %964 = arith.subf %958, %963 : vector<8x128xf32>
    %cst_468 = arith.constant -1.000000e+00 : f32
    %965 = vector.broadcast %cst_468 : f32 to vector<8x128xf32>
    %966 = arith.subf %964, %965 : vector<8x128xf32>
    %cst_469 = arith.constant 115.909088 : f32
    %967 = vector.broadcast %cst_469 : f32 to vector<8x128xf32>
    %968 = arith.mulf %966, %967 : vector<8x128xf32>
    %969 = math.roundeven %968 : vector<8x128xf32>
    %cst_470 = arith.constant 0.000000e+00 : f32
    %cst_471 = arith.constant 2.550000e+02 : f32
    %970 = vector.broadcast %cst_470 : f32 to vector<8x128xf32>
    %971 = arith.maximumf %970, %969 : vector<8x128xf32>
    %972 = vector.broadcast %cst_471 : f32 to vector<8x128xf32>
    %973 = arith.minimumf %972, %971 : vector<8x128xf32>
    %cst_472 = arith.constant 0.00862745102 : f32
    %974 = vector.broadcast %cst_472 : f32 to vector<8x128xf32>
    %975 = arith.mulf %973, %974 : vector<8x128xf32>
    %cst_473 = arith.constant -1.000000e+00 : f32
    %976 = vector.broadcast %cst_473 : f32 to vector<8x128xf32>
    %977 = arith.addf %976, %975 : vector<8x128xf32>
    %cst_474 = arith.constant 1.000000e+00 : f32
    %978 = vector.broadcast %cst_474 : f32 to vector<8x128xf32>
    %979 = arith.cmpf ogt, %977, %978 : vector<8x128xf32>
    %980 = arith.extui %979 : vector<8x128xi1> to vector<8x128xi32>
    %981 = arith.sitofp %980 : vector<8x128xi32> to vector<8x128xf32>
    %c8_475 = arith.constant 8 : index
    %c0_476 = arith.constant 0 : index
    %c0_477 = arith.constant 0 : index
    %982 = vector.load %arg5[%c8_475, %c0_476, %c0_477] : memref<25x8x128xf32, #tpu.memory_space<vmem>>, vector<1x8x128xf32>
    %983 = vector.shape_cast %982 : vector<1x8x128xf32> to vector<8x128xf32>
    %984 = vector.shape_cast %981 : vector<8x128xf32> to vector<1x8x128xf32>
    tpu.vector_store %arg5[%c8_475, %c0_476, %c0_477], %984 {strides = array<i32>} : memref<25x8x128xf32, #tpu.memory_space<vmem>>, vector<1x8x128xf32>,
    %c8_478 = arith.constant 8 : index
    %c0_479 = arith.constant 0 : index
    %c0_480 = arith.constant 0 : index
    %985 = vector.load %arg6[%c8_478, %c0_479, %c0_480] : memref<25x8x128xf32, #tpu.memory_space<vmem>>, vector<1x8x128xf32>
    %986 = vector.shape_cast %985 : vector<1x8x128xf32> to vector<8x128xf32>
    %987 = vector.shape_cast %977 : vector<8x128xf32> to vector<1x8x128xf32>
    tpu.vector_store %arg6[%c8_478, %c0_479, %c0_480], %987 {strides = array<i32>} : memref<25x8x128xf32, #tpu.memory_space<vmem>>, vector<1x8x128xf32>,
    %c72_481 = arith.constant 72 : index
    %c0_482 = arith.constant 0 : index
    %988 = vector.load %arg8[%c72_481, %c0_482] : memref<200x128xf32, #tpu.memory_space<vmem>>, vector<8x128xf32>
    %cst_483 = arith.constant 0.949999988 : f32
    %989 = vector.broadcast %cst_483 : f32 to vector<8x128xf32>
    %990 = arith.mulf %989, %977 : vector<8x128xf32>
    %991 = arith.addf %990, %988 : vector<8x128xf32>
    %cst_484 = arith.constant 1.000000e+00 : f32
    %992 = vector.broadcast %cst_484 : f32 to vector<8x128xf32>
    %993 = arith.cmpf ogt, %977, %992 : vector<8x128xf32>
    %cst_485 = arith.constant 1.000000e+00 : f32
    %cst_486 = arith.constant 0.000000e+00 : f32
    %994 = vector.broadcast %cst_485 : f32 to vector<8x128xf32>
    %995 = vector.broadcast %cst_486 : f32 to vector<8x128xf32>
    %996 = arith.select %993, %994, %995 : vector<8x128xi1>, vector<8x128xf32>
    %997 = arith.subf %991, %996 : vector<8x128xf32>
    %cst_487 = arith.constant -1.000000e+00 : f32
    %998 = vector.broadcast %cst_487 : f32 to vector<8x128xf32>
    %999 = arith.subf %997, %998 : vector<8x128xf32>
    %cst_488 = arith.constant 115.909088 : f32
    %1000 = vector.broadcast %cst_488 : f32 to vector<8x128xf32>
    %1001 = arith.mulf %999, %1000 : vector<8x128xf32>
    %1002 = math.roundeven %1001 : vector<8x128xf32>
    %cst_489 = arith.constant 0.000000e+00 : f32
    %cst_490 = arith.constant 2.550000e+02 : f32
    %1003 = vector.broadcast %cst_489 : f32 to vector<8x128xf32>
    %1004 = arith.maximumf %1003, %1002 : vector<8x128xf32>
    %1005 = vector.broadcast %cst_490 : f32 to vector<8x128xf32>
    %1006 = arith.minimumf %1005, %1004 : vector<8x128xf32>
    %cst_491 = arith.constant 0.00862745102 : f32
    %1007 = vector.broadcast %cst_491 : f32 to vector<8x128xf32>
    %1008 = arith.mulf %1006, %1007 : vector<8x128xf32>
    %cst_492 = arith.constant -1.000000e+00 : f32
    %1009 = vector.broadcast %cst_492 : f32 to vector<8x128xf32>
    %1010 = arith.addf %1009, %1008 : vector<8x128xf32>
    %cst_493 = arith.constant 1.000000e+00 : f32
    %1011 = vector.broadcast %cst_493 : f32 to vector<8x128xf32>
    %1012 = arith.cmpf ogt, %1010, %1011 : vector<8x128xf32>
    %1013 = arith.extui %1012 : vector<8x128xi1> to vector<8x128xi32>
    %1014 = arith.sitofp %1013 : vector<8x128xi32> to vector<8x128xf32>
    %c9 = arith.constant 9 : index
    %c0_494 = arith.constant 0 : index
    %c0_495 = arith.constant 0 : index
    %1015 = vector.load %arg5[%c9, %c0_494, %c0_495] : memref<25x8x128xf32, #tpu.memory_space<vmem>>, vector<1x8x128xf32>
    %1016 = vector.shape_cast %1015 : vector<1x8x128xf32> to vector<8x128xf32>
    %1017 = vector.shape_cast %1014 : vector<8x128xf32> to vector<1x8x128xf32>
    tpu.vector_store %arg5[%c9, %c0_494, %c0_495], %1017 {strides = array<i32>} : memref<25x8x128xf32, #tpu.memory_space<vmem>>, vector<1x8x128xf32>,
    %c9_496 = arith.constant 9 : index
    %c0_497 = arith.constant 0 : index
    %c0_498 = arith.constant 0 : index
    %1018 = vector.load %arg6[%c9_496, %c0_497, %c0_498] : memref<25x8x128xf32, #tpu.memory_space<vmem>>, vector<1x8x128xf32>
    %1019 = vector.shape_cast %1018 : vector<1x8x128xf32> to vector<8x128xf32>
    %1020 = vector.shape_cast %1010 : vector<8x128xf32> to vector<1x8x128xf32>
    tpu.vector_store %arg6[%c9_496, %c0_497, %c0_498], %1020 {strides = array<i32>} : memref<25x8x128xf32, #tpu.memory_space<vmem>>, vector<1x8x128xf32>,
    %c80_499 = arith.constant 80 : index
    %c0_500 = arith.constant 0 : index
    %1021 = vector.load %arg8[%c80_499, %c0_500] : memref<200x128xf32, #tpu.memory_space<vmem>>, vector<8x128xf32>
    %cst_501 = arith.constant 0.949999988 : f32
    %1022 = vector.broadcast %cst_501 : f32 to vector<8x128xf32>
    %1023 = arith.mulf %1022, %1010 : vector<8x128xf32>
    %1024 = arith.addf %1023, %1021 : vector<8x128xf32>
    %cst_502 = arith.constant 1.000000e+00 : f32
    %1025 = vector.broadcast %cst_502 : f32 to vector<8x128xf32>
    %1026 = arith.cmpf ogt, %1010, %1025 : vector<8x128xf32>
    %cst_503 = arith.constant 1.000000e+00 : f32
    %cst_504 = arith.constant 0.000000e+00 : f32
    %1027 = vector.broadcast %cst_503 : f32 to vector<8x128xf32>
    %1028 = vector.broadcast %cst_504 : f32 to vector<8x128xf32>
    %1029 = arith.select %1026, %1027, %1028 : vector<8x128xi1>, vector<8x128xf32>
    %1030 = arith.subf %1024, %1029 : vector<8x128xf32>
    %cst_505 = arith.constant -1.000000e+00 : f32
    %1031 = vector.broadcast %cst_505 : f32 to vector<8x128xf32>
    %1032 = arith.subf %1030, %1031 : vector<8x128xf32>
    %cst_506 = arith.constant 115.909088 : f32
    %1033 = vector.broadcast %cst_506 : f32 to vector<8x128xf32>
    %1034 = arith.mulf %1032, %1033 : vector<8x128xf32>
    %1035 = math.roundeven %1034 : vector<8x128xf32>
    %cst_507 = arith.constant 0.000000e+00 : f32
    %cst_508 = arith.constant 2.550000e+02 : f32
    %1036 = vector.broadcast %cst_507 : f32 to vector<8x128xf32>
    %1037 = arith.maximumf %1036, %1035 : vector<8x128xf32>
    %1038 = vector.broadcast %cst_508 : f32 to vector<8x128xf32>
    %1039 = arith.minimumf %1038, %1037 : vector<8x128xf32>
    %cst_509 = arith.constant 0.00862745102 : f32
    %1040 = vector.broadcast %cst_509 : f32 to vector<8x128xf32>
    %1041 = arith.mulf %1039, %1040 : vector<8x128xf32>
    %cst_510 = arith.constant -1.000000e+00 : f32
    %1042 = vector.broadcast %cst_510 : f32 to vector<8x128xf32>
    %1043 = arith.addf %1042, %1041 : vector<8x128xf32>
    %cst_511 = arith.constant 1.000000e+00 : f32
    %1044 = vector.broadcast %cst_511 : f32 to vector<8x128xf32>
    %1045 = arith.cmpf ogt, %1043, %1044 : vector<8x128xf32>
    %1046 = arith.extui %1045 : vector<8x128xi1> to vector<8x128xi32>
    %1047 = arith.sitofp %1046 : vector<8x128xi32> to vector<8x128xf32>
    %c10 = arith.constant 10 : index
    %c0_512 = arith.constant 0 : index
    %c0_513 = arith.constant 0 : index
    %1048 = vector.load %arg5[%c10, %c0_512, %c0_513] : memref<25x8x128xf32, #tpu.memory_space<vmem>>, vector<1x8x128xf32>
    %1049 = vector.shape_cast %1048 : vector<1x8x128xf32> to vector<8x128xf32>
    %1050 = vector.shape_cast %1047 : vector<8x128xf32> to vector<1x8x128xf32>
    tpu.vector_store %arg5[%c10, %c0_512, %c0_513], %1050 {strides = array<i32>} : memref<25x8x128xf32, #tpu.memory_space<vmem>>, vector<1x8x128xf32>,
    %c10_514 = arith.constant 10 : index
    %c0_515 = arith.constant 0 : index
    %c0_516 = arith.constant 0 : index
    %1051 = vector.load %arg6[%c10_514, %c0_515, %c0_516] : memref<25x8x128xf32, #tpu.memory_space<vmem>>, vector<1x8x128xf32>
    %1052 = vector.shape_cast %1051 : vector<1x8x128xf32> to vector<8x128xf32>
    %1053 = vector.shape_cast %1043 : vector<8x128xf32> to vector<1x8x128xf32>
    tpu.vector_store %arg6[%c10_514, %c0_515, %c0_516], %1053 {strides = array<i32>} : memref<25x8x128xf32, #tpu.memory_space<vmem>>, vector<1x8x128xf32>,
    %c88_517 = arith.constant 88 : index
    %c0_518 = arith.constant 0 : index
    %1054 = vector.load %arg8[%c88_517, %c0_518] : memref<200x128xf32, #tpu.memory_space<vmem>>, vector<8x128xf32>
    %cst_519 = arith.constant 0.949999988 : f32
    %1055 = vector.broadcast %cst_519 : f32 to vector<8x128xf32>
    %1056 = arith.mulf %1055, %1043 : vector<8x128xf32>
    %1057 = arith.addf %1056, %1054 : vector<8x128xf32>
    %cst_520 = arith.constant 1.000000e+00 : f32
    %1058 = vector.broadcast %cst_520 : f32 to vector<8x128xf32>
    %1059 = arith.cmpf ogt, %1043, %1058 : vector<8x128xf32>
    %cst_521 = arith.constant 1.000000e+00 : f32
    %cst_522 = arith.constant 0.000000e+00 : f32
    %1060 = vector.broadcast %cst_521 : f32 to vector<8x128xf32>
    %1061 = vector.broadcast %cst_522 : f32 to vector<8x128xf32>
    %1062 = arith.select %1059, %1060, %1061 : vector<8x128xi1>, vector<8x128xf32>
    %1063 = arith.subf %1057, %1062 : vector<8x128xf32>
    %cst_523 = arith.constant -1.000000e+00 : f32
    %1064 = vector.broadcast %cst_523 : f32 to vector<8x128xf32>
    %1065 = arith.subf %1063, %1064 : vector<8x128xf32>
    %cst_524 = arith.constant 115.909088 : f32
    %1066 = vector.broadcast %cst_524 : f32 to vector<8x128xf32>
    %1067 = arith.mulf %1065, %1066 : vector<8x128xf32>
    %1068 = math.roundeven %1067 : vector<8x128xf32>
    %cst_525 = arith.constant 0.000000e+00 : f32
    %cst_526 = arith.constant 2.550000e+02 : f32
    %1069 = vector.broadcast %cst_525 : f32 to vector<8x128xf32>
    %1070 = arith.maximumf %1069, %1068 : vector<8x128xf32>
    %1071 = vector.broadcast %cst_526 : f32 to vector<8x128xf32>
    %1072 = arith.minimumf %1071, %1070 : vector<8x128xf32>
    %cst_527 = arith.constant 0.00862745102 : f32
    %1073 = vector.broadcast %cst_527 : f32 to vector<8x128xf32>
    %1074 = arith.mulf %1072, %1073 : vector<8x128xf32>
    %cst_528 = arith.constant -1.000000e+00 : f32
    %1075 = vector.broadcast %cst_528 : f32 to vector<8x128xf32>
    %1076 = arith.addf %1075, %1074 : vector<8x128xf32>
    %cst_529 = arith.constant 1.000000e+00 : f32
    %1077 = vector.broadcast %cst_529 : f32 to vector<8x128xf32>
    %1078 = arith.cmpf ogt, %1076, %1077 : vector<8x128xf32>
    %1079 = arith.extui %1078 : vector<8x128xi1> to vector<8x128xi32>
    %1080 = arith.sitofp %1079 : vector<8x128xi32> to vector<8x128xf32>
    %c11 = arith.constant 11 : index
    %c0_530 = arith.constant 0 : index
    %c0_531 = arith.constant 0 : index
    %1081 = vector.load %arg5[%c11, %c0_530, %c0_531] : memref<25x8x128xf32, #tpu.memory_space<vmem>>, vector<1x8x128xf32>
    %1082 = vector.shape_cast %1081 : vector<1x8x128xf32> to vector<8x128xf32>
    %1083 = vector.shape_cast %1080 : vector<8x128xf32> to vector<1x8x128xf32>
    tpu.vector_store %arg5[%c11, %c0_530, %c0_531], %1083 {strides = array<i32>} : memref<25x8x128xf32, #tpu.memory_space<vmem>>, vector<1x8x128xf32>,
    %c11_532 = arith.constant 11 : index
    %c0_533 = arith.constant 0 : index
    %c0_534 = arith.constant 0 : index
    %1084 = vector.load %arg6[%c11_532, %c0_533, %c0_534] : memref<25x8x128xf32, #tpu.memory_space<vmem>>, vector<1x8x128xf32>
    %1085 = vector.shape_cast %1084 : vector<1x8x128xf32> to vector<8x128xf32>
    %1086 = vector.shape_cast %1076 : vector<8x128xf32> to vector<1x8x128xf32>
    tpu.vector_store %arg6[%c11_532, %c0_533, %c0_534], %1086 {strides = array<i32>} : memref<25x8x128xf32, #tpu.memory_space<vmem>>, vector<1x8x128xf32>,
    %c96_535 = arith.constant 96 : index
    %c0_536 = arith.constant 0 : index
    %1087 = vector.load %arg8[%c96_535, %c0_536] : memref<200x128xf32, #tpu.memory_space<vmem>>, vector<8x128xf32>
    %cst_537 = arith.constant 0.949999988 : f32
    %1088 = vector.broadcast %cst_537 : f32 to vector<8x128xf32>
    %1089 = arith.mulf %1088, %1076 : vector<8x128xf32>
    %1090 = arith.addf %1089, %1087 : vector<8x128xf32>
    %cst_538 = arith.constant 1.000000e+00 : f32
    %1091 = vector.broadcast %cst_538 : f32 to vector<8x128xf32>
    %1092 = arith.cmpf ogt, %1076, %1091 : vector<8x128xf32>
    %cst_539 = arith.constant 1.000000e+00 : f32
    %cst_540 = arith.constant 0.000000e+00 : f32
    %1093 = vector.broadcast %cst_539 : f32 to vector<8x128xf32>
    %1094 = vector.broadcast %cst_540 : f32 to vector<8x128xf32>
    %1095 = arith.select %1092, %1093, %1094 : vector<8x128xi1>, vector<8x128xf32>
    %1096 = arith.subf %1090, %1095 : vector<8x128xf32>
    %cst_541 = arith.constant -1.000000e+00 : f32
    %1097 = vector.broadcast %cst_541 : f32 to vector<8x128xf32>
    %1098 = arith.subf %1096, %1097 : vector<8x128xf32>
    %cst_542 = arith.constant 115.909088 : f32
    %1099 = vector.broadcast %cst_542 : f32 to vector<8x128xf32>
    %1100 = arith.mulf %1098, %1099 : vector<8x128xf32>
    %1101 = math.roundeven %1100 : vector<8x128xf32>
    %cst_543 = arith.constant 0.000000e+00 : f32
    %cst_544 = arith.constant 2.550000e+02 : f32
    %1102 = vector.broadcast %cst_543 : f32 to vector<8x128xf32>
    %1103 = arith.maximumf %1102, %1101 : vector<8x128xf32>
    %1104 = vector.broadcast %cst_544 : f32 to vector<8x128xf32>
    %1105 = arith.minimumf %1104, %1103 : vector<8x128xf32>
    %cst_545 = arith.constant 0.00862745102 : f32
    %1106 = vector.broadcast %cst_545 : f32 to vector<8x128xf32>
    %1107 = arith.mulf %1105, %1106 : vector<8x128xf32>
    %cst_546 = arith.constant -1.000000e+00 : f32
    %1108 = vector.broadcast %cst_546 : f32 to vector<8x128xf32>
    %1109 = arith.addf %1108, %1107 : vector<8x128xf32>
    %cst_547 = arith.constant 1.000000e+00 : f32
    %1110 = vector.broadcast %cst_547 : f32 to vector<8x128xf32>
    %1111 = arith.cmpf ogt, %1109, %1110 : vector<8x128xf32>
    %1112 = arith.extui %1111 : vector<8x128xi1> to vector<8x128xi32>
    %1113 = arith.sitofp %1112 : vector<8x128xi32> to vector<8x128xf32>
    %c12 = arith.constant 12 : index
    %c0_548 = arith.constant 0 : index
    %c0_549 = arith.constant 0 : index
    %1114 = vector.load %arg5[%c12, %c0_548, %c0_549] : memref<25x8x128xf32, #tpu.memory_space<vmem>>, vector<1x8x128xf32>
    %1115 = vector.shape_cast %1114 : vector<1x8x128xf32> to vector<8x128xf32>
    %1116 = vector.shape_cast %1113 : vector<8x128xf32> to vector<1x8x128xf32>
    tpu.vector_store %arg5[%c12, %c0_548, %c0_549], %1116 {strides = array<i32>} : memref<25x8x128xf32, #tpu.memory_space<vmem>>, vector<1x8x128xf32>,
    %c12_550 = arith.constant 12 : index
    %c0_551 = arith.constant 0 : index
    %c0_552 = arith.constant 0 : index
    %1117 = vector.load %arg6[%c12_550, %c0_551, %c0_552] : memref<25x8x128xf32, #tpu.memory_space<vmem>>, vector<1x8x128xf32>
    %1118 = vector.shape_cast %1117 : vector<1x8x128xf32> to vector<8x128xf32>
    %1119 = vector.shape_cast %1109 : vector<8x128xf32> to vector<1x8x128xf32>
    tpu.vector_store %arg6[%c12_550, %c0_551, %c0_552], %1119 {strides = array<i32>} : memref<25x8x128xf32, #tpu.memory_space<vmem>>, vector<1x8x128xf32>,
    %c104_553 = arith.constant 104 : index
    %c0_554 = arith.constant 0 : index
    %1120 = vector.load %arg8[%c104_553, %c0_554] : memref<200x128xf32, #tpu.memory_space<vmem>>, vector<8x128xf32>
    %cst_555 = arith.constant 0.949999988 : f32
    %1121 = vector.broadcast %cst_555 : f32 to vector<8x128xf32>
    %1122 = arith.mulf %1121, %1109 : vector<8x128xf32>
    %1123 = arith.addf %1122, %1120 : vector<8x128xf32>
    %cst_556 = arith.constant 1.000000e+00 : f32
    %1124 = vector.broadcast %cst_556 : f32 to vector<8x128xf32>
    %1125 = arith.cmpf ogt, %1109, %1124 : vector<8x128xf32>
    %cst_557 = arith.constant 1.000000e+00 : f32
    %cst_558 = arith.constant 0.000000e+00 : f32
    %1126 = vector.broadcast %cst_557 : f32 to vector<8x128xf32>
    %1127 = vector.broadcast %cst_558 : f32 to vector<8x128xf32>
    %1128 = arith.select %1125, %1126, %1127 : vector<8x128xi1>, vector<8x128xf32>
    %1129 = arith.subf %1123, %1128 : vector<8x128xf32>
    %cst_559 = arith.constant -1.000000e+00 : f32
    %1130 = vector.broadcast %cst_559 : f32 to vector<8x128xf32>
    %1131 = arith.subf %1129, %1130 : vector<8x128xf32>
    %cst_560 = arith.constant 115.909088 : f32
    %1132 = vector.broadcast %cst_560 : f32 to vector<8x128xf32>
    %1133 = arith.mulf %1131, %1132 : vector<8x128xf32>
    %1134 = math.roundeven %1133 : vector<8x128xf32>
    %cst_561 = arith.constant 0.000000e+00 : f32
    %cst_562 = arith.constant 2.550000e+02 : f32
    %1135 = vector.broadcast %cst_561 : f32 to vector<8x128xf32>
    %1136 = arith.maximumf %1135, %1134 : vector<8x128xf32>
    %1137 = vector.broadcast %cst_562 : f32 to vector<8x128xf32>
    %1138 = arith.minimumf %1137, %1136 : vector<8x128xf32>
    %cst_563 = arith.constant 0.00862745102 : f32
    %1139 = vector.broadcast %cst_563 : f32 to vector<8x128xf32>
    %1140 = arith.mulf %1138, %1139 : vector<8x128xf32>
    %cst_564 = arith.constant -1.000000e+00 : f32
    %1141 = vector.broadcast %cst_564 : f32 to vector<8x128xf32>
    %1142 = arith.addf %1141, %1140 : vector<8x128xf32>
    %cst_565 = arith.constant 1.000000e+00 : f32
    %1143 = vector.broadcast %cst_565 : f32 to vector<8x128xf32>
    %1144 = arith.cmpf ogt, %1142, %1143 : vector<8x128xf32>
    %1145 = arith.extui %1144 : vector<8x128xi1> to vector<8x128xi32>
    %1146 = arith.sitofp %1145 : vector<8x128xi32> to vector<8x128xf32>
    %c13 = arith.constant 13 : index
    %c0_566 = arith.constant 0 : index
    %c0_567 = arith.constant 0 : index
    %1147 = vector.load %arg5[%c13, %c0_566, %c0_567] : memref<25x8x128xf32, #tpu.memory_space<vmem>>, vector<1x8x128xf32>
    %1148 = vector.shape_cast %1147 : vector<1x8x128xf32> to vector<8x128xf32>
    %1149 = vector.shape_cast %1146 : vector<8x128xf32> to vector<1x8x128xf32>
    tpu.vector_store %arg5[%c13, %c0_566, %c0_567], %1149 {strides = array<i32>} : memref<25x8x128xf32, #tpu.memory_space<vmem>>, vector<1x8x128xf32>,
    %c13_568 = arith.constant 13 : index
    %c0_569 = arith.constant 0 : index
    %c0_570 = arith.constant 0 : index
    %1150 = vector.load %arg6[%c13_568, %c0_569, %c0_570] : memref<25x8x128xf32, #tpu.memory_space<vmem>>, vector<1x8x128xf32>
    %1151 = vector.shape_cast %1150 : vector<1x8x128xf32> to vector<8x128xf32>
    %1152 = vector.shape_cast %1142 : vector<8x128xf32> to vector<1x8x128xf32>
    tpu.vector_store %arg6[%c13_568, %c0_569, %c0_570], %1152 {strides = array<i32>} : memref<25x8x128xf32, #tpu.memory_space<vmem>>, vector<1x8x128xf32>,
    %c112_571 = arith.constant 112 : index
    %c0_572 = arith.constant 0 : index
    %1153 = vector.load %arg8[%c112_571, %c0_572] : memref<200x128xf32, #tpu.memory_space<vmem>>, vector<8x128xf32>
    %cst_573 = arith.constant 0.949999988 : f32
    %1154 = vector.broadcast %cst_573 : f32 to vector<8x128xf32>
    %1155 = arith.mulf %1154, %1142 : vector<8x128xf32>
    %1156 = arith.addf %1155, %1153 : vector<8x128xf32>
    %cst_574 = arith.constant 1.000000e+00 : f32
    %1157 = vector.broadcast %cst_574 : f32 to vector<8x128xf32>
    %1158 = arith.cmpf ogt, %1142, %1157 : vector<8x128xf32>
    %cst_575 = arith.constant 1.000000e+00 : f32
    %cst_576 = arith.constant 0.000000e+00 : f32
    %1159 = vector.broadcast %cst_575 : f32 to vector<8x128xf32>
    %1160 = vector.broadcast %cst_576 : f32 to vector<8x128xf32>
    %1161 = arith.select %1158, %1159, %1160 : vector<8x128xi1>, vector<8x128xf32>
    %1162 = arith.subf %1156, %1161 : vector<8x128xf32>
    %cst_577 = arith.constant -1.000000e+00 : f32
    %1163 = vector.broadcast %cst_577 : f32 to vector<8x128xf32>
    %1164 = arith.subf %1162, %1163 : vector<8x128xf32>
    %cst_578 = arith.constant 115.909088 : f32
    %1165 = vector.broadcast %cst_578 : f32 to vector<8x128xf32>
    %1166 = arith.mulf %1164, %1165 : vector<8x128xf32>
    %1167 = math.roundeven %1166 : vector<8x128xf32>
    %cst_579 = arith.constant 0.000000e+00 : f32
    %cst_580 = arith.constant 2.550000e+02 : f32
    %1168 = vector.broadcast %cst_579 : f32 to vector<8x128xf32>
    %1169 = arith.maximumf %1168, %1167 : vector<8x128xf32>
    %1170 = vector.broadcast %cst_580 : f32 to vector<8x128xf32>
    %1171 = arith.minimumf %1170, %1169 : vector<8x128xf32>
    %cst_581 = arith.constant 0.00862745102 : f32
    %1172 = vector.broadcast %cst_581 : f32 to vector<8x128xf32>
    %1173 = arith.mulf %1171, %1172 : vector<8x128xf32>
    %cst_582 = arith.constant -1.000000e+00 : f32
    %1174 = vector.broadcast %cst_582 : f32 to vector<8x128xf32>
    %1175 = arith.addf %1174, %1173 : vector<8x128xf32>
    %cst_583 = arith.constant 1.000000e+00 : f32
    %1176 = vector.broadcast %cst_583 : f32 to vector<8x128xf32>
    %1177 = arith.cmpf ogt, %1175, %1176 : vector<8x128xf32>
    %1178 = arith.extui %1177 : vector<8x128xi1> to vector<8x128xi32>
    %1179 = arith.sitofp %1178 : vector<8x128xi32> to vector<8x128xf32>
    %c14 = arith.constant 14 : index
    %c0_584 = arith.constant 0 : index
    %c0_585 = arith.constant 0 : index
    %1180 = vector.load %arg5[%c14, %c0_584, %c0_585] : memref<25x8x128xf32, #tpu.memory_space<vmem>>, vector<1x8x128xf32>
    %1181 = vector.shape_cast %1180 : vector<1x8x128xf32> to vector<8x128xf32>
    %1182 = vector.shape_cast %1179 : vector<8x128xf32> to vector<1x8x128xf32>
    tpu.vector_store %arg5[%c14, %c0_584, %c0_585], %1182 {strides = array<i32>} : memref<25x8x128xf32, #tpu.memory_space<vmem>>, vector<1x8x128xf32>,
    %c14_586 = arith.constant 14 : index
    %c0_587 = arith.constant 0 : index
    %c0_588 = arith.constant 0 : index
    %1183 = vector.load %arg6[%c14_586, %c0_587, %c0_588] : memref<25x8x128xf32, #tpu.memory_space<vmem>>, vector<1x8x128xf32>
    %1184 = vector.shape_cast %1183 : vector<1x8x128xf32> to vector<8x128xf32>
    %1185 = vector.shape_cast %1175 : vector<8x128xf32> to vector<1x8x128xf32>
    tpu.vector_store %arg6[%c14_586, %c0_587, %c0_588], %1185 {strides = array<i32>} : memref<25x8x128xf32, #tpu.memory_space<vmem>>, vector<1x8x128xf32>,
    %c120_589 = arith.constant 120 : index
    %c0_590 = arith.constant 0 : index
    %1186 = vector.load %arg8[%c120_589, %c0_590] : memref<200x128xf32, #tpu.memory_space<vmem>>, vector<8x128xf32>
    %cst_591 = arith.constant 0.949999988 : f32
    %1187 = vector.broadcast %cst_591 : f32 to vector<8x128xf32>
    %1188 = arith.mulf %1187, %1175 : vector<8x128xf32>
    %1189 = arith.addf %1188, %1186 : vector<8x128xf32>
    %cst_592 = arith.constant 1.000000e+00 : f32
    %1190 = vector.broadcast %cst_592 : f32 to vector<8x128xf32>
    %1191 = arith.cmpf ogt, %1175, %1190 : vector<8x128xf32>
    %cst_593 = arith.constant 1.000000e+00 : f32
    %cst_594 = arith.constant 0.000000e+00 : f32
    %1192 = vector.broadcast %cst_593 : f32 to vector<8x128xf32>
    %1193 = vector.broadcast %cst_594 : f32 to vector<8x128xf32>
    %1194 = arith.select %1191, %1192, %1193 : vector<8x128xi1>, vector<8x128xf32>
    %1195 = arith.subf %1189, %1194 : vector<8x128xf32>
    %cst_595 = arith.constant -1.000000e+00 : f32
    %1196 = vector.broadcast %cst_595 : f32 to vector<8x128xf32>
    %1197 = arith.subf %1195, %1196 : vector<8x128xf32>
    %cst_596 = arith.constant 115.909088 : f32
    %1198 = vector.broadcast %cst_596 : f32 to vector<8x128xf32>
    %1199 = arith.mulf %1197, %1198 : vector<8x128xf32>
    %1200 = math.roundeven %1199 : vector<8x128xf32>
    %cst_597 = arith.constant 0.000000e+00 : f32
    %cst_598 = arith.constant 2.550000e+02 : f32
    %1201 = vector.broadcast %cst_597 : f32 to vector<8x128xf32>
    %1202 = arith.maximumf %1201, %1200 : vector<8x128xf32>
    %1203 = vector.broadcast %cst_598 : f32 to vector<8x128xf32>
    %1204 = arith.minimumf %1203, %1202 : vector<8x128xf32>
    %cst_599 = arith.constant 0.00862745102 : f32
    %1205 = vector.broadcast %cst_599 : f32 to vector<8x128xf32>
    %1206 = arith.mulf %1204, %1205 : vector<8x128xf32>
    %cst_600 = arith.constant -1.000000e+00 : f32
    %1207 = vector.broadcast %cst_600 : f32 to vector<8x128xf32>
    %1208 = arith.addf %1207, %1206 : vector<8x128xf32>
    %cst_601 = arith.constant 1.000000e+00 : f32
    %1209 = vector.broadcast %cst_601 : f32 to vector<8x128xf32>
    %1210 = arith.cmpf ogt, %1208, %1209 : vector<8x128xf32>
    %1211 = arith.extui %1210 : vector<8x128xi1> to vector<8x128xi32>
    %1212 = arith.sitofp %1211 : vector<8x128xi32> to vector<8x128xf32>
    %c15 = arith.constant 15 : index
    %c0_602 = arith.constant 0 : index
    %c0_603 = arith.constant 0 : index
    %1213 = vector.load %arg5[%c15, %c0_602, %c0_603] : memref<25x8x128xf32, #tpu.memory_space<vmem>>, vector<1x8x128xf32>
    %1214 = vector.shape_cast %1213 : vector<1x8x128xf32> to vector<8x128xf32>
    %1215 = vector.shape_cast %1212 : vector<8x128xf32> to vector<1x8x128xf32>
    tpu.vector_store %arg5[%c15, %c0_602, %c0_603], %1215 {strides = array<i32>} : memref<25x8x128xf32, #tpu.memory_space<vmem>>, vector<1x8x128xf32>,
    %c15_604 = arith.constant 15 : index
    %c0_605 = arith.constant 0 : index
    %c0_606 = arith.constant 0 : index
    %1216 = vector.load %arg6[%c15_604, %c0_605, %c0_606] : memref<25x8x128xf32, #tpu.memory_space<vmem>>, vector<1x8x128xf32>
    %1217 = vector.shape_cast %1216 : vector<1x8x128xf32> to vector<8x128xf32>
    %1218 = vector.shape_cast %1208 : vector<8x128xf32> to vector<1x8x128xf32>
    tpu.vector_store %arg6[%c15_604, %c0_605, %c0_606], %1218 {strides = array<i32>} : memref<25x8x128xf32, #tpu.memory_space<vmem>>, vector<1x8x128xf32>,
    %c128_607 = arith.constant 128 : index
    %c0_608 = arith.constant 0 : index
    %1219 = vector.load %arg8[%c128_607, %c0_608] : memref<200x128xf32, #tpu.memory_space<vmem>>, vector<8x128xf32>
    %cst_609 = arith.constant 0.949999988 : f32
    %1220 = vector.broadcast %cst_609 : f32 to vector<8x128xf32>
    %1221 = arith.mulf %1220, %1208 : vector<8x128xf32>
    %1222 = arith.addf %1221, %1219 : vector<8x128xf32>
    %cst_610 = arith.constant 1.000000e+00 : f32
    %1223 = vector.broadcast %cst_610 : f32 to vector<8x128xf32>
    %1224 = arith.cmpf ogt, %1208, %1223 : vector<8x128xf32>
    %cst_611 = arith.constant 1.000000e+00 : f32
    %cst_612 = arith.constant 0.000000e+00 : f32
    %1225 = vector.broadcast %cst_611 : f32 to vector<8x128xf32>
    %1226 = vector.broadcast %cst_612 : f32 to vector<8x128xf32>
    %1227 = arith.select %1224, %1225, %1226 : vector<8x128xi1>, vector<8x128xf32>
    %1228 = arith.subf %1222, %1227 : vector<8x128xf32>
    %cst_613 = arith.constant -1.000000e+00 : f32
    %1229 = vector.broadcast %cst_613 : f32 to vector<8x128xf32>
    %1230 = arith.subf %1228, %1229 : vector<8x128xf32>
    %cst_614 = arith.constant 115.909088 : f32
    %1231 = vector.broadcast %cst_614 : f32 to vector<8x128xf32>
    %1232 = arith.mulf %1230, %1231 : vector<8x128xf32>
    %1233 = math.roundeven %1232 : vector<8x128xf32>
    %cst_615 = arith.constant 0.000000e+00 : f32
    %cst_616 = arith.constant 2.550000e+02 : f32
    %1234 = vector.broadcast %cst_615 : f32 to vector<8x128xf32>
    %1235 = arith.maximumf %1234, %1233 : vector<8x128xf32>
    %1236 = vector.broadcast %cst_616 : f32 to vector<8x128xf32>
    %1237 = arith.minimumf %1236, %1235 : vector<8x128xf32>
    %cst_617 = arith.constant 0.00862745102 : f32
    %1238 = vector.broadcast %cst_617 : f32 to vector<8x128xf32>
    %1239 = arith.mulf %1237, %1238 : vector<8x128xf32>
    %cst_618 = arith.constant -1.000000e+00 : f32
    %1240 = vector.broadcast %cst_618 : f32 to vector<8x128xf32>
    %1241 = arith.addf %1240, %1239 : vector<8x128xf32>
    %cst_619 = arith.constant 1.000000e+00 : f32
    %1242 = vector.broadcast %cst_619 : f32 to vector<8x128xf32>
    %1243 = arith.cmpf ogt, %1241, %1242 : vector<8x128xf32>
    %1244 = arith.extui %1243 : vector<8x128xi1> to vector<8x128xi32>
    %1245 = arith.sitofp %1244 : vector<8x128xi32> to vector<8x128xf32>
    %c16_620 = arith.constant 16 : index
    %c0_621 = arith.constant 0 : index
    %c0_622 = arith.constant 0 : index
    %1246 = vector.load %arg5[%c16_620, %c0_621, %c0_622] : memref<25x8x128xf32, #tpu.memory_space<vmem>>, vector<1x8x128xf32>
    %1247 = vector.shape_cast %1246 : vector<1x8x128xf32> to vector<8x128xf32>
    %1248 = vector.shape_cast %1245 : vector<8x128xf32> to vector<1x8x128xf32>
    tpu.vector_store %arg5[%c16_620, %c0_621, %c0_622], %1248 {strides = array<i32>} : memref<25x8x128xf32, #tpu.memory_space<vmem>>, vector<1x8x128xf32>,
    %c16_623 = arith.constant 16 : index
    %c0_624 = arith.constant 0 : index
    %c0_625 = arith.constant 0 : index
    %1249 = vector.load %arg6[%c16_623, %c0_624, %c0_625] : memref<25x8x128xf32, #tpu.memory_space<vmem>>, vector<1x8x128xf32>
    %1250 = vector.shape_cast %1249 : vector<1x8x128xf32> to vector<8x128xf32>
    %1251 = vector.shape_cast %1241 : vector<8x128xf32> to vector<1x8x128xf32>
    tpu.vector_store %arg6[%c16_623, %c0_624, %c0_625], %1251 {strides = array<i32>} : memref<25x8x128xf32, #tpu.memory_space<vmem>>, vector<1x8x128xf32>,
    %c136_626 = arith.constant 136 : index
    %c0_627 = arith.constant 0 : index
    %1252 = vector.load %arg8[%c136_626, %c0_627] : memref<200x128xf32, #tpu.memory_space<vmem>>, vector<8x128xf32>
    %cst_628 = arith.constant 0.949999988 : f32
    %1253 = vector.broadcast %cst_628 : f32 to vector<8x128xf32>
    %1254 = arith.mulf %1253, %1241 : vector<8x128xf32>
    %1255 = arith.addf %1254, %1252 : vector<8x128xf32>
    %cst_629 = arith.constant 1.000000e+00 : f32
    %1256 = vector.broadcast %cst_629 : f32 to vector<8x128xf32>
    %1257 = arith.cmpf ogt, %1241, %1256 : vector<8x128xf32>
    %cst_630 = arith.constant 1.000000e+00 : f32
    %cst_631 = arith.constant 0.000000e+00 : f32
    %1258 = vector.broadcast %cst_630 : f32 to vector<8x128xf32>
    %1259 = vector.broadcast %cst_631 : f32 to vector<8x128xf32>
    %1260 = arith.select %1257, %1258, %1259 : vector<8x128xi1>, vector<8x128xf32>
    %1261 = arith.subf %1255, %1260 : vector<8x128xf32>
    %cst_632 = arith.constant -1.000000e+00 : f32
    %1262 = vector.broadcast %cst_632 : f32 to vector<8x128xf32>
    %1263 = arith.subf %1261, %1262 : vector<8x128xf32>
    %cst_633 = arith.constant 115.909088 : f32
    %1264 = vector.broadcast %cst_633 : f32 to vector<8x128xf32>
    %1265 = arith.mulf %1263, %1264 : vector<8x128xf32>
    %1266 = math.roundeven %1265 : vector<8x128xf32>
    %cst_634 = arith.constant 0.000000e+00 : f32
    %cst_635 = arith.constant 2.550000e+02 : f32
    %1267 = vector.broadcast %cst_634 : f32 to vector<8x128xf32>
    %1268 = arith.maximumf %1267, %1266 : vector<8x128xf32>
    %1269 = vector.broadcast %cst_635 : f32 to vector<8x128xf32>
    %1270 = arith.minimumf %1269, %1268 : vector<8x128xf32>
    %cst_636 = arith.constant 0.00862745102 : f32
    %1271 = vector.broadcast %cst_636 : f32 to vector<8x128xf32>
    %1272 = arith.mulf %1270, %1271 : vector<8x128xf32>
    %cst_637 = arith.constant -1.000000e+00 : f32
    %1273 = vector.broadcast %cst_637 : f32 to vector<8x128xf32>
    %1274 = arith.addf %1273, %1272 : vector<8x128xf32>
    %cst_638 = arith.constant 1.000000e+00 : f32
    %1275 = vector.broadcast %cst_638 : f32 to vector<8x128xf32>
    %1276 = arith.cmpf ogt, %1274, %1275 : vector<8x128xf32>
    %1277 = arith.extui %1276 : vector<8x128xi1> to vector<8x128xi32>
    %1278 = arith.sitofp %1277 : vector<8x128xi32> to vector<8x128xf32>
    %c17 = arith.constant 17 : index
    %c0_639 = arith.constant 0 : index
    %c0_640 = arith.constant 0 : index
    %1279 = vector.load %arg5[%c17, %c0_639, %c0_640] : memref<25x8x128xf32, #tpu.memory_space<vmem>>, vector<1x8x128xf32>
    %1280 = vector.shape_cast %1279 : vector<1x8x128xf32> to vector<8x128xf32>
    %1281 = vector.shape_cast %1278 : vector<8x128xf32> to vector<1x8x128xf32>
    tpu.vector_store %arg5[%c17, %c0_639, %c0_640], %1281 {strides = array<i32>} : memref<25x8x128xf32, #tpu.memory_space<vmem>>, vector<1x8x128xf32>,
    %c17_641 = arith.constant 17 : index
    %c0_642 = arith.constant 0 : index
    %c0_643 = arith.constant 0 : index
    %1282 = vector.load %arg6[%c17_641, %c0_642, %c0_643] : memref<25x8x128xf32, #tpu.memory_space<vmem>>, vector<1x8x128xf32>
    %1283 = vector.shape_cast %1282 : vector<1x8x128xf32> to vector<8x128xf32>
    %1284 = vector.shape_cast %1274 : vector<8x128xf32> to vector<1x8x128xf32>
    tpu.vector_store %arg6[%c17_641, %c0_642, %c0_643], %1284 {strides = array<i32>} : memref<25x8x128xf32, #tpu.memory_space<vmem>>, vector<1x8x128xf32>,
    %c144_644 = arith.constant 144 : index
    %c0_645 = arith.constant 0 : index
    %1285 = vector.load %arg8[%c144_644, %c0_645] : memref<200x128xf32, #tpu.memory_space<vmem>>, vector<8x128xf32>
    %cst_646 = arith.constant 0.949999988 : f32
    %1286 = vector.broadcast %cst_646 : f32 to vector<8x128xf32>
    %1287 = arith.mulf %1286, %1274 : vector<8x128xf32>
    %1288 = arith.addf %1287, %1285 : vector<8x128xf32>
    %cst_647 = arith.constant 1.000000e+00 : f32
    %1289 = vector.broadcast %cst_647 : f32 to vector<8x128xf32>
    %1290 = arith.cmpf ogt, %1274, %1289 : vector<8x128xf32>
    %cst_648 = arith.constant 1.000000e+00 : f32
    %cst_649 = arith.constant 0.000000e+00 : f32
    %1291 = vector.broadcast %cst_648 : f32 to vector<8x128xf32>
    %1292 = vector.broadcast %cst_649 : f32 to vector<8x128xf32>
    %1293 = arith.select %1290, %1291, %1292 : vector<8x128xi1>, vector<8x128xf32>
    %1294 = arith.subf %1288, %1293 : vector<8x128xf32>
    %cst_650 = arith.constant -1.000000e+00 : f32
    %1295 = vector.broadcast %cst_650 : f32 to vector<8x128xf32>
    %1296 = arith.subf %1294, %1295 : vector<8x128xf32>
    %cst_651 = arith.constant 115.909088 : f32
    %1297 = vector.broadcast %cst_651 : f32 to vector<8x128xf32>
    %1298 = arith.mulf %1296, %1297 : vector<8x128xf32>
    %1299 = math.roundeven %1298 : vector<8x128xf32>
    %cst_652 = arith.constant 0.000000e+00 : f32
    %cst_653 = arith.constant 2.550000e+02 : f32
    %1300 = vector.broadcast %cst_652 : f32 to vector<8x128xf32>
    %1301 = arith.maximumf %1300, %1299 : vector<8x128xf32>
    %1302 = vector.broadcast %cst_653 : f32 to vector<8x128xf32>
    %1303 = arith.minimumf %1302, %1301 : vector<8x128xf32>
    %cst_654 = arith.constant 0.00862745102 : f32
    %1304 = vector.broadcast %cst_654 : f32 to vector<8x128xf32>
    %1305 = arith.mulf %1303, %1304 : vector<8x128xf32>
    %cst_655 = arith.constant -1.000000e+00 : f32
    %1306 = vector.broadcast %cst_655 : f32 to vector<8x128xf32>
    %1307 = arith.addf %1306, %1305 : vector<8x128xf32>
    %cst_656 = arith.constant 1.000000e+00 : f32
    %1308 = vector.broadcast %cst_656 : f32 to vector<8x128xf32>
    %1309 = arith.cmpf ogt, %1307, %1308 : vector<8x128xf32>
    %1310 = arith.extui %1309 : vector<8x128xi1> to vector<8x128xi32>
    %1311 = arith.sitofp %1310 : vector<8x128xi32> to vector<8x128xf32>
    %c18 = arith.constant 18 : index
    %c0_657 = arith.constant 0 : index
    %c0_658 = arith.constant 0 : index
    %1312 = vector.load %arg5[%c18, %c0_657, %c0_658] : memref<25x8x128xf32, #tpu.memory_space<vmem>>, vector<1x8x128xf32>
    %1313 = vector.shape_cast %1312 : vector<1x8x128xf32> to vector<8x128xf32>
    %1314 = vector.shape_cast %1311 : vector<8x128xf32> to vector<1x8x128xf32>
    tpu.vector_store %arg5[%c18, %c0_657, %c0_658], %1314 {strides = array<i32>} : memref<25x8x128xf32, #tpu.memory_space<vmem>>, vector<1x8x128xf32>,
    %c18_659 = arith.constant 18 : index
    %c0_660 = arith.constant 0 : index
    %c0_661 = arith.constant 0 : index
    %1315 = vector.load %arg6[%c18_659, %c0_660, %c0_661] : memref<25x8x128xf32, #tpu.memory_space<vmem>>, vector<1x8x128xf32>
    %1316 = vector.shape_cast %1315 : vector<1x8x128xf32> to vector<8x128xf32>
    %1317 = vector.shape_cast %1307 : vector<8x128xf32> to vector<1x8x128xf32>
    tpu.vector_store %arg6[%c18_659, %c0_660, %c0_661], %1317 {strides = array<i32>} : memref<25x8x128xf32, #tpu.memory_space<vmem>>, vector<1x8x128xf32>,
    %c152_662 = arith.constant 152 : index
    %c0_663 = arith.constant 0 : index
    %1318 = vector.load %arg8[%c152_662, %c0_663] : memref<200x128xf32, #tpu.memory_space<vmem>>, vector<8x128xf32>
    %cst_664 = arith.constant 0.949999988 : f32
    %1319 = vector.broadcast %cst_664 : f32 to vector<8x128xf32>
    %1320 = arith.mulf %1319, %1307 : vector<8x128xf32>
    %1321 = arith.addf %1320, %1318 : vector<8x128xf32>
    %cst_665 = arith.constant 1.000000e+00 : f32
    %1322 = vector.broadcast %cst_665 : f32 to vector<8x128xf32>
    %1323 = arith.cmpf ogt, %1307, %1322 : vector<8x128xf32>
    %cst_666 = arith.constant 1.000000e+00 : f32
    %cst_667 = arith.constant 0.000000e+00 : f32
    %1324 = vector.broadcast %cst_666 : f32 to vector<8x128xf32>
    %1325 = vector.broadcast %cst_667 : f32 to vector<8x128xf32>
    %1326 = arith.select %1323, %1324, %1325 : vector<8x128xi1>, vector<8x128xf32>
    %1327 = arith.subf %1321, %1326 : vector<8x128xf32>
    %cst_668 = arith.constant -1.000000e+00 : f32
    %1328 = vector.broadcast %cst_668 : f32 to vector<8x128xf32>
    %1329 = arith.subf %1327, %1328 : vector<8x128xf32>
    %cst_669 = arith.constant 115.909088 : f32
    %1330 = vector.broadcast %cst_669 : f32 to vector<8x128xf32>
    %1331 = arith.mulf %1329, %1330 : vector<8x128xf32>
    %1332 = math.roundeven %1331 : vector<8x128xf32>
    %cst_670 = arith.constant 0.000000e+00 : f32
    %cst_671 = arith.constant 2.550000e+02 : f32
    %1333 = vector.broadcast %cst_670 : f32 to vector<8x128xf32>
    %1334 = arith.maximumf %1333, %1332 : vector<8x128xf32>
    %1335 = vector.broadcast %cst_671 : f32 to vector<8x128xf32>
    %1336 = arith.minimumf %1335, %1334 : vector<8x128xf32>
    %cst_672 = arith.constant 0.00862745102 : f32
    %1337 = vector.broadcast %cst_672 : f32 to vector<8x128xf32>
    %1338 = arith.mulf %1336, %1337 : vector<8x128xf32>
    %cst_673 = arith.constant -1.000000e+00 : f32
    %1339 = vector.broadcast %cst_673 : f32 to vector<8x128xf32>
    %1340 = arith.addf %1339, %1338 : vector<8x128xf32>
    %cst_674 = arith.constant 1.000000e+00 : f32
    %1341 = vector.broadcast %cst_674 : f32 to vector<8x128xf32>
    %1342 = arith.cmpf ogt, %1340, %1341 : vector<8x128xf32>
    %1343 = arith.extui %1342 : vector<8x128xi1> to vector<8x128xi32>
    %1344 = arith.sitofp %1343 : vector<8x128xi32> to vector<8x128xf32>
    %c19 = arith.constant 19 : index
    %c0_675 = arith.constant 0 : index
    %c0_676 = arith.constant 0 : index
    %1345 = vector.load %arg5[%c19, %c0_675, %c0_676] : memref<25x8x128xf32, #tpu.memory_space<vmem>>, vector<1x8x128xf32>
    %1346 = vector.shape_cast %1345 : vector<1x8x128xf32> to vector<8x128xf32>
    %1347 = vector.shape_cast %1344 : vector<8x128xf32> to vector<1x8x128xf32>
    tpu.vector_store %arg5[%c19, %c0_675, %c0_676], %1347 {strides = array<i32>} : memref<25x8x128xf32, #tpu.memory_space<vmem>>, vector<1x8x128xf32>,
    %c19_677 = arith.constant 19 : index
    %c0_678 = arith.constant 0 : index
    %c0_679 = arith.constant 0 : index
    %1348 = vector.load %arg6[%c19_677, %c0_678, %c0_679] : memref<25x8x128xf32, #tpu.memory_space<vmem>>, vector<1x8x128xf32>
    %1349 = vector.shape_cast %1348 : vector<1x8x128xf32> to vector<8x128xf32>
    %1350 = vector.shape_cast %1340 : vector<8x128xf32> to vector<1x8x128xf32>
    tpu.vector_store %arg6[%c19_677, %c0_678, %c0_679], %1350 {strides = array<i32>} : memref<25x8x128xf32, #tpu.memory_space<vmem>>, vector<1x8x128xf32>,
    %c160_680 = arith.constant 160 : index
    %c0_681 = arith.constant 0 : index
    %1351 = vector.load %arg8[%c160_680, %c0_681] : memref<200x128xf32, #tpu.memory_space<vmem>>, vector<8x128xf32>
    %cst_682 = arith.constant 0.949999988 : f32
    %1352 = vector.broadcast %cst_682 : f32 to vector<8x128xf32>
    %1353 = arith.mulf %1352, %1340 : vector<8x128xf32>
    %1354 = arith.addf %1353, %1351 : vector<8x128xf32>
    %cst_683 = arith.constant 1.000000e+00 : f32
    %1355 = vector.broadcast %cst_683 : f32 to vector<8x128xf32>
    %1356 = arith.cmpf ogt, %1340, %1355 : vector<8x128xf32>
    %cst_684 = arith.constant 1.000000e+00 : f32
    %cst_685 = arith.constant 0.000000e+00 : f32
    %1357 = vector.broadcast %cst_684 : f32 to vector<8x128xf32>
    %1358 = vector.broadcast %cst_685 : f32 to vector<8x128xf32>
    %1359 = arith.select %1356, %1357, %1358 : vector<8x128xi1>, vector<8x128xf32>
    %1360 = arith.subf %1354, %1359 : vector<8x128xf32>
    %cst_686 = arith.constant -1.000000e+00 : f32
    %1361 = vector.broadcast %cst_686 : f32 to vector<8x128xf32>
    %1362 = arith.subf %1360, %1361 : vector<8x128xf32>
    %cst_687 = arith.constant 115.909088 : f32
    %1363 = vector.broadcast %cst_687 : f32 to vector<8x128xf32>
    %1364 = arith.mulf %1362, %1363 : vector<8x128xf32>
    %1365 = math.roundeven %1364 : vector<8x128xf32>
    %cst_688 = arith.constant 0.000000e+00 : f32
    %cst_689 = arith.constant 2.550000e+02 : f32
    %1366 = vector.broadcast %cst_688 : f32 to vector<8x128xf32>
    %1367 = arith.maximumf %1366, %1365 : vector<8x128xf32>
    %1368 = vector.broadcast %cst_689 : f32 to vector<8x128xf32>
    %1369 = arith.minimumf %1368, %1367 : vector<8x128xf32>
    %cst_690 = arith.constant 0.00862745102 : f32
    %1370 = vector.broadcast %cst_690 : f32 to vector<8x128xf32>
    %1371 = arith.mulf %1369, %1370 : vector<8x128xf32>
    %cst_691 = arith.constant -1.000000e+00 : f32
    %1372 = vector.broadcast %cst_691 : f32 to vector<8x128xf32>
    %1373 = arith.addf %1372, %1371 : vector<8x128xf32>
    %cst_692 = arith.constant 1.000000e+00 : f32
    %1374 = vector.broadcast %cst_692 : f32 to vector<8x128xf32>
    %1375 = arith.cmpf ogt, %1373, %1374 : vector<8x128xf32>
    %1376 = arith.extui %1375 : vector<8x128xi1> to vector<8x128xi32>
    %1377 = arith.sitofp %1376 : vector<8x128xi32> to vector<8x128xf32>
    %c20 = arith.constant 20 : index
    %c0_693 = arith.constant 0 : index
    %c0_694 = arith.constant 0 : index
    %1378 = vector.load %arg5[%c20, %c0_693, %c0_694] : memref<25x8x128xf32, #tpu.memory_space<vmem>>, vector<1x8x128xf32>
    %1379 = vector.shape_cast %1378 : vector<1x8x128xf32> to vector<8x128xf32>
    %1380 = vector.shape_cast %1377 : vector<8x128xf32> to vector<1x8x128xf32>
    tpu.vector_store %arg5[%c20, %c0_693, %c0_694], %1380 {strides = array<i32>} : memref<25x8x128xf32, #tpu.memory_space<vmem>>, vector<1x8x128xf32>,
    %c20_695 = arith.constant 20 : index
    %c0_696 = arith.constant 0 : index
    %c0_697 = arith.constant 0 : index
    %1381 = vector.load %arg6[%c20_695, %c0_696, %c0_697] : memref<25x8x128xf32, #tpu.memory_space<vmem>>, vector<1x8x128xf32>
    %1382 = vector.shape_cast %1381 : vector<1x8x128xf32> to vector<8x128xf32>
    %1383 = vector.shape_cast %1373 : vector<8x128xf32> to vector<1x8x128xf32>
    tpu.vector_store %arg6[%c20_695, %c0_696, %c0_697], %1383 {strides = array<i32>} : memref<25x8x128xf32, #tpu.memory_space<vmem>>, vector<1x8x128xf32>,
    %c168_698 = arith.constant 168 : index
    %c0_699 = arith.constant 0 : index
    %1384 = vector.load %arg8[%c168_698, %c0_699] : memref<200x128xf32, #tpu.memory_space<vmem>>, vector<8x128xf32>
    %cst_700 = arith.constant 0.949999988 : f32
    %1385 = vector.broadcast %cst_700 : f32 to vector<8x128xf32>
    %1386 = arith.mulf %1385, %1373 : vector<8x128xf32>
    %1387 = arith.addf %1386, %1384 : vector<8x128xf32>
    %cst_701 = arith.constant 1.000000e+00 : f32
    %1388 = vector.broadcast %cst_701 : f32 to vector<8x128xf32>
    %1389 = arith.cmpf ogt, %1373, %1388 : vector<8x128xf32>
    %cst_702 = arith.constant 1.000000e+00 : f32
    %cst_703 = arith.constant 0.000000e+00 : f32
    %1390 = vector.broadcast %cst_702 : f32 to vector<8x128xf32>
    %1391 = vector.broadcast %cst_703 : f32 to vector<8x128xf32>
    %1392 = arith.select %1389, %1390, %1391 : vector<8x128xi1>, vector<8x128xf32>
    %1393 = arith.subf %1387, %1392 : vector<8x128xf32>
    %cst_704 = arith.constant -1.000000e+00 : f32
    %1394 = vector.broadcast %cst_704 : f32 to vector<8x128xf32>
    %1395 = arith.subf %1393, %1394 : vector<8x128xf32>
    %cst_705 = arith.constant 115.909088 : f32
    %1396 = vector.broadcast %cst_705 : f32 to vector<8x128xf32>
    %1397 = arith.mulf %1395, %1396 : vector<8x128xf32>
    %1398 = math.roundeven %1397 : vector<8x128xf32>
    %cst_706 = arith.constant 0.000000e+00 : f32
    %cst_707 = arith.constant 2.550000e+02 : f32
    %1399 = vector.broadcast %cst_706 : f32 to vector<8x128xf32>
    %1400 = arith.maximumf %1399, %1398 : vector<8x128xf32>
    %1401 = vector.broadcast %cst_707 : f32 to vector<8x128xf32>
    %1402 = arith.minimumf %1401, %1400 : vector<8x128xf32>
    %cst_708 = arith.constant 0.00862745102 : f32
    %1403 = vector.broadcast %cst_708 : f32 to vector<8x128xf32>
    %1404 = arith.mulf %1402, %1403 : vector<8x128xf32>
    %cst_709 = arith.constant -1.000000e+00 : f32
    %1405 = vector.broadcast %cst_709 : f32 to vector<8x128xf32>
    %1406 = arith.addf %1405, %1404 : vector<8x128xf32>
    %cst_710 = arith.constant 1.000000e+00 : f32
    %1407 = vector.broadcast %cst_710 : f32 to vector<8x128xf32>
    %1408 = arith.cmpf ogt, %1406, %1407 : vector<8x128xf32>
    %1409 = arith.extui %1408 : vector<8x128xi1> to vector<8x128xi32>
    %1410 = arith.sitofp %1409 : vector<8x128xi32> to vector<8x128xf32>
    %c21 = arith.constant 21 : index
    %c0_711 = arith.constant 0 : index
    %c0_712 = arith.constant 0 : index
    %1411 = vector.load %arg5[%c21, %c0_711, %c0_712] : memref<25x8x128xf32, #tpu.memory_space<vmem>>, vector<1x8x128xf32>
    %1412 = vector.shape_cast %1411 : vector<1x8x128xf32> to vector<8x128xf32>
    %1413 = vector.shape_cast %1410 : vector<8x128xf32> to vector<1x8x128xf32>
    tpu.vector_store %arg5[%c21, %c0_711, %c0_712], %1413 {strides = array<i32>} : memref<25x8x128xf32, #tpu.memory_space<vmem>>, vector<1x8x128xf32>,
    %c21_713 = arith.constant 21 : index
    %c0_714 = arith.constant 0 : index
    %c0_715 = arith.constant 0 : index
    %1414 = vector.load %arg6[%c21_713, %c0_714, %c0_715] : memref<25x8x128xf32, #tpu.memory_space<vmem>>, vector<1x8x128xf32>
    %1415 = vector.shape_cast %1414 : vector<1x8x128xf32> to vector<8x128xf32>
    %1416 = vector.shape_cast %1406 : vector<8x128xf32> to vector<1x8x128xf32>
    tpu.vector_store %arg6[%c21_713, %c0_714, %c0_715], %1416 {strides = array<i32>} : memref<25x8x128xf32, #tpu.memory_space<vmem>>, vector<1x8x128xf32>,
    %c176_716 = arith.constant 176 : index
    %c0_717 = arith.constant 0 : index
    %1417 = vector.load %arg8[%c176_716, %c0_717] : memref<200x128xf32, #tpu.memory_space<vmem>>, vector<8x128xf32>
    %cst_718 = arith.constant 0.949999988 : f32
    %1418 = vector.broadcast %cst_718 : f32 to vector<8x128xf32>
    %1419 = arith.mulf %1418, %1406 : vector<8x128xf32>
    %1420 = arith.addf %1419, %1417 : vector<8x128xf32>
    %cst_719 = arith.constant 1.000000e+00 : f32
    %1421 = vector.broadcast %cst_719 : f32 to vector<8x128xf32>
    %1422 = arith.cmpf ogt, %1406, %1421 : vector<8x128xf32>
    %cst_720 = arith.constant 1.000000e+00 : f32
    %cst_721 = arith.constant 0.000000e+00 : f32
    %1423 = vector.broadcast %cst_720 : f32 to vector<8x128xf32>
    %1424 = vector.broadcast %cst_721 : f32 to vector<8x128xf32>
    %1425 = arith.select %1422, %1423, %1424 : vector<8x128xi1>, vector<8x128xf32>
    %1426 = arith.subf %1420, %1425 : vector<8x128xf32>
    %cst_722 = arith.constant -1.000000e+00 : f32
    %1427 = vector.broadcast %cst_722 : f32 to vector<8x128xf32>
    %1428 = arith.subf %1426, %1427 : vector<8x128xf32>
    %cst_723 = arith.constant 115.909088 : f32
    %1429 = vector.broadcast %cst_723 : f32 to vector<8x128xf32>
    %1430 = arith.mulf %1428, %1429 : vector<8x128xf32>
    %1431 = math.roundeven %1430 : vector<8x128xf32>
    %cst_724 = arith.constant 0.000000e+00 : f32
    %cst_725 = arith.constant 2.550000e+02 : f32
    %1432 = vector.broadcast %cst_724 : f32 to vector<8x128xf32>
    %1433 = arith.maximumf %1432, %1431 : vector<8x128xf32>
    %1434 = vector.broadcast %cst_725 : f32 to vector<8x128xf32>
    %1435 = arith.minimumf %1434, %1433 : vector<8x128xf32>
    %cst_726 = arith.constant 0.00862745102 : f32
    %1436 = vector.broadcast %cst_726 : f32 to vector<8x128xf32>
    %1437 = arith.mulf %1435, %1436 : vector<8x128xf32>
    %cst_727 = arith.constant -1.000000e+00 : f32
    %1438 = vector.broadcast %cst_727 : f32 to vector<8x128xf32>
    %1439 = arith.addf %1438, %1437 : vector<8x128xf32>
    %cst_728 = arith.constant 1.000000e+00 : f32
    %1440 = vector.broadcast %cst_728 : f32 to vector<8x128xf32>
    %1441 = arith.cmpf ogt, %1439, %1440 : vector<8x128xf32>
    %1442 = arith.extui %1441 : vector<8x128xi1> to vector<8x128xi32>
    %1443 = arith.sitofp %1442 : vector<8x128xi32> to vector<8x128xf32>
    %c22 = arith.constant 22 : index
    %c0_729 = arith.constant 0 : index
    %c0_730 = arith.constant 0 : index
    %1444 = vector.load %arg5[%c22, %c0_729, %c0_730] : memref<25x8x128xf32, #tpu.memory_space<vmem>>, vector<1x8x128xf32>
    %1445 = vector.shape_cast %1444 : vector<1x8x128xf32> to vector<8x128xf32>
    %1446 = vector.shape_cast %1443 : vector<8x128xf32> to vector<1x8x128xf32>
    tpu.vector_store %arg5[%c22, %c0_729, %c0_730], %1446 {strides = array<i32>} : memref<25x8x128xf32, #tpu.memory_space<vmem>>, vector<1x8x128xf32>,
    %c22_731 = arith.constant 22 : index
    %c0_732 = arith.constant 0 : index
    %c0_733 = arith.constant 0 : index
    %1447 = vector.load %arg6[%c22_731, %c0_732, %c0_733] : memref<25x8x128xf32, #tpu.memory_space<vmem>>, vector<1x8x128xf32>
    %1448 = vector.shape_cast %1447 : vector<1x8x128xf32> to vector<8x128xf32>
    %1449 = vector.shape_cast %1439 : vector<8x128xf32> to vector<1x8x128xf32>
    tpu.vector_store %arg6[%c22_731, %c0_732, %c0_733], %1449 {strides = array<i32>} : memref<25x8x128xf32, #tpu.memory_space<vmem>>, vector<1x8x128xf32>,
    %c184_734 = arith.constant 184 : index
    %c0_735 = arith.constant 0 : index
    %1450 = vector.load %arg8[%c184_734, %c0_735] : memref<200x128xf32, #tpu.memory_space<vmem>>, vector<8x128xf32>
    %cst_736 = arith.constant 0.949999988 : f32
    %1451 = vector.broadcast %cst_736 : f32 to vector<8x128xf32>
    %1452 = arith.mulf %1451, %1439 : vector<8x128xf32>
    %1453 = arith.addf %1452, %1450 : vector<8x128xf32>
    %cst_737 = arith.constant 1.000000e+00 : f32
    %1454 = vector.broadcast %cst_737 : f32 to vector<8x128xf32>
    %1455 = arith.cmpf ogt, %1439, %1454 : vector<8x128xf32>
    %cst_738 = arith.constant 1.000000e+00 : f32
    %cst_739 = arith.constant 0.000000e+00 : f32
    %1456 = vector.broadcast %cst_738 : f32 to vector<8x128xf32>
    %1457 = vector.broadcast %cst_739 : f32 to vector<8x128xf32>
    %1458 = arith.select %1455, %1456, %1457 : vector<8x128xi1>, vector<8x128xf32>
    %1459 = arith.subf %1453, %1458 : vector<8x128xf32>
    %cst_740 = arith.constant -1.000000e+00 : f32
    %1460 = vector.broadcast %cst_740 : f32 to vector<8x128xf32>
    %1461 = arith.subf %1459, %1460 : vector<8x128xf32>
    %cst_741 = arith.constant 115.909088 : f32
    %1462 = vector.broadcast %cst_741 : f32 to vector<8x128xf32>
    %1463 = arith.mulf %1461, %1462 : vector<8x128xf32>
    %1464 = math.roundeven %1463 : vector<8x128xf32>
    %cst_742 = arith.constant 0.000000e+00 : f32
    %cst_743 = arith.constant 2.550000e+02 : f32
    %1465 = vector.broadcast %cst_742 : f32 to vector<8x128xf32>
    %1466 = arith.maximumf %1465, %1464 : vector<8x128xf32>
    %1467 = vector.broadcast %cst_743 : f32 to vector<8x128xf32>
    %1468 = arith.minimumf %1467, %1466 : vector<8x128xf32>
    %cst_744 = arith.constant 0.00862745102 : f32
    %1469 = vector.broadcast %cst_744 : f32 to vector<8x128xf32>
    %1470 = arith.mulf %1468, %1469 : vector<8x128xf32>
    %cst_745 = arith.constant -1.000000e+00 : f32
    %1471 = vector.broadcast %cst_745 : f32 to vector<8x128xf32>
    %1472 = arith.addf %1471, %1470 : vector<8x128xf32>
    %cst_746 = arith.constant 1.000000e+00 : f32
    %1473 = vector.broadcast %cst_746 : f32 to vector<8x128xf32>
    %1474 = arith.cmpf ogt, %1472, %1473 : vector<8x128xf32>
    %1475 = arith.extui %1474 : vector<8x128xi1> to vector<8x128xi32>
    %1476 = arith.sitofp %1475 : vector<8x128xi32> to vector<8x128xf32>
    %c23 = arith.constant 23 : index
    %c0_747 = arith.constant 0 : index
    %c0_748 = arith.constant 0 : index
    %1477 = vector.load %arg5[%c23, %c0_747, %c0_748] : memref<25x8x128xf32, #tpu.memory_space<vmem>>, vector<1x8x128xf32>
    %1478 = vector.shape_cast %1477 : vector<1x8x128xf32> to vector<8x128xf32>
    %1479 = vector.shape_cast %1476 : vector<8x128xf32> to vector<1x8x128xf32>
    tpu.vector_store %arg5[%c23, %c0_747, %c0_748], %1479 {strides = array<i32>} : memref<25x8x128xf32, #tpu.memory_space<vmem>>, vector<1x8x128xf32>,
    %c23_749 = arith.constant 23 : index
    %c0_750 = arith.constant 0 : index
    %c0_751 = arith.constant 0 : index
    %1480 = vector.load %arg6[%c23_749, %c0_750, %c0_751] : memref<25x8x128xf32, #tpu.memory_space<vmem>>, vector<1x8x128xf32>
    %1481 = vector.shape_cast %1480 : vector<1x8x128xf32> to vector<8x128xf32>
    %1482 = vector.shape_cast %1472 : vector<8x128xf32> to vector<1x8x128xf32>
    tpu.vector_store %arg6[%c23_749, %c0_750, %c0_751], %1482 {strides = array<i32>} : memref<25x8x128xf32, #tpu.memory_space<vmem>>, vector<1x8x128xf32>,
    %c192_752 = arith.constant 192 : index
    %c0_753 = arith.constant 0 : index
    %1483 = vector.load %arg8[%c192_752, %c0_753] : memref<200x128xf32, #tpu.memory_space<vmem>>, vector<8x128xf32>
    %cst_754 = arith.constant 0.949999988 : f32
    %1484 = vector.broadcast %cst_754 : f32 to vector<8x128xf32>
    %1485 = arith.mulf %1484, %1472 : vector<8x128xf32>
    %1486 = arith.addf %1485, %1483 : vector<8x128xf32>
    %cst_755 = arith.constant 1.000000e+00 : f32
    %1487 = vector.broadcast %cst_755 : f32 to vector<8x128xf32>
    %1488 = arith.cmpf ogt, %1472, %1487 : vector<8x128xf32>
    %cst_756 = arith.constant 1.000000e+00 : f32
    %cst_757 = arith.constant 0.000000e+00 : f32
    %1489 = vector.broadcast %cst_756 : f32 to vector<8x128xf32>
    %1490 = vector.broadcast %cst_757 : f32 to vector<8x128xf32>
    %1491 = arith.select %1488, %1489, %1490 : vector<8x128xi1>, vector<8x128xf32>
    %1492 = arith.subf %1486, %1491 : vector<8x128xf32>
    %cst_758 = arith.constant -1.000000e+00 : f32
    %1493 = vector.broadcast %cst_758 : f32 to vector<8x128xf32>
    %1494 = arith.subf %1492, %1493 : vector<8x128xf32>
    %cst_759 = arith.constant 115.909088 : f32
    %1495 = vector.broadcast %cst_759 : f32 to vector<8x128xf32>
    %1496 = arith.mulf %1494, %1495 : vector<8x128xf32>
    %1497 = math.roundeven %1496 : vector<8x128xf32>
    %cst_760 = arith.constant 0.000000e+00 : f32
    %cst_761 = arith.constant 2.550000e+02 : f32
    %1498 = vector.broadcast %cst_760 : f32 to vector<8x128xf32>
    %1499 = arith.maximumf %1498, %1497 : vector<8x128xf32>
    %1500 = vector.broadcast %cst_761 : f32 to vector<8x128xf32>
    %1501 = arith.minimumf %1500, %1499 : vector<8x128xf32>
    %cst_762 = arith.constant 0.00862745102 : f32
    %1502 = vector.broadcast %cst_762 : f32 to vector<8x128xf32>
    %1503 = arith.mulf %1501, %1502 : vector<8x128xf32>
    %cst_763 = arith.constant -1.000000e+00 : f32
    %1504 = vector.broadcast %cst_763 : f32 to vector<8x128xf32>
    %1505 = arith.addf %1504, %1503 : vector<8x128xf32>
    %cst_764 = arith.constant 1.000000e+00 : f32
    %1506 = vector.broadcast %cst_764 : f32 to vector<8x128xf32>
    %1507 = arith.cmpf ogt, %1505, %1506 : vector<8x128xf32>
    %1508 = arith.extui %1507 : vector<8x128xi1> to vector<8x128xi32>
    %1509 = arith.sitofp %1508 : vector<8x128xi32> to vector<8x128xf32>
    %c24_765 = arith.constant 24 : index
    %c0_766 = arith.constant 0 : index
    %c0_767 = arith.constant 0 : index
    %1510 = vector.load %arg5[%c24_765, %c0_766, %c0_767] : memref<25x8x128xf32, #tpu.memory_space<vmem>>, vector<1x8x128xf32>
    %1511 = vector.shape_cast %1510 : vector<1x8x128xf32> to vector<8x128xf32>
    %1512 = vector.shape_cast %1509 : vector<8x128xf32> to vector<1x8x128xf32>
    tpu.vector_store %arg5[%c24_765, %c0_766, %c0_767], %1512 {strides = array<i32>} : memref<25x8x128xf32, #tpu.memory_space<vmem>>, vector<1x8x128xf32>,
    %c24_768 = arith.constant 24 : index
    %c0_769 = arith.constant 0 : index
    %c0_770 = arith.constant 0 : index
    %1513 = vector.load %arg6[%c24_768, %c0_769, %c0_770] : memref<25x8x128xf32, #tpu.memory_space<vmem>>, vector<1x8x128xf32>
    %1514 = vector.shape_cast %1513 : vector<1x8x128xf32> to vector<8x128xf32>
    %1515 = vector.shape_cast %1505 : vector<8x128xf32> to vector<1x8x128xf32>
    tpu.vector_store %arg6[%c24_768, %c0_769, %c0_770], %1515 {strides = array<i32>} : memref<25x8x128xf32, #tpu.memory_space<vmem>>, vector<1x8x128xf32>,
    return
  }
}

</mosaic_0001>

<llo_original>
// kernel: quantized_snn_forward.1
$region0: #{quantized_snn_forward.1}
  #allocation0 [shape = 'u32[]', space=smem, size = 0x4, offset = 0x4, fixed_abs, tag = 'smem constant byte address 0x4 - core index']
  #allocation1 [shape = 'u32[144,128]{1,0:T(1,128)}', space=vmem, size = 0x12000, scoped, tag = 'internal scratch']
  #allocation2 [shape = 'f32[200,1024]{1,0:T(8,128)}', space=vmem, size = 0xc8000, scoped, tag = 'scratch operand']
  #allocation3 [shape = 'f32[200,128]{1,0:T(8,128)}', space=vmem, size = 0x19000, scoped, tag = 'scratch operand']
  %s0 = inlined_call_operand.vmem [shape: bf16[8,784], index: 0, kind: input, shape index: {}]
  %s1 = inlined_call_operand.vmem [shape: bf16[784,1024], index: 1, kind: input, shape index: {}]
  %s2 = inlined_call_operand.vmem [shape: f32[1,1024], index: 2, kind: input, shape index: {}]
  %s3 = inlined_call_operand.vmem [shape: bf16[1024,128], index: 3, kind: input, shape index: {}]
  %s4 = inlined_call_operand.vmem [shape: f32[1,128], index: 4, kind: input, shape index: {}]
  %s5 = inlined_call_operand.vmem [shape: f32[25,8,128], index: 5, kind: output, shape index: {0}]
  %s6 = inlined_call_operand.vmem [shape: f32[25,8,128], index: 6, kind: output, shape index: {1}]
  %7 = xla_tuple %s5, %s6
  %s8 = sld [smem:[#allocation0]]
  $region38: #{quantized_snn_forward.1} parent=0
    _
  %s10 = ssub.s32 1, %s8
  %s11 = scalar_select 0, %s10, %s8
  // Predicated region
  $region2: #{quantized_snn_forward.1} parent=0 // pred_check
    _
  $region3: #{quantized_snn_forward.1} parent=0 // pred_check_branch
    %13 = sbr.rel (0) target = $region5
  $region4: #{quantized_snn_forward.1} parent=0 // pred_region
    _
  $region5: #{quantized_snn_forward.1} parent=0 // pred_fallthru
    _
  // Predicated region
  $region6: #{quantized_snn_forward.1} parent=0 // pred_check
    _
  $region7: #{quantized_snn_forward.1} parent=0 // pred_check_branch
    %15 = sbr.rel (0) target = $region9
  $region8: #{quantized_snn_forward.1} parent=0 // pred_region
    _
  $region9: #{quantized_snn_forward.1} parent=0 // pred_fallthru
    _
  // Predicated region
  $region10: #{quantized_snn_forward.1} parent=0 // pred_check
    _
  $region11: #{quantized_snn_forward.1} parent=0 // pred_check_branch
    %17 = sbr.rel (0) target = $region13
  $region12: #{quantized_snn_forward.1} parent=0 // pred_region
    _
  $region13: #{quantized_snn_forward.1} parent=0 // pred_fallthru
    _
  // Predicated region
  $region14: #{quantized_snn_forward.1} parent=0 // pred_check
    _
  $region15: #{quantized_snn_forward.1} parent=0 // pred_check_branch
    %19 = sbr.rel (0) target = $region17
  $region16: #{quantized_snn_forward.1} parent=0 // pred_region
    _
  $region17: #{quantized_snn_forward.1} parent=0 // pred_fallthru
    _
  // Predicated region
  $region18: #{quantized_snn_forward.1} parent=0 // pred_check
    _
  $region19: #{quantized_snn_forward.1} parent=0 // pred_check_branch
    %21 = sbr.rel (0) target = $region21
  $region20: #{quantized_snn_forward.1} parent=0 // pred_region
    _
  $region21: #{quantized_snn_forward.1} parent=0 // pred_fallthru
    _
  %v23 = vld [vmem:[%s0] sm:$0xff]
  %v24 = vld [vmem:[%s0 + $0x8] sm:$0xff]
  %v25 = vld [vmem:[%s0 + $0x10] sm:$0xff]
  %v26 = vld [vmem:[%s0 + $0x18] sm:$0xf]
  %v27 = vld [vmem:[%s1] sm:$0xff]
  %v28 = vld [vmem:[%s1 + $0x8] sm:$0xff]
  %v29 = vld [vmem:[%s1 + $0x10] sm:$0xff]
  %v30 = vld [vmem:[%s1 + $0x18] sm:$0xff]
  %v31 = vld [vmem:[%s1 + $0x20] sm:$0xff]
  %v32 = vld [vmem:[%s1 + $0x28] sm:$0xff]
  %v33 = vld [vmem:[%s1 + $0x30] sm:$0xff]
  %v34 = vld [vmem:[%s1 + $0x38] sm:$0xff]
  %v35 = vld [vmem:[%s1 + $0x40] sm:$0xff]
  %v36 = vld [vmem:[%s1 + $0x48] sm:$0xff]
  %v37 = vld [vmem:[%s1 + $0x50] sm:$0xff]
  %v38 = vld [vmem:[%s1 + $0x58] sm:$0xff]
  %v39 = vld [vmem:[%s1 + $0x60] sm:$0xff]
  %v40 = vld [vmem:[%s1 + $0x68] sm:$0xff]
  %v41 = vld [vmem:[%s1 + $0x70] sm:$0xff]
  %v42 = vld [vmem:[%s1 + $0x78] sm:$0xff]
  %v43 = vld [vmem:[%s1 + $0x80] sm:$0xff]
  %v44 = vld [vmem:[%s1 + $0x88] sm:$0xff]
  %v45 = vld [vmem:[%s1 + $0x90] sm:$0xff]
  %v46 = vld [vmem:[%s1 + $0x98] sm:$0xff]
  %v47 = vld [vmem:[%s1 + $0xa0] sm:$0xff]
  %v48 = vld [vmem:[%s1 + $0xa8] sm:$0xff]
  %v49 = vld [vmem:[%s1 + $0xb0] sm:$0xff]
  %v50 = vld [vmem:[%s1 + $0xb8] sm:$0xff]
  %v51 = vld [vmem:[%s1 + $0xc0] sm:$0xff]
  %v52 = vld [vmem:[%s1 + $0xc8] sm:$0xff]
  %v53 = vld [vmem:[%s1 + $0xd0] sm:$0xff]
  %v54 = vld [vmem:[%s1 + $0xd8] sm:$0xff]
  %v55 = vld [vmem:[%s1 + $0xe0] sm:$0xff]
  %v56 = vld [vmem:[%s1 + $0xe8] sm:$0xff]
  %v57 = vld [vmem:[%s1 + $0xf0] sm:$0xff]
  %v58 = vld [vmem:[%s1 + $0xf8] sm:$0xff]
  %v59 = vld [vmem:[%s1 + $0x100] sm:$0xff]
  %v60 = vld [vmem:[%s1 + $0x108] sm:$0xff]
  %v61 = vld [vmem:[%s1 + $0x110] sm:$0xff]
  %v62 = vld [vmem:[%s1 + $0x118] sm:$0xff]
  %v63 = vld [vmem:[%s1 + $0x120] sm:$0xff]
  %v64 = vld [vmem:[%s1 + $0x128] sm:$0xff]
  %v65 = vld [vmem:[%s1 + $0x130] sm:$0xff]
  %v66 = vld [vmem:[%s1 + $0x138] sm:$0xff]
  %v67 = vld [vmem:[%s1 + $0x140] sm:$0xff]
  %v68 = vld [vmem:[%s1 + $0x148] sm:$0xff]
  %v69 = vld [vmem:[%s1 + $0x150] sm:$0xff]
  %v70 = vld [vmem:[%s1 + $0x158] sm:$0xff]
  %v71 = vld [vmem:[%s1 + $0x160] sm:$0xff]
  %v72 = vld [vmem:[%s1 + $0x168] sm:$0xff]
  %v73 = vld [vmem:[%s1 + $0x170] sm:$0xff]
  %v74 = vld [vmem:[%s1 + $0x178] sm:$0xff]
  %v75 = vld [vmem:[%s1 + $0x180] sm:$0xff]
  %v76 = vld [vmem:[%s1 + $0x188] sm:$0xff]
  %v77 = vld [vmem:[%s1 + $0x190] sm:$0xff]
  %v78 = vld [vmem:[%s1 + $0x198] sm:$0xff]
  %v79 = vld [vmem:[%s1 + $0x1a0] sm:$0xff]
  %v80 = vld [vmem:[%s1 + $0x1a8] sm:$0xff]
  %v81 = vld [vmem:[%s1 + $0x1b0] sm:$0xff]
  %v82 = vld [vmem:[%s1 + $0x1b8] sm:$0xff]
  %v83 = vld [vmem:[%s1 + $0x1c0] sm:$0xff]
  %v84 = vld [vmem:[%s1 + $0x1c8] sm:$0xff]
  %v85 = vld [vmem:[%s1 + $0x1d0] sm:$0xff]
  %v86 = vld [vmem:[%s1 + $0x1d8] sm:$0xff]
  %v87 = vld [vmem:[%s1 + $0x1e0] sm:$0xff]
  %v88 = vld [vmem:[%s1 + $0x1e8] sm:$0xff]
  %v89 = vld [vmem:[%s1 + $0x1f0] sm:$0xff]
  %v90 = vld [vmem:[%s1 + $0x1f8] sm:$0xff]
  %v91 = vld [vmem:[%s1 + $0x200] sm:$0xff]
  %v92 = vld [vmem:[%s1 + $0x208] sm:$0xff]
  %v93 = vld [vmem:[%s1 + $0x210] sm:$0xff]
  %v94 = vld [vmem:[%s1 + $0x218] sm:$0xff]
  %v95 = vld [vmem:[%s1 + $0x220] sm:$0xff]
  %v96 = vld [vmem:[%s1 + $0x228] sm:$0xff]
  %v97 = vld [vmem:[%s1 + $0x230] sm:$0xff]
  %v98 = vld [vmem:[%s1 + $0x238] sm:$0xff]
  %v99 = vld [vmem:[%s1 + $0x240] sm:$0xff]
  %v100 = vld [vmem:[%s1 + $0x248] sm:$0xff]
  %v101 = vld [vmem:[%s1 + $0x250] sm:$0xff]
  %v102 = vld [vmem:[%s1 + $0x258] sm:$0xff]
  %v103 = vld [vmem:[%s1 + $0x260] sm:$0xff]
  %v104 = vld [vmem:[%s1 + $0x268] sm:$0xff]
  %v105 = vld [vmem:[%s1 + $0x270] sm:$0xff]
  %v106 = vld [vmem:[%s1 + $0x278] sm:$0xff]
  %v107 = vld [vmem:[%s1 + $0x280] sm:$0xff]
  %v108 = vld [vmem:[%s1 + $0x288] sm:$0xff]
  %v109 = vld [vmem:[%s1 + $0x290] sm:$0xff]
  %v110 = vld [vmem:[%s1 + $0x298] sm:$0xff]
  %v111 = vld [vmem:[%s1 + $0x2a0] sm:$0xff]
  %v112 = vld [vmem:[%s1 + $0x2a8] sm:$0xff]
  %v113 = vld [vmem:[%s1 + $0x2b0] sm:$0xff]
  %v114 = vld [vmem:[%s1 + $0x2b8] sm:$0xff]
  %v115 = vld [vmem:[%s1 + $0x2c0] sm:$0xff]
  %v116 = vld [vmem:[%s1 + $0x2c8] sm:$0xff]
  %v117 = vld [vmem:[%s1 + $0x2d0] sm:$0xff]
  %v118 = vld [vmem:[%s1 + $0x2d8] sm:$0xff]
  %v119 = vld [vmem:[%s1 + $0x2e0] sm:$0xff]
  %v120 = vld [vmem:[%s1 + $0x2e8] sm:$0xff]
  %v121 = vld [vmem:[%s1 + $0x2f0] sm:$0xff]
  %v122 = vld [vmem:[%s1 + $0x2f8] sm:$0xff]
  %v123 = vld [vmem:[%s1 + $0x300] sm:$0xff]
  %v124 = vld [vmem:[%s1 + $0x308] sm:$0xff]
  %v125 = vld [vmem:[%s1 + $0x310] sm:$0xff]
  %v126 = vld [vmem:[%s1 + $0x318] sm:$0xff]
  %v127 = vld [vmem:[%s1 + $0x320] sm:$0xff]
  %v128 = vld [vmem:[%s1 + $0x328] sm:$0xff]
  %v129 = vld [vmem:[%s1 + $0x330] sm:$0xff]
  %v130 = vld [vmem:[%s1 + $0x338] sm:$0xff]
  %v131 = vld [vmem:[%s1 + $0x340] sm:$0xff]
  %v132 = vld [vmem:[%s1 + $0x348] sm:$0xff]
  %v133 = vld [vmem:[%s1 + $0x350] sm:$0xff]
  %v134 = vld [vmem:[%s1 + $0x358] sm:$0xff]
  %v135 = vld [vmem:[%s1 + $0x360] sm:$0xff]
  %v136 = vld [vmem:[%s1 + $0x368] sm:$0xff]
  %v137 = vld [vmem:[%s1 + $0x370] sm:$0xff]
  %v138 = vld [vmem:[%s1 + $0x378] sm:$0xff]
  %v139 = vld [vmem:[%s1 + $0x380] sm:$0xff]
  %v140 = vld [vmem:[%s1 + $0x388] sm:$0xff]
  %v141 = vld [vmem:[%s1 + $0x390] sm:$0xff]
  %v142 = vld [vmem:[%s1 + $0x398] sm:$0xff]
  %v143 = vld [vmem:[%s1 + $0x3a0] sm:$0xff]
  %v144 = vld [vmem:[%s1 + $0x3a8] sm:$0xff]
  %v145 = vld [vmem:[%s1 + $0x3b0] sm:$0xff]
  %v146 = vld [vmem:[%s1 + $0x3b8] sm:$0xff]
  %v147 = vld [vmem:[%s1 + $0x3c0] sm:$0xff]
  %v148 = vld [vmem:[%s1 + $0x3c8] sm:$0xff]
  %v149 = vld [vmem:[%s1 + $0x3d0] sm:$0xff]
  %v150 = vld [vmem:[%s1 + $0x3d8] sm:$0xff]
  %v151 = vld [vmem:[%s1 + $0x3e0] sm:$0xff]
  %v152 = vld [vmem:[%s1 + $0x3e8] sm:$0xff]
  %v153 = vld [vmem:[%s1 + $0x3f0] sm:$0xff]
  %v154 = vld [vmem:[%s1 + $0x3f8] sm:$0xff]
  %v155 = vld [vmem:[%s1 + $0x400] sm:$0xff]
  %v156 = vld [vmem:[%s1 + $0x408] sm:$0xff]
  %v157 = vld [vmem:[%s1 + $0x410] sm:$0xff]
  %v158 = vld [vmem:[%s1 + $0x418] sm:$0xff]
  %v159 = vld [vmem:[%s1 + $0x420] sm:$0xff]
  %v160 = vld [vmem:[%s1 + $0x428] sm:$0xff]
  %v161 = vld [vmem:[%s1 + $0x430] sm:$0xff]
  %v162 = vld [vmem:[%s1 + $0x438] sm:$0xff]
  %v163 = vld [vmem:[%s1 + $0x440] sm:$0xff]
  %v164 = vld [vmem:[%s1 + $0x448] sm:$0xff]
  %v165 = vld [vmem:[%s1 + $0x450] sm:$0xff]
  %v166 = vld [vmem:[%s1 + $0x458] sm:$0xff]
  %v167 = vld [vmem:[%s1 + $0x460] sm:$0xff]
  %v168 = vld [vmem:[%s1 + $0x468] sm:$0xff]
  %v169 = vld [vmem:[%s1 + $0x470] sm:$0xff]
  %v170 = vld [vmem:[%s1 + $0x478] sm:$0xff]
  %v171 = vld [vmem:[%s1 + $0x480] sm:$0xff]
  %v172 = vld [vmem:[%s1 + $0x488] sm:$0xff]
  %v173 = vld [vmem:[%s1 + $0x490] sm:$0xff]
  %v174 = vld [vmem:[%s1 + $0x498] sm:$0xff]
  %v175 = vld [vmem:[%s1 + $0x4a0] sm:$0xff]
  %v176 = vld [vmem:[%s1 + $0x4a8] sm:$0xff]
  %v177 = vld [vmem:[%s1 + $0x4b0] sm:$0xff]
  %v178 = vld [vmem:[%s1 + $0x4b8] sm:$0xff]
  %v179 = vld [vmem:[%s1 + $0x4c0] sm:$0xff]
  %v180 = vld [vmem:[%s1 + $0x4c8] sm:$0xff]
  %v181 = vld [vmem:[%s1 + $0x4d0] sm:$0xff]
  %v182 = vld [vmem:[%s1 + $0x4d8] sm:$0xff]
  %v183 = vld [vmem:[%s1 + $0x4e0] sm:$0xff]
  %v184 = vld [vmem:[%s1 + $0x4e8] sm:$0xff]
  %v185 = vld [vmem:[%s1 + $0x4f0] sm:$0xff]
  %v186 = vld [vmem:[%s1 + $0x4f8] sm:$0xff]
  %v187 = vld [vmem:[%s1 + $0x500] sm:$0xff]
  %v188 = vld [vmem:[%s1 + $0x508] sm:$0xff]
  %v189 = vld [vmem:[%s1 + $0x510] sm:$0xff]
  %v190 = vld [vmem:[%s1 + $0x518] sm:$0xff]
  %v191 = vld [vmem:[%s1 + $0x520] sm:$0xff]
  %v192 = vld [vmem:[%s1 + $0x528] sm:$0xff]
  %v193 = vld [vmem:[%s1 + $0x530] sm:$0xff]
  %v194 = vld [vmem:[%s1 + $0x538] sm:$0xff]
  %v195 = vld [vmem:[%s1 + $0x540] sm:$0xff]
  %v196 = vld [vmem:[%s1 + $0x548] sm:$0xff]
  %v197 = vld [vmem:[%s1 + $0x550] sm:$0xff]
  %v198 = vld [vmem:[%s1 + $0x558] sm:$0xff]
  %v199 = vld [vmem:[%s1 + $0x560] sm:$0xff]
  %v200 = vld [vmem:[%s1 + $0x568] sm:$0xff]
  %v201 = vld [vmem:[%s1 + $0x570] sm:$0xff]
  %v202 = vld [vmem:[%s1 + $0x578] sm:$0xff]
  %v203 = vld [vmem:[%s1 + $0x580] sm:$0xff]
  %v204 = vld [vmem:[%s1 + $0x588] sm:$0xff]
  %v205 = vld [vmem:[%s1 + $0x590] sm:$0xff]
  %v206 = vld [vmem:[%s1 + $0x598] sm:$0xff]
  %v207 = vld [vmem:[%s1 + $0x5a0] sm:$0xff]
  %v208 = vld [vmem:[%s1 + $0x5a8] sm:$0xff]
  %v209 = vld [vmem:[%s1 + $0x5b0] sm:$0xff]
  %v210 = vld [vmem:[%s1 + $0x5b8] sm:$0xff]
  %v211 = vld [vmem:[%s1 + $0x5c0] sm:$0xff]
  %v212 = vld [vmem:[%s1 + $0x5c8] sm:$0xff]
  %v213 = vld [vmem:[%s1 + $0x5d0] sm:$0xff]
  %v214 = vld [vmem:[%s1 + $0x5d8] sm:$0xff]
  %v215 = vld [vmem:[%s1 + $0x5e0] sm:$0xff]
  %v216 = vld [vmem:[%s1 + $0x5e8] sm:$0xff]
  %v217 = vld [vmem:[%s1 + $0x5f0] sm:$0xff]
  %v218 = vld [vmem:[%s1 + $0x5f8] sm:$0xff]
  %v219 = vld [vmem:[%s1 + $0x600] sm:$0xff]
  %v220 = vld [vmem:[%s1 + $0x608] sm:$0xff]
  %v221 = vld [vmem:[%s1 + $0x610] sm:$0xff]
  %v222 = vld [vmem:[%s1 + $0x618] sm:$0xff]
  %v223 = vld [vmem:[%s1 + $0x620] sm:$0xff]
  %v224 = vld [vmem:[%s1 + $0x628] sm:$0xff]
  %v225 = vld [vmem:[%s1 + $0x630] sm:$0xff]
  %v226 = vld [vmem:[%s1 + $0x638] sm:$0xff]
  %v227 = vld [vmem:[%s1 + $0x640] sm:$0xff]
  %v228 = vld [vmem:[%s1 + $0x648] sm:$0xff]
  %v229 = vld [vmem:[%s1 + $0x650] sm:$0xff]
  %v230 = vld [vmem:[%s1 + $0x658] sm:$0xff]
  %v231 = vld [vmem:[%s1 + $0x660] sm:$0xff]
  %v232 = vld [vmem:[%s1 + $0x668] sm:$0xff]
  %v233 = vld [vmem:[%s1 + $0x670] sm:$0xff]
  %v234 = vld [vmem:[%s1 + $0x678] sm:$0xff]
  %v235 = vld [vmem:[%s1 + $0x680] sm:$0xff]
  %v236 = vld [vmem:[%s1 + $0x688] sm:$0xff]
  %v237 = vld [vmem:[%s1 + $0x690] sm:$0xff]
  %v238 = vld [vmem:[%s1 + $0x698] sm:$0xff]
  %v239 = vld [vmem:[%s1 + $0x6a0] sm:$0xff]
  %v240 = vld [vmem:[%s1 + $0x6a8] sm:$0xff]
  %v241 = vld [vmem:[%s1 + $0x6b0] sm:$0xff]
  %v242 = vld [vmem:[%s1 + $0x6b8] sm:$0xff]
  %v243 = vld [vmem:[%s1 + $0x6c0] sm:$0xff]
  %v244 = vld [vmem:[%s1 + $0x6c8] sm:$0xff]
  %v245 = vld [vmem:[%s1 + $0x6d0] sm:$0xff]
  %v246 = vld [vmem:[%s1 + $0x6d8] sm:$0xff]
  %v247 = vld [vmem:[%s1 + $0x6e0] sm:$0xff]
  %v248 = vld [vmem:[%s1 + $0x6e8] sm:$0xff]
  %v249 = vld [vmem:[%s1 + $0x6f0] sm:$0xff]
  %v250 = vld [vmem:[%s1 + $0x6f8] sm:$0xff]
  %v251 = vld [vmem:[%s1 + $0x700] sm:$0xff]
  %v252 = vld [vmem:[%s1 + $0x708] sm:$0xff]
  %v253 = vld [vmem:[%s1 + $0x710] sm:$0xff]
  %v254 = vld [vmem:[%s1 + $0x718] sm:$0xff]
  %v255 = vld [vmem:[%s1 + $0x720] sm:$0xff]
  %v256 = vld [vmem:[%s1 + $0x728] sm:$0xff]
  %v257 = vld [vmem:[%s1 + $0x730] sm:$0xff]
  %v258 = vld [vmem:[%s1 + $0x738] sm:$0xff]
  %v259 = vld [vmem:[%s1 + $0x740] sm:$0xff]
  %v260 = vld [vmem:[%s1 + $0x748] sm:$0xff]
  %v261 = vld [vmem:[%s1 + $0x750] sm:$0xff]
  %v262 = vld [vmem:[%s1 + $0x758] sm:$0xff]
  %v263 = vld [vmem:[%s1 + $0x760] sm:$0xff]
  %v264 = vld [vmem:[%s1 + $0x768] sm:$0xff]
  %v265 = vld [vmem:[%s1 + $0x770] sm:$0xff]
  %v266 = vld [vmem:[%s1 + $0x778] sm:$0xff]
  %v267 = vld [vmem:[%s1 + $0x780] sm:$0xff]
  %v268 = vld [vmem:[%s1 + $0x788] sm:$0xff]
  %v269 = vld [vmem:[%s1 + $0x790] sm:$0xff]
  %v270 = vld [vmem:[%s1 + $0x798] sm:$0xff]
  %v271 = vld [vmem:[%s1 + $0x7a0] sm:$0xff]
  %v272 = vld [vmem:[%s1 + $0x7a8] sm:$0xff]
  %v273 = vld [vmem:[%s1 + $0x7b0] sm:$0xff]
  %v274 = vld [vmem:[%s1 + $0x7b8] sm:$0xff]
  %v275 = vld [vmem:[%s1 + $0x7c0] sm:$0xff]
  %v276 = vld [vmem:[%s1 + $0x7c8] sm:$0xff]
  %v277 = vld [vmem:[%s1 + $0x7d0] sm:$0xff]
  %v278 = vld [vmem:[%s1 + $0x7d8] sm:$0xff]
  %v279 = vld [vmem:[%s1 + $0x7e0] sm:$0xff]
  %v280 = vld [vmem:[%s1 + $0x7e8] sm:$0xff]
  %v281 = vld [vmem:[%s1 + $0x7f0] sm:$0xff]
  %v282 = vld [vmem:[%s1 + $0x7f8] sm:$0xff]
  %v283 = vld [vmem:[%s1 + $0x800] sm:$0xff]
  %v284 = vld [vmem:[%s1 + $0x808] sm:$0xff]
  %v285 = vld [vmem:[%s1 + $0x810] sm:$0xff]
  %v286 = vld [vmem:[%s1 + $0x818] sm:$0xff]
  %v287 = vld [vmem:[%s1 + $0x820] sm:$0xff]
  %v288 = vld [vmem:[%s1 + $0x828] sm:$0xff]
  %v289 = vld [vmem:[%s1 + $0x830] sm:$0xff]
  %v290 = vld [vmem:[%s1 + $0x838] sm:$0xff]
  %v291 = vld [vmem:[%s1 + $0x840] sm:$0xff]
  %v292 = vld [vmem:[%s1 + $0x848] sm:$0xff]
  %v293 = vld [vmem:[%s1 + $0x850] sm:$0xff]
  %v294 = vld [vmem:[%s1 + $0x858] sm:$0xff]
  %v295 = vld [vmem:[%s1 + $0x860] sm:$0xff]
  %v296 = vld [vmem:[%s1 + $0x868] sm:$0xff]
  %v297 = vld [vmem:[%s1 + $0x870] sm:$0xff]
  %v298 = vld [vmem:[%s1 + $0x878] sm:$0xff]
  %v299 = vld [vmem:[%s1 + $0x880] sm:$0xff]
  %v300 = vld [vmem:[%s1 + $0x888] sm:$0xff]
  %v301 = vld [vmem:[%s1 + $0x890] sm:$0xff]
  %v302 = vld [vmem:[%s1 + $0x898] sm:$0xff]
  %v303 = vld [vmem:[%s1 + $0x8a0] sm:$0xff]
  %v304 = vld [vmem:[%s1 + $0x8a8] sm:$0xff]
  %v305 = vld [vmem:[%s1 + $0x8b0] sm:$0xff]
  %v306 = vld [vmem:[%s1 + $0x8b8] sm:$0xff]
  %v307 = vld [vmem:[%s1 + $0x8c0] sm:$0xff]
  %v308 = vld [vmem:[%s1 + $0x8c8] sm:$0xff]
  %v309 = vld [vmem:[%s1 + $0x8d0] sm:$0xff]
  %v310 = vld [vmem:[%s1 + $0x8d8] sm:$0xff]
  %v311 = vld [vmem:[%s1 + $0x8e0] sm:$0xff]
  %v312 = vld [vmem:[%s1 + $0x8e8] sm:$0xff]
  %v313 = vld [vmem:[%s1 + $0x8f0] sm:$0xff]
  %v314 = vld [vmem:[%s1 + $0x8f8] sm:$0xff]
  %v315 = vld [vmem:[%s1 + $0x900] sm:$0xff]
  %v316 = vld [vmem:[%s1 + $0x908] sm:$0xff]
  %v317 = vld [vmem:[%s1 + $0x910] sm:$0xff]
  %v318 = vld [vmem:[%s1 + $0x918] sm:$0xff]
  %v319 = vld [vmem:[%s1 + $0x920] sm:$0xff]
  %v320 = vld [vmem:[%s1 + $0x928] sm:$0xff]
  %v321 = vld [vmem:[%s1 + $0x930] sm:$0xff]
  %v322 = vld [vmem:[%s1 + $0x938] sm:$0xff]
  %v323 = vld [vmem:[%s1 + $0x940] sm:$0xff]
  %v324 = vld [vmem:[%s1 + $0x948] sm:$0xff]
  %v325 = vld [vmem:[%s1 + $0x950] sm:$0xff]
  %v326 = vld [vmem:[%s1 + $0x958] sm:$0xff]
  %v327 = vld [vmem:[%s1 + $0x960] sm:$0xff]
  %v328 = vld [vmem:[%s1 + $0x968] sm:$0xff]
  %v329 = vld [vmem:[%s1 + $0x970] sm:$0xff]
  %v330 = vld [vmem:[%s1 + $0x978] sm:$0xff]
  %v331 = vld [vmem:[%s1 + $0x980] sm:$0xff]
  %v332 = vld [vmem:[%s1 + $0x988] sm:$0xff]
  %v333 = vld [vmem:[%s1 + $0x990] sm:$0xff]
  %v334 = vld [vmem:[%s1 + $0x998] sm:$0xff]
  %v335 = vld [vmem:[%s1 + $0x9a0] sm:$0xff]
  %v336 = vld [vmem:[%s1 + $0x9a8] sm:$0xff]
  %v337 = vld [vmem:[%s1 + $0x9b0] sm:$0xff]
  %v338 = vld [vmem:[%s1 + $0x9b8] sm:$0xff]
  %v339 = vld [vmem:[%s1 + $0x9c0] sm:$0xff]
  %v340 = vld [vmem:[%s1 + $0x9c8] sm:$0xff]
  %v341 = vld [vmem:[%s1 + $0x9d0] sm:$0xff]
  %v342 = vld [vmem:[%s1 + $0x9d8] sm:$0xff]
  %v343 = vld [vmem:[%s1 + $0x9e0] sm:$0xff]
  %v344 = vld [vmem:[%s1 + $0x9e8] sm:$0xff]
  %v345 = vld [vmem:[%s1 + $0x9f0] sm:$0xff]
  %v346 = vld [vmem:[%s1 + $0x9f8] sm:$0xff]
  %v347 = vld [vmem:[%s1 + $0xa00] sm:$0xff]
  %v348 = vld [vmem:[%s1 + $0xa08] sm:$0xff]
  %v349 = vld [vmem:[%s1 + $0xa10] sm:$0xff]
  %v350 = vld [vmem:[%s1 + $0xa18] sm:$0xff]
  %v351 = vld [vmem:[%s1 + $0xa20] sm:$0xff]
  %v352 = vld [vmem:[%s1 + $0xa28] sm:$0xff]
  %v353 = vld [vmem:[%s1 + $0xa30] sm:$0xff]
  %v354 = vld [vmem:[%s1 + $0xa38] sm:$0xff]
  %v355 = vld [vmem:[%s1 + $0xa40] sm:$0xff]
  %v356 = vld [vmem:[%s1 + $0xa48] sm:$0xff]
  %v357 = vld [vmem:[%s1 + $0xa50] sm:$0xff]
  %v358 = vld [vmem:[%s1 + $0xa58] sm:$0xff]
  %v359 = vld [vmem:[%s1 + $0xa60] sm:$0xff]
  %v360 = vld [vmem:[%s1 + $0xa68] sm:$0xff]
  %v361 = vld [vmem:[%s1 + $0xa70] sm:$0xff]
  %v362 = vld [vmem:[%s1 + $0xa78] sm:$0xff]
  %v363 = vld [vmem:[%s1 + $0xa80] sm:$0xff]
  %v364 = vld [vmem:[%s1 + $0xa88] sm:$0xff]
  %v365 = vld [vmem:[%s1 + $0xa90] sm:$0xff]
  %v366 = vld [vmem:[%s1 + $0xa98] sm:$0xff]
  %v367 = vld [vmem:[%s1 + $0xaa0] sm:$0xff]
  %v368 = vld [vmem:[%s1 + $0xaa8] sm:$0xff]
  %v369 = vld [vmem:[%s1 + $0xab0] sm:$0xff]
  %v370 = vld [vmem:[%s1 + $0xab8] sm:$0xff]
  %v371 = vld [vmem:[%s1 + $0xac0] sm:$0xff]
  %v372 = vld [vmem:[%s1 + $0xac8] sm:$0xff]
  %v373 = vld [vmem:[%s1 + $0xad0] sm:$0xff]
  %v374 = vld [vmem:[%s1 + $0xad8] sm:$0xff]
  %v375 = vld [vmem:[%s1 + $0xae0] sm:$0xff]
  %v376 = vld [vmem:[%s1 + $0xae8] sm:$0xff]
  %v377 = vld [vmem:[%s1 + $0xaf0] sm:$0xff]
  %v378 = vld [vmem:[%s1 + $0xaf8] sm:$0xff]
  %v379 = vld [vmem:[%s1 + $0xb00] sm:$0xff]
  %v380 = vld [vmem:[%s1 + $0xb08] sm:$0xff]
  %v381 = vld [vmem:[%s1 + $0xb10] sm:$0xff]
  %v382 = vld [vmem:[%s1 + $0xb18] sm:$0xff]
  %v383 = vld [vmem:[%s1 + $0xb20] sm:$0xff]
  %v384 = vld [vmem:[%s1 + $0xb28] sm:$0xff]
  %v385 = vld [vmem:[%s1 + $0xb30] sm:$0xff]
  %v386 = vld [vmem:[%s1 + $0xb38] sm:$0xff]
  %v387 = vld [vmem:[%s1 + $0xb40] sm:$0xff]
  %v388 = vld [vmem:[%s1 + $0xb48] sm:$0xff]
  %v389 = vld [vmem:[%s1 + $0xb50] sm:$0xff]
  %v390 = vld [vmem:[%s1 + $0xb58] sm:$0xff]
  %v391 = vld [vmem:[%s1 + $0xb60] sm:$0xff]
  %v392 = vld [vmem:[%s1 + $0xb68] sm:$0xff]
  %v393 = vld [vmem:[%s1 + $0xb70] sm:$0xff]
  %v394 = vld [vmem:[%s1 + $0xb78] sm:$0xff]
  %v395 = vld [vmem:[%s1 + $0xb80] sm:$0xff]
  %v396 = vld [vmem:[%s1 + $0xb88] sm:$0xff]
  %v397 = vld [vmem:[%s1 + $0xb90] sm:$0xff]
  %v398 = vld [vmem:[%s1 + $0xb98] sm:$0xff]
  %v399 = vld [vmem:[%s1 + $0xba0] sm:$0xff]
  %v400 = vld [vmem:[%s1 + $0xba8] sm:$0xff]
  %v401 = vld [vmem:[%s1 + $0xbb0] sm:$0xff]
  %v402 = vld [vmem:[%s1 + $0xbb8] sm:$0xff]
  %v403 = vld [vmem:[%s1 + $0xbc0] sm:$0xff]
  %v404 = vld [vmem:[%s1 + $0xbc8] sm:$0xff]
  %v405 = vld [vmem:[%s1 + $0xbd0] sm:$0xff]
  %v406 = vld [vmem:[%s1 + $0xbd8] sm:$0xff]
  %v407 = vld [vmem:[%s1 + $0xbe0] sm:$0xff]
  %v408 = vld [vmem:[%s1 + $0xbe8] sm:$0xff]
  %v409 = vld [vmem:[%s1 + $0xbf0] sm:$0xff]
  %v410 = vld [vmem:[%s1 + $0xbf8] sm:$0xff]
  %v411 = vld [vmem:[%s1 + $0xc00] sm:$0xff]
  %v412 = vld [vmem:[%s1 + $0xc08] sm:$0xff]
  %v413 = vld [vmem:[%s1 + $0xc10] sm:$0xff]
  %v414 = vld [vmem:[%s1 + $0xc18] sm:$0xff]
  %v415 = vld [vmem:[%s1 + $0xc20] sm:$0xff]
  %v416 = vld [vmem:[%s1 + $0xc28] sm:$0xff]
  %v417 = vld [vmem:[%s1 + $0xc30] sm:$0xff]
  %v418 = vld [vmem:[%s1 + $0xc38] sm:$0xff]
  %v419 = vld [vmem:[%s2] sm:$0xff]
  %v421 = vlaneseq
  %v422 = vshrl.u32 %v421, 7
  %v423 = vsub.s32 0, %v422
  %v424 = vrot.slane %v419, %v423
  %v425 = vlaneseq
  %v426 = vshrl.u32 %v425, 7
  %v427 = vsub.s32 1, %v426
  %v428 = vrot.slane %v419, %v427
  %v429 = vlaneseq
  %v430 = vshrl.u32 %v429, 7
  %v431 = vsub.s32 2, %v430
  %v432 = vrot.slane %v419, %v431
  %v433 = vlaneseq
  %v434 = vshrl.u32 %v433, 7
  %v435 = vsub.s32 3, %v434
  %v436 = vrot.slane %v419, %v435
  %v437 = vlaneseq
  %v438 = vshrl.u32 %v437, 7
  %v439 = vsub.s32 4, %v438
  %v440 = vrot.slane %v419, %v439
  %v441 = vlaneseq
  %v442 = vshrl.u32 %v441, 7
  %v443 = vsub.s32 5, %v442
  %v444 = vrot.slane %v419, %v443
  %v445 = vlaneseq
  %v446 = vshrl.u32 %v445, 7
  %v447 = vsub.s32 6, %v446
  %v448 = vrot.slane %v419, %v447
  %v449 = vlaneseq
  %v450 = vshrl.u32 %v449, 7
  %v451 = vsub.s32 7, %v450
  %v452 = vrot.slane %v419, %v451
  %v465 = vunpack.c.l.b16 %v23
  %v466 = vunpack.c.h.b16 %v23
  %v467 = vunpack.c.l.b16 %v24
  %v468 = vunpack.c.h.b16 %v24
  %v469 = vunpack.c.l.b16 %v25
  %v470 = vunpack.c.h.b16 %v25
  %v471 = vunpack.c.l.b16 %v26
  %v472 = vpack.c.b16 %v465, %v465
  %v473 = vpack.c.b16 %v466, %v466
  %v474 = vpack.c.b16 %v467, %v467
  %v475 = vpack.c.b16 %v468, %v468
  %v476 = vpack.c.b16 %v469, %v469
  %v477 = vpack.c.b16 %v470, %v470
  %v478 = vpack.c.b16 %v471, %v471
  %v877 = vunpack.c.l.b16 %v27
  %v878 = vunpack.c.h.b16 %v27
  %v879 = vunpack.c.l.b16 %v28
  %v880 = vunpack.c.h.b16 %v28
  %v881 = vunpack.c.l.b16 %v29
  %v882 = vunpack.c.h.b16 %v29
  %v883 = vunpack.c.l.b16 %v30
  %v884 = vunpack.c.h.b16 %v30
  %v885 = vunpack.c.l.b16 %v31
  %v886 = vunpack.c.h.b16 %v31
  %v887 = vunpack.c.l.b16 %v32
  %v888 = vunpack.c.h.b16 %v32
  %v889 = vunpack.c.l.b16 %v33
  %v890 = vunpack.c.h.b16 %v33
  %v891 = vunpack.c.l.b16 %v34
  %v892 = vunpack.c.h.b16 %v34
  %v893 = vunpack.c.l.b16 %v35
  %v894 = vunpack.c.h.b16 %v35
  %v895 = vunpack.c.l.b16 %v36
  %v896 = vunpack.c.h.b16 %v36
  %v897 = vunpack.c.l.b16 %v37
  %v898 = vunpack.c.h.b16 %v37
  %v899 = vunpack.c.l.b16 %v38
  %v900 = vunpack.c.h.b16 %v38
  %v901 = vunpack.c.l.b16 %v39
  %v902 = vunpack.c.h.b16 %v39
  %v903 = vunpack.c.l.b16 %v40
  %v904 = vunpack.c.h.b16 %v40
  %v905 = vunpack.c.l.b16 %v41
  %v906 = vunpack.c.h.b16 %v41
  %v907 = vunpack.c.l.b16 %v42
  %v908 = vunpack.c.h.b16 %v42
  %v909 = vunpack.c.l.b16 %v43
  %v910 = vunpack.c.h.b16 %v43
  %v911 = vunpack.c.l.b16 %v44
  %v912 = vunpack.c.h.b16 %v44
  %v913 = vunpack.c.l.b16 %v45
  %v914 = vunpack.c.h.b16 %v45
  %v915 = vunpack.c.l.b16 %v46
  %v916 = vunpack.c.h.b16 %v46
  %v917 = vunpack.c.l.b16 %v47
  %v918 = vunpack.c.h.b16 %v47
  %v919 = vunpack.c.l.b16 %v48
  %v920 = vunpack.c.h.b16 %v48
  %v921 = vunpack.c.l.b16 %v49
  %v922 = vunpack.c.h.b16 %v49
  %v923 = vunpack.c.l.b16 %v50
  %v924 = vunpack.c.h.b16 %v50
  %v925 = vunpack.c.l.b16 %v51
  %v926 = vunpack.c.h.b16 %v51
  %v927 = vunpack.c.l.b16 %v52
  %v928 = vunpack.c.h.b16 %v52
  %v929 = vunpack.c.l.b16 %v53
  %v930 = vunpack.c.h.b16 %v53
  %v931 = vunpack.c.l.b16 %v54
  %v932 = vunpack.c.h.b16 %v54
  %v933 = vunpack.c.l.b16 %v55
  %v934 = vunpack.c.h.b16 %v55
  %v935 = vunpack.c.l.b16 %v56
  %v936 = vunpack.c.h.b16 %v56
  %v937 = vunpack.c.l.b16 %v57
  %v938 = vunpack.c.h.b16 %v57
  %v939 = vunpack.c.l.b16 %v58
  %v940 = vunpack.c.h.b16 %v58
  %v941 = vunpack.c.l.b16 %v59
  %v942 = vunpack.c.h.b16 %v59
  %v943 = vunpack.c.l.b16 %v60
  %v944 = vunpack.c.h.b16 %v60
  %v945 = vunpack.c.l.b16 %v61
  %v946 = vunpack.c.h.b16 %v61
  %v947 = vunpack.c.l.b16 %v62
  %v948 = vunpack.c.h.b16 %v62
  %v949 = vunpack.c.l.b16 %v63
  %v950 = vunpack.c.h.b16 %v63
  %v951 = vunpack.c.l.b16 %v64
  %v952 = vunpack.c.h.b16 %v64
  %v953 = vunpack.c.l.b16 %v65
  %v954 = vunpack.c.h.b16 %v65
  %v955 = vunpack.c.l.b16 %v66
  %v956 = vunpack.c.h.b16 %v66
  %v957 = vunpack.c.l.b16 %v67
  %v958 = vunpack.c.h.b16 %v67
  %v959 = vunpack.c.l.b16 %v68
  %v960 = vunpack.c.h.b16 %v68
  %v961 = vunpack.c.l.b16 %v69
  %v962 = vunpack.c.h.b16 %v69
  %v963 = vunpack.c.l.b16 %v70
  %v964 = vunpack.c.h.b16 %v70
  %v965 = vunpack.c.l.b16 %v71
  %v966 = vunpack.c.h.b16 %v71
  %v967 = vunpack.c.l.b16 %v72
  %v968 = vunpack.c.h.b16 %v72
  %v969 = vunpack.c.l.b16 %v73
  %v970 = vunpack.c.h.b16 %v73
  %v971 = vunpack.c.l.b16 %v74
  %v972 = vunpack.c.h.b16 %v74
  %v973 = vunpack.c.l.b16 %v75
  %v974 = vunpack.c.h.b16 %v75
  %v975 = vunpack.c.l.b16 %v76
  %v976 = vunpack.c.h.b16 %v76
  %v977 = vunpack.c.l.b16 %v77
  %v978 = vunpack.c.h.b16 %v77
  %v979 = vunpack.c.l.b16 %v78
  %v980 = vunpack.c.h.b16 %v78
  %v981 = vunpack.c.l.b16 %v79
  %v982 = vunpack.c.h.b16 %v79
  %v983 = vunpack.c.l.b16 %v80
  %v984 = vunpack.c.h.b16 %v80
  %v985 = vunpack.c.l.b16 %v81
  %v986 = vunpack.c.h.b16 %v81
  %v987 = vunpack.c.l.b16 %v82
  %v988 = vunpack.c.h.b16 %v82
  %v989 = vunpack.c.l.b16 %v83
  %v990 = vunpack.c.h.b16 %v83
  %v991 = vunpack.c.l.b16 %v84
  %v992 = vunpack.c.h.b16 %v84
  %v993 = vunpack.c.l.b16 %v85
  %v994 = vunpack.c.h.b16 %v85
  %v995 = vunpack.c.l.b16 %v86
  %v996 = vunpack.c.h.b16 %v86
  %v997 = vunpack.c.l.b16 %v87
  %v998 = vunpack.c.h.b16 %v87
  %v999 = vunpack.c.l.b16 %v88
  %v1000 = vunpack.c.h.b16 %v88
  %v1001 = vunpack.c.l.b16 %v89
  %v1002 = vunpack.c.h.b16 %v89
  %v1003 = vunpack.c.l.b16 %v90
  %v1004 = vunpack.c.h.b16 %v90
  %v1005 = vunpack.c.l.b16 %v91
  %v1006 = vunpack.c.h.b16 %v91
  %v1007 = vunpack.c.l.b16 %v92
  %v1008 = vunpack.c.h.b16 %v92
  %v1009 = vunpack.c.l.b16 %v93
  %v1010 = vunpack.c.h.b16 %v93
  %v1011 = vunpack.c.l.b16 %v94
  %v1012 = vunpack.c.h.b16 %v94
  %v1013 = vunpack.c.l.b16 %v95
  %v1014 = vunpack.c.h.b16 %v95
  %v1015 = vunpack.c.l.b16 %v96
  %v1016 = vunpack.c.h.b16 %v96
  %v1017 = vunpack.c.l.b16 %v97
  %v1018 = vunpack.c.h.b16 %v97
  %v1019 = vunpack.c.l.b16 %v98
  %v1020 = vunpack.c.h.b16 %v98
  %v1021 = vunpack.c.l.b16 %v99
  %v1022 = vunpack.c.h.b16 %v99
  %v1023 = vunpack.c.l.b16 %v100
  %v1024 = vunpack.c.h.b16 %v100
  %v1025 = vunpack.c.l.b16 %v101
  %v1026 = vunpack.c.h.b16 %v101
  %v1027 = vunpack.c.l.b16 %v102
  %v1028 = vunpack.c.h.b16 %v102
  %v1029 = vunpack.c.l.b16 %v103
  %v1030 = vunpack.c.h.b16 %v103
  %v1031 = vunpack.c.l.b16 %v104
  %v1032 = vunpack.c.h.b16 %v104
  %v1033 = vunpack.c.l.b16 %v105
  %v1034 = vunpack.c.h.b16 %v105
  %v1035 = vunpack.c.l.b16 %v106
  %v1036 = vunpack.c.h.b16 %v106
  %v1037 = vunpack.c.l.b16 %v107
  %v1038 = vunpack.c.h.b16 %v107
  %v1039 = vunpack.c.l.b16 %v108
  %v1040 = vunpack.c.h.b16 %v108
  %v1041 = vunpack.c.l.b16 %v109
  %v1042 = vunpack.c.h.b16 %v109
  %v1043 = vunpack.c.l.b16 %v110
  %v1044 = vunpack.c.h.b16 %v110
  %v1045 = vunpack.c.l.b16 %v111
  %v1046 = vunpack.c.h.b16 %v111
  %v1047 = vunpack.c.l.b16 %v112
  %v1048 = vunpack.c.h.b16 %v112
  %v1049 = vunpack.c.l.b16 %v113
  %v1050 = vunpack.c.h.b16 %v113
  %v1051 = vunpack.c.l.b16 %v114
  %v1052 = vunpack.c.h.b16 %v114
  %v1053 = vunpack.c.l.b16 %v115
  %v1054 = vunpack.c.h.b16 %v115
  %v1055 = vunpack.c.l.b16 %v116
  %v1056 = vunpack.c.h.b16 %v116
  %v1057 = vunpack.c.l.b16 %v117
  %v1058 = vunpack.c.h.b16 %v117
  %v1059 = vunpack.c.l.b16 %v118
  %v1060 = vunpack.c.h.b16 %v118
  %v1061 = vunpack.c.l.b16 %v119
  %v1062 = vunpack.c.h.b16 %v119
  %v1063 = vunpack.c.l.b16 %v120
  %v1064 = vunpack.c.h.b16 %v120
  %v1065 = vunpack.c.l.b16 %v121
  %v1066 = vunpack.c.h.b16 %v121
  %v1067 = vunpack.c.l.b16 %v122
  %v1068 = vunpack.c.h.b16 %v122
  %v1069 = vunpack.c.l.b16 %v123
  %v1070 = vunpack.c.h.b16 %v123
  %v1071 = vunpack.c.l.b16 %v124
  %v1072 = vunpack.c.h.b16 %v124
  %v1073 = vunpack.c.l.b16 %v125
  %v1074 = vunpack.c.h.b16 %v125
  %v1075 = vunpack.c.l.b16 %v126
  %v1076 = vunpack.c.h.b16 %v126
  %v1077 = vunpack.c.l.b16 %v127
  %v1078 = vunpack.c.h.b16 %v127
  %v1079 = vunpack.c.l.b16 %v128
  %v1080 = vunpack.c.h.b16 %v128
  %v1081 = vunpack.c.l.b16 %v129
  %v1082 = vunpack.c.h.b16 %v129
  %v1083 = vunpack.c.l.b16 %v130
  %v1084 = vunpack.c.h.b16 %v130
  %v1085 = vunpack.c.l.b16 %v131
  %v1086 = vunpack.c.h.b16 %v131
  %v1087 = vunpack.c.l.b16 %v132
  %v1088 = vunpack.c.h.b16 %v132
  %v1089 = vunpack.c.l.b16 %v133
  %v1090 = vunpack.c.h.b16 %v133
  %v1091 = vunpack.c.l.b16 %v134
  %v1092 = vunpack.c.h.b16 %v134
  %v1093 = vunpack.c.l.b16 %v135
  %v1094 = vunpack.c.h.b16 %v135
  %v1095 = vunpack.c.l.b16 %v136
  %v1096 = vunpack.c.h.b16 %v136
  %v1097 = vunpack.c.l.b16 %v137
  %v1098 = vunpack.c.h.b16 %v137
  %v1099 = vunpack.c.l.b16 %v138
  %v1100 = vunpack.c.h.b16 %v138
  %v1101 = vunpack.c.l.b16 %v139
  %v1102 = vunpack.c.h.b16 %v139
  %v1103 = vunpack.c.l.b16 %v140
  %v1104 = vunpack.c.h.b16 %v140
  %v1105 = vunpack.c.l.b16 %v141
  %v1106 = vunpack.c.h.b16 %v141
  %v1107 = vunpack.c.l.b16 %v142
  %v1108 = vunpack.c.h.b16 %v142
  %v1109 = vunpack.c.l.b16 %v143
  %v1110 = vunpack.c.h.b16 %v143
  %v1111 = vunpack.c.l.b16 %v144
  %v1112 = vunpack.c.h.b16 %v144
  %v1113 = vunpack.c.l.b16 %v145
  %v1114 = vunpack.c.h.b16 %v145
  %v1115 = vunpack.c.l.b16 %v146
  %v1116 = vunpack.c.h.b16 %v146
  %v1117 = vunpack.c.l.b16 %v147
  %v1118 = vunpack.c.h.b16 %v147
  %v1119 = vunpack.c.l.b16 %v148
  %v1120 = vunpack.c.h.b16 %v148
  %v1121 = vunpack.c.l.b16 %v149
  %v1122 = vunpack.c.h.b16 %v149
  %v1123 = vunpack.c.l.b16 %v150
  %v1124 = vunpack.c.h.b16 %v150
  %v1125 = vunpack.c.l.b16 %v151
  %v1126 = vunpack.c.h.b16 %v151
  %v1127 = vunpack.c.l.b16 %v152
  %v1128 = vunpack.c.h.b16 %v152
  %v1129 = vunpack.c.l.b16 %v153
  %v1130 = vunpack.c.h.b16 %v153
  %v1131 = vunpack.c.l.b16 %v154
  %v1132 = vunpack.c.h.b16 %v154
  %v1133 = vunpack.c.l.b16 %v155
  %v1134 = vunpack.c.h.b16 %v155
  %v1135 = vunpack.c.l.b16 %v156
  %v1136 = vunpack.c.h.b16 %v156
  %v1137 = vunpack.c.l.b16 %v157
  %v1138 = vunpack.c.h.b16 %v157
  %v1139 = vunpack.c.l.b16 %v158
  %v1140 = vunpack.c.h.b16 %v158
  %v1141 = vunpack.c.l.b16 %v159
  %v1142 = vunpack.c.h.b16 %v159
  %v1143 = vunpack.c.l.b16 %v160
  %v1144 = vunpack.c.h.b16 %v160
  %v1145 = vunpack.c.l.b16 %v161
  %v1146 = vunpack.c.h.b16 %v161
  %v1147 = vunpack.c.l.b16 %v162
  %v1148 = vunpack.c.h.b16 %v162
  %v1149 = vunpack.c.l.b16 %v163
  %v1150 = vunpack.c.h.b16 %v163
  %v1151 = vunpack.c.l.b16 %v164
  %v1152 = vunpack.c.h.b16 %v164
  %v1153 = vunpack.c.l.b16 %v165
  %v1154 = vunpack.c.h.b16 %v165
  %v1155 = vunpack.c.l.b16 %v166
  %v1156 = vunpack.c.h.b16 %v166
  %v1157 = vunpack.c.l.b16 %v167
  %v1158 = vunpack.c.h.b16 %v167
  %v1159 = vunpack.c.l.b16 %v168
  %v1160 = vunpack.c.h.b16 %v168
  %v1161 = vunpack.c.l.b16 %v169
  %v1162 = vunpack.c.h.b16 %v169
  %v1163 = vunpack.c.l.b16 %v170
  %v1164 = vunpack.c.h.b16 %v170
  %v1165 = vunpack.c.l.b16 %v171
  %v1166 = vunpack.c.h.b16 %v171
  %v1167 = vunpack.c.l.b16 %v172
  %v1168 = vunpack.c.h.b16 %v172
  %v1169 = vunpack.c.l.b16 %v173
  %v1170 = vunpack.c.h.b16 %v173
  %v1171 = vunpack.c.l.b16 %v174
  %v1172 = vunpack.c.h.b16 %v174
  %v1173 = vunpack.c.l.b16 %v175
  %v1174 = vunpack.c.h.b16 %v175
  %v1175 = vunpack.c.l.b16 %v176
  %v1176 = vunpack.c.h.b16 %v176
  %v1177 = vunpack.c.l.b16 %v177
  %v1178 = vunpack.c.h.b16 %v177
  %v1179 = vunpack.c.l.b16 %v178
  %v1180 = vunpack.c.h.b16 %v178
  %v1181 = vunpack.c.l.b16 %v179
  %v1182 = vunpack.c.h.b16 %v179
  %v1183 = vunpack.c.l.b16 %v180
  %v1184 = vunpack.c.h.b16 %v180
  %v1185 = vunpack.c.l.b16 %v181
  %v1186 = vunpack.c.h.b16 %v181
  %v1187 = vunpack.c.l.b16 %v182
  %v1188 = vunpack.c.h.b16 %v182
  %v1189 = vunpack.c.l.b16 %v183
  %v1190 = vunpack.c.h.b16 %v183
  %v1191 = vunpack.c.l.b16 %v184
  %v1192 = vunpack.c.h.b16 %v184
  %v1193 = vunpack.c.l.b16 %v185
  %v1194 = vunpack.c.h.b16 %v185
  %v1195 = vunpack.c.l.b16 %v186
  %v1196 = vunpack.c.h.b16 %v186
  %v1197 = vunpack.c.l.b16 %v187
  %v1198 = vunpack.c.h.b16 %v187
  %v1199 = vunpack.c.l.b16 %v188
  %v1200 = vunpack.c.h.b16 %v188
  %v1201 = vunpack.c.l.b16 %v189
  %v1202 = vunpack.c.h.b16 %v189
  %v1203 = vunpack.c.l.b16 %v190
  %v1204 = vunpack.c.h.b16 %v190
  %v1205 = vunpack.c.l.b16 %v191
  %v1206 = vunpack.c.h.b16 %v191
  %v1207 = vunpack.c.l.b16 %v192
  %v1208 = vunpack.c.h.b16 %v192
  %v1209 = vunpack.c.l.b16 %v193
  %v1210 = vunpack.c.h.b16 %v193
  %v1211 = vunpack.c.l.b16 %v194
  %v1212 = vunpack.c.h.b16 %v194
  %v1213 = vunpack.c.l.b16 %v195
  %v1214 = vunpack.c.h.b16 %v195
  %v1215 = vunpack.c.l.b16 %v196
  %v1216 = vunpack.c.h.b16 %v196
  %v1217 = vunpack.c.l.b16 %v197
  %v1218 = vunpack.c.h.b16 %v197
  %v1219 = vunpack.c.l.b16 %v198
  %v1220 = vunpack.c.h.b16 %v198
  %v1221 = vunpack.c.l.b16 %v199
  %v1222 = vunpack.c.h.b16 %v199
  %v1223 = vunpack.c.l.b16 %v200
  %v1224 = vunpack.c.h.b16 %v200
  %v1225 = vunpack.c.l.b16 %v201
  %v1226 = vunpack.c.h.b16 %v201
  %v1227 = vunpack.c.l.b16 %v202
  %v1228 = vunpack.c.h.b16 %v202
  %v1229 = vunpack.c.l.b16 %v203
  %v1230 = vunpack.c.h.b16 %v203
  %v1231 = vunpack.c.l.b16 %v204
  %v1232 = vunpack.c.h.b16 %v204
  %v1233 = vunpack.c.l.b16 %v205
  %v1234 = vunpack.c.h.b16 %v205
  %v1235 = vunpack.c.l.b16 %v206
  %v1236 = vunpack.c.h.b16 %v206
  %v1237 = vunpack.c.l.b16 %v207
  %v1238 = vunpack.c.h.b16 %v207
  %v1239 = vunpack.c.l.b16 %v208
  %v1240 = vunpack.c.h.b16 %v208
  %v1241 = vunpack.c.l.b16 %v209
  %v1242 = vunpack.c.h.b16 %v209
  %v1243 = vunpack.c.l.b16 %v210
  %v1244 = vunpack.c.h.b16 %v210
  %v1245 = vunpack.c.l.b16 %v211
  %v1246 = vunpack.c.h.b16 %v211
  %v1247 = vunpack.c.l.b16 %v212
  %v1248 = vunpack.c.h.b16 %v212
  %v1249 = vunpack.c.l.b16 %v213
  %v1250 = vunpack.c.h.b16 %v213
  %v1251 = vunpack.c.l.b16 %v214
  %v1252 = vunpack.c.h.b16 %v214
  %v1253 = vunpack.c.l.b16 %v215
  %v1254 = vunpack.c.h.b16 %v215
  %v1255 = vunpack.c.l.b16 %v216
  %v1256 = vunpack.c.h.b16 %v216
  %v1257 = vunpack.c.l.b16 %v217
  %v1258 = vunpack.c.h.b16 %v217
  %v1259 = vunpack.c.l.b16 %v218
  %v1260 = vunpack.c.h.b16 %v218
  %v1261 = vunpack.c.l.b16 %v219
  %v1262 = vunpack.c.h.b16 %v219
  %v1263 = vunpack.c.l.b16 %v220
  %v1264 = vunpack.c.h.b16 %v220
  %v1265 = vunpack.c.l.b16 %v221
  %v1266 = vunpack.c.h.b16 %v221
  %v1267 = vunpack.c.l.b16 %v222
  %v1268 = vunpack.c.h.b16 %v222
  %v1269 = vunpack.c.l.b16 %v223
  %v1270 = vunpack.c.h.b16 %v223
  %v1271 = vunpack.c.l.b16 %v224
  %v1272 = vunpack.c.h.b16 %v224
  %v1273 = vunpack.c.l.b16 %v225
  %v1274 = vunpack.c.h.b16 %v225
  %v1275 = vunpack.c.l.b16 %v226
  %v1276 = vunpack.c.h.b16 %v226
  %v1277 = vunpack.c.l.b16 %v227
  %v1278 = vunpack.c.h.b16 %v227
  %v1279 = vunpack.c.l.b16 %v228
  %v1280 = vunpack.c.h.b16 %v228
  %v1281 = vunpack.c.l.b16 %v229
  %v1282 = vunpack.c.h.b16 %v229
  %v1283 = vunpack.c.l.b16 %v230
  %v1284 = vunpack.c.h.b16 %v230
  %v1285 = vunpack.c.l.b16 %v231
  %v1286 = vunpack.c.h.b16 %v231
  %v1287 = vunpack.c.l.b16 %v232
  %v1288 = vunpack.c.h.b16 %v232
  %v1289 = vunpack.c.l.b16 %v233
  %v1290 = vunpack.c.h.b16 %v233
  %v1291 = vunpack.c.l.b16 %v234
  %v1292 = vunpack.c.h.b16 %v234
  %v1293 = vunpack.c.l.b16 %v235
  %v1294 = vunpack.c.h.b16 %v235
  %v1295 = vunpack.c.l.b16 %v236
  %v1296 = vunpack.c.h.b16 %v236
  %v1297 = vunpack.c.l.b16 %v237
  %v1298 = vunpack.c.h.b16 %v237
  %v1299 = vunpack.c.l.b16 %v238
  %v1300 = vunpack.c.h.b16 %v238
  %v1301 = vunpack.c.l.b16 %v239
  %v1302 = vunpack.c.h.b16 %v239
  %v1303 = vunpack.c.l.b16 %v240
  %v1304 = vunpack.c.h.b16 %v240
  %v1305 = vunpack.c.l.b16 %v241
  %v1306 = vunpack.c.h.b16 %v241
  %v1307 = vunpack.c.l.b16 %v242
  %v1308 = vunpack.c.h.b16 %v242
  %v1309 = vunpack.c.l.b16 %v243
  %v1310 = vunpack.c.h.b16 %v243
  %v1311 = vunpack.c.l.b16 %v244
  %v1312 = vunpack.c.h.b16 %v244
  %v1313 = vunpack.c.l.b16 %v245
  %v1314 = vunpack.c.h.b16 %v245
  %v1315 = vunpack.c.l.b16 %v246
  %v1316 = vunpack.c.h.b16 %v246
  %v1317 = vunpack.c.l.b16 %v247
  %v1318 = vunpack.c.h.b16 %v247
  %v1319 = vunpack.c.l.b16 %v248
  %v1320 = vunpack.c.h.b16 %v248
  %v1321 = vunpack.c.l.b16 %v249
  %v1322 = vunpack.c.h.b16 %v249
  %v1323 = vunpack.c.l.b16 %v250
  %v1324 = vunpack.c.h.b16 %v250
  %v1325 = vunpack.c.l.b16 %v251
  %v1326 = vunpack.c.h.b16 %v251
  %v1327 = vunpack.c.l.b16 %v252
  %v1328 = vunpack.c.h.b16 %v252
  %v1329 = vunpack.c.l.b16 %v253
  %v1330 = vunpack.c.h.b16 %v253
  %v1331 = vunpack.c.l.b16 %v254
  %v1332 = vunpack.c.h.b16 %v254
  %v1333 = vunpack.c.l.b16 %v255
  %v1334 = vunpack.c.h.b16 %v255
  %v1335 = vunpack.c.l.b16 %v256
  %v1336 = vunpack.c.h.b16 %v256
  %v1337 = vunpack.c.l.b16 %v257
  %v1338 = vunpack.c.h.b16 %v257
  %v1339 = vunpack.c.l.b16 %v258
  %v1340 = vunpack.c.h.b16 %v258
  %v1341 = vunpack.c.l.b16 %v259
  %v1342 = vunpack.c.h.b16 %v259
  %v1343 = vunpack.c.l.b16 %v260
  %v1344 = vunpack.c.h.b16 %v260
  %v1345 = vunpack.c.l.b16 %v261
  %v1346 = vunpack.c.h.b16 %v261
  %v1347 = vunpack.c.l.b16 %v262
  %v1348 = vunpack.c.h.b16 %v262
  %v1349 = vunpack.c.l.b16 %v263
  %v1350 = vunpack.c.h.b16 %v263
  %v1351 = vunpack.c.l.b16 %v264
  %v1352 = vunpack.c.h.b16 %v264
  %v1353 = vunpack.c.l.b16 %v265
  %v1354 = vunpack.c.h.b16 %v265
  %v1355 = vunpack.c.l.b16 %v266
  %v1356 = vunpack.c.h.b16 %v266
  %v1357 = vunpack.c.l.b16 %v267
  %v1358 = vunpack.c.h.b16 %v267
  %v1359 = vunpack.c.l.b16 %v268
  %v1360 = vunpack.c.h.b16 %v268
  %v1361 = vunpack.c.l.b16 %v269
  %v1362 = vunpack.c.h.b16 %v269
  %v1363 = vunpack.c.l.b16 %v270
  %v1364 = vunpack.c.h.b16 %v270
  %v1365 = vunpack.c.l.b16 %v271
  %v1366 = vunpack.c.h.b16 %v271
  %v1367 = vunpack.c.l.b16 %v272
  %v1368 = vunpack.c.h.b16 %v272
  %v1369 = vunpack.c.l.b16 %v273
  %v1370 = vunpack.c.h.b16 %v273
  %v1371 = vunpack.c.l.b16 %v274
  %v1372 = vunpack.c.h.b16 %v274
  %v1373 = vunpack.c.l.b16 %v275
  %v1374 = vunpack.c.h.b16 %v275
  %v1375 = vunpack.c.l.b16 %v276
  %v1376 = vunpack.c.h.b16 %v276
  %v1377 = vunpack.c.l.b16 %v277
  %v1378 = vunpack.c.h.b16 %v277
  %v1379 = vunpack.c.l.b16 %v278
  %v1380 = vunpack.c.h.b16 %v278
  %v1381 = vunpack.c.l.b16 %v279
  %v1382 = vunpack.c.h.b16 %v279
  %v1383 = vunpack.c.l.b16 %v280
  %v1384 = vunpack.c.h.b16 %v280
  %v1385 = vunpack.c.l.b16 %v281
  %v1386 = vunpack.c.h.b16 %v281
  %v1387 = vunpack.c.l.b16 %v282
  %v1388 = vunpack.c.h.b16 %v282
  %v1389 = vunpack.c.l.b16 %v283
  %v1390 = vunpack.c.h.b16 %v283
  %v1391 = vunpack.c.l.b16 %v284
  %v1392 = vunpack.c.h.b16 %v284
  %v1393 = vunpack.c.l.b16 %v285
  %v1394 = vunpack.c.h.b16 %v285
  %v1395 = vunpack.c.l.b16 %v286
  %v1396 = vunpack.c.h.b16 %v286
  %v1397 = vunpack.c.l.b16 %v287
  %v1398 = vunpack.c.h.b16 %v287
  %v1399 = vunpack.c.l.b16 %v288
  %v1400 = vunpack.c.h.b16 %v288
  %v1401 = vunpack.c.l.b16 %v289
  %v1402 = vunpack.c.h.b16 %v289
  %v1403 = vunpack.c.l.b16 %v290
  %v1404 = vunpack.c.h.b16 %v290
  %v1405 = vunpack.c.l.b16 %v291
  %v1406 = vunpack.c.h.b16 %v291
  %v1407 = vunpack.c.l.b16 %v292
  %v1408 = vunpack.c.h.b16 %v292
  %v1409 = vunpack.c.l.b16 %v293
  %v1410 = vunpack.c.h.b16 %v293
  %v1411 = vunpack.c.l.b16 %v294
  %v1412 = vunpack.c.h.b16 %v294
  %v1413 = vunpack.c.l.b16 %v295
  %v1414 = vunpack.c.h.b16 %v295
  %v1415 = vunpack.c.l.b16 %v296
  %v1416 = vunpack.c.h.b16 %v296
  %v1417 = vunpack.c.l.b16 %v297
  %v1418 = vunpack.c.h.b16 %v297
  %v1419 = vunpack.c.l.b16 %v298
  %v1420 = vunpack.c.h.b16 %v298
  %v1421 = vunpack.c.l.b16 %v299
  %v1422 = vunpack.c.h.b16 %v299
  %v1423 = vunpack.c.l.b16 %v300
  %v1424 = vunpack.c.h.b16 %v300
  %v1425 = vunpack.c.l.b16 %v301
  %v1426 = vunpack.c.h.b16 %v301
  %v1427 = vunpack.c.l.b16 %v302
  %v1428 = vunpack.c.h.b16 %v302
  %v1429 = vunpack.c.l.b16 %v303
  %v1430 = vunpack.c.h.b16 %v303
  %v1431 = vunpack.c.l.b16 %v304
  %v1432 = vunpack.c.h.b16 %v304
  %v1433 = vunpack.c.l.b16 %v305
  %v1434 = vunpack.c.h.b16 %v305
  %v1435 = vunpack.c.l.b16 %v306
  %v1436 = vunpack.c.h.b16 %v306
  %v1437 = vunpack.c.l.b16 %v307
  %v1438 = vunpack.c.h.b16 %v307
  %v1439 = vunpack.c.l.b16 %v308
  %v1440 = vunpack.c.h.b16 %v308
  %v1441 = vunpack.c.l.b16 %v309
  %v1442 = vunpack.c.h.b16 %v309
  %v1443 = vunpack.c.l.b16 %v310
  %v1444 = vunpack.c.h.b16 %v310
  %v1445 = vunpack.c.l.b16 %v311
  %v1446 = vunpack.c.h.b16 %v311
  %v1447 = vunpack.c.l.b16 %v312
  %v1448 = vunpack.c.h.b16 %v312
  %v1449 = vunpack.c.l.b16 %v313
  %v1450 = vunpack.c.h.b16 %v313
  %v1451 = vunpack.c.l.b16 %v314
  %v1452 = vunpack.c.h.b16 %v314
  %v1453 = vunpack.c.l.b16 %v315
  %v1454 = vunpack.c.h.b16 %v315
  %v1455 = vunpack.c.l.b16 %v316
  %v1456 = vunpack.c.h.b16 %v316
  %v1457 = vunpack.c.l.b16 %v317
  %v1458 = vunpack.c.h.b16 %v317
  %v1459 = vunpack.c.l.b16 %v318
  %v1460 = vunpack.c.h.b16 %v318
  %v1461 = vunpack.c.l.b16 %v319
  %v1462 = vunpack.c.h.b16 %v319
  %v1463 = vunpack.c.l.b16 %v320
  %v1464 = vunpack.c.h.b16 %v320
  %v1465 = vunpack.c.l.b16 %v321
  %v1466 = vunpack.c.h.b16 %v321
  %v1467 = vunpack.c.l.b16 %v322
  %v1468 = vunpack.c.h.b16 %v322
  %v1469 = vunpack.c.l.b16 %v323
  %v1470 = vunpack.c.h.b16 %v323
  %v1471 = vunpack.c.l.b16 %v324
  %v1472 = vunpack.c.h.b16 %v324
  %v1473 = vunpack.c.l.b16 %v325
  %v1474 = vunpack.c.h.b16 %v325
  %v1475 = vunpack.c.l.b16 %v326
  %v1476 = vunpack.c.h.b16 %v326
  %v1477 = vunpack.c.l.b16 %v327
  %v1478 = vunpack.c.h.b16 %v327
  %v1479 = vunpack.c.l.b16 %v328
  %v1480 = vunpack.c.h.b16 %v328
  %v1481 = vunpack.c.l.b16 %v329
  %v1482 = vunpack.c.h.b16 %v329
  %v1483 = vunpack.c.l.b16 %v330
  %v1484 = vunpack.c.h.b16 %v330
  %v1485 = vunpack.c.l.b16 %v331
  %v1486 = vunpack.c.h.b16 %v331
  %v1487 = vunpack.c.l.b16 %v332
  %v1488 = vunpack.c.h.b16 %v332
  %v1489 = vunpack.c.l.b16 %v333
  %v1490 = vunpack.c.h.b16 %v333
  %v1491 = vunpack.c.l.b16 %v334
  %v1492 = vunpack.c.h.b16 %v334
  %v1493 = vunpack.c.l.b16 %v335
  %v1494 = vunpack.c.h.b16 %v335
  %v1495 = vunpack.c.l.b16 %v336
  %v1496 = vunpack.c.h.b16 %v336
  %v1497 = vunpack.c.l.b16 %v337
  %v1498 = vunpack.c.h.b16 %v337
  %v1499 = vunpack.c.l.b16 %v338
  %v1500 = vunpack.c.h.b16 %v338
  %v1501 = vunpack.c.l.b16 %v339
  %v1502 = vunpack.c.h.b16 %v339
  %v1503 = vunpack.c.l.b16 %v340
  %v1504 = vunpack.c.h.b16 %v340
  %v1505 = vunpack.c.l.b16 %v341
  %v1506 = vunpack.c.h.b16 %v341
  %v1507 = vunpack.c.l.b16 %v342
  %v1508 = vunpack.c.h.b16 %v342
  %v1509 = vunpack.c.l.b16 %v343
  %v1510 = vunpack.c.h.b16 %v343
  %v1511 = vunpack.c.l.b16 %v344
  %v1512 = vunpack.c.h.b16 %v344
  %v1513 = vunpack.c.l.b16 %v345
  %v1514 = vunpack.c.h.b16 %v345
  %v1515 = vunpack.c.l.b16 %v346
  %v1516 = vunpack.c.h.b16 %v346
  %v1517 = vunpack.c.l.b16 %v347
  %v1518 = vunpack.c.h.b16 %v347
  %v1519 = vunpack.c.l.b16 %v348
  %v1520 = vunpack.c.h.b16 %v348
  %v1521 = vunpack.c.l.b16 %v349
  %v1522 = vunpack.c.h.b16 %v349
  %v1523 = vunpack.c.l.b16 %v350
  %v1524 = vunpack.c.h.b16 %v350
  %v1525 = vunpack.c.l.b16 %v351
  %v1526 = vunpack.c.h.b16 %v351
  %v1527 = vunpack.c.l.b16 %v352
  %v1528 = vunpack.c.h.b16 %v352
  %v1529 = vunpack.c.l.b16 %v353
  %v1530 = vunpack.c.h.b16 %v353
  %v1531 = vunpack.c.l.b16 %v354
  %v1532 = vunpack.c.h.b16 %v354
  %v1533 = vunpack.c.l.b16 %v355
  %v1534 = vunpack.c.h.b16 %v355
  %v1535 = vunpack.c.l.b16 %v356
  %v1536 = vunpack.c.h.b16 %v356
  %v1537 = vunpack.c.l.b16 %v357
  %v1538 = vunpack.c.h.b16 %v357
  %v1539 = vunpack.c.l.b16 %v358
  %v1540 = vunpack.c.h.b16 %v358
  %v1541 = vunpack.c.l.b16 %v359
  %v1542 = vunpack.c.h.b16 %v359
  %v1543 = vunpack.c.l.b16 %v360
  %v1544 = vunpack.c.h.b16 %v360
  %v1545 = vunpack.c.l.b16 %v361
  %v1546 = vunpack.c.h.b16 %v361
  %v1547 = vunpack.c.l.b16 %v362
  %v1548 = vunpack.c.h.b16 %v362
  %v1549 = vunpack.c.l.b16 %v363
  %v1550 = vunpack.c.h.b16 %v363
  %v1551 = vunpack.c.l.b16 %v364
  %v1552 = vunpack.c.h.b16 %v364
  %v1553 = vunpack.c.l.b16 %v365
  %v1554 = vunpack.c.h.b16 %v365
  %v1555 = vunpack.c.l.b16 %v366
  %v1556 = vunpack.c.h.b16 %v366
  %v1557 = vunpack.c.l.b16 %v367
  %v1558 = vunpack.c.h.b16 %v367
  %v1559 = vunpack.c.l.b16 %v368
  %v1560 = vunpack.c.h.b16 %v368
  %v1561 = vunpack.c.l.b16 %v369
  %v1562 = vunpack.c.h.b16 %v369
  %v1563 = vunpack.c.l.b16 %v370
  %v1564 = vunpack.c.h.b16 %v370
  %v1565 = vunpack.c.l.b16 %v371
  %v1566 = vunpack.c.h.b16 %v371
  %v1567 = vunpack.c.l.b16 %v372
  %v1568 = vunpack.c.h.b16 %v372
  %v1569 = vunpack.c.l.b16 %v373
  %v1570 = vunpack.c.h.b16 %v373
  %v1571 = vunpack.c.l.b16 %v374
  %v1572 = vunpack.c.h.b16 %v374
  %v1573 = vunpack.c.l.b16 %v375
  %v1574 = vunpack.c.h.b16 %v375
  %v1575 = vunpack.c.l.b16 %v376
  %v1576 = vunpack.c.h.b16 %v376
  %v1577 = vunpack.c.l.b16 %v377
  %v1578 = vunpack.c.h.b16 %v377
  %v1579 = vunpack.c.l.b16 %v378
  %v1580 = vunpack.c.h.b16 %v378
  %v1581 = vunpack.c.l.b16 %v379
  %v1582 = vunpack.c.h.b16 %v379
  %v1583 = vunpack.c.l.b16 %v380
  %v1584 = vunpack.c.h.b16 %v380
  %v1585 = vunpack.c.l.b16 %v381
  %v1586 = vunpack.c.h.b16 %v381
  %v1587 = vunpack.c.l.b16 %v382
  %v1588 = vunpack.c.h.b16 %v382
  %v1589 = vunpack.c.l.b16 %v383
  %v1590 = vunpack.c.h.b16 %v383
  %v1591 = vunpack.c.l.b16 %v384
  %v1592 = vunpack.c.h.b16 %v384
  %v1593 = vunpack.c.l.b16 %v385
  %v1594 = vunpack.c.h.b16 %v385
  %v1595 = vunpack.c.l.b16 %v386
  %v1596 = vunpack.c.h.b16 %v386
  %v1597 = vunpack.c.l.b16 %v387
  %v1598 = vunpack.c.h.b16 %v387
  %v1599 = vunpack.c.l.b16 %v388
  %v1600 = vunpack.c.h.b16 %v388
  %v1601 = vunpack.c.l.b16 %v389
  %v1602 = vunpack.c.h.b16 %v389
  %v1603 = vunpack.c.l.b16 %v390
  %v1604 = vunpack.c.h.b16 %v390
  %v1605 = vunpack.c.l.b16 %v391
  %v1606 = vunpack.c.h.b16 %v391
  %v1607 = vunpack.c.l.b16 %v392
  %v1608 = vunpack.c.h.b16 %v392
  %v1609 = vunpack.c.l.b16 %v393
  %v1610 = vunpack.c.h.b16 %v393
  %v1611 = vunpack.c.l.b16 %v394
  %v1612 = vunpack.c.h.b16 %v394
  %v1613 = vunpack.c.l.b16 %v395
  %v1614 = vunpack.c.h.b16 %v395
  %v1615 = vunpack.c.l.b16 %v396
  %v1616 = vunpack.c.h.b16 %v396
  %v1617 = vunpack.c.l.b16 %v397
  %v1618 = vunpack.c.h.b16 %v397
  %v1619 = vunpack.c.l.b16 %v398
  %v1620 = vunpack.c.h.b16 %v398
  %v1621 = vunpack.c.l.b16 %v399
  %v1622 = vunpack.c.h.b16 %v399
  %v1623 = vunpack.c.l.b16 %v400
  %v1624 = vunpack.c.h.b16 %v400
  %v1625 = vunpack.c.l.b16 %v401
  %v1626 = vunpack.c.h.b16 %v401
  %v1627 = vunpack.c.l.b16 %v402
  %v1628 = vunpack.c.h.b16 %v402
  %v1629 = vunpack.c.l.b16 %v403
  %v1630 = vunpack.c.h.b16 %v403
  %v1631 = vunpack.c.l.b16 %v404
  %v1632 = vunpack.c.h.b16 %v404
  %v1633 = vunpack.c.l.b16 %v405
  %v1634 = vunpack.c.h.b16 %v405
  %v1635 = vunpack.c.l.b16 %v406
  %v1636 = vunpack.c.h.b16 %v406
  %v1637 = vunpack.c.l.b16 %v407
  %v1638 = vunpack.c.h.b16 %v407
  %v1639 = vunpack.c.l.b16 %v408
  %v1640 = vunpack.c.h.b16 %v408
  %v1641 = vunpack.c.l.b16 %v409
  %v1642 = vunpack.c.h.b16 %v409
  %v1643 = vunpack.c.l.b16 %v410
  %v1644 = vunpack.c.h.b16 %v410
  %v1645 = vunpack.c.l.b16 %v411
  %v1646 = vunpack.c.h.b16 %v411
  %v1647 = vunpack.c.l.b16 %v412
  %v1648 = vunpack.c.h.b16 %v412
  %v1649 = vunpack.c.l.b16 %v413
  %v1650 = vunpack.c.h.b16 %v413
  %v1651 = vunpack.c.l.b16 %v414
  %v1652 = vunpack.c.h.b16 %v414
  %v1653 = vunpack.c.l.b16 %v415
  %v1654 = vunpack.c.h.b16 %v415
  %v1655 = vunpack.c.l.b16 %v416
  %v1656 = vunpack.c.h.b16 %v416
  %v1657 = vunpack.c.l.b16 %v417
  %v1658 = vunpack.c.h.b16 %v417
  %v1659 = vunpack.c.l.b16 %v418
  %v1660 = vunpack.c.h.b16 %v418
  %v1661 = vpack.c.b16 %v885, %v877
  %v1662 = vpack.c.b16 %v886, %v878
  %v1663 = vpack.c.b16 %v887, %v879
  %v1664 = vpack.c.b16 %v888, %v880
  %v1665 = vpack.c.b16 %v889, %v881
  %v1666 = vpack.c.b16 %v890, %v882
  %v1667 = vpack.c.b16 %v891, %v883
  %v1668 = vpack.c.b16 %v892, %v884
  %v1669 = vpack.c.b16 %v901, %v893
  %v1670 = vpack.c.b16 %v902, %v894
  %v1671 = vpack.c.b16 %v903, %v895
  %v1672 = vpack.c.b16 %v904, %v896
  %v1673 = vpack.c.b16 %v905, %v897
  %v1674 = vpack.c.b16 %v906, %v898
  %v1675 = vpack.c.b16 %v907, %v899
  %v1676 = vpack.c.b16 %v908, %v900
  %v1677 = vpack.c.b16 %v917, %v909
  %v1678 = vpack.c.b16 %v918, %v910
  %v1679 = vpack.c.b16 %v919, %v911
  %v1680 = vpack.c.b16 %v920, %v912
  %v1681 = vpack.c.b16 %v921, %v913
  %v1682 = vpack.c.b16 %v922, %v914
  %v1683 = vpack.c.b16 %v923, %v915
  %v1684 = vpack.c.b16 %v924, %v916
  %v1685 = vpack.c.b16 %v933, %v925
  %v1686 = vpack.c.b16 %v934, %v926
  %v1687 = vpack.c.b16 %v935, %v927
  %v1688 = vpack.c.b16 %v936, %v928
  %v1689 = vpack.c.b16 %v937, %v929
  %v1690 = vpack.c.b16 %v938, %v930
  %v1691 = vpack.c.b16 %v939, %v931
  %v1692 = vpack.c.b16 %v940, %v932
  %v1693 = vpack.c.b16 %v949, %v941
  %v1694 = vpack.c.b16 %v950, %v942
  %v1695 = vpack.c.b16 %v951, %v943
  %v1696 = vpack.c.b16 %v952, %v944
  %v1697 = vpack.c.b16 %v953, %v945
  %v1698 = vpack.c.b16 %v954, %v946
  %v1699 = vpack.c.b16 %v955, %v947
  %v1700 = vpack.c.b16 %v956, %v948
  %v1701 = vpack.c.b16 %v965, %v957
  %v1702 = vpack.c.b16 %v966, %v958
  %v1703 = vpack.c.b16 %v967, %v959
  %v1704 = vpack.c.b16 %v968, %v960
  %v1705 = vpack.c.b16 %v969, %v961
  %v1706 = vpack.c.b16 %v970, %v962
  %v1707 = vpack.c.b16 %v971, %v963
  %v1708 = vpack.c.b16 %v972, %v964
  %v1709 = vpack.c.b16 %v981, %v973
  %v1710 = vpack.c.b16 %v982, %v974
  %v1711 = vpack.c.b16 %v983, %v975
  %v1712 = vpack.c.b16 %v984, %v976
  %v1713 = vpack.c.b16 %v985, %v977
  %v1714 = vpack.c.b16 %v986, %v978
  %v1715 = vpack.c.b16 %v987, %v979
  %v1716 = vpack.c.b16 %v988, %v980
  %v1717 = vpack.c.b16 %v997, %v989
  %v1718 = vpack.c.b16 %v998, %v990
  %v1719 = vpack.c.b16 %v999, %v991
  %v1720 = vpack.c.b16 %v1000, %v992
  %v1721 = vpack.c.b16 %v1001, %v993
  %v1722 = vpack.c.b16 %v1002, %v994
  %v1723 = vpack.c.b16 %v1003, %v995
  %v1724 = vpack.c.b16 %v1004, %v996
  %v1725 = vpack.c.b16 %v1013, %v1005
  %v1726 = vpack.c.b16 %v1014, %v1006
  %v1727 = vpack.c.b16 %v1015, %v1007
  %v1728 = vpack.c.b16 %v1016, %v1008
  %v1729 = vpack.c.b16 %v1017, %v1009
  %v1730 = vpack.c.b16 %v1018, %v1010
  %v1731 = vpack.c.b16 %v1019, %v1011
  %v1732 = vpack.c.b16 %v1020, %v1012
  %v1733 = vpack.c.b16 %v1029, %v1021
  %v1734 = vpack.c.b16 %v1030, %v1022
  %v1735 = vpack.c.b16 %v1031, %v1023
  %v1736 = vpack.c.b16 %v1032, %v1024
  %v1737 = vpack.c.b16 %v1033, %v1025
  %v1738 = vpack.c.b16 %v1034, %v1026
  %v1739 = vpack.c.b16 %v1035, %v1027
  %v1740 = vpack.c.b16 %v1036, %v1028
  %v1741 = vpack.c.b16 %v1045, %v1037
  %v1742 = vpack.c.b16 %v1046, %v1038
  %v1743 = vpack.c.b16 %v1047, %v1039
  %v1744 = vpack.c.b16 %v1048, %v1040
  %v1745 = vpack.c.b16 %v1049, %v1041
  %v1746 = vpack.c.b16 %v1050, %v1042
  %v1747 = vpack.c.b16 %v1051, %v1043
  %v1748 = vpack.c.b16 %v1052, %v1044
  %v1749 = vpack.c.b16 %v1061, %v1053
  %v1750 = vpack.c.b16 %v1062, %v1054
  %v1751 = vpack.c.b16 %v1063, %v1055
  %v1752 = vpack.c.b16 %v1064, %v1056
  %v1753 = vpack.c.b16 %v1065, %v1057
  %v1754 = vpack.c.b16 %v1066, %v1058
  %v1755 = vpack.c.b16 %v1067, %v1059
  %v1756 = vpack.c.b16 %v1068, %v1060
  %v1757 = vpack.c.b16 %v1077, %v1069
  %v1758 = vpack.c.b16 %v1078, %v1070
  %v1759 = vpack.c.b16 %v1079, %v1071
  %v1760 = vpack.c.b16 %v1080, %v1072
  %v1761 = vpack.c.b16 %v1081, %v1073
  %v1762 = vpack.c.b16 %v1082, %v1074
  %v1763 = vpack.c.b16 %v1083, %v1075
  %v1764 = vpack.c.b16 %v1084, %v1076
  %v1765 = vpack.c.b16 %v1093, %v1085
  %v1766 = vpack.c.b16 %v1094, %v1086
  %v1767 = vpack.c.b16 %v1095, %v1087
  %v1768 = vpack.c.b16 %v1096, %v1088
  %v1769 = vpack.c.b16 %v1097, %v1089
  %v1770 = vpack.c.b16 %v1098, %v1090
  %v1771 = vpack.c.b16 %v1099, %v1091
  %v1772 = vpack.c.b16 %v1100, %v1092
  %v1773 = vpack.c.b16 %v1109, %v1101
  %v1774 = vpack.c.b16 %v1110, %v1102
  %v1775 = vpack.c.b16 %v1111, %v1103
  %v1776 = vpack.c.b16 %v1112, %v1104
  %v1777 = vpack.c.b16 %v1113, %v1105
  %v1778 = vpack.c.b16 %v1114, %v1106
  %v1779 = vpack.c.b16 %v1115, %v1107
  %v1780 = vpack.c.b16 %v1116, %v1108
  %v1781 = vpack.c.b16 %v1125, %v1117
  %v1782 = vpack.c.b16 %v1126, %v1118
  %v1783 = vpack.c.b16 %v1127, %v1119
  %v1784 = vpack.c.b16 %v1128, %v1120
  %v1785 = vpack.c.b16 %v1129, %v1121
  %v1786 = vpack.c.b16 %v1130, %v1122
  %v1787 = vpack.c.b16 %v1131, %v1123
  %v1788 = vpack.c.b16 %v1132, %v1124
  %v1789 = vpack.c.b16 %v1141, %v1133
  %v1790 = vpack.c.b16 %v1142, %v1134
  %v1791 = vpack.c.b16 %v1143, %v1135
  %v1792 = vpack.c.b16 %v1144, %v1136
  %v1793 = vpack.c.b16 %v1145, %v1137
  %v1794 = vpack.c.b16 %v1146, %v1138
  %v1795 = vpack.c.b16 %v1147, %v1139
  %v1796 = vpack.c.b16 %v1148, %v1140
  %v1797 = vpack.c.b16 %v1157, %v1149
  %v1798 = vpack.c.b16 %v1158, %v1150
  %v1799 = vpack.c.b16 %v1159, %v1151
  %v1800 = vpack.c.b16 %v1160, %v1152
  %v1801 = vpack.c.b16 %v1161, %v1153
  %v1802 = vpack.c.b16 %v1162, %v1154
  %v1803 = vpack.c.b16 %v1163, %v1155
  %v1804 = vpack.c.b16 %v1164, %v1156
  %v1805 = vpack.c.b16 %v1173, %v1165
  %v1806 = vpack.c.b16 %v1174, %v1166
  %v1807 = vpack.c.b16 %v1175, %v1167
  %v1808 = vpack.c.b16 %v1176, %v1168
  %v1809 = vpack.c.b16 %v1177, %v1169
  %v1810 = vpack.c.b16 %v1178, %v1170
  %v1811 = vpack.c.b16 %v1179, %v1171
  %v1812 = vpack.c.b16 %v1180, %v1172
  %v1813 = vpack.c.b16 %v1189, %v1181
  %v1814 = vpack.c.b16 %v1190, %v1182
  %v1815 = vpack.c.b16 %v1191, %v1183
  %v1816 = vpack.c.b16 %v1192, %v1184
  %v1817 = vpack.c.b16 %v1193, %v1185
  %v1818 = vpack.c.b16 %v1194, %v1186
  %v1819 = vpack.c.b16 %v1195, %v1187
  %v1820 = vpack.c.b16 %v1196, %v1188
  %v1821 = vpack.c.b16 %v1205, %v1197
  %v1822 = vpack.c.b16 %v1206, %v1198
  %v1823 = vpack.c.b16 %v1207, %v1199
  %v1824 = vpack.c.b16 %v1208, %v1200
  %v1825 = vpack.c.b16 %v1209, %v1201
  %v1826 = vpack.c.b16 %v1210, %v1202
  %v1827 = vpack.c.b16 %v1211, %v1203
  %v1828 = vpack.c.b16 %v1212, %v1204
  %v1829 = vpack.c.b16 %v1221, %v1213
  %v1830 = vpack.c.b16 %v1222, %v1214
  %v1831 = vpack.c.b16 %v1223, %v1215
  %v1832 = vpack.c.b16 %v1224, %v1216
  %v1833 = vpack.c.b16 %v1225, %v1217
  %v1834 = vpack.c.b16 %v1226, %v1218
  %v1835 = vpack.c.b16 %v1227, %v1219
  %v1836 = vpack.c.b16 %v1228, %v1220
  %v1837 = vpack.c.b16 %v1237, %v1229
  %v1838 = vpack.c.b16 %v1238, %v1230
  %v1839 = vpack.c.b16 %v1239, %v1231
  %v1840 = vpack.c.b16 %v1240, %v1232
  %v1841 = vpack.c.b16 %v1241, %v1233
  %v1842 = vpack.c.b16 %v1242, %v1234
  %v1843 = vpack.c.b16 %v1243, %v1235
  %v1844 = vpack.c.b16 %v1244, %v1236
  %v1845 = vpack.c.b16 %v1253, %v1245
  %v1846 = vpack.c.b16 %v1254, %v1246
  %v1847 = vpack.c.b16 %v1255, %v1247
  %v1848 = vpack.c.b16 %v1256, %v1248
  %v1849 = vpack.c.b16 %v1257, %v1249
  %v1850 = vpack.c.b16 %v1258, %v1250
  %v1851 = vpack.c.b16 %v1259, %v1251
  %v1852 = vpack.c.b16 %v1260, %v1252
  %v1853 = vpack.c.b16 %v1269, %v1261
  %v1854 = vpack.c.b16 %v1270, %v1262
  %v1855 = vpack.c.b16 %v1271, %v1263
  %v1856 = vpack.c.b16 %v1272, %v1264
  %v1857 = vpack.c.b16 %v1273, %v1265
  %v1858 = vpack.c.b16 %v1274, %v1266
  %v1859 = vpack.c.b16 %v1275, %v1267
  %v1860 = vpack.c.b16 %v1276, %v1268
  %v1861 = vpack.c.b16 %v1285, %v1277
  %v1862 = vpack.c.b16 %v1286, %v1278
  %v1863 = vpack.c.b16 %v1287, %v1279
  %v1864 = vpack.c.b16 %v1288, %v1280
  %v1865 = vpack.c.b16 %v1289, %v1281
  %v1866 = vpack.c.b16 %v1290, %v1282
  %v1867 = vpack.c.b16 %v1291, %v1283
  %v1868 = vpack.c.b16 %v1292, %v1284
  %v1869 = vpack.c.b16 %v1301, %v1293
  %v1870 = vpack.c.b16 %v1302, %v1294
  %v1871 = vpack.c.b16 %v1303, %v1295
  %v1872 = vpack.c.b16 %v1304, %v1296
  %v1873 = vpack.c.b16 %v1305, %v1297
  %v1874 = vpack.c.b16 %v1306, %v1298
  %v1875 = vpack.c.b16 %v1307, %v1299
  %v1876 = vpack.c.b16 %v1308, %v1300
  %v1877 = vpack.c.b16 %v1317, %v1309
  %v1878 = vpack.c.b16 %v1318, %v1310
  %v1879 = vpack.c.b16 %v1319, %v1311
  %v1880 = vpack.c.b16 %v1320, %v1312
  %v1881 = vpack.c.b16 %v1321, %v1313
  %v1882 = vpack.c.b16 %v1322, %v1314
  %v1883 = vpack.c.b16 %v1323, %v1315
  %v1884 = vpack.c.b16 %v1324, %v1316
  %v1885 = vpack.c.b16 %v1333, %v1325
  %v1886 = vpack.c.b16 %v1334, %v1326
  %v1887 = vpack.c.b16 %v1335, %v1327
  %v1888 = vpack.c.b16 %v1336, %v1328
  %v1889 = vpack.c.b16 %v1337, %v1329
  %v1890 = vpack.c.b16 %v1338, %v1330
  %v1891 = vpack.c.b16 %v1339, %v1331
  %v1892 = vpack.c.b16 %v1340, %v1332
  %v1893 = vpack.c.b16 %v1349, %v1341
  %v1894 = vpack.c.b16 %v1350, %v1342
  %v1895 = vpack.c.b16 %v1351, %v1343
  %v1896 = vpack.c.b16 %v1352, %v1344
  %v1897 = vpack.c.b16 %v1353, %v1345
  %v1898 = vpack.c.b16 %v1354, %v1346
  %v1899 = vpack.c.b16 %v1355, %v1347
  %v1900 = vpack.c.b16 %v1356, %v1348
  %v1901 = vpack.c.b16 %v1365, %v1357
  %v1902 = vpack.c.b16 %v1366, %v1358
  %v1903 = vpack.c.b16 %v1367, %v1359
  %v1904 = vpack.c.b16 %v1368, %v1360
  %v1905 = vpack.c.b16 %v1369, %v1361
  %v1906 = vpack.c.b16 %v1370, %v1362
  %v1907 = vpack.c.b16 %v1371, %v1363
  %v1908 = vpack.c.b16 %v1372, %v1364
  %v1909 = vpack.c.b16 %v1381, %v1373
  %v1910 = vpack.c.b16 %v1382, %v1374
  %v1911 = vpack.c.b16 %v1383, %v1375
  %v1912 = vpack.c.b16 %v1384, %v1376
  %v1913 = vpack.c.b16 %v1385, %v1377
  %v1914 = vpack.c.b16 %v1386, %v1378
  %v1915 = vpack.c.b16 %v1387, %v1379
  %v1916 = vpack.c.b16 %v1388, %v1380
  %v1917 = vpack.c.b16 %v1397, %v1389
  %v1918 = vpack.c.b16 %v1398, %v1390
  %v1919 = vpack.c.b16 %v1399, %v1391
  %v1920 = vpack.c.b16 %v1400, %v1392
  %v1921 = vpack.c.b16 %v1401, %v1393
  %v1922 = vpack.c.b16 %v1402, %v1394
  %v1923 = vpack.c.b16 %v1403, %v1395
  %v1924 = vpack.c.b16 %v1404, %v1396
  %v1925 = vpack.c.b16 %v1413, %v1405
  %v1926 = vpack.c.b16 %v1414, %v1406
  %v1927 = vpack.c.b16 %v1415, %v1407
  %v1928 = vpack.c.b16 %v1416, %v1408
  %v1929 = vpack.c.b16 %v1417, %v1409
  %v1930 = vpack.c.b16 %v1418, %v1410
  %v1931 = vpack.c.b16 %v1419, %v1411
  %v1932 = vpack.c.b16 %v1420, %v1412
  %v1933 = vpack.c.b16 %v1429, %v1421
  %v1934 = vpack.c.b16 %v1430, %v1422
  %v1935 = vpack.c.b16 %v1431, %v1423
  %v1936 = vpack.c.b16 %v1432, %v1424
  %v1937 = vpack.c.b16 %v1433, %v1425
  %v1938 = vpack.c.b16 %v1434, %v1426
  %v1939 = vpack.c.b16 %v1435, %v1427
  %v1940 = vpack.c.b16 %v1436, %v1428
  %v1941 = vpack.c.b16 %v1445, %v1437
  %v1942 = vpack.c.b16 %v1446, %v1438
  %v1943 = vpack.c.b16 %v1447, %v1439
  %v1944 = vpack.c.b16 %v1448, %v1440
  %v1945 = vpack.c.b16 %v1449, %v1441
  %v1946 = vpack.c.b16 %v1450, %v1442
  %v1947 = vpack.c.b16 %v1451, %v1443
  %v1948 = vpack.c.b16 %v1452, %v1444
  %v1949 = vpack.c.b16 %v1461, %v1453
  %v1950 = vpack.c.b16 %v1462, %v1454
  %v1951 = vpack.c.b16 %v1463, %v1455
  %v1952 = vpack.c.b16 %v1464, %v1456
  %v1953 = vpack.c.b16 %v1465, %v1457
  %v1954 = vpack.c.b16 %v1466, %v1458
  %v1955 = vpack.c.b16 %v1467, %v1459
  %v1956 = vpack.c.b16 %v1468, %v1460
  %v1957 = vpack.c.b16 %v1477, %v1469
  %v1958 = vpack.c.b16 %v1478, %v1470
  %v1959 = vpack.c.b16 %v1479, %v1471
  %v1960 = vpack.c.b16 %v1480, %v1472
  %v1961 = vpack.c.b16 %v1481, %v1473
  %v1962 = vpack.c.b16 %v1482, %v1474
  %v1963 = vpack.c.b16 %v1483, %v1475
  %v1964 = vpack.c.b16 %v1484, %v1476
  %v1965 = vpack.c.b16 %v1493, %v1485
  %v1966 = vpack.c.b16 %v1494, %v1486
  %v1967 = vpack.c.b16 %v1495, %v1487
  %v1968 = vpack.c.b16 %v1496, %v1488
  %v1969 = vpack.c.b16 %v1497, %v1489
  %v1970 = vpack.c.b16 %v1498, %v1490
  %v1971 = vpack.c.b16 %v1499, %v1491
  %v1972 = vpack.c.b16 %v1500, %v1492
  %v1973 = vpack.c.b16 %v1509, %v1501
  %v1974 = vpack.c.b16 %v1510, %v1502
  %v1975 = vpack.c.b16 %v1511, %v1503
  %v1976 = vpack.c.b16 %v1512, %v1504
  %v1977 = vpack.c.b16 %v1513, %v1505
  %v1978 = vpack.c.b16 %v1514, %v1506
  %v1979 = vpack.c.b16 %v1515, %v1507
  %v1980 = vpack.c.b16 %v1516, %v1508
  %v1981 = vpack.c.b16 %v1525, %v1517
  %v1982 = vpack.c.b16 %v1526, %v1518
  %v1983 = vpack.c.b16 %v1527, %v1519
  %v1984 = vpack.c.b16 %v1528, %v1520
  %v1985 = vpack.c.b16 %v1529, %v1521
  %v1986 = vpack.c.b16 %v1530, %v1522
  %v1987 = vpack.c.b16 %v1531, %v1523
  %v1988 = vpack.c.b16 %v1532, %v1524
  %v1989 = vpack.c.b16 %v1541, %v1533
  %v1990 = vpack.c.b16 %v1542, %v1534
  %v1991 = vpack.c.b16 %v1543, %v1535
  %v1992 = vpack.c.b16 %v1544, %v1536
  %v1993 = vpack.c.b16 %v1545, %v1537
  %v1994 = vpack.c.b16 %v1546, %v1538
  %v1995 = vpack.c.b16 %v1547, %v1539
  %v1996 = vpack.c.b16 %v1548, %v1540
  %v1997 = vpack.c.b16 %v1557, %v1549
  %v1998 = vpack.c.b16 %v1558, %v1550
  %v1999 = vpack.c.b16 %v1559, %v1551
  %v2000 = vpack.c.b16 %v1560, %v1552
  %v2001 = vpack.c.b16 %v1561, %v1553
  %v2002 = vpack.c.b16 %v1562, %v1554
  %v2003 = vpack.c.b16 %v1563, %v1555
  %v2004 = vpack.c.b16 %v1564, %v1556
  %v2005 = vpack.c.b16 %v1573, %v1565
  %v2006 = vpack.c.b16 %v1574, %v1566
  %v2007 = vpack.c.b16 %v1575, %v1567
  %v2008 = vpack.c.b16 %v1576, %v1568
  %v2009 = vpack.c.b16 %v1577, %v1569
  %v2010 = vpack.c.b16 %v1578, %v1570
  %v2011 = vpack.c.b16 %v1579, %v1571
  %v2012 = vpack.c.b16 %v1580, %v1572
  %v2013 = vpack.c.b16 %v1589, %v1581
  %v2014 = vpack.c.b16 %v1590, %v1582
  %v2015 = vpack.c.b16 %v1591, %v1583
  %v2016 = vpack.c.b16 %v1592, %v1584
  %v2017 = vpack.c.b16 %v1593, %v1585
  %v2018 = vpack.c.b16 %v1594, %v1586
  %v2019 = vpack.c.b16 %v1595, %v1587
  %v2020 = vpack.c.b16 %v1596, %v1588
  %v2021 = vpack.c.b16 %v1605, %v1597
  %v2022 = vpack.c.b16 %v1606, %v1598
  %v2023 = vpack.c.b16 %v1607, %v1599
  %v2024 = vpack.c.b16 %v1608, %v1600
  %v2025 = vpack.c.b16 %v1609, %v1601
  %v2026 = vpack.c.b16 %v1610, %v1602
  %v2027 = vpack.c.b16 %v1611, %v1603
  %v2028 = vpack.c.b16 %v1612, %v1604
  %v2029 = vpack.c.b16 %v1621, %v1613
  %v2030 = vpack.c.b16 %v1622, %v1614
  %v2031 = vpack.c.b16 %v1623, %v1615
  %v2032 = vpack.c.b16 %v1624, %v1616
  %v2033 = vpack.c.b16 %v1625, %v1617
  %v2034 = vpack.c.b16 %v1626, %v1618
  %v2035 = vpack.c.b16 %v1627, %v1619
  %v2036 = vpack.c.b16 %v1628, %v1620
  %v2037 = vpack.c.b16 %v1637, %v1629
  %v2038 = vpack.c.b16 %v1638, %v1630
  %v2039 = vpack.c.b16 %v1639, %v1631
  %v2040 = vpack.c.b16 %v1640, %v1632
  %v2041 = vpack.c.b16 %v1641, %v1633
  %v2042 = vpack.c.b16 %v1642, %v1634
  %v2043 = vpack.c.b16 %v1643, %v1635
  %v2044 = vpack.c.b16 %v1644, %v1636
  %v2045 = vpack.c.b16 %v1653, %v1645
  %v2046 = vpack.c.b16 %v1654, %v1646
  %v2047 = vpack.c.b16 %v1655, %v1647
  %v2048 = vpack.c.b16 %v1656, %v1648
  %v2049 = vpack.c.b16 %v1657, %v1649
  %v2050 = vpack.c.b16 %v1658, %v1650
  %v2051 = vpack.c.b16 %v1659, %v1651
  %v2052 = vpack.c.b16 %v1660, %v1652
  %vm2445 = vcmask 130048
  %v2447 = vsel %vm2445, %v478, 0
  %2449 = vmatprep.subr.bf16.mxu0 %v1662
  %2450 = vmatpush1.bf16.msra.mxu0 %v1661
  %2451 = vmatprep.subr.bf16.mxu0 %v1670
  %2452 = vmatpush1.bf16.msra.mxu0 %v1669
  %2453 = vmatprep.subr.bf16.mxu0 %v1678
  %2454 = vmatpush1.bf16.msra.mxu0 %v1677
  %2455 = vmatprep.subr.bf16.mxu0 %v1686
  %2456 = vmatpush1.bf16.msra.mxu0 %v1685
  %2457 = vmatprep.subr.bf16.mxu0 %v1694
  %2458 = vmatpush1.bf16.msra.mxu0 %v1693
  %2459 = vmatprep.subr.bf16.mxu0 %v1702
  %2460 = vmatpush1.bf16.msra.mxu0 %v1701
  %2461 = vmatprep.subr.bf16.mxu0 %v1710
  %2462 = vmatpush1.bf16.msra.mxu0 %v1709
  %2463 = vmatprep.subr.bf16.mxu0 %v1718
  %2464 = vmatpush1.bf16.msra.mxu0 %v1717
  %2465 = vmatprep.subr.bf16.mxu0 %v1726
  %2466 = vmatpush1.bf16.msra.mxu0 %v1725
  %2467 = vmatprep.subr.bf16.mxu0 %v1734
  %2468 = vmatpush1.bf16.msra.mxu0 %v1733
  %2469 = vmatprep.subr.bf16.mxu0 %v1742
  %2470 = vmatpush1.bf16.msra.mxu0 %v1741
  %2471 = vmatprep.subr.bf16.mxu0 %v1750
  %2472 = vmatpush1.bf16.msra.mxu0 %v1749
  %2473 = vmatprep.subr.bf16.mxu0 %v1758
  %2474 = vmatpush1.bf16.msra.mxu0 %v1757
  %2475 = vmatprep.subr.bf16.mxu0 %v1766
  %2476 = vmatpush1.bf16.msra.mxu0 %v1765
  %2477 = vmatprep.subr.bf16.mxu0 %v1774
  %2478 = vmatpush1.bf16.msra.mxu0 %v1773
  %2479 = vmatprep.subr.bf16.mxu0 %v1782
  %2480 = vmatpush1.bf16.msra.mxu0 %v1781
  %2481 = vmatprep.mubr.bf16.mxu0 %v473
  %2482 = vmatmul.mubr.bf16.gmra.mrb[0].mxu0 %v472
  %v2483 = vpop.f32.mrb[0].mxu0
  %v2484 = vadd.f32 %v424, %v2483
  %v2485 = vpop.f32.mrb[0].mxu0
  %v2486 = vadd.f32 %v428, %v2485
  %v2487 = vpop.f32.mrb[0].mxu0
  %v2488 = vpop.f32.mrb[0].mxu0
  %2489 = vdwg.mxu0
  %2490 = vmatprep.subr.bf16.mxu0 %v1790
  %2491 = vmatpush1.bf16.msra.mxu0 %v1789
  %2492 = vmatprep.subr.bf16.mxu0 %v1798
  %2493 = vmatpush1.bf16.msra.mxu0 %v1797
  %2494 = vmatprep.subr.bf16.mxu0 %v1806
  %2495 = vmatpush1.bf16.msra.mxu0 %v1805
  %2496 = vmatprep.subr.bf16.mxu0 %v1814
  %2497 = vmatpush1.bf16.msra.mxu0 %v1813
  %2498 = vmatprep.subr.bf16.mxu0 %v1822
  %2499 = vmatpush1.bf16.msra.mxu0 %v1821
  %2500 = vmatprep.subr.bf16.mxu0 %v1830
  %2501 = vmatpush1.bf16.msra.mxu0 %v1829
  %2502 = vmatprep.subr.bf16.mxu0 %v1838
  %2503 = vmatpush1.bf16.msra.mxu0 %v1837
  %2504 = vmatprep.subr.bf16.mxu0 %v1846
  %2505 = vmatpush1.bf16.msra.mxu0 %v1845
  %2506 = vmatprep.subr.bf16.mxu0 %v1854
  %2507 = vmatpush1.bf16.msra.mxu0 %v1853
  %2508 = vmatprep.subr.bf16.mxu0 %v1862
  %2509 = vmatpush1.bf16.msra.mxu0 %v1861
  %2510 = vmatprep.subr.bf16.mxu0 %v1870
  %2511 = vmatpush1.bf16.msra.mxu0 %v1869
  %2512 = vmatprep.subr.bf16.mxu0 %v1878
  %2513 = vmatpush1.bf16.msra.mxu0 %v1877
  %2514 = vmatprep.subr.bf16.mxu0 %v1886
  %2515 = vmatpush1.bf16.msra.mxu0 %v1885
  %2516 = vmatprep.subr.bf16.mxu0 %v1894
  %2517 = vmatpush1.bf16.msra.mxu0 %v1893
  %2518 = vmatprep.subr.bf16.mxu0 %v1902
  %2519 = vmatpush1.bf16.msra.mxu0 %v1901
  %2520 = vmatprep.subr.bf16.mxu0 %v1910
  %2521 = vmatpush1.bf16.msra.mxu0 %v1909
  %2522 = vmatprep.mubr.bf16.mxu0 %v475
  %2523 = vmatmul.mubr.bf16.gmra.mrb[0].mxu0 %v474
  %v2524 = vpop.f32.mrb[0].mxu0
  %v2525 = vadd.f32 %v2484, %v2524
  %v2526 = vpop.f32.mrb[0].mxu0
  %v2527 = vadd.f32 %v2486, %v2526
  %v2528 = vpop.f32.mrb[0].mxu0
  %v2529 = vpop.f32.mrb[0].mxu0
  %2530 = vdwg.mxu0
  %2531 = vmatprep.subr.bf16.mxu0 %v1918
  %2532 = vmatpush1.bf16.msra.mxu0 %v1917
  %2533 = vmatprep.subr.bf16.mxu0 %v1926
  %2534 = vmatpush1.bf16.msra.mxu0 %v1925
  %2535 = vmatprep.subr.bf16.mxu0 %v1934
  %2536 = vmatpush1.bf16.msra.mxu0 %v1933
  %2537 = vmatprep.subr.bf16.mxu0 %v1942
  %2538 = vmatpush1.bf16.msra.mxu0 %v1941
  %2539 = vmatprep.subr.bf16.mxu0 %v1950
  %2540 = vmatpush1.bf16.msra.mxu0 %v1949
  %2541 = vmatprep.subr.bf16.mxu0 %v1958
  %2542 = vmatpush1.bf16.msra.mxu0 %v1957
  %2543 = vmatprep.subr.bf16.mxu0 %v1966
  %2544 = vmatpush1.bf16.msra.mxu0 %v1965
  %2545 = vmatprep.subr.bf16.mxu0 %v1974
  %2546 = vmatpush1.bf16.msra.mxu0 %v1973
  %2547 = vmatprep.subr.bf16.mxu0 %v1982
  %2548 = vmatpush1.bf16.msra.mxu0 %v1981
  %2549 = vmatprep.subr.bf16.mxu0 %v1990
  %2550 = vmatpush1.bf16.msra.mxu0 %v1989
  %2551 = vmatprep.subr.bf16.mxu0 %v1998
  %2552 = vmatpush1.bf16.msra.mxu0 %v1997
  %2553 = vmatprep.subr.bf16.mxu0 %v2006
  %2554 = vmatpush1.bf16.msra.mxu0 %v2005
  %2555 = vmatprep.subr.bf16.mxu0 %v2014
  %2556 = vmatpush1.bf16.msra.mxu0 %v2013
  %2557 = vmatprep.subr.bf16.mxu0 %v2022
  %2558 = vmatpush1.bf16.msra.mxu0 %v2021
  %2559 = vmatprep.subr.bf16.mxu0 %v2030
  %2560 = vmatpush1.bf16.msra.mxu0 %v2029
  %2561 = vmatprep.subr.bf16.mxu0 %v2038
  %2562 = vmatpush1.bf16.msra.mxu0 %v2037
  %2563 = vmatprep.mubr.bf16.mxu0 %v477
  %2564 = vmatmul.mubr.bf16.gmra.mrb[0].mxu0 %v476
  %v2565 = vpop.f32.mrb[0].mxu0
  %v2566 = vadd.f32 %v2525, %v2565
  %v2567 = vpop.f32.mrb[0].mxu0
  %v2568 = vadd.f32 %v2527, %v2567
  %v2569 = vpop.f32.mrb[0].mxu0
  %v2570 = vpop.f32.mrb[0].mxu0
  %2571 = vdwg.mxu0
  %2572 = vmatprep.subr.bf16.mxu0 %v2046
  %2573 = vmatpush1.bf16.msra.mxu0 %v2045
  %2574 = vmatprep.subr.bf16.mxu0 0
  %2575 = vmatpush1.bf16.msra.mxu0 0
  %2576 = vmatprep.subr.bf16.mxu0 0
  %2577 = vmatpush1.bf16.msra.mxu0 0
  %2578 = vmatprep.subr.bf16.mxu0 0
  %2579 = vmatpush1.bf16.msra.mxu0 0
  %2580 = vmatprep.subr.bf16.mxu0 0
  %2581 = vmatpush1.bf16.msra.mxu0 0
  %2582 = vmatprep.subr.bf16.mxu0 0
  %2583 = vmatpush1.bf16.msra.mxu0 0
  %2584 = vmatprep.subr.bf16.mxu0 0
  %2585 = vmatpush1.bf16.msra.mxu0 0
  %2586 = vmatprep.subr.bf16.mxu0 0
  %2587 = vmatpush1.bf16.msra.mxu0 0
  %2588 = vmatprep.subr.bf16.mxu0 0
  %2589 = vmatpush1.bf16.msra.mxu0 0
  %2590 = vmatprep.subr.bf16.mxu0 0
  %2591 = vmatpush1.bf16.msra.mxu0 0
  %2592 = vmatprep.subr.bf16.mxu0 0
  %2593 = vmatpush1.bf16.msra.mxu0 0
  %2594 = vmatprep.subr.bf16.mxu0 0
  %2595 = vmatpush1.bf16.msra.mxu0 0
  %2596 = vmatprep.subr.bf16.mxu0 0
  %2597 = vmatpush1.bf16.msra.mxu0 0
  %2598 = vmatprep.subr.bf16.mxu0 0
  %2599 = vmatpush1.bf16.msra.mxu0 0
  %2600 = vmatprep.subr.bf16.mxu0 0
  %2601 = vmatpush1.bf16.msra.mxu0 0
  %2602 = vmatprep.subr.bf16.mxu0 0
  %2603 = vmatpush1.bf16.msra.mxu0 0
  %2604 = vmatprep.mubr.bf16.mxu0 0
  %2605 = vmatmul.mubr.bf16.gmra.mrb[0].mxu0 %v2447
  %v2606 = vpop.f32.mrb[0].mxu0
  %v2607 = vadd.f32 %v2566, %v2606
  %v2608 = vpop.f32.mrb[0].mxu0
  %v2609 = vadd.f32 %v2568, %v2608
  %v2610 = vpop.f32.mrb[0].mxu0
  %v2611 = vpop.f32.mrb[0].mxu0
  %2612 = vdwg.mxu0
  %2613 = vmatprep.subr.bf16.mxu0 %v1664
  %2614 = vmatpush1.bf16.msra.mxu0 %v1663
  %2615 = vmatprep.subr.bf16.mxu0 %v1672
  %2616 = vmatpush1.bf16.msra.mxu0 %v1671
  %2617 = vmatprep.subr.bf16.mxu0 %v1680
  %2618 = vmatpush1.bf16.msra.mxu0 %v1679
  %2619 = vmatprep.subr.bf16.mxu0 %v1688
  %2620 = vmatpush1.bf16.msra.mxu0 %v1687
  %2621 = vmatprep.subr.bf16.mxu0 %v1696
  %2622 = vmatpush1.bf16.msra.mxu0 %v1695
  %2623 = vmatprep.subr.bf16.mxu0 %v1704
  %2624 = vmatpush1.bf16.msra.mxu0 %v1703
  %2625 = vmatprep.subr.bf16.mxu0 %v1712
  %2626 = vmatpush1.bf16.msra.mxu0 %v1711
  %2627 = vmatprep.subr.bf16.mxu0 %v1720
  %2628 = vmatpush1.bf16.msra.mxu0 %v1719
  %2629 = vmatprep.subr.bf16.mxu0 %v1728
  %2630 = vmatpush1.bf16.msra.mxu0 %v1727
  %2631 = vmatprep.subr.bf16.mxu0 %v1736
  %2632 = vmatpush1.bf16.msra.mxu0 %v1735
  %2633 = vmatprep.subr.bf16.mxu0 %v1744
  %2634 = vmatpush1.bf16.msra.mxu0 %v1743
  %2635 = vmatprep.subr.bf16.mxu0 %v1752
  %2636 = vmatpush1.bf16.msra.mxu0 %v1751
  %2637 = vmatprep.subr.bf16.mxu0 %v1760
  %2638 = vmatpush1.bf16.msra.mxu0 %v1759
  %2639 = vmatprep.subr.bf16.mxu0 %v1768
  %2640 = vmatpush1.bf16.msra.mxu0 %v1767
  %2641 = vmatprep.subr.bf16.mxu0 %v1776
  %2642 = vmatpush1.bf16.msra.mxu0 %v1775
  %2643 = vmatprep.subr.bf16.mxu0 %v1784
  %2644 = vmatpush1.bf16.msra.mxu0 %v1783
  %2645 = vmatprep.mubr.bf16.mxu0 %v473
  %2646 = vmatmul.mubr.bf16.gmra.mrb[0].mxu0 %v472
  %v2647 = vpop.f32.mrb[0].mxu0
  %v2648 = vadd.f32 %v432, %v2647
  %v2649 = vpop.f32.mrb[0].mxu0
  %v2650 = vadd.f32 %v436, %v2649
  %v2651 = vpop.f32.mrb[0].mxu0
  %v2652 = vpop.f32.mrb[0].mxu0
  %2653 = vdwg.mxu0
  %2654 = vmatprep.subr.bf16.mxu0 %v1792
  %2655 = vmatpush1.bf16.msra.mxu0 %v1791
  %2656 = vmatprep.subr.bf16.mxu0 %v1800
  %2657 = vmatpush1.bf16.msra.mxu0 %v1799
  %2658 = vmatprep.subr.bf16.mxu0 %v1808
  %2659 = vmatpush1.bf16.msra.mxu0 %v1807
  %2660 = vmatprep.subr.bf16.mxu0 %v1816
  %2661 = vmatpush1.bf16.msra.mxu0 %v1815
  %2662 = vmatprep.subr.bf16.mxu0 %v1824
  %2663 = vmatpush1.bf16.msra.mxu0 %v1823
  %2664 = vmatprep.subr.bf16.mxu0 %v1832
  %2665 = vmatpush1.bf16.msra.mxu0 %v1831
  %2666 = vmatprep.subr.bf16.mxu0 %v1840
  %2667 = vmatpush1.bf16.msra.mxu0 %v1839
  %2668 = vmatprep.subr.bf16.mxu0 %v1848
  %2669 = vmatpush1.bf16.msra.mxu0 %v1847
  %2670 = vmatprep.subr.bf16.mxu0 %v1856
  %2671 = vmatpush1.bf16.msra.mxu0 %v1855
  %2672 = vmatprep.subr.bf16.mxu0 %v1864
  %2673 = vmatpush1.bf16.msra.mxu0 %v1863
  %2674 = vmatprep.subr.bf16.mxu0 %v1872
  %2675 = vmatpush1.bf16.msra.mxu0 %v1871
  %2676 = vmatprep.subr.bf16.mxu0 %v1880
  %2677 = vmatpush1.bf16.msra.mxu0 %v1879
  %2678 = vmatprep.subr.bf16.mxu0 %v1888
  %2679 = vmatpush1.bf16.msra.mxu0 %v1887
  %2680 = vmatprep.subr.bf16.mxu0 %v1896
  %2681 = vmatpush1.bf16.msra.mxu0 %v1895
  %2682 = vmatprep.subr.bf16.mxu0 %v1904
  %2683 = vmatpush1.bf16.msra.mxu0 %v1903
  %2684 = vmatprep.subr.bf16.mxu0 %v1912
  %2685 = vmatpush1.bf16.msra.mxu0 %v1911
  %2686 = vmatprep.mubr.bf16.mxu0 %v475
  %2687 = vmatmul.mubr.bf16.gmra.mrb[0].mxu0 %v474
  %v2688 = vpop.f32.mrb[0].mxu0
  %v2689 = vadd.f32 %v2648, %v2688
  %v2690 = vpop.f32.mrb[0].mxu0
  %v2691 = vadd.f32 %v2650, %v2690
  %v2692 = vpop.f32.mrb[0].mxu0
  %v2693 = vpop.f32.mrb[0].mxu0
  %2694 = vdwg.mxu0
  %2695 = vmatprep.subr.bf16.mxu0 %v1920
  %2696 = vmatpush1.bf16.msra.mxu0 %v1919
  %2697 = vmatprep.subr.bf16.mxu0 %v1928
  %2698 = vmatpush1.bf16.msra.mxu0 %v1927
  %2699 = vmatprep.subr.bf16.mxu0 %v1936
  %2700 = vmatpush1.bf16.msra.mxu0 %v1935
  %2701 = vmatprep.subr.bf16.mxu0 %v1944
  %2702 = vmatpush1.bf16.msra.mxu0 %v1943
  %2703 = vmatprep.subr.bf16.mxu0 %v1952
  %2704 = vmatpush1.bf16.msra.mxu0 %v1951
  %2705 = vmatprep.subr.bf16.mxu0 %v1960
  %2706 = vmatpush1.bf16.msra.mxu0 %v1959
  %2707 = vmatprep.subr.bf16.mxu0 %v1968
  %2708 = vmatpush1.bf16.msra.mxu0 %v1967
  %2709 = vmatprep.subr.bf16.mxu0 %v1976
  %2710 = vmatpush1.bf16.msra.mxu0 %v1975
  %2711 = vmatprep.subr.bf16.mxu0 %v1984
  %2712 = vmatpush1.bf16.msra.mxu0 %v1983
  %2713 = vmatprep.subr.bf16.mxu0 %v1992
  %2714 = vmatpush1.bf16.msra.mxu0 %v1991
  %2715 = vmatprep.subr.bf16.mxu0 %v2000
  %2716 = vmatpush1.bf16.msra.mxu0 %v1999
  %2717 = vmatprep.subr.bf16.mxu0 %v2008
  %2718 = vmatpush1.bf16.msra.mxu0 %v2007
  %2719 = vmatprep.subr.bf16.mxu0 %v2016
  %2720 = vmatpush1.bf16.msra.mxu0 %v2015
  %2721 = vmatprep.subr.bf16.mxu0 %v2024
  %2722 = vmatpush1.bf16.msra.mxu0 %v2023
  %2723 = vmatprep.subr.bf16.mxu0 %v2032
  %2724 = vmatpush1.bf16.msra.mxu0 %v2031
  %2725 = vmatprep.subr.bf16.mxu0 %v2040
  %2726 = vmatpush1.bf16.msra.mxu0 %v2039
  %2727 = vmatprep.mubr.bf16.mxu0 %v477
  %2728 = vmatmul.mubr.bf16.gmra.mrb[0].mxu0 %v476
  %v2729 = vpop.f32.mrb[0].mxu0
  %v2730 = vadd.f32 %v2689, %v2729
  %v2731 = vpop.f32.mrb[0].mxu0
  %v2732 = vadd.f32 %v2691, %v2731
  %v2733 = vpop.f32.mrb[0].mxu0
  %v2734 = vpop.f32.mrb[0].mxu0
  %2735 = vdwg.mxu0
  %2736 = vmatprep.subr.bf16.mxu0 %v2048
  %2737 = vmatpush1.bf16.msra.mxu0 %v2047
  %2738 = vmatprep.subr.bf16.mxu0 0
  %2739 = vmatpush1.bf16.msra.mxu0 0
  %2740 = vmatprep.subr.bf16.mxu0 0
  %2741 = vmatpush1.bf16.msra.mxu0 0
  %2742 = vmatprep.subr.bf16.mxu0 0
  %2743 = vmatpush1.bf16.msra.mxu0 0
  %2744 = vmatprep.subr.bf16.mxu0 0
  %2745 = vmatpush1.bf16.msra.mxu0 0
  %2746 = vmatprep.subr.bf16.mxu0 0
  %2747 = vmatpush1.bf16.msra.mxu0 0
  %2748 = vmatprep.subr.bf16.mxu0 0
  %2749 = vmatpush1.bf16.msra.mxu0 0
  %2750 = vmatprep.subr.bf16.mxu0 0
  %2751 = vmatpush1.bf16.msra.mxu0 0
  %2752 = vmatprep.subr.bf16.mxu0 0
  %2753 = vmatpush1.bf16.msra.mxu0 0
  %2754 = vmatprep.subr.bf16.mxu0 0
  %2755 = vmatpush1.bf16.msra.mxu0 0
  %2756 = vmatprep.subr.bf16.mxu0 0
  %2757 = vmatpush1.bf16.msra.mxu0 0
  %2758 = vmatprep.subr.bf16.mxu0 0
  %2759 = vmatpush1.bf16.msra.mxu0 0
  %2760 = vmatprep.subr.bf16.mxu0 0
  %2761 = vmatpush1.bf16.msra.mxu0 0
  %2762 = vmatprep.subr.bf16.mxu0 0
  %2763 = vmatpush1.bf16.msra.mxu0 0
  %2764 = vmatprep.subr.bf16.mxu0 0
  %2765 = vmatpush1.bf16.msra.mxu0 0
  %2766 = vmatprep.subr.bf16.mxu0 0
  %2767 = vmatpush1.bf16.msra.mxu0 0
  %2768 = vmatprep.mubr.bf16.mxu0 0
  %2769 = vmatmul.mubr.bf16.gmra.mrb[0].mxu0 %v2447
  %v2770 = vpop.f32.mrb[0].mxu0
  %v2771 = vadd.f32 %v2730, %v2770
  %v2772 = vpop.f32.mrb[0].mxu0
  %v2773 = vadd.f32 %v2732, %v2772
  %v2774 = vpop.f32.mrb[0].mxu0
  %v2775 = vpop.f32.mrb[0].mxu0
  %2776 = vdwg.mxu0
  %2777 = vmatprep.subr.bf16.mxu0 %v1666
  %2778 = vmatpush1.bf16.msra.mxu0 %v1665
  %2779 = vmatprep.subr.bf16.mxu0 %v1674
  %2780 = vmatpush1.bf16.msra.mxu0 %v1673
  %2781 = vmatprep.subr.bf16.mxu0 %v1682
  %2782 = vmatpush1.bf16.msra.mxu0 %v1681
  %2783 = vmatprep.subr.bf16.mxu0 %v1690
  %2784 = vmatpush1.bf16.msra.mxu0 %v1689
  %2785 = vmatprep.subr.bf16.mxu0 %v1698
  %2786 = vmatpush1.bf16.msra.mxu0 %v1697
  %2787 = vmatprep.subr.bf16.mxu0 %v1706
  %2788 = vmatpush1.bf16.msra.mxu0 %v1705
  %2789 = vmatprep.subr.bf16.mxu0 %v1714
  %2790 = vmatpush1.bf16.msra.mxu0 %v1713
  %2791 = vmatprep.subr.bf16.mxu0 %v1722
  %2792 = vmatpush1.bf16.msra.mxu0 %v1721
  %2793 = vmatprep.subr.bf16.mxu0 %v1730
  %2794 = vmatpush1.bf16.msra.mxu0 %v1729
  %2795 = vmatprep.subr.bf16.mxu0 %v1738
  %2796 = vmatpush1.bf16.msra.mxu0 %v1737
  %2797 = vmatprep.subr.bf16.mxu0 %v1746
  %2798 = vmatpush1.bf16.msra.mxu0 %v1745
  %2799 = vmatprep.subr.bf16.mxu0 %v1754
  %2800 = vmatpush1.bf16.msra.mxu0 %v1753
  %2801 = vmatprep.subr.bf16.mxu0 %v1762
  %2802 = vmatpush1.bf16.msra.mxu0 %v1761
  %2803 = vmatprep.subr.bf16.mxu0 %v1770
  %2804 = vmatpush1.bf16.msra.mxu0 %v1769
  %2805 = vmatprep.subr.bf16.mxu0 %v1778
  %2806 = vmatpush1.bf16.msra.mxu0 %v1777
  %2807 = vmatprep.subr.bf16.mxu0 %v1786
  %2808 = vmatpush1.bf16.msra.mxu0 %v1785
  %2809 = vmatprep.mubr.bf16.mxu0 %v473
  %2810 = vmatmul.mubr.bf16.gmra.mrb[0].mxu0 %v472
  %v2811 = vpop.f32.mrb[0].mxu0
  %v2812 = vadd.f32 %v440, %v2811
  %v2813 = vpop.f32.mrb[0].mxu0
  %v2814 = vadd.f32 %v444, %v2813
  %v2815 = vpop.f32.mrb[0].mxu0
  %v2816 = vpop.f32.mrb[0].mxu0
  %2817 = vdwg.mxu0
  %2818 = vmatprep.subr.bf16.mxu0 %v1794
  %2819 = vmatpush1.bf16.msra.mxu0 %v1793
  %2820 = vmatprep.subr.bf16.mxu0 %v1802
  %2821 = vmatpush1.bf16.msra.mxu0 %v1801
  %2822 = vmatprep.subr.bf16.mxu0 %v1810
  %2823 = vmatpush1.bf16.msra.mxu0 %v1809
  %2824 = vmatprep.subr.bf16.mxu0 %v1818
  %2825 = vmatpush1.bf16.msra.mxu0 %v1817
  %2826 = vmatprep.subr.bf16.mxu0 %v1826
  %2827 = vmatpush1.bf16.msra.mxu0 %v1825
  %2828 = vmatprep.subr.bf16.mxu0 %v1834
  %2829 = vmatpush1.bf16.msra.mxu0 %v1833
  %2830 = vmatprep.subr.bf16.mxu0 %v1842
  %2831 = vmatpush1.bf16.msra.mxu0 %v1841
  %2832 = vmatprep.subr.bf16.mxu0 %v1850
  %2833 = vmatpush1.bf16.msra.mxu0 %v1849
  %2834 = vmatprep.subr.bf16.mxu0 %v1858
  %2835 = vmatpush1.bf16.msra.mxu0 %v1857
  %2836 = vmatprep.subr.bf16.mxu0 %v1866
  %2837 = vmatpush1.bf16.msra.mxu0 %v1865
  %2838 = vmatprep.subr.bf16.mxu0 %v1874
  %2839 = vmatpush1.bf16.msra.mxu0 %v1873
  %2840 = vmatprep.subr.bf16.mxu0 %v1882
  %2841 = vmatpush1.bf16.msra.mxu0 %v1881
  %2842 = vmatprep.subr.bf16.mxu0 %v1890
  %2843 = vmatpush1.bf16.msra.mxu0 %v1889
  %2844 = vmatprep.subr.bf16.mxu0 %v1898
  %2845 = vmatpush1.bf16.msra.mxu0 %v1897
  %2846 = vmatprep.subr.bf16.mxu0 %v1906
  %2847 = vmatpush1.bf16.msra.mxu0 %v1905
  %2848 = vmatprep.subr.bf16.mxu0 %v1914
  %2849 = vmatpush1.bf16.msra.mxu0 %v1913
  %2850 = vmatprep.mubr.bf16.mxu0 %v475
  %2851 = vmatmul.mubr.bf16.gmra.mrb[0].mxu0 %v474
  %v2852 = vpop.f32.mrb[0].mxu0
  %v2853 = vadd.f32 %v2812, %v2852
  %v2854 = vpop.f32.mrb[0].mxu0
  %v2855 = vadd.f32 %v2814, %v2854
  %v2856 = vpop.f32.mrb[0].mxu0
  %v2857 = vpop.f32.mrb[0].mxu0
  %2858 = vdwg.mxu0
  %2859 = vmatprep.subr.bf16.mxu0 %v1922
  %2860 = vmatpush1.bf16.msra.mxu0 %v1921
  %2861 = vmatprep.subr.bf16.mxu0 %v1930
  %2862 = vmatpush1.bf16.msra.mxu0 %v1929
  %2863 = vmatprep.subr.bf16.mxu0 %v1938
  %2864 = vmatpush1.bf16.msra.mxu0 %v1937
  %2865 = vmatprep.subr.bf16.mxu0 %v1946
  %2866 = vmatpush1.bf16.msra.mxu0 %v1945
  %2867 = vmatprep.subr.bf16.mxu0 %v1954
  %2868 = vmatpush1.bf16.msra.mxu0 %v1953
  %2869 = vmatprep.subr.bf16.mxu0 %v1962
  %2870 = vmatpush1.bf16.msra.mxu0 %v1961
  %2871 = vmatprep.subr.bf16.mxu0 %v1970
  %2872 = vmatpush1.bf16.msra.mxu0 %v1969
  %2873 = vmatprep.subr.bf16.mxu0 %v1978
  %2874 = vmatpush1.bf16.msra.mxu0 %v1977
  %2875 = vmatprep.subr.bf16.mxu0 %v1986
  %2876 = vmatpush1.bf16.msra.mxu0 %v1985
  %2877 = vmatprep.subr.bf16.mxu0 %v1994
  %2878 = vmatpush1.bf16.msra.mxu0 %v1993
  %2879 = vmatprep.subr.bf16.mxu0 %v2002
  %2880 = vmatpush1.bf16.msra.mxu0 %v2001
  %2881 = vmatprep.subr.bf16.mxu0 %v2010
  %2882 = vmatpush1.bf16.msra.mxu0 %v2009
  %2883 = vmatprep.subr.bf16.mxu0 %v2018
  %2884 = vmatpush1.bf16.msra.mxu0 %v2017
  %2885 = vmatprep.subr.bf16.mxu0 %v2026
  %2886 = vmatpush1.bf16.msra.mxu0 %v2025
  %2887 = vmatprep.subr.bf16.mxu0 %v2034
  %2888 = vmatpush1.bf16.msra.mxu0 %v2033
  %2889 = vmatprep.subr.bf16.mxu0 %v2042
  %2890 = vmatpush1.bf16.msra.mxu0 %v2041
  %2891 = vmatprep.mubr.bf16.mxu0 %v477
  %2892 = vmatmul.mubr.bf16.gmra.mrb[0].mxu0 %v476
  %v2893 = vpop.f32.mrb[0].mxu0
  %v2894 = vadd.f32 %v2853, %v2893
  %v2895 = vpop.f32.mrb[0].mxu0
  %v2896 = vadd.f32 %v2855, %v2895
  %v2897 = vpop.f32.mrb[0].mxu0
  %v2898 = vpop.f32.mrb[0].mxu0
  %2899 = vdwg.mxu0
  %2900 = vmatprep.subr.bf16.mxu0 %v2050
  %2901 = vmatpush1.bf16.msra.mxu0 %v2049
  %2902 = vmatprep.subr.bf16.mxu0 0
  %2903 = vmatpush1.bf16.msra.mxu0 0
  %2904 = vmatprep.subr.bf16.mxu0 0
  %2905 = vmatpush1.bf16.msra.mxu0 0
  %2906 = vmatprep.subr.bf16.mxu0 0
  %2907 = vmatpush1.bf16.msra.mxu0 0
  %2908 = vmatprep.subr.bf16.mxu0 0
  %2909 = vmatpush1.bf16.msra.mxu0 0
  %2910 = vmatprep.subr.bf16.mxu0 0
  %2911 = vmatpush1.bf16.msra.mxu0 0
  %2912 = vmatprep.subr.bf16.mxu0 0
  %2913 = vmatpush1.bf16.msra.mxu0 0
  %2914 = vmatprep.subr.bf16.mxu0 0
  %2915 = vmatpush1.bf16.msra.mxu0 0
  %2916 = vmatprep.subr.bf16.mxu0 0
  %2917 = vmatpush1.bf16.msra.mxu0 0
  %2918 = vmatprep.subr.bf16.mxu0 0
  %2919 = vmatpush1.bf16.msra.mxu0 0
  %2920 = vmatprep.subr.bf16.mxu0 0
  %2921 = vmatpush1.bf16.msra.mxu0 0
  %2922 = vmatprep.subr.bf16.mxu0 0
  %2923 = vmatpush1.bf16.msra.mxu0 0
  %2924 = vmatprep.subr.bf16.mxu0 0
  %2925 = vmatpush1.bf16.msra.mxu0 0
  %2926 = vmatprep.subr.bf16.mxu0 0
  %2927 = vmatpush1.bf16.msra.mxu0 0
  %2928 = vmatprep.subr.bf16.mxu0 0
  %2929 = vmatpush1.bf16.msra.mxu0 0
  %2930 = vmatprep.subr.bf16.mxu0 0
  %2931 = vmatpush1.bf16.msra.mxu0 0
  %2932 = vmatprep.mubr.bf16.mxu0 0
  %2933 = vmatmul.mubr.bf16.gmra.mrb[0].mxu0 %v2447
  %v2934 = vpop.f32.mrb[0].mxu0
  %v2935 = vadd.f32 %v2894, %v2934
  %v2936 = vpop.f32.mrb[0].mxu0
  %v2937 = vadd.f32 %v2896, %v2936
  %v2938 = vpop.f32.mrb[0].mxu0
  %v2939 = vpop.f32.mrb[0].mxu0
  %2940 = vdwg.mxu0
  %2941 = vmatprep.subr.bf16.mxu0 %v1668
  %2942 = vmatpush1.bf16.msra.mxu0 %v1667
  %2943 = vmatprep.subr.bf16.mxu0 %v1676
  %2944 = vmatpush1.bf16.msra.mxu0 %v1675
  %2945 = vmatprep.subr.bf16.mxu0 %v1684
  %2946 = vmatpush1.bf16.msra.mxu0 %v1683
  %2947 = vmatprep.subr.bf16.mxu0 %v1692
  %2948 = vmatpush1.bf16.msra.mxu0 %v1691
  %2949 = vmatprep.subr.bf16.mxu0 %v1700
  %2950 = vmatpush1.bf16.msra.mxu0 %v1699
  %2951 = vmatprep.subr.bf16.mxu0 %v1708
  %2952 = vmatpush1.bf16.msra.mxu0 %v1707
  %2953 = vmatprep.subr.bf16.mxu0 %v1716
  %2954 = vmatpush1.bf16.msra.mxu0 %v1715
  %2955 = vmatprep.subr.bf16.mxu0 %v1724
  %2956 = vmatpush1.bf16.msra.mxu0 %v1723
  %2957 = vmatprep.subr.bf16.mxu0 %v1732
  %2958 = vmatpush1.bf16.msra.mxu0 %v1731
  %2959 = vmatprep.subr.bf16.mxu0 %v1740
  %2960 = vmatpush1.bf16.msra.mxu0 %v1739
  %2961 = vmatprep.subr.bf16.mxu0 %v1748
  %2962 = vmatpush1.bf16.msra.mxu0 %v1747
  %2963 = vmatprep.subr.bf16.mxu0 %v1756
  %2964 = vmatpush1.bf16.msra.mxu0 %v1755
  %2965 = vmatprep.subr.bf16.mxu0 %v1764
  %2966 = vmatpush1.bf16.msra.mxu0 %v1763
  %2967 = vmatprep.subr.bf16.mxu0 %v1772
  %2968 = vmatpush1.bf16.msra.mxu0 %v1771
  %2969 = vmatprep.subr.bf16.mxu0 %v1780
  %2970 = vmatpush1.bf16.msra.mxu0 %v1779
  %2971 = vmatprep.subr.bf16.mxu0 %v1788
  %2972 = vmatpush1.bf16.msra.mxu0 %v1787
  %2973 = vmatprep.mubr.bf16.mxu0 %v473
  %2974 = vmatmul.mubr.bf16.gmra.mrb[0].mxu0 %v472
  %v2975 = vpop.f32.mrb[0].mxu0
  %v2976 = vadd.f32 %v448, %v2975
  %v2977 = vpop.f32.mrb[0].mxu0
  %v2978 = vadd.f32 %v452, %v2977
  %v2979 = vpop.f32.mrb[0].mxu0
  %v2980 = vpop.f32.mrb[0].mxu0
  %2981 = vdwg.mxu0
  %2982 = vmatprep.subr.bf16.mxu0 %v1796
  %2983 = vmatpush1.bf16.msra.mxu0 %v1795
  %2984 = vmatprep.subr.bf16.mxu0 %v1804
  %2985 = vmatpush1.bf16.msra.mxu0 %v1803
  %2986 = vmatprep.subr.bf16.mxu0 %v1812
  %2987 = vmatpush1.bf16.msra.mxu0 %v1811
  %2988 = vmatprep.subr.bf16.mxu0 %v1820
  %2989 = vmatpush1.bf16.msra.mxu0 %v1819
  %2990 = vmatprep.subr.bf16.mxu0 %v1828
  %2991 = vmatpush1.bf16.msra.mxu0 %v1827
  %2992 = vmatprep.subr.bf16.mxu0 %v1836
  %2993 = vmatpush1.bf16.msra.mxu0 %v1835
  %2994 = vmatprep.subr.bf16.mxu0 %v1844
  %2995 = vmatpush1.bf16.msra.mxu0 %v1843
  %2996 = vmatprep.subr.bf16.mxu0 %v1852
  %2997 = vmatpush1.bf16.msra.mxu0 %v1851
  %2998 = vmatprep.subr.bf16.mxu0 %v1860
  %2999 = vmatpush1.bf16.msra.mxu0 %v1859
  %3000 = vmatprep.subr.bf16.mxu0 %v1868
  %3001 = vmatpush1.bf16.msra.mxu0 %v1867
  %3002 = vmatprep.subr.bf16.mxu0 %v1876
  %3003 = vmatpush1.bf16.msra.mxu0 %v1875
  %3004 = vmatprep.subr.bf16.mxu0 %v1884
  %3005 = vmatpush1.bf16.msra.mxu0 %v1883
  %3006 = vmatprep.subr.bf16.mxu0 %v1892
  %3007 = vmatpush1.bf16.msra.mxu0 %v1891
  %3008 = vmatprep.subr.bf16.mxu0 %v1900
  %3009 = vmatpush1.bf16.msra.mxu0 %v1899
  %3010 = vmatprep.subr.bf16.mxu0 %v1908
  %3011 = vmatpush1.bf16.msra.mxu0 %v1907
  %3012 = vmatprep.subr.bf16.mxu0 %v1916
  %3013 = vmatpush1.bf16.msra.mxu0 %v1915
  %3014 = vmatprep.mubr.bf16.mxu0 %v475
  %3015 = vmatmul.mubr.bf16.gmra.mrb[0].mxu0 %v474
  %v3016 = vpop.f32.mrb[0].mxu0
  %v3017 = vadd.f32 %v2976, %v3016
  %v3018 = vpop.f32.mrb[0].mxu0
  %v3019 = vadd.f32 %v2978, %v3018
  %v3020 = vpop.f32.mrb[0].mxu0
  %v3021 = vpop.f32.mrb[0].mxu0
  %3022 = vdwg.mxu0
  %3023 = vmatprep.subr.bf16.mxu0 %v1924
  %3024 = vmatpush1.bf16.msra.mxu0 %v1923
  %3025 = vmatprep.subr.bf16.mxu0 %v1932
  %3026 = vmatpush1.bf16.msra.mxu0 %v1931
  %3027 = vmatprep.subr.bf16.mxu0 %v1940
  %3028 = vmatpush1.bf16.msra.mxu0 %v1939
  %3029 = vmatprep.subr.bf16.mxu0 %v1948
  %3030 = vmatpush1.bf16.msra.mxu0 %v1947
  %3031 = vmatprep.subr.bf16.mxu0 %v1956
  %3032 = vmatpush1.bf16.msra.mxu0 %v1955
  %3033 = vmatprep.subr.bf16.mxu0 %v1964
  %3034 = vmatpush1.bf16.msra.mxu0 %v1963
  %3035 = vmatprep.subr.bf16.mxu0 %v1972
  %3036 = vmatpush1.bf16.msra.mxu0 %v1971
  %3037 = vmatprep.subr.bf16.mxu0 %v1980
  %3038 = vmatpush1.bf16.msra.mxu0 %v1979
  %3039 = vmatprep.subr.bf16.mxu0 %v1988
  %3040 = vmatpush1.bf16.msra.mxu0 %v1987
  %3041 = vmatprep.subr.bf16.mxu0 %v1996
  %3042 = vmatpush1.bf16.msra.mxu0 %v1995
  %3043 = vmatprep.subr.bf16.mxu0 %v2004
  %3044 = vmatpush1.bf16.msra.mxu0 %v2003
  %3045 = vmatprep.subr.bf16.mxu0 %v2012
  %3046 = vmatpush1.bf16.msra.mxu0 %v2011
  %3047 = vmatprep.subr.bf16.mxu0 %v2020
  %3048 = vmatpush1.bf16.msra.mxu0 %v2019
  %3049 = vmatprep.subr.bf16.mxu0 %v2028
  %3050 = vmatpush1.bf16.msra.mxu0 %v2027
  %3051 = vmatprep.subr.bf16.mxu0 %v2036
  %3052 = vmatpush1.bf16.msra.mxu0 %v2035
  %3053 = vmatprep.subr.bf16.mxu0 %v2044
  %3054 = vmatpush1.bf16.msra.mxu0 %v2043
  %3055 = vmatprep.mubr.bf16.mxu0 %v477
  %3056 = vmatmul.mubr.bf16.gmra.mrb[0].mxu0 %v476
  %v3057 = vpop.f32.mrb[0].mxu0
  %v3058 = vadd.f32 %v3017, %v3057
  %v3059 = vpop.f32.mrb[0].mxu0
  %v3060 = vadd.f32 %v3019, %v3059
  %v3061 = vpop.f32.mrb[0].mxu0
  %v3062 = vpop.f32.mrb[0].mxu0
  %3063 = vdwg.mxu0
  %3064 = vmatprep.subr.bf16.mxu0 %v2052
  %3065 = vmatpush1.bf16.msra.mxu0 %v2051
  %3066 = vmatprep.subr.bf16.mxu0 0
  %3067 = vmatpush1.bf16.msra.mxu0 0
  %3068 = vmatprep.subr.bf16.mxu0 0
  %3069 = vmatpush1.bf16.msra.mxu0 0
  %3070 = vmatprep.subr.bf16.mxu0 0
  %3071 = vmatpush1.bf16.msra.mxu0 0
  %3072 = vmatprep.subr.bf16.mxu0 0
  %3073 = vmatpush1.bf16.msra.mxu0 0
  %3074 = vmatprep.subr.bf16.mxu0 0
  %3075 = vmatpush1.bf16.msra.mxu0 0
  %3076 = vmatprep.subr.bf16.mxu0 0
  %3077 = vmatpush1.bf16.msra.mxu0 0
  %3078 = vmatprep.subr.bf16.mxu0 0
  %3079 = vmatpush1.bf16.msra.mxu0 0
  %3080 = vmatprep.subr.bf16.mxu0 0
  %3081 = vmatpush1.bf16.msra.mxu0 0
  %3082 = vmatprep.subr.bf16.mxu0 0
  %3083 = vmatpush1.bf16.msra.mxu0 0
  %3084 = vmatprep.subr.bf16.mxu0 0
  %3085 = vmatpush1.bf16.msra.mxu0 0
  %3086 = vmatprep.subr.bf16.mxu0 0
  %3087 = vmatpush1.bf16.msra.mxu0 0
  %3088 = vmatprep.subr.bf16.mxu0 0
  %3089 = vmatpush1.bf16.msra.mxu0 0
  %3090 = vmatprep.subr.bf16.mxu0 0
  %3091 = vmatpush1.bf16.msra.mxu0 0
  %3092 = vmatprep.subr.bf16.mxu0 0
  %3093 = vmatpush1.bf16.msra.mxu0 0
  %3094 = vmatprep.subr.bf16.mxu0 0
  %3095 = vmatpush1.bf16.msra.mxu0 0
  %3096 = vmatprep.mubr.bf16.mxu0 0
  %3097 = vmatmul.mubr.bf16.gmra.mrb[0].mxu0 %v2447
  %v3098 = vpop.f32.mrb[0].mxu0
  %v3099 = vadd.f32 %v3058, %v3098
  %v3100 = vpop.f32.mrb[0].mxu0
  %v3101 = vadd.f32 %v3060, %v3100
  %v3102 = vpop.f32.mrb[0].mxu0
  %v3103 = vpop.f32.mrb[0].mxu0
  %3104 = vdwg.mxu0
  %v3105 = vadd.f32 %v2607, 0.0
  %v3106 = vadd.f32 %v2609, 0.0
  %v3107 = vadd.f32 %v2771, 0.0
  %v3108 = vadd.f32 %v2773, 0.0
  %v3109 = vadd.f32 %v2935, 0.0
  %v3110 = vadd.f32 %v2937, 0.0
  %v3111 = vadd.f32 %v3099, 0.0
  %v3112 = vadd.f32 %v3101, 0.0
  %vm3113 = vcmp.gt.f32.partialorder 0.0, 1.0
  %v3114 = vsel %vm3113, 1.0, 0.0
  %v3115 = vsub.f32 %v3105, %v3114
  %v3116 = vsub.f32 %v3106, %v3114
  %v3117 = vsub.f32 %v3107, %v3114
  %v3118 = vsub.f32 %v3108, %v3114
  %v3119 = vsub.f32 %v3109, %v3114
  %v3120 = vsub.f32 %v3110, %v3114
  %v3121 = vsub.f32 %v3111, %v3114
  %v3122 = vsub.f32 %v3112, %v3114
  %v3123 = vsub.f32 %v3115, -1.0
  %v3124 = vsub.f32 %v3116, -1.0
  %v3125 = vsub.f32 %v3117, -1.0
  %v3126 = vsub.f32 %v3118, -1.0
  %v3127 = vsub.f32 %v3119, -1.0
  %v3128 = vsub.f32 %v3120, -1.0
  %v3129 = vsub.f32 %v3121, -1.0
  %v3130 = vsub.f32 %v3122, -1.0
  %v3131 = vmul.f32 %v3123, 115.90909
  %v3132 = vmul.f32 %v3124, 115.90909
  %v3133 = vmul.f32 %v3125, 115.90909
  %v3134 = vmul.f32 %v3126, 115.90909
  %v3135 = vmul.f32 %v3127, 115.90909
  %v3136 = vmul.f32 %v3128, 115.90909
  %v3137 = vmul.f32 %v3129, 115.90909
  %v3138 = vmul.f32 %v3130, 115.90909
  %v3139 = vround.ne.pseudo %v3131
  %v3140 = vround.ne.pseudo %v3132
  %v3141 = vround.ne.pseudo %v3133
  %v3142 = vround.ne.pseudo %v3134
  %v3143 = vround.ne.pseudo %v3135
  %v3144 = vround.ne.pseudo %v3136
  %v3145 = vround.ne.pseudo %v3137
  %v3146 = vround.ne.pseudo %v3138
  %v3147 = vmax.f32 %v3139, 0.0
  %v3148 = vmax.f32 %v3140, 0.0
  %v3149 = vmax.f32 %v3141, 0.0
  %v3150 = vmax.f32 %v3142, 0.0
  %v3151 = vmax.f32 %v3143, 0.0
  %v3152 = vmax.f32 %v3144, 0.0
  %v3153 = vmax.f32 %v3145, 0.0
  %v3154 = vmax.f32 %v3146, 0.0
  %v3155 = vmin.f32 %v3147, 255.0
  %v3156 = vmin.f32 %v3148, 255.0
  %v3157 = vmin.f32 %v3149, 255.0
  %v3158 = vmin.f32 %v3150, 255.0
  %v3159 = vmin.f32 %v3151, 255.0
  %v3160 = vmin.f32 %v3152, 255.0
  %v3161 = vmin.f32 %v3153, 255.0
  %v3162 = vmin.f32 %v3154, 255.0
  %v3163 = vmul.f32 %v3155, 0.008627451
  %v3164 = vmul.f32 %v3156, 0.008627451
  %v3165 = vmul.f32 %v3157, 0.008627451
  %v3166 = vmul.f32 %v3158, 0.008627451
  %v3167 = vmul.f32 %v3159, 0.008627451
  %v3168 = vmul.f32 %v3160, 0.008627451
  %v3169 = vmul.f32 %v3161, 0.008627451
  %v3170 = vmul.f32 %v3162, 0.008627451
  %v3171 = vadd.f32 %v3163, -1.0
  %v3172 = vadd.f32 %v3164, -1.0
  %v3173 = vadd.f32 %v3165, -1.0
  %v3174 = vadd.f32 %v3166, -1.0
  %v3175 = vadd.f32 %v3167, -1.0
  %v3176 = vadd.f32 %v3168, -1.0
  %v3177 = vadd.f32 %v3169, -1.0
  %v3178 = vadd.f32 %v3170, -1.0
  %vm3179 = vcmp.gt.f32.partialorder %v3171, 1.0
  %vm3180 = vcmp.gt.f32.partialorder %v3172, 1.0
  %vm3181 = vcmp.gt.f32.partialorder %v3173, 1.0
  %vm3182 = vcmp.gt.f32.partialorder %v3174, 1.0
  %vm3183 = vcmp.gt.f32.partialorder %v3175, 1.0
  %vm3184 = vcmp.gt.f32.partialorder %v3176, 1.0
  %vm3185 = vcmp.gt.f32.partialorder %v3177, 1.0
  %vm3186 = vcmp.gt.f32.partialorder %v3178, 1.0
  %v3187 = vsel %vm3179, 1, 0
  %v3188 = vsel %vm3180, 1, 0
  %v3189 = vsel %vm3181, 1, 0
  %v3190 = vsel %vm3182, 1, 0
  %v3191 = vsel %vm3183, 1, 0
  %v3192 = vsel %vm3184, 1, 0
  %v3193 = vsel %vm3185, 1, 0
  %v3194 = vsel %vm3186, 1, 0
  %v3195 = vcvt.s32.f32 %v3187
  %v3196 = vcvt.s32.f32 %v3188
  %v3197 = vcvt.s32.f32 %v3189
  %v3198 = vcvt.s32.f32 %v3190
  %v3199 = vcvt.s32.f32 %v3191
  %v3200 = vcvt.s32.f32 %v3192
  %v3201 = vcvt.s32.f32 %v3193
  %v3202 = vcvt.s32.f32 %v3194
  %3203 = vst [vmem:[#allocation2] sm:$0xff] %v3195
  %3204 = vst [vmem:[#allocation2 + $0x8] sm:$0xff] %v3196
  %3205 = vst [vmem:[#allocation2 + $0x10] sm:$0xff] %v3197
  %3206 = vst [vmem:[#allocation2 + $0x18] sm:$0xff] %v3198
  %3207 = vst [vmem:[#allocation2 + $0x20] sm:$0xff] %v3199
  %3208 = vst [vmem:[#allocation2 + $0x28] sm:$0xff] %v3200
  %3209 = vst [vmem:[#allocation2 + $0x30] sm:$0xff] %v3201
  %3210 = vst [vmem:[#allocation2 + $0x38] sm:$0xff] %v3202
  %v3211 = vmul.f32 %v3171, 0.95
  %v3212 = vmul.f32 %v3172, 0.95
  %v3213 = vmul.f32 %v3173, 0.95
  %v3214 = vmul.f32 %v3174, 0.95
  %v3215 = vmul.f32 %v3175, 0.95
  %v3216 = vmul.f32 %v3176, 0.95
  %v3217 = vmul.f32 %v3177, 0.95
  %v3218 = vmul.f32 %v3178, 0.95
  %v3219 = vadd.f32 %v3211, %v2607
  %v3220 = vadd.f32 %v3212, %v2609
  %v3221 = vadd.f32 %v3213, %v2771
  %v3222 = vadd.f32 %v3214, %v2773
  %v3223 = vadd.f32 %v3215, %v2935
  %v3224 = vadd.f32 %v3216, %v2937
  %v3225 = vadd.f32 %v3217, %v3099
  %v3226 = vadd.f32 %v3218, %v3101
  %v3227 = vsel %vm3179, 1.0, 0.0
  %v3228 = vsel %vm3180, 1.0, 0.0
  %v3229 = vsel %vm3181, 1.0, 0.0
  %v3230 = vsel %vm3182, 1.0, 0.0
  %v3231 = vsel %vm3183, 1.0, 0.0
  %v3232 = vsel %vm3184, 1.0, 0.0
  %v3233 = vsel %vm3185, 1.0, 0.0
  %v3234 = vsel %vm3186, 1.0, 0.0
  %v3235 = vsub.f32 %v3219, %v3227
  %v3236 = vsub.f32 %v3220, %v3228
  %v3237 = vsub.f32 %v3221, %v3229
  %v3238 = vsub.f32 %v3222, %v3230
  %v3239 = vsub.f32 %v3223, %v3231
  %v3240 = vsub.f32 %v3224, %v3232
  %v3241 = vsub.f32 %v3225, %v3233
  %v3242 = vsub.f32 %v3226, %v3234
  %v3243 = vsub.f32 %v3235, -1.0
  %v3244 = vsub.f32 %v3236, -1.0
  %v3245 = vsub.f32 %v3237, -1.0
  %v3246 = vsub.f32 %v3238, -1.0
  %v3247 = vsub.f32 %v3239, -1.0
  %v3248 = vsub.f32 %v3240, -1.0
  %v3249 = vsub.f32 %v3241, -1.0
  %v3250 = vsub.f32 %v3242, -1.0
  %v3251 = vmul.f32 %v3243, 115.90909
  %v3252 = vmul.f32 %v3244, 115.90909
  %v3253 = vmul.f32 %v3245, 115.90909
  %v3254 = vmul.f32 %v3246, 115.90909
  %v3255 = vmul.f32 %v3247, 115.90909
  %v3256 = vmul.f32 %v3248, 115.90909
  %v3257 = vmul.f32 %v3249, 115.90909
  %v3258 = vmul.f32 %v3250, 115.90909
  %v3259 = vround.ne.pseudo %v3251
  %v3260 = vround.ne.pseudo %v3252
  %v3261 = vround.ne.pseudo %v3253
  %v3262 = vround.ne.pseudo %v3254
  %v3263 = vround.ne.pseudo %v3255
  %v3264 = vround.ne.pseudo %v3256
  %v3265 = vround.ne.pseudo %v3257
  %v3266 = vround.ne.pseudo %v3258
  %v3267 = vmax.f32 %v3259, 0.0
  %v3268 = vmax.f32 %v3260, 0.0
  %v3269 = vmax.f32 %v3261, 0.0
  %v3270 = vmax.f32 %v3262, 0.0
  %v3271 = vmax.f32 %v3263, 0.0
  %v3272 = vmax.f32 %v3264, 0.0
  %v3273 = vmax.f32 %v3265, 0.0
  %v3274 = vmax.f32 %v3266, 0.0
  %v3275 = vmin.f32 %v3267, 255.0
  %v3276 = vmin.f32 %v3268, 255.0
  %v3277 = vmin.f32 %v3269, 255.0
  %v3278 = vmin.f32 %v3270, 255.0
  %v3279 = vmin.f32 %v3271, 255.0
  %v3280 = vmin.f32 %v3272, 255.0
  %v3281 = vmin.f32 %v3273, 255.0
  %v3282 = vmin.f32 %v3274, 255.0
  %v3283 = vmul.f32 %v3275, 0.008627451
  %v3284 = vmul.f32 %v3276, 0.008627451
  %v3285 = vmul.f32 %v3277, 0.008627451
  %v3286 = vmul.f32 %v3278, 0.008627451
  %v3287 = vmul.f32 %v3279, 0.008627451
  %v3288 = vmul.f32 %v3280, 0.008627451
  %v3289 = vmul.f32 %v3281, 0.008627451
  %v3290 = vmul.f32 %v3282, 0.008627451
  %v3291 = vadd.f32 %v3283, -1.0
  %v3292 = vadd.f32 %v3284, -1.0
  %v3293 = vadd.f32 %v3285, -1.0
  %v3294 = vadd.f32 %v3286, -1.0
  %v3295 = vadd.f32 %v3287, -1.0
  %v3296 = vadd.f32 %v3288, -1.0
  %v3297 = vadd.f32 %v3289, -1.0
  %v3298 = vadd.f32 %v3290, -1.0
  %vm3299 = vcmp.gt.f32.partialorder %v3291, 1.0
  %vm3300 = vcmp.gt.f32.partialorder %v3292, 1.0
  %vm3301 = vcmp.gt.f32.partialorder %v3293, 1.0
  %vm3302 = vcmp.gt.f32.partialorder %v3294, 1.0
  %vm3303 = vcmp.gt.f32.partialorder %v3295, 1.0
  %vm3304 = vcmp.gt.f32.partialorder %v3296, 1.0
  %vm3305 = vcmp.gt.f32.partialorder %v3297, 1.0
  %vm3306 = vcmp.gt.f32.partialorder %v3298, 1.0
  %v3307 = vsel %vm3299, 1, 0
  %v3308 = vsel %vm3300, 1, 0
  %v3309 = vsel %vm3301, 1, 0
  %v3310 = vsel %vm3302, 1, 0
  %v3311 = vsel %vm3303, 1, 0
  %v3312 = vsel %vm3304, 1, 0
  %v3313 = vsel %vm3305, 1, 0
  %v3314 = vsel %vm3306, 1, 0
  %v3315 = vcvt.s32.f32 %v3307
  %v3316 = vcvt.s32.f32 %v3308
  %v3317 = vcvt.s32.f32 %v3309
  %v3318 = vcvt.s32.f32 %v3310
  %v3319 = vcvt.s32.f32 %v3311
  %v3320 = vcvt.s32.f32 %v3312
  %v3321 = vcvt.s32.f32 %v3313
  %v3322 = vcvt.s32.f32 %v3314
  %3323 = vst [vmem:[#allocation2 + $0x40] sm:$0xff] %v3315
  %3324 = vst [vmem:[#allocation2 + $0x48] sm:$0xff] %v3316
  %3325 = vst [vmem:[#allocation2 + $0x50] sm:$0xff] %v3317
  %3326 = vst [vmem:[#allocation2 + $0x58] sm:$0xff] %v3318
  %3327 = vst [vmem:[#allocation2 + $0x60] sm:$0xff] %v3319
  %3328 = vst [vmem:[#allocation2 + $0x68] sm:$0xff] %v3320
  %3329 = vst [vmem:[#allocation2 + $0x70] sm:$0xff] %v3321
  %3330 = vst [vmem:[#allocation2 + $0x78] sm:$0xff] %v3322
  %v3331 = vmul.f32 %v3291, 0.95
  %v3332 = vmul.f32 %v3292, 0.95
  %v3333 = vmul.f32 %v3293, 0.95
  %v3334 = vmul.f32 %v3294, 0.95
  %v3335 = vmul.f32 %v3295, 0.95
  %v3336 = vmul.f32 %v3296, 0.95
  %v3337 = vmul.f32 %v3297, 0.95
  %v3338 = vmul.f32 %v3298, 0.95
  %v3339 = vadd.f32 %v3331, %v2607
  %v3340 = vadd.f32 %v3332, %v2609
  %v3341 = vadd.f32 %v3333, %v2771
  %v3342 = vadd.f32 %v3334, %v2773
  %v3343 = vadd.f32 %v3335, %v2935
  %v3344 = vadd.f32 %v3336, %v2937
  %v3345 = vadd.f32 %v3337, %v3099
  %v3346 = vadd.f32 %v3338, %v3101
  %v3347 = vsel %vm3299, 1.0, 0.0
  %v3348 = vsel %vm3300, 1.0, 0.0
  %v3349 = vsel %vm3301, 1.0, 0.0
  %v3350 = vsel %vm3302, 1.0, 0.0
  %v3351 = vsel %vm3303, 1.0, 0.0
  %v3352 = vsel %vm3304, 1.0, 0.0
  %v3353 = vsel %vm3305, 1.0, 0.0
  %v3354 = vsel %vm3306, 1.0, 0.0
  %v3355 = vsub.f32 %v3339, %v3347
  %v3356 = vsub.f32 %v3340, %v3348
  %v3357 = vsub.f32 %v3341, %v3349
  %v3358 = vsub.f32 %v3342, %v3350
  %v3359 = vsub.f32 %v3343, %v3351
  %v3360 = vsub.f32 %v3344, %v3352
  %v3361 = vsub.f32 %v3345, %v3353
  %v3362 = vsub.f32 %v3346, %v3354
  %v3363 = vsub.f32 %v3355, -1.0
  %v3364 = vsub.f32 %v3356, -1.0
  %v3365 = vsub.f32 %v3357, -1.0
  %v3366 = vsub.f32 %v3358, -1.0
  %v3367 = vsub.f32 %v3359, -1.0
  %v3368 = vsub.f32 %v3360, -1.0
  %v3369 = vsub.f32 %v3361, -1.0
  %v3370 = vsub.f32 %v3362, -1.0
  %v3371 = vmul.f32 %v3363, 115.90909
  %v3372 = vmul.f32 %v3364, 115.90909
  %v3373 = vmul.f32 %v3365, 115.90909
  %v3374 = vmul.f32 %v3366, 115.90909
  %v3375 = vmul.f32 %v3367, 115.90909
  %v3376 = vmul.f32 %v3368, 115.90909
  %v3377 = vmul.f32 %v3369, 115.90909
  %v3378 = vmul.f32 %v3370, 115.90909
  %v3379 = vround.ne.pseudo %v3371
  %v3380 = vround.ne.pseudo %v3372
  %v3381 = vround.ne.pseudo %v3373
  %v3382 = vround.ne.pseudo %v3374
  %v3383 = vround.ne.pseudo %v3375
  %v3384 = vround.ne.pseudo %v3376
  %v3385 = vround.ne.pseudo %v3377
  %v3386 = vround.ne.pseudo %v3378
  %v3387 = vmax.f32 %v3379, 0.0
  %v3388 = vmax.f32 %v3380, 0.0
  %v3389 = vmax.f32 %v3381, 0.0
  %v3390 = vmax.f32 %v3382, 0.0
  %v3391 = vmax.f32 %v3383, 0.0
  %v3392 = vmax.f32 %v3384, 0.0
  %v3393 = vmax.f32 %v3385, 0.0
  %v3394 = vmax.f32 %v3386, 0.0
  %v3395 = vmin.f32 %v3387, 255.0
  %v3396 = vmin.f32 %v3388, 255.0
  %v3397 = vmin.f32 %v3389, 255.0
  %v3398 = vmin.f32 %v3390, 255.0
  %v3399 = vmin.f32 %v3391, 255.0
  %v3400 = vmin.f32 %v3392, 255.0
  %v3401 = vmin.f32 %v3393, 255.0
  %v3402 = vmin.f32 %v3394, 255.0
  %v3403 = vmul.f32 %v3395, 0.008627451
  %v3404 = vmul.f32 %v3396, 0.008627451
  %v3405 = vmul.f32 %v3397, 0.008627451
  %v3406 = vmul.f32 %v3398, 0.008627451
  %v3407 = vmul.f32 %v3399, 0.008627451
  %v3408 = vmul.f32 %v3400, 0.008627451
  %v3409 = vmul.f32 %v3401, 0.008627451
  %v3410 = vmul.f32 %v3402, 0.008627451
  %v3411 = vadd.f32 %v3403, -1.0
  %v3412 = vadd.f32 %v3404, -1.0
  %v3413 = vadd.f32 %v3405, -1.0
  %v3414 = vadd.f32 %v3406, -1.0
  %v3415 = vadd.f32 %v3407, -1.0
  %v3416 = vadd.f32 %v3408, -1.0
  %v3417 = vadd.f32 %v3409, -1.0
  %v3418 = vadd.f32 %v3410, -1.0
  %vm3419 = vcmp.gt.f32.partialorder %v3411, 1.0
  %vm3420 = vcmp.gt.f32.partialorder %v3412, 1.0
  %vm3421 = vcmp.gt.f32.partialorder %v3413, 1.0
  %vm3422 = vcmp.gt.f32.partialorder %v3414, 1.0
  %vm3423 = vcmp.gt.f32.partialorder %v3415, 1.0
  %vm3424 = vcmp.gt.f32.partialorder %v3416, 1.0
  %vm3425 = vcmp.gt.f32.partialorder %v3417, 1.0
  %vm3426 = vcmp.gt.f32.partialorder %v3418, 1.0
  %v3427 = vsel %vm3419, 1, 0
  %v3428 = vsel %vm3420, 1, 0
  %v3429 = vsel %vm3421, 1, 0
  %v3430 = vsel %vm3422, 1, 0
  %v3431 = vsel %vm3423, 1, 0
  %v3432 = vsel %vm3424, 1, 0
  %v3433 = vsel %vm3425, 1, 0
  %v3434 = vsel %vm3426, 1, 0
  %v3435 = vcvt.s32.f32 %v3427
  %v3436 = vcvt.s32.f32 %v3428
  %v3437 = vcvt.s32.f32 %v3429
  %v3438 = vcvt.s32.f32 %v3430
  %v3439 = vcvt.s32.f32 %v3431
  %v3440 = vcvt.s32.f32 %v3432
  %v3441 = vcvt.s32.f32 %v3433
  %v3442 = vcvt.s32.f32 %v3434
  %3443 = vst [vmem:[#allocation2 + $0x80] sm:$0xff] %v3435
  %3444 = vst [vmem:[#allocation2 + $0x88] sm:$0xff] %v3436
  %3445 = vst [vmem:[#allocation2 + $0x90] sm:$0xff] %v3437
  %3446 = vst [vmem:[#allocation2 + $0x98] sm:$0xff] %v3438
  %3447 = vst [vmem:[#allocation2 + $0xa0] sm:$0xff] %v3439
  %3448 = vst [vmem:[#allocation2 + $0xa8] sm:$0xff] %v3440
  %3449 = vst [vmem:[#allocation2 + $0xb0] sm:$0xff] %v3441
  %3450 = vst [vmem:[#allocation2 + $0xb8] sm:$0xff] %v3442
  %v3451 = vmul.f32 %v3411, 0.95
  %v3452 = vmul.f32 %v3412, 0.95
  %v3453 = vmul.f32 %v3413, 0.95
  %v3454 = vmul.f32 %v3414, 0.95
  %v3455 = vmul.f32 %v3415, 0.95
  %v3456 = vmul.f32 %v3416, 0.95
  %v3457 = vmul.f32 %v3417, 0.95
  %v3458 = vmul.f32 %v3418, 0.95
  %v3459 = vadd.f32 %v3451, %v2607
  %v3460 = vadd.f32 %v3452, %v2609
  %v3461 = vadd.f32 %v3453, %v2771
  %v3462 = vadd.f32 %v3454, %v2773
  %v3463 = vadd.f32 %v3455, %v2935
  %v3464 = vadd.f32 %v3456, %v2937
  %v3465 = vadd.f32 %v3457, %v3099
  %v3466 = vadd.f32 %v3458, %v3101
  %v3467 = vsel %vm3419, 1.0, 0.0
  %v3468 = vsel %vm3420, 1.0, 0.0
  %v3469 = vsel %vm3421, 1.0, 0.0
  %v3470 = vsel %vm3422, 1.0, 0.0
  %v3471 = vsel %vm3423, 1.0, 0.0
  %v3472 = vsel %vm3424, 1.0, 0.0
  %v3473 = vsel %vm3425, 1.0, 0.0
  %v3474 = vsel %vm3426, 1.0, 0.0
  %v3475 = vsub.f32 %v3459, %v3467
  %v3476 = vsub.f32 %v3460, %v3468
  %v3477 = vsub.f32 %v3461, %v3469
  %v3478 = vsub.f32 %v3462, %v3470
  %v3479 = vsub.f32 %v3463, %v3471
  %v3480 = vsub.f32 %v3464, %v3472
  %v3481 = vsub.f32 %v3465, %v3473
  %v3482 = vsub.f32 %v3466, %v3474
  %v3483 = vsub.f32 %v3475, -1.0
  %v3484 = vsub.f32 %v3476, -1.0
  %v3485 = vsub.f32 %v3477, -1.0
  %v3486 = vsub.f32 %v3478, -1.0
  %v3487 = vsub.f32 %v3479, -1.0
  %v3488 = vsub.f32 %v3480, -1.0
  %v3489 = vsub.f32 %v3481, -1.0
  %v3490 = vsub.f32 %v3482, -1.0
  %v3491 = vmul.f32 %v3483, 115.90909
  %v3492 = vmul.f32 %v3484, 115.90909
  %v3493 = vmul.f32 %v3485, 115.90909
  %v3494 = vmul.f32 %v3486, 115.90909
  %v3495 = vmul.f32 %v3487, 115.90909
  %v3496 = vmul.f32 %v3488, 115.90909
  %v3497 = vmul.f32 %v3489, 115.90909
  %v3498 = vmul.f32 %v3490, 115.90909
  %v3499 = vround.ne.pseudo %v3491
  %v3500 = vround.ne.pseudo %v3492
  %v3501 = vround.ne.pseudo %v3493
  %v3502 = vround.ne.pseudo %v3494
  %v3503 = vround.ne.pseudo %v3495
  %v3504 = vround.ne.pseudo %v3496
  %v3505 = vround.ne.pseudo %v3497
  %v3506 = vround.ne.pseudo %v3498
  %v3507 = vmax.f32 %v3499, 0.0
  %v3508 = vmax.f32 %v3500, 0.0
  %v3509 = vmax.f32 %v3501, 0.0
  %v3510 = vmax.f32 %v3502, 0.0
  %v3511 = vmax.f32 %v3503, 0.0
  %v3512 = vmax.f32 %v3504, 0.0
  %v3513 = vmax.f32 %v3505, 0.0
  %v3514 = vmax.f32 %v3506, 0.0
  %v3515 = vmin.f32 %v3507, 255.0
  %v3516 = vmin.f32 %v3508, 255.0
  %v3517 = vmin.f32 %v3509, 255.0
  %v3518 = vmin.f32 %v3510, 255.0
  %v3519 = vmin.f32 %v3511, 255.0
  %v3520 = vmin.f32 %v3512, 255.0
  %v3521 = vmin.f32 %v3513, 255.0
  %v3522 = vmin.f32 %v3514, 255.0
  %v3523 = vmul.f32 %v3515, 0.008627451
  %v3524 = vmul.f32 %v3516, 0.008627451
  %v3525 = vmul.f32 %v3517, 0.008627451
  %v3526 = vmul.f32 %v3518, 0.008627451
  %v3527 = vmul.f32 %v3519, 0.008627451
  %v3528 = vmul.f32 %v3520, 0.008627451
  %v3529 = vmul.f32 %v3521, 0.008627451
  %v3530 = vmul.f32 %v3522, 0.008627451
  %v3531 = vadd.f32 %v3523, -1.0
  %v3532 = vadd.f32 %v3524, -1.0
  %v3533 = vadd.f32 %v3525, -1.0
  %v3534 = vadd.f32 %v3526, -1.0
  %v3535 = vadd.f32 %v3527, -1.0
  %v3536 = vadd.f32 %v3528, -1.0
  %v3537 = vadd.f32 %v3529, -1.0
  %v3538 = vadd.f32 %v3530, -1.0
  %vm3539 = vcmp.gt.f32.partialorder %v3531, 1.0
  %vm3540 = vcmp.gt.f32.partialorder %v3532, 1.0
  %vm3541 = vcmp.gt.f32.partialorder %v3533, 1.0
  %vm3542 = vcmp.gt.f32.partialorder %v3534, 1.0
  %vm3543 = vcmp.gt.f32.partialorder %v3535, 1.0
  %vm3544 = vcmp.gt.f32.partialorder %v3536, 1.0
  %vm3545 = vcmp.gt.f32.partialorder %v3537, 1.0
  %vm3546 = vcmp.gt.f32.partialorder %v3538, 1.0
  %v3547 = vsel %vm3539, 1, 0
  %v3548 = vsel %vm3540, 1, 0
  %v3549 = vsel %vm3541, 1, 0
  %v3550 = vsel %vm3542, 1, 0
  %v3551 = vsel %vm3543, 1, 0
  %v3552 = vsel %vm3544, 1, 0
  %v3553 = vsel %vm3545, 1, 0
  %v3554 = vsel %vm3546, 1, 0
  %v3555 = vcvt.s32.f32 %v3547
  %v3556 = vcvt.s32.f32 %v3548
  %v3557 = vcvt.s32.f32 %v3549
  %v3558 = vcvt.s32.f32 %v3550
  %v3559 = vcvt.s32.f32 %v3551
  %v3560 = vcvt.s32.f32 %v3552
  %v3561 = vcvt.s32.f32 %v3553
  %v3562 = vcvt.s32.f32 %v3554
  %3563 = vst [vmem:[#allocation2 + $0xc0] sm:$0xff] %v3555
  %3564 = vst [vmem:[#allocation2 + $0xc8] sm:$0xff] %v3556
  %3565 = vst [vmem:[#allocation2 + $0xd0] sm:$0xff] %v3557
  %3566 = vst [vmem:[#allocation2 + $0xd8] sm:$0xff] %v3558
  %3567 = vst [vmem:[#allocation2 + $0xe0] sm:$0xff] %v3559
  %3568 = vst [vmem:[#allocation2 + $0xe8] sm:$0xff] %v3560
  %3569 = vst [vmem:[#allocation2 + $0xf0] sm:$0xff] %v3561
  %3570 = vst [vmem:[#allocation2 + $0xf8] sm:$0xff] %v3562
  %v3571 = vmul.f32 %v3531, 0.95
  %v3572 = vmul.f32 %v3532, 0.95
  %v3573 = vmul.f32 %v3533, 0.95
  %v3574 = vmul.f32 %v3534, 0.95
  %v3575 = vmul.f32 %v3535, 0.95
  %v3576 = vmul.f32 %v3536, 0.95
  %v3577 = vmul.f32 %v3537, 0.95
  %v3578 = vmul.f32 %v3538, 0.95
  %v3579 = vadd.f32 %v3571, %v2607
  %v3580 = vadd.f32 %v3572, %v2609
  %v3581 = vadd.f32 %v3573, %v2771
  %v3582 = vadd.f32 %v3574, %v2773
  %v3583 = vadd.f32 %v3575, %v2935
  %v3584 = vadd.f32 %v3576, %v2937
  %v3585 = vadd.f32 %v3577, %v3099
  %v3586 = vadd.f32 %v3578, %v3101
  %v3587 = vsel %vm3539, 1.0, 0.0
  %v3588 = vsel %vm3540, 1.0, 0.0
  %v3589 = vsel %vm3541, 1.0, 0.0
  %v3590 = vsel %vm3542, 1.0, 0.0
  %v3591 = vsel %vm3543, 1.0, 0.0
  %v3592 = vsel %vm3544, 1.0, 0.0
  %v3593 = vsel %vm3545, 1.0, 0.0
  %v3594 = vsel %vm3546, 1.0, 0.0
  %v3595 = vsub.f32 %v3579, %v3587
  %v3596 = vsub.f32 %v3580, %v3588
  %v3597 = vsub.f32 %v3581, %v3589
  %v3598 = vsub.f32 %v3582, %v3590
  %v3599 = vsub.f32 %v3583, %v3591
  %v3600 = vsub.f32 %v3584, %v3592
  %v3601 = vsub.f32 %v3585, %v3593
  %v3602 = vsub.f32 %v3586, %v3594
  %v3603 = vsub.f32 %v3595, -1.0
  %v3604 = vsub.f32 %v3596, -1.0
  %v3605 = vsub.f32 %v3597, -1.0
  %v3606 = vsub.f32 %v3598, -1.0
  %v3607 = vsub.f32 %v3599, -1.0
  %v3608 = vsub.f32 %v3600, -1.0
  %v3609 = vsub.f32 %v3601, -1.0
  %v3610 = vsub.f32 %v3602, -1.0
  %v3611 = vmul.f32 %v3603, 115.90909
  %v3612 = vmul.f32 %v3604, 115.90909
  %v3613 = vmul.f32 %v3605, 115.90909
  %v3614 = vmul.f32 %v3606, 115.90909
  %v3615 = vmul.f32 %v3607, 115.90909
  %v3616 = vmul.f32 %v3608, 115.90909
  %v3617 = vmul.f32 %v3609, 115.90909
  %v3618 = vmul.f32 %v3610, 115.90909
  %v3619 = vround.ne.pseudo %v3611
  %v3620 = vround.ne.pseudo %v3612
  %v3621 = vround.ne.pseudo %v3613
  %v3622 = vround.ne.pseudo %v3614
  %v3623 = vround.ne.pseudo %v3615
  %v3624 = vround.ne.pseudo %v3616
  %v3625 = vround.ne.pseudo %v3617
  %v3626 = vround.ne.pseudo %v3618
  %v3627 = vmax.f32 %v3619, 0.0
  %v3628 = vmax.f32 %v3620, 0.0
  %v3629 = vmax.f32 %v3621, 0.0
  %v3630 = vmax.f32 %v3622, 0.0
  %v3631 = vmax.f32 %v3623, 0.0
  %v3632 = vmax.f32 %v3624, 0.0
  %v3633 = vmax.f32 %v3625, 0.0
  %v3634 = vmax.f32 %v3626, 0.0
  %v3635 = vmin.f32 %v3627, 255.0
  %v3636 = vmin.f32 %v3628, 255.0
  %v3637 = vmin.f32 %v3629, 255.0
  %v3638 = vmin.f32 %v3630, 255.0
  %v3639 = vmin.f32 %v3631, 255.0
  %v3640 = vmin.f32 %v3632, 255.0
  %v3641 = vmin.f32 %v3633, 255.0
  %v3642 = vmin.f32 %v3634, 255.0
  %v3643 = vmul.f32 %v3635, 0.008627451
  %v3644 = vmul.f32 %v3636, 0.008627451
  %v3645 = vmul.f32 %v3637, 0.008627451
  %v3646 = vmul.f32 %v3638, 0.008627451
  %v3647 = vmul.f32 %v3639, 0.008627451
  %v3648 = vmul.f32 %v3640, 0.008627451
  %v3649 = vmul.f32 %v3641, 0.008627451
  %v3650 = vmul.f32 %v3642, 0.008627451
  %v3651 = vadd.f32 %v3643, -1.0
  %v3652 = vadd.f32 %v3644, -1.0
  %v3653 = vadd.f32 %v3645, -1.0
  %v3654 = vadd.f32 %v3646, -1.0
  %v3655 = vadd.f32 %v3647, -1.0
  %v3656 = vadd.f32 %v3648, -1.0
  %v3657 = vadd.f32 %v3649, -1.0
  %v3658 = vadd.f32 %v3650, -1.0
  %vm3659 = vcmp.gt.f32.partialorder %v3651, 1.0
  %vm3660 = vcmp.gt.f32.partialorder %v3652, 1.0
  %vm3661 = vcmp.gt.f32.partialorder %v3653, 1.0
  %vm3662 = vcmp.gt.f32.partialorder %v3654, 1.0
  %vm3663 = vcmp.gt.f32.partialorder %v3655, 1.0
  %vm3664 = vcmp.gt.f32.partialorder %v3656, 1.0
  %vm3665 = vcmp.gt.f32.partialorder %v3657, 1.0
  %vm3666 = vcmp.gt.f32.partialorder %v3658, 1.0
  %v3667 = vsel %vm3659, 1, 0
  %v3668 = vsel %vm3660, 1, 0
  %v3669 = vsel %vm3661, 1, 0
  %v3670 = vsel %vm3662, 1, 0
  %v3671 = vsel %vm3663, 1, 0
  %v3672 = vsel %vm3664, 1, 0
  %v3673 = vsel %vm3665, 1, 0
  %v3674 = vsel %vm3666, 1, 0
  %v3675 = vcvt.s32.f32 %v3667
  %v3676 = vcvt.s32.f32 %v3668
  %v3677 = vcvt.s32.f32 %v3669
  %v3678 = vcvt.s32.f32 %v3670
  %v3679 = vcvt.s32.f32 %v3671
  %v3680 = vcvt.s32.f32 %v3672
  %v3681 = vcvt.s32.f32 %v3673
  %v3682 = vcvt.s32.f32 %v3674
  %3683 = vst [vmem:[#allocation2 + $0x100] sm:$0xff] %v3675
  %3684 = vst [vmem:[#allocation2 + $0x108] sm:$0xff] %v3676
  %3685 = vst [vmem:[#allocation2 + $0x110] sm:$0xff] %v3677
  %3686 = vst [vmem:[#allocation2 + $0x118] sm:$0xff] %v3678
  %3687 = vst [vmem:[#allocation2 + $0x120] sm:$0xff] %v3679
  %3688 = vst [vmem:[#allocation2 + $0x128] sm:$0xff] %v3680
  %3689 = vst [vmem:[#allocation2 + $0x130] sm:$0xff] %v3681
  %3690 = vst [vmem:[#allocation2 + $0x138] sm:$0xff] %v3682
  %v3691 = vmul.f32 %v3651, 0.95
  %v3692 = vmul.f32 %v3652, 0.95
  %v3693 = vmul.f32 %v3653, 0.95
  %v3694 = vmul.f32 %v3654, 0.95
  %v3695 = vmul.f32 %v3655, 0.95
  %v3696 = vmul.f32 %v3656, 0.95
  %v3697 = vmul.f32 %v3657, 0.95
  %v3698 = vmul.f32 %v3658, 0.95
  %v3699 = vadd.f32 %v3691, %v2607
  %v3700 = vadd.f32 %v3692, %v2609
  %v3701 = vadd.f32 %v3693, %v2771
  %v3702 = vadd.f32 %v3694, %v2773
  %v3703 = vadd.f32 %v3695, %v2935
  %v3704 = vadd.f32 %v3696, %v2937
  %v3705 = vadd.f32 %v3697, %v3099
  %v3706 = vadd.f32 %v3698, %v3101
  %v3707 = vsel %vm3659, 1.0, 0.0
  %v3708 = vsel %vm3660, 1.0, 0.0
  %v3709 = vsel %vm3661, 1.0, 0.0
  %v3710 = vsel %vm3662, 1.0, 0.0
  %v3711 = vsel %vm3663, 1.0, 0.0
  %v3712 = vsel %vm3664, 1.0, 0.0
  %v3713 = vsel %vm3665, 1.0, 0.0
  %v3714 = vsel %vm3666, 1.0, 0.0
  %v3715 = vsub.f32 %v3699, %v3707
  %v3716 = vsub.f32 %v3700, %v3708
  %v3717 = vsub.f32 %v3701, %v3709
  %v3718 = vsub.f32 %v3702, %v3710
  %v3719 = vsub.f32 %v3703, %v3711
  %v3720 = vsub.f32 %v3704, %v3712
  %v3721 = vsub.f32 %v3705, %v3713
  %v3722 = vsub.f32 %v3706, %v3714
  %v3723 = vsub.f32 %v3715, -1.0
  %v3724 = vsub.f32 %v3716, -1.0
  %v3725 = vsub.f32 %v3717, -1.0
  %v3726 = vsub.f32 %v3718, -1.0
  %v3727 = vsub.f32 %v3719, -1.0
  %v3728 = vsub.f32 %v3720, -1.0
  %v3729 = vsub.f32 %v3721, -1.0
  %v3730 = vsub.f32 %v3722, -1.0
  %v3731 = vmul.f32 %v3723, 115.90909
  %v3732 = vmul.f32 %v3724, 115.90909
  %v3733 = vmul.f32 %v3725, 115.90909
  %v3734 = vmul.f32 %v3726, 115.90909
  %v3735 = vmul.f32 %v3727, 115.90909
  %v3736 = vmul.f32 %v3728, 115.90909
  %v3737 = vmul.f32 %v3729, 115.90909
  %v3738 = vmul.f32 %v3730, 115.90909
  %v3739 = vround.ne.pseudo %v3731
  %v3740 = vround.ne.pseudo %v3732
  %v3741 = vround.ne.pseudo %v3733
  %v3742 = vround.ne.pseudo %v3734
  %v3743 = vround.ne.pseudo %v3735
  %v3744 = vround.ne.pseudo %v3736
  %v3745 = vround.ne.pseudo %v3737
  %v3746 = vround.ne.pseudo %v3738
  %v3747 = vmax.f32 %v3739, 0.0
  %v3748 = vmax.f32 %v3740, 0.0
  %v3749 = vmax.f32 %v3741, 0.0
  %v3750 = vmax.f32 %v3742, 0.0
  %v3751 = vmax.f32 %v3743, 0.0
  %v3752 = vmax.f32 %v3744, 0.0
  %v3753 = vmax.f32 %v3745, 0.0
  %v3754 = vmax.f32 %v3746, 0.0
  %v3755 = vmin.f32 %v3747, 255.0
  %v3756 = vmin.f32 %v3748, 255.0
  %v3757 = vmin.f32 %v3749, 255.0
  %v3758 = vmin.f32 %v3750, 255.0
  %v3759 = vmin.f32 %v3751, 255.0
  %v3760 = vmin.f32 %v3752, 255.0
  %v3761 = vmin.f32 %v3753, 255.0
  %v3762 = vmin.f32 %v3754, 255.0
  %v3763 = vmul.f32 %v3755, 0.008627451
  %v3764 = vmul.f32 %v3756, 0.008627451
  %v3765 = vmul.f32 %v3757, 0.008627451
  %v3766 = vmul.f32 %v3758, 0.008627451
  %v3767 = vmul.f32 %v3759, 0.008627451
  %v3768 = vmul.f32 %v3760, 0.008627451
  %v3769 = vmul.f32 %v3761, 0.008627451
  %v3770 = vmul.f32 %v3762, 0.008627451
  %v3771 = vadd.f32 %v3763, -1.0
  %v3772 = vadd.f32 %v3764, -1.0
  %v3773 = vadd.f32 %v3765, -1.0
  %v3774 = vadd.f32 %v3766, -1.0
  %v3775 = vadd.f32 %v3767, -1.0
  %v3776 = vadd.f32 %v3768, -1.0
  %v3777 = vadd.f32 %v3769, -1.0
  %v3778 = vadd.f32 %v3770, -1.0
  %vm3779 = vcmp.gt.f32.partialorder %v3771, 1.0
  %vm3780 = vcmp.gt.f32.partialorder %v3772, 1.0
  %vm3781 = vcmp.gt.f32.partialorder %v3773, 1.0
  %vm3782 = vcmp.gt.f32.partialorder %v3774, 1.0
  %vm3783 = vcmp.gt.f32.partialorder %v3775, 1.0
  %vm3784 = vcmp.gt.f32.partialorder %v3776, 1.0
  %vm3785 = vcmp.gt.f32.partialorder %v3777, 1.0
  %vm3786 = vcmp.gt.f32.partialorder %v3778, 1.0
  %v3787 = vsel %vm3779, 1, 0
  %v3788 = vsel %vm3780, 1, 0
  %v3789 = vsel %vm3781, 1, 0
  %v3790 = vsel %vm3782, 1, 0
  %v3791 = vsel %vm3783, 1, 0
  %v3792 = vsel %vm3784, 1, 0
  %v3793 = vsel %vm3785, 1, 0
  %v3794 = vsel %vm3786, 1, 0
  %v3795 = vcvt.s32.f32 %v3787
  %v3796 = vcvt.s32.f32 %v3788
  %v3797 = vcvt.s32.f32 %v3789
  %v3798 = vcvt.s32.f32 %v3790
  %v3799 = vcvt.s32.f32 %v3791
  %v3800 = vcvt.s32.f32 %v3792
  %v3801 = vcvt.s32.f32 %v3793
  %v3802 = vcvt.s32.f32 %v3794
  %3803 = vst [vmem:[#allocation2 + $0x140] sm:$0xff] %v3795
  %3804 = vst [vmem:[#allocation2 + $0x148] sm:$0xff] %v3796
  %3805 = vst [vmem:[#allocation2 + $0x150] sm:$0xff] %v3797
  %3806 = vst [vmem:[#allocation2 + $0x158] sm:$0xff] %v3798
  %3807 = vst [vmem:[#allocation2 + $0x160] sm:$0xff] %v3799
  %3808 = vst [vmem:[#allocation2 + $0x168] sm:$0xff] %v3800
  %3809 = vst [vmem:[#allocation2 + $0x170] sm:$0xff] %v3801
  %3810 = vst [vmem:[#allocation2 + $0x178] sm:$0xff] %v3802
  %v3811 = vmul.f32 %v3771, 0.95
  %v3812 = vmul.f32 %v3772, 0.95
  %v3813 = vmul.f32 %v3773, 0.95
  %v3814 = vmul.f32 %v3774, 0.95
  %v3815 = vmul.f32 %v3775, 0.95
  %v3816 = vmul.f32 %v3776, 0.95
  %v3817 = vmul.f32 %v3777, 0.95
  %v3818 = vmul.f32 %v3778, 0.95
  %v3819 = vadd.f32 %v3811, %v2607
  %v3820 = vadd.f32 %v3812, %v2609
  %v3821 = vadd.f32 %v3813, %v2771
  %v3822 = vadd.f32 %v3814, %v2773
  %v3823 = vadd.f32 %v3815, %v2935
  %v3824 = vadd.f32 %v3816, %v2937
  %v3825 = vadd.f32 %v3817, %v3099
  %v3826 = vadd.f32 %v3818, %v3101
  %v3827 = vsel %vm3779, 1.0, 0.0
  %v3828 = vsel %vm3780, 1.0, 0.0
  %v3829 = vsel %vm3781, 1.0, 0.0
  %v3830 = vsel %vm3782, 1.0, 0.0
  %v3831 = vsel %vm3783, 1.0, 0.0
  %v3832 = vsel %vm3784, 1.0, 0.0
  %v3833 = vsel %vm3785, 1.0, 0.0
  %v3834 = vsel %vm3786, 1.0, 0.0
  %v3835 = vsub.f32 %v3819, %v3827
  %v3836 = vsub.f32 %v3820, %v3828
  %v3837 = vsub.f32 %v3821, %v3829
  %v3838 = vsub.f32 %v3822, %v3830
  %v3839 = vsub.f32 %v3823, %v3831
  %v3840 = vsub.f32 %v3824, %v3832
  %v3841 = vsub.f32 %v3825, %v3833
  %v3842 = vsub.f32 %v3826, %v3834
  %v3843 = vsub.f32 %v3835, -1.0
  %v3844 = vsub.f32 %v3836, -1.0
  %v3845 = vsub.f32 %v3837, -1.0
  %v3846 = vsub.f32 %v3838, -1.0
  %v3847 = vsub.f32 %v3839, -1.0
  %v3848 = vsub.f32 %v3840, -1.0
  %v3849 = vsub.f32 %v3841, -1.0
  %v3850 = vsub.f32 %v3842, -1.0
  %v3851 = vmul.f32 %v3843, 115.90909
  %v3852 = vmul.f32 %v3844, 115.90909
  %v3853 = vmul.f32 %v3845, 115.90909
  %v3854 = vmul.f32 %v3846, 115.90909
  %v3855 = vmul.f32 %v3847, 115.90909
  %v3856 = vmul.f32 %v3848, 115.90909
  %v3857 = vmul.f32 %v3849, 115.90909
  %v3858 = vmul.f32 %v3850, 115.90909
  %v3859 = vround.ne.pseudo %v3851
  %v3860 = vround.ne.pseudo %v3852
  %v3861 = vround.ne.pseudo %v3853
  %v3862 = vround.ne.pseudo %v3854
  %v3863 = vround.ne.pseudo %v3855
  %v3864 = vround.ne.pseudo %v3856
  %v3865 = vround.ne.pseudo %v3857
  %v3866 = vround.ne.pseudo %v3858
  %v3867 = vmax.f32 %v3859, 0.0
  %v3868 = vmax.f32 %v3860, 0.0
  %v3869 = vmax.f32 %v3861, 0.0
  %v3870 = vmax.f32 %v3862, 0.0
  %v3871 = vmax.f32 %v3863, 0.0
  %v3872 = vmax.f32 %v3864, 0.0
  %v3873 = vmax.f32 %v3865, 0.0
  %v3874 = vmax.f32 %v3866, 0.0
  %v3875 = vmin.f32 %v3867, 255.0
  %v3876 = vmin.f32 %v3868, 255.0
  %v3877 = vmin.f32 %v3869, 255.0
  %v3878 = vmin.f32 %v3870, 255.0
  %v3879 = vmin.f32 %v3871, 255.0
  %v3880 = vmin.f32 %v3872, 255.0
  %v3881 = vmin.f32 %v3873, 255.0
  %v3882 = vmin.f32 %v3874, 255.0
  %v3883 = vmul.f32 %v3875, 0.008627451
  %v3884 = vmul.f32 %v3876, 0.008627451
  %v3885 = vmul.f32 %v3877, 0.008627451
  %v3886 = vmul.f32 %v3878, 0.008627451
  %v3887 = vmul.f32 %v3879, 0.008627451
  %v3888 = vmul.f32 %v3880, 0.008627451
  %v3889 = vmul.f32 %v3881, 0.008627451
  %v3890 = vmul.f32 %v3882, 0.008627451
  %v3891 = vadd.f32 %v3883, -1.0
  %v3892 = vadd.f32 %v3884, -1.0
  %v3893 = vadd.f32 %v3885, -1.0
  %v3894 = vadd.f32 %v3886, -1.0
  %v3895 = vadd.f32 %v3887, -1.0
  %v3896 = vadd.f32 %v3888, -1.0
  %v3897 = vadd.f32 %v3889, -1.0
  %v3898 = vadd.f32 %v3890, -1.0
  %vm3899 = vcmp.gt.f32.partialorder %v3891, 1.0
  %vm3900 = vcmp.gt.f32.partialorder %v3892, 1.0
  %vm3901 = vcmp.gt.f32.partialorder %v3893, 1.0
  %vm3902 = vcmp.gt.f32.partialorder %v3894, 1.0
  %vm3903 = vcmp.gt.f32.partialorder %v3895, 1.0
  %vm3904 = vcmp.gt.f32.partialorder %v3896, 1.0
  %vm3905 = vcmp.gt.f32.partialorder %v3897, 1.0
  %vm3906 = vcmp.gt.f32.partialorder %v3898, 1.0
  %v3907 = vsel %vm3899, 1, 0
  %v3908 = vsel %vm3900, 1, 0
  %v3909 = vsel %vm3901, 1, 0
  %v3910 = vsel %vm3902, 1, 0
  %v3911 = vsel %vm3903, 1, 0
  %v3912 = vsel %vm3904, 1, 0
  %v3913 = vsel %vm3905, 1, 0
  %v3914 = vsel %vm3906, 1, 0
  %v3915 = vcvt.s32.f32 %v3907
  %v3916 = vcvt.s32.f32 %v3908
  %v3917 = vcvt.s32.f32 %v3909
  %v3918 = vcvt.s32.f32 %v3910
  %v3919 = vcvt.s32.f32 %v3911
  %v3920 = vcvt.s32.f32 %v3912
  %v3921 = vcvt.s32.f32 %v3913
  %v3922 = vcvt.s32.f32 %v3914
  %3923 = vst [vmem:[#allocation2 + $0x180] sm:$0xff] %v3915
  %3924 = vst [vmem:[#allocation2 + $0x188] sm:$0xff] %v3916
  %3925 = vst [vmem:[#allocation2 + $0x190] sm:$0xff] %v3917
  %3926 = vst [vmem:[#allocation2 + $0x198] sm:$0xff] %v3918
  %3927 = vst [vmem:[#allocation2 + $0x1a0] sm:$0xff] %v3919
  %3928 = vst [vmem:[#allocation2 + $0x1a8] sm:$0xff] %v3920
  %3929 = vst [vmem:[#allocation2 + $0x1b0] sm:$0xff] %v3921
  %3930 = vst [vmem:[#allocation2 + $0x1b8] sm:$0xff] %v3922
  %v3931 = vmul.f32 %v3891, 0.95
  %v3932 = vmul.f32 %v3892, 0.95
  %v3933 = vmul.f32 %v3893, 0.95
  %v3934 = vmul.f32 %v3894, 0.95
  %v3935 = vmul.f32 %v3895, 0.95
  %v3936 = vmul.f32 %v3896, 0.95
  %v3937 = vmul.f32 %v3897, 0.95
  %v3938 = vmul.f32 %v3898, 0.95
  %v3939 = vadd.f32 %v3931, %v2607
  %v3940 = vadd.f32 %v3932, %v2609
  %v3941 = vadd.f32 %v3933, %v2771
  %v3942 = vadd.f32 %v3934, %v2773
  %v3943 = vadd.f32 %v3935, %v2935
  %v3944 = vadd.f32 %v3936, %v2937
  %v3945 = vadd.f32 %v3937, %v3099
  %v3946 = vadd.f32 %v3938, %v3101
  %v3947 = vsel %vm3899, 1.0, 0.0
  %v3948 = vsel %vm3900, 1.0, 0.0
  %v3949 = vsel %vm3901, 1.0, 0.0
  %v3950 = vsel %vm3902, 1.0, 0.0
  %v3951 = vsel %vm3903, 1.0, 0.0
  %v3952 = vsel %vm3904, 1.0, 0.0
  %v3953 = vsel %vm3905, 1.0, 0.0
  %v3954 = vsel %vm3906, 1.0, 0.0
  %v3955 = vsub.f32 %v3939, %v3947
  %v3956 = vsub.f32 %v3940, %v3948
  %v3957 = vsub.f32 %v3941, %v3949
  %v3958 = vsub.f32 %v3942, %v3950
  %v3959 = vsub.f32 %v3943, %v3951
  %v3960 = vsub.f32 %v3944, %v3952
  %v3961 = vsub.f32 %v3945, %v3953
  %v3962 = vsub.f32 %v3946, %v3954
  %v3963 = vsub.f32 %v3955, -1.0
  %v3964 = vsub.f32 %v3956, -1.0
  %v3965 = vsub.f32 %v3957, -1.0
  %v3966 = vsub.f32 %v3958, -1.0
  %v3967 = vsub.f32 %v3959, -1.0
  %v3968 = vsub.f32 %v3960, -1.0
  %v3969 = vsub.f32 %v3961, -1.0
  %v3970 = vsub.f32 %v3962, -1.0
  %v3971 = vmul.f32 %v3963, 115.90909
  %v3972 = vmul.f32 %v3964, 115.90909
  %v3973 = vmul.f32 %v3965, 115.90909
  %v3974 = vmul.f32 %v3966, 115.90909
  %v3975 = vmul.f32 %v3967, 115.90909
  %v3976 = vmul.f32 %v3968, 115.90909
  %v3977 = vmul.f32 %v3969, 115.90909
  %v3978 = vmul.f32 %v3970, 115.90909
  %v3979 = vround.ne.pseudo %v3971
  %v3980 = vround.ne.pseudo %v3972
  %v3981 = vround.ne.pseudo %v3973
  %v3982 = vround.ne.pseudo %v3974
  %v3983 = vround.ne.pseudo %v3975
  %v3984 = vround.ne.pseudo %v3976
  %v3985 = vround.ne.pseudo %v3977
  %v3986 = vround.ne.pseudo %v3978
  %v3987 = vmax.f32 %v3979, 0.0
  %v3988 = vmax.f32 %v3980, 0.0
  %v3989 = vmax.f32 %v3981, 0.0
  %v3990 = vmax.f32 %v3982, 0.0
  %v3991 = vmax.f32 %v3983, 0.0
  %v3992 = vmax.f32 %v3984, 0.0
  %v3993 = vmax.f32 %v3985, 0.0
  %v3994 = vmax.f32 %v3986, 0.0
  %v3995 = vmin.f32 %v3987, 255.0
  %v3996 = vmin.f32 %v3988, 255.0
  %v3997 = vmin.f32 %v3989, 255.0
  %v3998 = vmin.f32 %v3990, 255.0
  %v3999 = vmin.f32 %v3991, 255.0
  %v4000 = vmin.f32 %v3992, 255.0
  %v4001 = vmin.f32 %v3993, 255.0
  %v4002 = vmin.f32 %v3994, 255.0
  %v4003 = vmul.f32 %v3995, 0.008627451
  %v4004 = vmul.f32 %v3996, 0.008627451
  %v4005 = vmul.f32 %v3997, 0.008627451
  %v4006 = vmul.f32 %v3998, 0.008627451
  %v4007 = vmul.f32 %v3999, 0.008627451
  %v4008 = vmul.f32 %v4000, 0.008627451
  %v4009 = vmul.f32 %v4001, 0.008627451
  %v4010 = vmul.f32 %v4002, 0.008627451
  %v4011 = vadd.f32 %v4003, -1.0
  %v4012 = vadd.f32 %v4004, -1.0
  %v4013 = vadd.f32 %v4005, -1.0
  %v4014 = vadd.f32 %v4006, -1.0
  %v4015 = vadd.f32 %v4007, -1.0
  %v4016 = vadd.f32 %v4008, -1.0
  %v4017 = vadd.f32 %v4009, -1.0
  %v4018 = vadd.f32 %v4010, -1.0
  %vm4019 = vcmp.gt.f32.partialorder %v4011, 1.0
  %vm4020 = vcmp.gt.f32.partialorder %v4012, 1.0
  %vm4021 = vcmp.gt.f32.partialorder %v4013, 1.0
  %vm4022 = vcmp.gt.f32.partialorder %v4014, 1.0
  %vm4023 = vcmp.gt.f32.partialorder %v4015, 1.0
  %vm4024 = vcmp.gt.f32.partialorder %v4016, 1.0
  %vm4025 = vcmp.gt.f32.partialorder %v4017, 1.0
  %vm4026 = vcmp.gt.f32.partialorder %v4018, 1.0
  %v4027 = vsel %vm4019, 1, 0
  %v4028 = vsel %vm4020, 1, 0
  %v4029 = vsel %vm4021, 1, 0
  %v4030 = vsel %vm4022, 1, 0
  %v4031 = vsel %vm4023, 1, 0
  %v4032 = vsel %vm4024, 1, 0
  %v4033 = vsel %vm4025, 1, 0
  %v4034 = vsel %vm4026, 1, 0
  %v4035 = vcvt.s32.f32 %v4027
  %v4036 = vcvt.s32.f32 %v4028
  %v4037 = vcvt.s32.f32 %v4029
  %v4038 = vcvt.s32.f32 %v4030
  %v4039 = vcvt.s32.f32 %v4031
  %v4040 = vcvt.s32.f32 %v4032
  %v4041 = vcvt.s32.f32 %v4033
  %v4042 = vcvt.s32.f32 %v4034
  %4043 = vst [vmem:[#allocation2 + $0x1c0] sm:$0xff] %v4035
  %4044 = vst [vmem:[#allocation2 + $0x1c8] sm:$0xff] %v4036
  %4045 = vst [vmem:[#allocation2 + $0x1d0] sm:$0xff] %v4037
  %4046 = vst [vmem:[#allocation2 + $0x1d8] sm:$0xff] %v4038
  %4047 = vst [vmem:[#allocation2 + $0x1e0] sm:$0xff] %v4039
  %4048 = vst [vmem:[#allocation2 + $0x1e8] sm:$0xff] %v4040
  %4049 = vst [vmem:[#allocation2 + $0x1f0] sm:$0xff] %v4041
  %4050 = vst [vmem:[#allocation2 + $0x1f8] sm:$0xff] %v4042
  %v4051 = vmul.f32 %v4011, 0.95
  %v4052 = vmul.f32 %v4012, 0.95
  %v4053 = vmul.f32 %v4013, 0.95
  %v4054 = vmul.f32 %v4014, 0.95
  %v4055 = vmul.f32 %v4015, 0.95
  %v4056 = vmul.f32 %v4016, 0.95
  %v4057 = vmul.f32 %v4017, 0.95
  %v4058 = vmul.f32 %v4018, 0.95
  %v4059 = vadd.f32 %v4051, %v2607
  %v4060 = vadd.f32 %v4052, %v2609
  %v4061 = vadd.f32 %v4053, %v2771
  %v4062 = vadd.f32 %v4054, %v2773
  %v4063 = vadd.f32 %v4055, %v2935
  %v4064 = vadd.f32 %v4056, %v2937
  %v4065 = vadd.f32 %v4057, %v3099
  %v4066 = vadd.f32 %v4058, %v3101
  %v4067 = vsel %vm4019, 1.0, 0.0
  %v4068 = vsel %vm4020, 1.0, 0.0
  %v4069 = vsel %vm4021, 1.0, 0.0
  %v4070 = vsel %vm4022, 1.0, 0.0
  %v4071 = vsel %vm4023, 1.0, 0.0
  %v4072 = vsel %vm4024, 1.0, 0.0
  %v4073 = vsel %vm4025, 1.0, 0.0
  %v4074 = vsel %vm4026, 1.0, 0.0
  %v4075 = vsub.f32 %v4059, %v4067
  %v4076 = vsub.f32 %v4060, %v4068
  %v4077 = vsub.f32 %v4061, %v4069
  %v4078 = vsub.f32 %v4062, %v4070
  %v4079 = vsub.f32 %v4063, %v4071
  %v4080 = vsub.f32 %v4064, %v4072
  %v4081 = vsub.f32 %v4065, %v4073
  %v4082 = vsub.f32 %v4066, %v4074
  %v4083 = vsub.f32 %v4075, -1.0
  %v4084 = vsub.f32 %v4076, -1.0
  %v4085 = vsub.f32 %v4077, -1.0
  %v4086 = vsub.f32 %v4078, -1.0
  %v4087 = vsub.f32 %v4079, -1.0
  %v4088 = vsub.f32 %v4080, -1.0
  %v4089 = vsub.f32 %v4081, -1.0
  %v4090 = vsub.f32 %v4082, -1.0
  %v4091 = vmul.f32 %v4083, 115.90909
  %v4092 = vmul.f32 %v4084, 115.90909
  %v4093 = vmul.f32 %v4085, 115.90909
  %v4094 = vmul.f32 %v4086, 115.90909
  %v4095 = vmul.f32 %v4087, 115.90909
  %v4096 = vmul.f32 %v4088, 115.90909
  %v4097 = vmul.f32 %v4089, 115.90909
  %v4098 = vmul.f32 %v4090, 115.90909
  %v4099 = vround.ne.pseudo %v4091
  %v4100 = vround.ne.pseudo %v4092
  %v4101 = vround.ne.pseudo %v4093
  %v4102 = vround.ne.pseudo %v4094
  %v4103 = vround.ne.pseudo %v4095
  %v4104 = vround.ne.pseudo %v4096
  %v4105 = vround.ne.pseudo %v4097
  %v4106 = vround.ne.pseudo %v4098
  %v4107 = vmax.f32 %v4099, 0.0
  %v4108 = vmax.f32 %v4100, 0.0
  %v4109 = vmax.f32 %v4101, 0.0
  %v4110 = vmax.f32 %v4102, 0.0
  %v4111 = vmax.f32 %v4103, 0.0
  %v4112 = vmax.f32 %v4104, 0.0
  %v4113 = vmax.f32 %v4105, 0.0
  %v4114 = vmax.f32 %v4106, 0.0
  %v4115 = vmin.f32 %v4107, 255.0
  %v4116 = vmin.f32 %v4108, 255.0
  %v4117 = vmin.f32 %v4109, 255.0
  %v4118 = vmin.f32 %v4110, 255.0
  %v4119 = vmin.f32 %v4111, 255.0
  %v4120 = vmin.f32 %v4112, 255.0
  %v4121 = vmin.f32 %v4113, 255.0
  %v4122 = vmin.f32 %v4114, 255.0
  %v4123 = vmul.f32 %v4115, 0.008627451
  %v4124 = vmul.f32 %v4116, 0.008627451
  %v4125 = vmul.f32 %v4117, 0.008627451
  %v4126 = vmul.f32 %v4118, 0.008627451
  %v4127 = vmul.f32 %v4119, 0.008627451
  %v4128 = vmul.f32 %v4120, 0.008627451
  %v4129 = vmul.f32 %v4121, 0.008627451
  %v4130 = vmul.f32 %v4122, 0.008627451
  %v4131 = vadd.f32 %v4123, -1.0
  %v4132 = vadd.f32 %v4124, -1.0
  %v4133 = vadd.f32 %v4125, -1.0
  %v4134 = vadd.f32 %v4126, -1.0
  %v4135 = vadd.f32 %v4127, -1.0
  %v4136 = vadd.f32 %v4128, -1.0
  %v4137 = vadd.f32 %v4129, -1.0
  %v4138 = vadd.f32 %v4130, -1.0
  %vm4139 = vcmp.gt.f32.partialorder %v4131, 1.0
  %vm4140 = vcmp.gt.f32.partialorder %v4132, 1.0
  %vm4141 = vcmp.gt.f32.partialorder %v4133, 1.0
  %vm4142 = vcmp.gt.f32.partialorder %v4134, 1.0
  %vm4143 = vcmp.gt.f32.partialorder %v4135, 1.0
  %vm4144 = vcmp.gt.f32.partialorder %v4136, 1.0
  %vm4145 = vcmp.gt.f32.partialorder %v4137, 1.0
  %vm4146 = vcmp.gt.f32.partialorder %v4138, 1.0
  %v4147 = vsel %vm4139, 1, 0
  %v4148 = vsel %vm4140, 1, 0
  %v4149 = vsel %vm4141, 1, 0
  %v4150 = vsel %vm4142, 1, 0
  %v4151 = vsel %vm4143, 1, 0
  %v4152 = vsel %vm4144, 1, 0
  %v4153 = vsel %vm4145, 1, 0
  %v4154 = vsel %vm4146, 1, 0
  %v4155 = vcvt.s32.f32 %v4147
  %v4156 = vcvt.s32.f32 %v4148
  %v4157 = vcvt.s32.f32 %v4149
  %v4158 = vcvt.s32.f32 %v4150
  %v4159 = vcvt.s32.f32 %v4151
  %v4160 = vcvt.s32.f32 %v4152
  %v4161 = vcvt.s32.f32 %v4153
  %v4162 = vcvt.s32.f32 %v4154
  %4163 = vst [vmem:[#allocation2 + $0x200] sm:$0xff] %v4155
  %4164 = vst [vmem:[#allocation2 + $0x208] sm:$0xff] %v4156
  %4165 = vst [vmem:[#allocation2 + $0x210] sm:$0xff] %v4157
  %4166 = vst [vmem:[#allocation2 + $0x218] sm:$0xff] %v4158
  %4167 = vst [vmem:[#allocation2 + $0x220] sm:$0xff] %v4159
  %4168 = vst [vmem:[#allocation2 + $0x228] sm:$0xff] %v4160
  %4169 = vst [vmem:[#allocation2 + $0x230] sm:$0xff] %v4161
  %4170 = vst [vmem:[#allocation2 + $0x238] sm:$0xff] %v4162
  %v4171 = vmul.f32 %v4131, 0.95
  %v4172 = vmul.f32 %v4132, 0.95
  %v4173 = vmul.f32 %v4133, 0.95
  %v4174 = vmul.f32 %v4134, 0.95
  %v4175 = vmul.f32 %v4135, 0.95
  %v4176 = vmul.f32 %v4136, 0.95
  %v4177 = vmul.f32 %v4137, 0.95
  %v4178 = vmul.f32 %v4138, 0.95
  %v4179 = vadd.f32 %v4171, %v2607
  %v4180 = vadd.f32 %v4172, %v2609
  %v4181 = vadd.f32 %v4173, %v2771
  %v4182 = vadd.f32 %v4174, %v2773
  %v4183 = vadd.f32 %v4175, %v2935
  %v4184 = vadd.f32 %v4176, %v2937
  %v4185 = vadd.f32 %v4177, %v3099
  %v4186 = vadd.f32 %v4178, %v3101
  %v4187 = vsel %vm4139, 1.0, 0.0
  %v4188 = vsel %vm4140, 1.0, 0.0
  %v4189 = vsel %vm4141, 1.0, 0.0
  %v4190 = vsel %vm4142, 1.0, 0.0
  %v4191 = vsel %vm4143, 1.0, 0.0
  %v4192 = vsel %vm4144, 1.0, 0.0
  %v4193 = vsel %vm4145, 1.0, 0.0
  %v4194 = vsel %vm4146, 1.0, 0.0
  %v4195 = vsub.f32 %v4179, %v4187
  %v4196 = vsub.f32 %v4180, %v4188
  %v4197 = vsub.f32 %v4181, %v4189
  %v4198 = vsub.f32 %v4182, %v4190
  %v4199 = vsub.f32 %v4183, %v4191
  %v4200 = vsub.f32 %v4184, %v4192
  %v4201 = vsub.f32 %v4185, %v4193
  %v4202 = vsub.f32 %v4186, %v4194
  %v4203 = vsub.f32 %v4195, -1.0
  %v4204 = vsub.f32 %v4196, -1.0
  %v4205 = vsub.f32 %v4197, -1.0
  %v4206 = vsub.f32 %v4198, -1.0
  %v4207 = vsub.f32 %v4199, -1.0
  %v4208 = vsub.f32 %v4200, -1.0
  %v4209 = vsub.f32 %v4201, -1.0
  %v4210 = vsub.f32 %v4202, -1.0
  %v4211 = vmul.f32 %v4203, 115.90909
  %v4212 = vmul.f32 %v4204, 115.90909
  %v4213 = vmul.f32 %v4205, 115.90909
  %v4214 = vmul.f32 %v4206, 115.90909
  %v4215 = vmul.f32 %v4207, 115.90909
  %v4216 = vmul.f32 %v4208, 115.90909
  %v4217 = vmul.f32 %v4209, 115.90909
  %v4218 = vmul.f32 %v4210, 115.90909
  %v4219 = vround.ne.pseudo %v4211
  %v4220 = vround.ne.pseudo %v4212
  %v4221 = vround.ne.pseudo %v4213
  %v4222 = vround.ne.pseudo %v4214
  %v4223 = vround.ne.pseudo %v4215
  %v4224 = vround.ne.pseudo %v4216
  %v4225 = vround.ne.pseudo %v4217
  %v4226 = vround.ne.pseudo %v4218
  %v4227 = vmax.f32 %v4219, 0.0
  %v4228 = vmax.f32 %v4220, 0.0
  %v4229 = vmax.f32 %v4221, 0.0
  %v4230 = vmax.f32 %v4222, 0.0
  %v4231 = vmax.f32 %v4223, 0.0
  %v4232 = vmax.f32 %v4224, 0.0
  %v4233 = vmax.f32 %v4225, 0.0
  %v4234 = vmax.f32 %v4226, 0.0
  %v4235 = vmin.f32 %v4227, 255.0
  %v4236 = vmin.f32 %v4228, 255.0
  %v4237 = vmin.f32 %v4229, 255.0
  %v4238 = vmin.f32 %v4230, 255.0
  %v4239 = vmin.f32 %v4231, 255.0
  %v4240 = vmin.f32 %v4232, 255.0
  %v4241 = vmin.f32 %v4233, 255.0
  %v4242 = vmin.f32 %v4234, 255.0
  %v4243 = vmul.f32 %v4235, 0.008627451
  %v4244 = vmul.f32 %v4236, 0.008627451
  %v4245 = vmul.f32 %v4237, 0.008627451
  %v4246 = vmul.f32 %v4238, 0.008627451
  %v4247 = vmul.f32 %v4239, 0.008627451
  %v4248 = vmul.f32 %v4240, 0.008627451
  %v4249 = vmul.f32 %v4241, 0.008627451
  %v4250 = vmul.f32 %v4242, 0.008627451
  %v4251 = vadd.f32 %v4243, -1.0
  %v4252 = vadd.f32 %v4244, -1.0
  %v4253 = vadd.f32 %v4245, -1.0
  %v4254 = vadd.f32 %v4246, -1.0
  %v4255 = vadd.f32 %v4247, -1.0
  %v4256 = vadd.f32 %v4248, -1.0
  %v4257 = vadd.f32 %v4249, -1.0
  %v4258 = vadd.f32 %v4250, -1.0
  %vm4259 = vcmp.gt.f32.partialorder %v4251, 1.0
  %vm4260 = vcmp.gt.f32.partialorder %v4252, 1.0
  %vm4261 = vcmp.gt.f32.partialorder %v4253, 1.0
  %vm4262 = vcmp.gt.f32.partialorder %v4254, 1.0
  %vm4263 = vcmp.gt.f32.partialorder %v4255, 1.0
  %vm4264 = vcmp.gt.f32.partialorder %v4256, 1.0
  %vm4265 = vcmp.gt.f32.partialorder %v4257, 1.0
  %vm4266 = vcmp.gt.f32.partialorder %v4258, 1.0
  %v4267 = vsel %vm4259, 1, 0
  %v4268 = vsel %vm4260, 1, 0
  %v4269 = vsel %vm4261, 1, 0
  %v4270 = vsel %vm4262, 1, 0
  %v4271 = vsel %vm4263, 1, 0
  %v4272 = vsel %vm4264, 1, 0
  %v4273 = vsel %vm4265, 1, 0
  %v4274 = vsel %vm4266, 1, 0
  %v4275 = vcvt.s32.f32 %v4267
  %v4276 = vcvt.s32.f32 %v4268
  %v4277 = vcvt.s32.f32 %v4269
  %v4278 = vcvt.s32.f32 %v4270
  %v4279 = vcvt.s32.f32 %v4271
  %v4280 = vcvt.s32.f32 %v4272
  %v4281 = vcvt.s32.f32 %v4273
  %v4282 = vcvt.s32.f32 %v4274
  %4283 = vst [vmem:[#allocation2 + $0x240] sm:$0xff] %v4275
  %4284 = vst [vmem:[#allocation2 + $0x248] sm:$0xff] %v4276
  %4285 = vst [vmem:[#allocation2 + $0x250] sm:$0xff] %v4277
  %4286 = vst [vmem:[#allocation2 + $0x258] sm:$0xff] %v4278
  %4287 = vst [vmem:[#allocation2 + $0x260] sm:$0xff] %v4279
  %4288 = vst [vmem:[#allocation2 + $0x268] sm:$0xff] %v4280
  %4289 = vst [vmem:[#allocation2 + $0x270] sm:$0xff] %v4281
  %4290 = vst [vmem:[#allocation2 + $0x278] sm:$0xff] %v4282
  %v4291 = vmul.f32 %v4251, 0.95
  %v4292 = vmul.f32 %v4252, 0.95
  %v4293 = vmul.f32 %v4253, 0.95
  %v4294 = vmul.f32 %v4254, 0.95
  %v4295 = vmul.f32 %v4255, 0.95
  %v4296 = vmul.f32 %v4256, 0.95
  %v4297 = vmul.f32 %v4257, 0.95
  %v4298 = vmul.f32 %v4258, 0.95
  %v4299 = vadd.f32 %v4291, %v2607
  %v4300 = vadd.f32 %v4292, %v2609
  %v4301 = vadd.f32 %v4293, %v2771
  %v4302 = vadd.f32 %v4294, %v2773
  %v4303 = vadd.f32 %v4295, %v2935
  %v4304 = vadd.f32 %v4296, %v2937
  %v4305 = vadd.f32 %v4297, %v3099
  %v4306 = vadd.f32 %v4298, %v3101
  %v4307 = vsel %vm4259, 1.0, 0.0
  %v4308 = vsel %vm4260, 1.0, 0.0
  %v4309 = vsel %vm4261, 1.0, 0.0
  %v4310 = vsel %vm4262, 1.0, 0.0
  %v4311 = vsel %vm4263, 1.0, 0.0
  %v4312 = vsel %vm4264, 1.0, 0.0
  %v4313 = vsel %vm4265, 1.0, 0.0
  %v4314 = vsel %vm4266, 1.0, 0.0
  %v4315 = vsub.f32 %v4299, %v4307
  %v4316 = vsub.f32 %v4300, %v4308
  %v4317 = vsub.f32 %v4301, %v4309
  %v4318 = vsub.f32 %v4302, %v4310
  %v4319 = vsub.f32 %v4303, %v4311
  %v4320 = vsub.f32 %v4304, %v4312
  %v4321 = vsub.f32 %v4305, %v4313
  %v4322 = vsub.f32 %v4306, %v4314
  %v4323 = vsub.f32 %v4315, -1.0
  %v4324 = vsub.f32 %v4316, -1.0
  %v4325 = vsub.f32 %v4317, -1.0
  %v4326 = vsub.f32 %v4318, -1.0
  %v4327 = vsub.f32 %v4319, -1.0
  %v4328 = vsub.f32 %v4320, -1.0
  %v4329 = vsub.f32 %v4321, -1.0
  %v4330 = vsub.f32 %v4322, -1.0
  %v4331 = vmul.f32 %v4323, 115.90909
  %v4332 = vmul.f32 %v4324, 115.90909
  %v4333 = vmul.f32 %v4325, 115.90909
  %v4334 = vmul.f32 %v4326, 115.90909
  %v4335 = vmul.f32 %v4327, 115.90909
  %v4336 = vmul.f32 %v4328, 115.90909
  %v4337 = vmul.f32 %v4329, 115.90909
  %v4338 = vmul.f32 %v4330, 115.90909
  %v4339 = vround.ne.pseudo %v4331
  %v4340 = vround.ne.pseudo %v4332
  %v4341 = vround.ne.pseudo %v4333
  %v4342 = vround.ne.pseudo %v4334
  %v4343 = vround.ne.pseudo %v4335
  %v4344 = vround.ne.pseudo %v4336
  %v4345 = vround.ne.pseudo %v4337
  %v4346 = vround.ne.pseudo %v4338
  %v4347 = vmax.f32 %v4339, 0.0
  %v4348 = vmax.f32 %v4340, 0.0
  %v4349 = vmax.f32 %v4341, 0.0
  %v4350 = vmax.f32 %v4342, 0.0
  %v4351 = vmax.f32 %v4343, 0.0
  %v4352 = vmax.f32 %v4344, 0.0
  %v4353 = vmax.f32 %v4345, 0.0
  %v4354 = vmax.f32 %v4346, 0.0
  %v4355 = vmin.f32 %v4347, 255.0
  %v4356 = vmin.f32 %v4348, 255.0
  %v4357 = vmin.f32 %v4349, 255.0
  %v4358 = vmin.f32 %v4350, 255.0
  %v4359 = vmin.f32 %v4351, 255.0
  %v4360 = vmin.f32 %v4352, 255.0
  %v4361 = vmin.f32 %v4353, 255.0
  %v4362 = vmin.f32 %v4354, 255.0
  %v4363 = vmul.f32 %v4355, 0.008627451
  %v4364 = vmul.f32 %v4356, 0.008627451
  %v4365 = vmul.f32 %v4357, 0.008627451
  %v4366 = vmul.f32 %v4358, 0.008627451
  %v4367 = vmul.f32 %v4359, 0.008627451
  %v4368 = vmul.f32 %v4360, 0.008627451
  %v4369 = vmul.f32 %v4361, 0.008627451
  %v4370 = vmul.f32 %v4362, 0.008627451
  %v4371 = vadd.f32 %v4363, -1.0
  %v4372 = vadd.f32 %v4364, -1.0
  %v4373 = vadd.f32 %v4365, -1.0
  %v4374 = vadd.f32 %v4366, -1.0
  %v4375 = vadd.f32 %v4367, -1.0
  %v4376 = vadd.f32 %v4368, -1.0
  %v4377 = vadd.f32 %v4369, -1.0
  %v4378 = vadd.f32 %v4370, -1.0
  %vm4379 = vcmp.gt.f32.partialorder %v4371, 1.0
  %vm4380 = vcmp.gt.f32.partialorder %v4372, 1.0
  %vm4381 = vcmp.gt.f32.partialorder %v4373, 1.0
  %vm4382 = vcmp.gt.f32.partialorder %v4374, 1.0
  %vm4383 = vcmp.gt.f32.partialorder %v4375, 1.0
  %vm4384 = vcmp.gt.f32.partialorder %v4376, 1.0
  %vm4385 = vcmp.gt.f32.partialorder %v4377, 1.0
  %vm4386 = vcmp.gt.f32.partialorder %v4378, 1.0
  %v4387 = vsel %vm4379, 1, 0
  %v4388 = vsel %vm4380, 1, 0
  %v4389 = vsel %vm4381, 1, 0
  %v4390 = vsel %vm4382, 1, 0
  %v4391 = vsel %vm4383, 1, 0
  %v4392 = vsel %vm4384, 1, 0
  %v4393 = vsel %vm4385, 1, 0
  %v4394 = vsel %vm4386, 1, 0
  %v4395 = vcvt.s32.f32 %v4387
  %v4396 = vcvt.s32.f32 %v4388
  %v4397 = vcvt.s32.f32 %v4389
  %v4398 = vcvt.s32.f32 %v4390
  %v4399 = vcvt.s32.f32 %v4391
  %v4400 = vcvt.s32.f32 %v4392
  %v4401 = vcvt.s32.f32 %v4393
  %v4402 = vcvt.s32.f32 %v4394
  %4403 = vst [vmem:[#allocation2 + $0x280] sm:$0xff] %v4395
  %4404 = vst [vmem:[#allocation2 + $0x288] sm:$0xff] %v4396
  %4405 = vst [vmem:[#allocation2 + $0x290] sm:$0xff] %v4397
  %4406 = vst [vmem:[#allocation2 + $0x298] sm:$0xff] %v4398
  %4407 = vst [vmem:[#allocation2 + $0x2a0] sm:$0xff] %v4399
  %4408 = vst [vmem:[#allocation2 + $0x2a8] sm:$0xff] %v4400
  %4409 = vst [vmem:[#allocation2 + $0x2b0] sm:$0xff] %v4401
  %4410 = vst [vmem:[#allocation2 + $0x2b8] sm:$0xff] %v4402
  %v4411 = vmul.f32 %v4371, 0.95
  %v4412 = vmul.f32 %v4372, 0.95
  %v4413 = vmul.f32 %v4373, 0.95
  %v4414 = vmul.f32 %v4374, 0.95
  %v4415 = vmul.f32 %v4375, 0.95
  %v4416 = vmul.f32 %v4376, 0.95
  %v4417 = vmul.f32 %v4377, 0.95
  %v4418 = vmul.f32 %v4378, 0.95
  %v4419 = vadd.f32 %v4411, %v2607
  %v4420 = vadd.f32 %v4412, %v2609
  %v4421 = vadd.f32 %v4413, %v2771
  %v4422 = vadd.f32 %v4414, %v2773
  %v4423 = vadd.f32 %v4415, %v2935
  %v4424 = vadd.f32 %v4416, %v2937
  %v4425 = vadd.f32 %v4417, %v3099
  %v4426 = vadd.f32 %v4418, %v3101
  %v4427 = vsel %vm4379, 1.0, 0.0
  %v4428 = vsel %vm4380, 1.0, 0.0
  %v4429 = vsel %vm4381, 1.0, 0.0
  %v4430 = vsel %vm4382, 1.0, 0.0
  %v4431 = vsel %vm4383, 1.0, 0.0
  %v4432 = vsel %vm4384, 1.0, 0.0
  %v4433 = vsel %vm4385, 1.0, 0.0
  %v4434 = vsel %vm4386, 1.0, 0.0
  %v4435 = vsub.f32 %v4419, %v4427
  %v4436 = vsub.f32 %v4420, %v4428
  %v4437 = vsub.f32 %v4421, %v4429
  %v4438 = vsub.f32 %v4422, %v4430
  %v4439 = vsub.f32 %v4423, %v4431
  %v4440 = vsub.f32 %v4424, %v4432
  %v4441 = vsub.f32 %v4425, %v4433
  %v4442 = vsub.f32 %v4426, %v4434
  %v4443 = vsub.f32 %v4435, -1.0
  %v4444 = vsub.f32 %v4436, -1.0
  %v4445 = vsub.f32 %v4437, -1.0
  %v4446 = vsub.f32 %v4438, -1.0
  %v4447 = vsub.f32 %v4439, -1.0
  %v4448 = vsub.f32 %v4440, -1.0
  %v4449 = vsub.f32 %v4441, -1.0
  %v4450 = vsub.f32 %v4442, -1.0
  %v4451 = vmul.f32 %v4443, 115.90909
  %v4452 = vmul.f32 %v4444, 115.90909
  %v4453 = vmul.f32 %v4445, 115.90909
  %v4454 = vmul.f32 %v4446, 115.90909
  %v4455 = vmul.f32 %v4447, 115.90909
  %v4456 = vmul.f32 %v4448, 115.90909
  %v4457 = vmul.f32 %v4449, 115.90909
  %v4458 = vmul.f32 %v4450, 115.90909
  %v4459 = vround.ne.pseudo %v4451
  %v4460 = vround.ne.pseudo %v4452
  %v4461 = vround.ne.pseudo %v4453
  %v4462 = vround.ne.pseudo %v4454
  %v4463 = vround.ne.pseudo %v4455
  %v4464 = vround.ne.pseudo %v4456
  %v4465 = vround.ne.pseudo %v4457
  %v4466 = vround.ne.pseudo %v4458
  %v4467 = vmax.f32 %v4459, 0.0
  %v4468 = vmax.f32 %v4460, 0.0
  %v4469 = vmax.f32 %v4461, 0.0
  %v4470 = vmax.f32 %v4462, 0.0
  %v4471 = vmax.f32 %v4463, 0.0
  %v4472 = vmax.f32 %v4464, 0.0
  %v4473 = vmax.f32 %v4465, 0.0
  %v4474 = vmax.f32 %v4466, 0.0
  %v4475 = vmin.f32 %v4467, 255.0
  %v4476 = vmin.f32 %v4468, 255.0
  %v4477 = vmin.f32 %v4469, 255.0
  %v4478 = vmin.f32 %v4470, 255.0
  %v4479 = vmin.f32 %v4471, 255.0
  %v4480 = vmin.f32 %v4472, 255.0
  %v4481 = vmin.f32 %v4473, 255.0
  %v4482 = vmin.f32 %v4474, 255.0
  %v4483 = vmul.f32 %v4475, 0.008627451
  %v4484 = vmul.f32 %v4476, 0.008627451
  %v4485 = vmul.f32 %v4477, 0.008627451
  %v4486 = vmul.f32 %v4478, 0.008627451
  %v4487 = vmul.f32 %v4479, 0.008627451
  %v4488 = vmul.f32 %v4480, 0.008627451
  %v4489 = vmul.f32 %v4481, 0.008627451
  %v4490 = vmul.f32 %v4482, 0.008627451
  %v4491 = vadd.f32 %v4483, -1.0
  %v4492 = vadd.f32 %v4484, -1.0
  %v4493 = vadd.f32 %v4485, -1.0
  %v4494 = vadd.f32 %v4486, -1.0
  %v4495 = vadd.f32 %v4487, -1.0
  %v4496 = vadd.f32 %v4488, -1.0
  %v4497 = vadd.f32 %v4489, -1.0
  %v4498 = vadd.f32 %v4490, -1.0
  %vm4499 = vcmp.gt.f32.partialorder %v4491, 1.0
  %vm4500 = vcmp.gt.f32.partialorder %v4492, 1.0
  %vm4501 = vcmp.gt.f32.partialorder %v4493, 1.0
  %vm4502 = vcmp.gt.f32.partialorder %v4494, 1.0
  %vm4503 = vcmp.gt.f32.partialorder %v4495, 1.0
  %vm4504 = vcmp.gt.f32.partialorder %v4496, 1.0
  %vm4505 = vcmp.gt.f32.partialorder %v4497, 1.0
  %vm4506 = vcmp.gt.f32.partialorder %v4498, 1.0
  %v4507 = vsel %vm4499, 1, 0
  %v4508 = vsel %vm4500, 1, 0
  %v4509 = vsel %vm4501, 1, 0
  %v4510 = vsel %vm4502, 1, 0
  %v4511 = vsel %vm4503, 1, 0
  %v4512 = vsel %vm4504, 1, 0
  %v4513 = vsel %vm4505, 1, 0
  %v4514 = vsel %vm4506, 1, 0
  %v4515 = vcvt.s32.f32 %v4507
  %v4516 = vcvt.s32.f32 %v4508
  %v4517 = vcvt.s32.f32 %v4509
  %v4518 = vcvt.s32.f32 %v4510
  %v4519 = vcvt.s32.f32 %v4511
  %v4520 = vcvt.s32.f32 %v4512
  %v4521 = vcvt.s32.f32 %v4513
  %v4522 = vcvt.s32.f32 %v4514
  %4523 = vst [vmem:[#allocation2 + $0x2c0] sm:$0xff] %v4515
  %4524 = vst [vmem:[#allocation2 + $0x2c8] sm:$0xff] %v4516
  %4525 = vst [vmem:[#allocation2 + $0x2d0] sm:$0xff] %v4517
  %4526 = vst [vmem:[#allocation2 + $0x2d8] sm:$0xff] %v4518
  %4527 = vst [vmem:[#allocation2 + $0x2e0] sm:$0xff] %v4519
  %4528 = vst [vmem:[#allocation2 + $0x2e8] sm:$0xff] %v4520
  %4529 = vst [vmem:[#allocation2 + $0x2f0] sm:$0xff] %v4521
  %4530 = vst [vmem:[#allocation2 + $0x2f8] sm:$0xff] %v4522
  %v4531 = vmul.f32 %v4491, 0.95
  %v4532 = vmul.f32 %v4492, 0.95
  %v4533 = vmul.f32 %v4493, 0.95
  %v4534 = vmul.f32 %v4494, 0.95
  %v4535 = vmul.f32 %v4495, 0.95
  %v4536 = vmul.f32 %v4496, 0.95
  %v4537 = vmul.f32 %v4497, 0.95
  %v4538 = vmul.f32 %v4498, 0.95
  %v4539 = vadd.f32 %v4531, %v2607
  %v4540 = vadd.f32 %v4532, %v2609
  %v4541 = vadd.f32 %v4533, %v2771
  %v4542 = vadd.f32 %v4534, %v2773
  %v4543 = vadd.f32 %v4535, %v2935
  %v4544 = vadd.f32 %v4536, %v2937
  %v4545 = vadd.f32 %v4537, %v3099
  %v4546 = vadd.f32 %v4538, %v3101
  %v4547 = vsel %vm4499, 1.0, 0.0
  %v4548 = vsel %vm4500, 1.0, 0.0
  %v4549 = vsel %vm4501, 1.0, 0.0
  %v4550 = vsel %vm4502, 1.0, 0.0
  %v4551 = vsel %vm4503, 1.0, 0.0
  %v4552 = vsel %vm4504, 1.0, 0.0
  %v4553 = vsel %vm4505, 1.0, 0.0
  %v4554 = vsel %vm4506, 1.0, 0.0
  %v4555 = vsub.f32 %v4539, %v4547
  %v4556 = vsub.f32 %v4540, %v4548
  %v4557 = vsub.f32 %v4541, %v4549
  %v4558 = vsub.f32 %v4542, %v4550
  %v4559 = vsub.f32 %v4543, %v4551
  %v4560 = vsub.f32 %v4544, %v4552
  %v4561 = vsub.f32 %v4545, %v4553
  %v4562 = vsub.f32 %v4546, %v4554
  %v4563 = vsub.f32 %v4555, -1.0
  %v4564 = vsub.f32 %v4556, -1.0
  %v4565 = vsub.f32 %v4557, -1.0
  %v4566 = vsub.f32 %v4558, -1.0
  %v4567 = vsub.f32 %v4559, -1.0
  %v4568 = vsub.f32 %v4560, -1.0
  %v4569 = vsub.f32 %v4561, -1.0
  %v4570 = vsub.f32 %v4562, -1.0
  %v4571 = vmul.f32 %v4563, 115.90909
  %v4572 = vmul.f32 %v4564, 115.90909
  %v4573 = vmul.f32 %v4565, 115.90909
  %v4574 = vmul.f32 %v4566, 115.90909
  %v4575 = vmul.f32 %v4567, 115.90909
  %v4576 = vmul.f32 %v4568, 115.90909
  %v4577 = vmul.f32 %v4569, 115.90909
  %v4578 = vmul.f32 %v4570, 115.90909
  %v4579 = vround.ne.pseudo %v4571
  %v4580 = vround.ne.pseudo %v4572
  %v4581 = vround.ne.pseudo %v4573
  %v4582 = vround.ne.pseudo %v4574
  %v4583 = vround.ne.pseudo %v4575
  %v4584 = vround.ne.pseudo %v4576
  %v4585 = vround.ne.pseudo %v4577
  %v4586 = vround.ne.pseudo %v4578
  %v4587 = vmax.f32 %v4579, 0.0
  %v4588 = vmax.f32 %v4580, 0.0
  %v4589 = vmax.f32 %v4581, 0.0
  %v4590 = vmax.f32 %v4582, 0.0
  %v4591 = vmax.f32 %v4583, 0.0
  %v4592 = vmax.f32 %v4584, 0.0
  %v4593 = vmax.f32 %v4585, 0.0
  %v4594 = vmax.f32 %v4586, 0.0
  %v4595 = vmin.f32 %v4587, 255.0
  %v4596 = vmin.f32 %v4588, 255.0
  %v4597 = vmin.f32 %v4589, 255.0
  %v4598 = vmin.f32 %v4590, 255.0
  %v4599 = vmin.f32 %v4591, 255.0
  %v4600 = vmin.f32 %v4592, 255.0
  %v4601 = vmin.f32 %v4593, 255.0
  %v4602 = vmin.f32 %v4594, 255.0
  %v4603 = vmul.f32 %v4595, 0.008627451
  %v4604 = vmul.f32 %v4596, 0.008627451
  %v4605 = vmul.f32 %v4597, 0.008627451
  %v4606 = vmul.f32 %v4598, 0.008627451
  %v4607 = vmul.f32 %v4599, 0.008627451
  %v4608 = vmul.f32 %v4600, 0.008627451
  %v4609 = vmul.f32 %v4601, 0.008627451
  %v4610 = vmul.f32 %v4602, 0.008627451
  %v4611 = vadd.f32 %v4603, -1.0
  %v4612 = vadd.f32 %v4604, -1.0
  %v4613 = vadd.f32 %v4605, -1.0
  %v4614 = vadd.f32 %v4606, -1.0
  %v4615 = vadd.f32 %v4607, -1.0
  %v4616 = vadd.f32 %v4608, -1.0
  %v4617 = vadd.f32 %v4609, -1.0
  %v4618 = vadd.f32 %v4610, -1.0
  %vm4619 = vcmp.gt.f32.partialorder %v4611, 1.0
  %vm4620 = vcmp.gt.f32.partialorder %v4612, 1.0
  %vm4621 = vcmp.gt.f32.partialorder %v4613, 1.0
  %vm4622 = vcmp.gt.f32.partialorder %v4614, 1.0
  %vm4623 = vcmp.gt.f32.partialorder %v4615, 1.0
  %vm4624 = vcmp.gt.f32.partialorder %v4616, 1.0
  %vm4625 = vcmp.gt.f32.partialorder %v4617, 1.0
  %vm4626 = vcmp.gt.f32.partialorder %v4618, 1.0
  %v4627 = vsel %vm4619, 1, 0
  %v4628 = vsel %vm4620, 1, 0
  %v4629 = vsel %vm4621, 1, 0
  %v4630 = vsel %vm4622, 1, 0
  %v4631 = vsel %vm4623, 1, 0
  %v4632 = vsel %vm4624, 1, 0
  %v4633 = vsel %vm4625, 1, 0
  %v4634 = vsel %vm4626, 1, 0
  %v4635 = vcvt.s32.f32 %v4627
  %v4636 = vcvt.s32.f32 %v4628
  %v4637 = vcvt.s32.f32 %v4629
  %v4638 = vcvt.s32.f32 %v4630
  %v4639 = vcvt.s32.f32 %v4631
  %v4640 = vcvt.s32.f32 %v4632
  %v4641 = vcvt.s32.f32 %v4633
  %v4642 = vcvt.s32.f32 %v4634
  %4643 = vst [vmem:[#allocation2 + $0x300] sm:$0xff] %v4635
  %4644 = vst [vmem:[#allocation2 + $0x308] sm:$0xff] %v4636
  %4645 = vst [vmem:[#allocation2 + $0x310] sm:$0xff] %v4637
  %4646 = vst [vmem:[#allocation2 + $0x318] sm:$0xff] %v4638
  %4647 = vst [vmem:[#allocation2 + $0x320] sm:$0xff] %v4639
  %4648 = vst [vmem:[#allocation2 + $0x328] sm:$0xff] %v4640
  %4649 = vst [vmem:[#allocation2 + $0x330] sm:$0xff] %v4641
  %4650 = vst [vmem:[#allocation2 + $0x338] sm:$0xff] %v4642
  %v4651 = vmul.f32 %v4611, 0.95
  %v4652 = vmul.f32 %v4612, 0.95
  %v4653 = vmul.f32 %v4613, 0.95
  %v4654 = vmul.f32 %v4614, 0.95
  %v4655 = vmul.f32 %v4615, 0.95
  %v4656 = vmul.f32 %v4616, 0.95
  %v4657 = vmul.f32 %v4617, 0.95
  %v4658 = vmul.f32 %v4618, 0.95
  %v4659 = vadd.f32 %v4651, %v2607
  %v4660 = vadd.f32 %v4652, %v2609
  %v4661 = vadd.f32 %v4653, %v2771
  %v4662 = vadd.f32 %v4654, %v2773
  %v4663 = vadd.f32 %v4655, %v2935
  %v4664 = vadd.f32 %v4656, %v2937
  %v4665 = vadd.f32 %v4657, %v3099
  %v4666 = vadd.f32 %v4658, %v3101
  %v4667 = vsel %vm4619, 1.0, 0.0
  %v4668 = vsel %vm4620, 1.0, 0.0
  %v4669 = vsel %vm4621, 1.0, 0.0
  %v4670 = vsel %vm4622, 1.0, 0.0
  %v4671 = vsel %vm4623, 1.0, 0.0
  %v4672 = vsel %vm4624, 1.0, 0.0
  %v4673 = vsel %vm4625, 1.0, 0.0
  %v4674 = vsel %vm4626, 1.0, 0.0
  %v4675 = vsub.f32 %v4659, %v4667
  %v4676 = vsub.f32 %v4660, %v4668
  %v4677 = vsub.f32 %v4661, %v4669
  %v4678 = vsub.f32 %v4662, %v4670
  %v4679 = vsub.f32 %v4663, %v4671
  %v4680 = vsub.f32 %v4664, %v4672
  %v4681 = vsub.f32 %v4665, %v4673
  %v4682 = vsub.f32 %v4666, %v4674
  %v4683 = vsub.f32 %v4675, -1.0
  %v4684 = vsub.f32 %v4676, -1.0
  %v4685 = vsub.f32 %v4677, -1.0
  %v4686 = vsub.f32 %v4678, -1.0
  %v4687 = vsub.f32 %v4679, -1.0
  %v4688 = vsub.f32 %v4680, -1.0
  %v4689 = vsub.f32 %v4681, -1.0
  %v4690 = vsub.f32 %v4682, -1.0
  %v4691 = vmul.f32 %v4683, 115.90909
  %v4692 = vmul.f32 %v4684, 115.90909
  %v4693 = vmul.f32 %v4685, 115.90909
  %v4694 = vmul.f32 %v4686, 115.90909
  %v4695 = vmul.f32 %v4687, 115.90909
  %v4696 = vmul.f32 %v4688, 115.90909
  %v4697 = vmul.f32 %v4689, 115.90909
  %v4698 = vmul.f32 %v4690, 115.90909
  %v4699 = vround.ne.pseudo %v4691
  %v4700 = vround.ne.pseudo %v4692
  %v4701 = vround.ne.pseudo %v4693
  %v4702 = vround.ne.pseudo %v4694
  %v4703 = vround.ne.pseudo %v4695
  %v4704 = vround.ne.pseudo %v4696
  %v4705 = vround.ne.pseudo %v4697
  %v4706 = vround.ne.pseudo %v4698
  %v4707 = vmax.f32 %v4699, 0.0
  %v4708 = vmax.f32 %v4700, 0.0
  %v4709 = vmax.f32 %v4701, 0.0
  %v4710 = vmax.f32 %v4702, 0.0
  %v4711 = vmax.f32 %v4703, 0.0
  %v4712 = vmax.f32 %v4704, 0.0
  %v4713 = vmax.f32 %v4705, 0.0
  %v4714 = vmax.f32 %v4706, 0.0
  %v4715 = vmin.f32 %v4707, 255.0
  %v4716 = vmin.f32 %v4708, 255.0
  %v4717 = vmin.f32 %v4709, 255.0
  %v4718 = vmin.f32 %v4710, 255.0
  %v4719 = vmin.f32 %v4711, 255.0
  %v4720 = vmin.f32 %v4712, 255.0
  %v4721 = vmin.f32 %v4713, 255.0
  %v4722 = vmin.f32 %v4714, 255.0
  %v4723 = vmul.f32 %v4715, 0.008627451
  %v4724 = vmul.f32 %v4716, 0.008627451
  %v4725 = vmul.f32 %v4717, 0.008627451
  %v4726 = vmul.f32 %v4718, 0.008627451
  %v4727 = vmul.f32 %v4719, 0.008627451
  %v4728 = vmul.f32 %v4720, 0.008627451
  %v4729 = vmul.f32 %v4721, 0.008627451
  %v4730 = vmul.f32 %v4722, 0.008627451
  %v4731 = vadd.f32 %v4723, -1.0
  %v4732 = vadd.f32 %v4724, -1.0
  %v4733 = vadd.f32 %v4725, -1.0
  %v4734 = vadd.f32 %v4726, -1.0
  %v4735 = vadd.f32 %v4727, -1.0
  %v4736 = vadd.f32 %v4728, -1.0
  %v4737 = vadd.f32 %v4729, -1.0
  %v4738 = vadd.f32 %v4730, -1.0
  %vm4739 = vcmp.gt.f32.partialorder %v4731, 1.0
  %vm4740 = vcmp.gt.f32.partialorder %v4732, 1.0
  %vm4741 = vcmp.gt.f32.partialorder %v4733, 1.0
  %vm4742 = vcmp.gt.f32.partialorder %v4734, 1.0
  %vm4743 = vcmp.gt.f32.partialorder %v4735, 1.0
  %vm4744 = vcmp.gt.f32.partialorder %v4736, 1.0
  %vm4745 = vcmp.gt.f32.partialorder %v4737, 1.0
  %vm4746 = vcmp.gt.f32.partialorder %v4738, 1.0
  %v4747 = vsel %vm4739, 1, 0
  %v4748 = vsel %vm4740, 1, 0
  %v4749 = vsel %vm4741, 1, 0
  %v4750 = vsel %vm4742, 1, 0
  %v4751 = vsel %vm4743, 1, 0
  %v4752 = vsel %vm4744, 1, 0
  %v4753 = vsel %vm4745, 1, 0
  %v4754 = vsel %vm4746, 1, 0
  %v4755 = vcvt.s32.f32 %v4747
  %v4756 = vcvt.s32.f32 %v4748
  %v4757 = vcvt.s32.f32 %v4749
  %v4758 = vcvt.s32.f32 %v4750
  %v4759 = vcvt.s32.f32 %v4751
  %v4760 = vcvt.s32.f32 %v4752
  %v4761 = vcvt.s32.f32 %v4753
  %v4762 = vcvt.s32.f32 %v4754
  %4763 = vst [vmem:[#allocation2 + $0x340] sm:$0xff] %v4755
  %4764 = vst [vmem:[#allocation2 + $0x348] sm:$0xff] %v4756
  %4765 = vst [vmem:[#allocation2 + $0x350] sm:$0xff] %v4757
  %4766 = vst [vmem:[#allocation2 + $0x358] sm:$0xff] %v4758
  %4767 = vst [vmem:[#allocation2 + $0x360] sm:$0xff] %v4759
  %4768 = vst [vmem:[#allocation2 + $0x368] sm:$0xff] %v4760
  %4769 = vst [vmem:[#allocation2 + $0x370] sm:$0xff] %v4761
  %4770 = vst [vmem:[#allocation2 + $0x378] sm:$0xff] %v4762
  %v4771 = vmul.f32 %v4731, 0.95
  %v4772 = vmul.f32 %v4732, 0.95
  %v4773 = vmul.f32 %v4733, 0.95
  %v4774 = vmul.f32 %v4734, 0.95
  %v4775 = vmul.f32 %v4735, 0.95
  %v4776 = vmul.f32 %v4736, 0.95
  %v4777 = vmul.f32 %v4737, 0.95
  %v4778 = vmul.f32 %v4738, 0.95
  %v4779 = vadd.f32 %v4771, %v2607
  %v4780 = vadd.f32 %v4772, %v2609
  %v4781 = vadd.f32 %v4773, %v2771
  %v4782 = vadd.f32 %v4774, %v2773
  %v4783 = vadd.f32 %v4775, %v2935
  %v4784 = vadd.f32 %v4776, %v2937
  %v4785 = vadd.f32 %v4777, %v3099
  %v4786 = vadd.f32 %v4778, %v3101
  %v4787 = vsel %vm4739, 1.0, 0.0
  %v4788 = vsel %vm4740, 1.0, 0.0
  %v4789 = vsel %vm4741, 1.0, 0.0
  %v4790 = vsel %vm4742, 1.0, 0.0
  %v4791 = vsel %vm4743, 1.0, 0.0
  %v4792 = vsel %vm4744, 1.0, 0.0
  %v4793 = vsel %vm4745, 1.0, 0.0
  %v4794 = vsel %vm4746, 1.0, 0.0
  %v4795 = vsub.f32 %v4779, %v4787
  %v4796 = vsub.f32 %v4780, %v4788
  %v4797 = vsub.f32 %v4781, %v4789
  %v4798 = vsub.f32 %v4782, %v4790
  %v4799 = vsub.f32 %v4783, %v4791
  %v4800 = vsub.f32 %v4784, %v4792
  %v4801 = vsub.f32 %v4785, %v4793
  %v4802 = vsub.f32 %v4786, %v4794
  %v4803 = vsub.f32 %v4795, -1.0
  %v4804 = vsub.f32 %v4796, -1.0
  %v4805 = vsub.f32 %v4797, -1.0
  %v4806 = vsub.f32 %v4798, -1.0
  %v4807 = vsub.f32 %v4799, -1.0
  %v4808 = vsub.f32 %v4800, -1.0
  %v4809 = vsub.f32 %v4801, -1.0
  %v4810 = vsub.f32 %v4802, -1.0
  %v4811 = vmul.f32 %v4803, 115.90909
  %v4812 = vmul.f32 %v4804, 115.90909
  %v4813 = vmul.f32 %v4805, 115.90909
  %v4814 = vmul.f32 %v4806, 115.90909
  %v4815 = vmul.f32 %v4807, 115.90909
  %v4816 = vmul.f32 %v4808, 115.90909
  %v4817 = vmul.f32 %v4809, 115.90909
  %v4818 = vmul.f32 %v4810, 115.90909
  %v4819 = vround.ne.pseudo %v4811
  %v4820 = vround.ne.pseudo %v4812
  %v4821 = vround.ne.pseudo %v4813
  %v4822 = vround.ne.pseudo %v4814
  %v4823 = vround.ne.pseudo %v4815
  %v4824 = vround.ne.pseudo %v4816
  %v4825 = vround.ne.pseudo %v4817
  %v4826 = vround.ne.pseudo %v4818
  %v4827 = vmax.f32 %v4819, 0.0
  %v4828 = vmax.f32 %v4820, 0.0
  %v4829 = vmax.f32 %v4821, 0.0
  %v4830 = vmax.f32 %v4822, 0.0
  %v4831 = vmax.f32 %v4823, 0.0
  %v4832 = vmax.f32 %v4824, 0.0
  %v4833 = vmax.f32 %v4825, 0.0
  %v4834 = vmax.f32 %v4826, 0.0
  %v4835 = vmin.f32 %v4827, 255.0
  %v4836 = vmin.f32 %v4828, 255.0
  %v4837 = vmin.f32 %v4829, 255.0
  %v4838 = vmin.f32 %v4830, 255.0
  %v4839 = vmin.f32 %v4831, 255.0
  %v4840 = vmin.f32 %v4832, 255.0
  %v4841 = vmin.f32 %v4833, 255.0
  %v4842 = vmin.f32 %v4834, 255.0
  %v4843 = vmul.f32 %v4835, 0.008627451
  %v4844 = vmul.f32 %v4836, 0.008627451
  %v4845 = vmul.f32 %v4837, 0.008627451
  %v4846 = vmul.f32 %v4838, 0.008627451
  %v4847 = vmul.f32 %v4839, 0.008627451
  %v4848 = vmul.f32 %v4840, 0.008627451
  %v4849 = vmul.f32 %v4841, 0.008627451
  %v4850 = vmul.f32 %v4842, 0.008627451
  %v4851 = vadd.f32 %v4843, -1.0
  %v4852 = vadd.f32 %v4844, -1.0
  %v4853 = vadd.f32 %v4845, -1.0
  %v4854 = vadd.f32 %v4846, -1.0
  %v4855 = vadd.f32 %v4847, -1.0
  %v4856 = vadd.f32 %v4848, -1.0
  %v4857 = vadd.f32 %v4849, -1.0
  %v4858 = vadd.f32 %v4850, -1.0
  %vm4859 = vcmp.gt.f32.partialorder %v4851, 1.0
  %vm4860 = vcmp.gt.f32.partialorder %v4852, 1.0
  %vm4861 = vcmp.gt.f32.partialorder %v4853, 1.0
  %vm4862 = vcmp.gt.f32.partialorder %v4854, 1.0
  %vm4863 = vcmp.gt.f32.partialorder %v4855, 1.0
  %vm4864 = vcmp.gt.f32.partialorder %v4856, 1.0
  %vm4865 = vcmp.gt.f32.partialorder %v4857, 1.0
  %vm4866 = vcmp.gt.f32.partialorder %v4858, 1.0
  %v4867 = vsel %vm4859, 1, 0
  %v4868 = vsel %vm4860, 1, 0
  %v4869 = vsel %vm4861, 1, 0
  %v4870 = vsel %vm4862, 1, 0
  %v4871 = vsel %vm4863, 1, 0
  %v4872 = vsel %vm4864, 1, 0
  %v4873 = vsel %vm4865, 1, 0
  %v4874 = vsel %vm4866, 1, 0
  %v4875 = vcvt.s32.f32 %v4867
  %v4876 = vcvt.s32.f32 %v4868
  %v4877 = vcvt.s32.f32 %v4869
  %v4878 = vcvt.s32.f32 %v4870
  %v4879 = vcvt.s32.f32 %v4871
  %v4880 = vcvt.s32.f32 %v4872
  %v4881 = vcvt.s32.f32 %v4873
  %v4882 = vcvt.s32.f32 %v4874
  %4883 = vst [vmem:[#allocation2 + $0x380] sm:$0xff] %v4875
  %4884 = vst [vmem:[#allocation2 + $0x388] sm:$0xff] %v4876
  %4885 = vst [vmem:[#allocation2 + $0x390] sm:$0xff] %v4877
  %4886 = vst [vmem:[#allocation2 + $0x398] sm:$0xff] %v4878
  %4887 = vst [vmem:[#allocation2 + $0x3a0] sm:$0xff] %v4879
  %4888 = vst [vmem:[#allocation2 + $0x3a8] sm:$0xff] %v4880
  %4889 = vst [vmem:[#allocation2 + $0x3b0] sm:$0xff] %v4881
  %4890 = vst [vmem:[#allocation2 + $0x3b8] sm:$0xff] %v4882
  %v4891 = vmul.f32 %v4851, 0.95
  %v4892 = vmul.f32 %v4852, 0.95
  %v4893 = vmul.f32 %v4853, 0.95
  %v4894 = vmul.f32 %v4854, 0.95
  %v4895 = vmul.f32 %v4855, 0.95
  %v4896 = vmul.f32 %v4856, 0.95
  %v4897 = vmul.f32 %v4857, 0.95
  %v4898 = vmul.f32 %v4858, 0.95
  %v4899 = vadd.f32 %v4891, %v2607
  %v4900 = vadd.f32 %v4892, %v2609
  %v4901 = vadd.f32 %v4893, %v2771
  %v4902 = vadd.f32 %v4894, %v2773
  %v4903 = vadd.f32 %v4895, %v2935
  %v4904 = vadd.f32 %v4896, %v2937
  %v4905 = vadd.f32 %v4897, %v3099
  %v4906 = vadd.f32 %v4898, %v3101
  %v4907 = vsel %vm4859, 1.0, 0.0
  %v4908 = vsel %vm4860, 1.0, 0.0
  %v4909 = vsel %vm4861, 1.0, 0.0
  %v4910 = vsel %vm4862, 1.0, 0.0
  %v4911 = vsel %vm4863, 1.0, 0.0
  %v4912 = vsel %vm4864, 1.0, 0.0
  %v4913 = vsel %vm4865, 1.0, 0.0
  %v4914 = vsel %vm4866, 1.0, 0.0
  %v4915 = vsub.f32 %v4899, %v4907
  %v4916 = vsub.f32 %v4900, %v4908
  %v4917 = vsub.f32 %v4901, %v4909
  %v4918 = vsub.f32 %v4902, %v4910
  %v4919 = vsub.f32 %v4903, %v4911
  %v4920 = vsub.f32 %v4904, %v4912
  %v4921 = vsub.f32 %v4905, %v4913
  %v4922 = vsub.f32 %v4906, %v4914
  %v4923 = vsub.f32 %v4915, -1.0
  %v4924 = vsub.f32 %v4916, -1.0
  %v4925 = vsub.f32 %v4917, -1.0
  %v4926 = vsub.f32 %v4918, -1.0
  %v4927 = vsub.f32 %v4919, -1.0
  %v4928 = vsub.f32 %v4920, -1.0
  %v4929 = vsub.f32 %v4921, -1.0
  %v4930 = vsub.f32 %v4922, -1.0
  %v4931 = vmul.f32 %v4923, 115.90909
  %v4932 = vmul.f32 %v4924, 115.90909
  %v4933 = vmul.f32 %v4925, 115.90909
  %v4934 = vmul.f32 %v4926, 115.90909
  %v4935 = vmul.f32 %v4927, 115.90909
  %v4936 = vmul.f32 %v4928, 115.90909
  %v4937 = vmul.f32 %v4929, 115.90909
  %v4938 = vmul.f32 %v4930, 115.90909
  %v4939 = vround.ne.pseudo %v4931
  %v4940 = vround.ne.pseudo %v4932
  %v4941 = vround.ne.pseudo %v4933
  %v4942 = vround.ne.pseudo %v4934
  %v4943 = vround.ne.pseudo %v4935
  %v4944 = vround.ne.pseudo %v4936
  %v4945 = vround.ne.pseudo %v4937
  %v4946 = vround.ne.pseudo %v4938
  %v4947 = vmax.f32 %v4939, 0.0
  %v4948 = vmax.f32 %v4940, 0.0
  %v4949 = vmax.f32 %v4941, 0.0
  %v4950 = vmax.f32 %v4942, 0.0
  %v4951 = vmax.f32 %v4943, 0.0
  %v4952 = vmax.f32 %v4944, 0.0
  %v4953 = vmax.f32 %v4945, 0.0
  %v4954 = vmax.f32 %v4946, 0.0
  %v4955 = vmin.f32 %v4947, 255.0
  %v4956 = vmin.f32 %v4948, 255.0
  %v4957 = vmin.f32 %v4949, 255.0
  %v4958 = vmin.f32 %v4950, 255.0
  %v4959 = vmin.f32 %v4951, 255.0
  %v4960 = vmin.f32 %v4952, 255.0
  %v4961 = vmin.f32 %v4953, 255.0
  %v4962 = vmin.f32 %v4954, 255.0
  %v4963 = vmul.f32 %v4955, 0.008627451
  %v4964 = vmul.f32 %v4956, 0.008627451
  %v4965 = vmul.f32 %v4957, 0.008627451
  %v4966 = vmul.f32 %v4958, 0.008627451
  %v4967 = vmul.f32 %v4959, 0.008627451
  %v4968 = vmul.f32 %v4960, 0.008627451
  %v4969 = vmul.f32 %v4961, 0.008627451
  %v4970 = vmul.f32 %v4962, 0.008627451
  %v4971 = vadd.f32 %v4963, -1.0
  %v4972 = vadd.f32 %v4964, -1.0
  %v4973 = vadd.f32 %v4965, -1.0
  %v4974 = vadd.f32 %v4966, -1.0
  %v4975 = vadd.f32 %v4967, -1.0
  %v4976 = vadd.f32 %v4968, -1.0
  %v4977 = vadd.f32 %v4969, -1.0
  %v4978 = vadd.f32 %v4970, -1.0
  %vm4979 = vcmp.gt.f32.partialorder %v4971, 1.0
  %vm4980 = vcmp.gt.f32.partialorder %v4972, 1.0
  %vm4981 = vcmp.gt.f32.partialorder %v4973, 1.0
  %vm4982 = vcmp.gt.f32.partialorder %v4974, 1.0
  %vm4983 = vcmp.gt.f32.partialorder %v4975, 1.0
  %vm4984 = vcmp.gt.f32.partialorder %v4976, 1.0
  %vm4985 = vcmp.gt.f32.partialorder %v4977, 1.0
  %vm4986 = vcmp.gt.f32.partialorder %v4978, 1.0
  %v4987 = vsel %vm4979, 1, 0
  %v4988 = vsel %vm4980, 1, 0
  %v4989 = vsel %vm4981, 1, 0
  %v4990 = vsel %vm4982, 1, 0
  %v4991 = vsel %vm4983, 1, 0
  %v4992 = vsel %vm4984, 1, 0
  %v4993 = vsel %vm4985, 1, 0
  %v4994 = vsel %vm4986, 1, 0
  %v4995 = vcvt.s32.f32 %v4987
  %v4996 = vcvt.s32.f32 %v4988
  %v4997 = vcvt.s32.f32 %v4989
  %v4998 = vcvt.s32.f32 %v4990
  %v4999 = vcvt.s32.f32 %v4991
  %v5000 = vcvt.s32.f32 %v4992
  %v5001 = vcvt.s32.f32 %v4993
  %v5002 = vcvt.s32.f32 %v4994
  %5003 = vst [vmem:[#allocation2 + $0x3c0] sm:$0xff] %v4995
  %5004 = vst [vmem:[#allocation2 + $0x3c8] sm:$0xff] %v4996
  %5005 = vst [vmem:[#allocation2 + $0x3d0] sm:$0xff] %v4997
  %5006 = vst [vmem:[#allocation2 + $0x3d8] sm:$0xff] %v4998
  %5007 = vst [vmem:[#allocation2 + $0x3e0] sm:$0xff] %v4999
  %5008 = vst [vmem:[#allocation2 + $0x3e8] sm:$0xff] %v5000
  %5009 = vst [vmem:[#allocation2 + $0x3f0] sm:$0xff] %v5001
  %5010 = vst [vmem:[#allocation2 + $0x3f8] sm:$0xff] %v5002
  %v5011 = vmul.f32 %v4971, 0.95
  %v5012 = vmul.f32 %v4972, 0.95
  %v5013 = vmul.f32 %v4973, 0.95
  %v5014 = vmul.f32 %v4974, 0.95
  %v5015 = vmul.f32 %v4975, 0.95
  %v5016 = vmul.f32 %v4976, 0.95
  %v5017 = vmul.f32 %v4977, 0.95
  %v5018 = vmul.f32 %v4978, 0.95
  %v5019 = vadd.f32 %v5011, %v2607
  %v5020 = vadd.f32 %v5012, %v2609
  %v5021 = vadd.f32 %v5013, %v2771
  %v5022 = vadd.f32 %v5014, %v2773
  %v5023 = vadd.f32 %v5015, %v2935
  %v5024 = vadd.f32 %v5016, %v2937
  %v5025 = vadd.f32 %v5017, %v3099
  %v5026 = vadd.f32 %v5018, %v3101
  %v5027 = vsel %vm4979, 1.0, 0.0
  %v5028 = vsel %vm4980, 1.0, 0.0
  %v5029 = vsel %vm4981, 1.0, 0.0
  %v5030 = vsel %vm4982, 1.0, 0.0
  %v5031 = vsel %vm4983, 1.0, 0.0
  %v5032 = vsel %vm4984, 1.0, 0.0
  %v5033 = vsel %vm4985, 1.0, 0.0
  %v5034 = vsel %vm4986, 1.0, 0.0
  %v5035 = vsub.f32 %v5019, %v5027
  %v5036 = vsub.f32 %v5020, %v5028
  %v5037 = vsub.f32 %v5021, %v5029
  %v5038 = vsub.f32 %v5022, %v5030
  %v5039 = vsub.f32 %v5023, %v5031
  %v5040 = vsub.f32 %v5024, %v5032
  %v5041 = vsub.f32 %v5025, %v5033
  %v5042 = vsub.f32 %v5026, %v5034
  %v5043 = vsub.f32 %v5035, -1.0
  %v5044 = vsub.f32 %v5036, -1.0
  %v5045 = vsub.f32 %v5037, -1.0
  %v5046 = vsub.f32 %v5038, -1.0
  %v5047 = vsub.f32 %v5039, -1.0
  %v5048 = vsub.f32 %v5040, -1.0
  %v5049 = vsub.f32 %v5041, -1.0
  %v5050 = vsub.f32 %v5042, -1.0
  %v5051 = vmul.f32 %v5043, 115.90909
  %v5052 = vmul.f32 %v5044, 115.90909
  %v5053 = vmul.f32 %v5045, 115.90909
  %v5054 = vmul.f32 %v5046, 115.90909
  %v5055 = vmul.f32 %v5047, 115.90909
  %v5056 = vmul.f32 %v5048, 115.90909
  %v5057 = vmul.f32 %v5049, 115.90909
  %v5058 = vmul.f32 %v5050, 115.90909
  %v5059 = vround.ne.pseudo %v5051
  %v5060 = vround.ne.pseudo %v5052
  %v5061 = vround.ne.pseudo %v5053
  %v5062 = vround.ne.pseudo %v5054
  %v5063 = vround.ne.pseudo %v5055
  %v5064 = vround.ne.pseudo %v5056
  %v5065 = vround.ne.pseudo %v5057
  %v5066 = vround.ne.pseudo %v5058
  %v5067 = vmax.f32 %v5059, 0.0
  %v5068 = vmax.f32 %v5060, 0.0
  %v5069 = vmax.f32 %v5061, 0.0
  %v5070 = vmax.f32 %v5062, 0.0
  %v5071 = vmax.f32 %v5063, 0.0
  %v5072 = vmax.f32 %v5064, 0.0
  %v5073 = vmax.f32 %v5065, 0.0
  %v5074 = vmax.f32 %v5066, 0.0
  %v5075 = vmin.f32 %v5067, 255.0
  %v5076 = vmin.f32 %v5068, 255.0
  %v5077 = vmin.f32 %v5069, 255.0
  %v5078 = vmin.f32 %v5070, 255.0
  %v5079 = vmin.f32 %v5071, 255.0
  %v5080 = vmin.f32 %v5072, 255.0
  %v5081 = vmin.f32 %v5073, 255.0
  %v5082 = vmin.f32 %v5074, 255.0
  %v5083 = vmul.f32 %v5075, 0.008627451
  %v5084 = vmul.f32 %v5076, 0.008627451
  %v5085 = vmul.f32 %v5077, 0.008627451
  %v5086 = vmul.f32 %v5078, 0.008627451
  %v5087 = vmul.f32 %v5079, 0.008627451
  %v5088 = vmul.f32 %v5080, 0.008627451
  %v5089 = vmul.f32 %v5081, 0.008627451
  %v5090 = vmul.f32 %v5082, 0.008627451
  %v5091 = vadd.f32 %v5083, -1.0
  %v5092 = vadd.f32 %v5084, -1.0
  %v5093 = vadd.f32 %v5085, -1.0
  %v5094 = vadd.f32 %v5086, -1.0
  %v5095 = vadd.f32 %v5087, -1.0
  %v5096 = vadd.f32 %v5088, -1.0
  %v5097 = vadd.f32 %v5089, -1.0
  %v5098 = vadd.f32 %v5090, -1.0
  %vm5099 = vcmp.gt.f32.partialorder %v5091, 1.0
  %vm5100 = vcmp.gt.f32.partialorder %v5092, 1.0
  %vm5101 = vcmp.gt.f32.partialorder %v5093, 1.0
  %vm5102 = vcmp.gt.f32.partialorder %v5094, 1.0
  %vm5103 = vcmp.gt.f32.partialorder %v5095, 1.0
  %vm5104 = vcmp.gt.f32.partialorder %v5096, 1.0
  %vm5105 = vcmp.gt.f32.partialorder %v5097, 1.0
  %vm5106 = vcmp.gt.f32.partialorder %v5098, 1.0
  %v5107 = vsel %vm5099, 1, 0
  %v5108 = vsel %vm5100, 1, 0
  %v5109 = vsel %vm5101, 1, 0
  %v5110 = vsel %vm5102, 1, 0
  %v5111 = vsel %vm5103, 1, 0
  %v5112 = vsel %vm5104, 1, 0
  %v5113 = vsel %vm5105, 1, 0
  %v5114 = vsel %vm5106, 1, 0
  %v5115 = vcvt.s32.f32 %v5107
  %v5116 = vcvt.s32.f32 %v5108
  %v5117 = vcvt.s32.f32 %v5109
  %v5118 = vcvt.s32.f32 %v5110
  %v5119 = vcvt.s32.f32 %v5111
  %v5120 = vcvt.s32.f32 %v5112
  %v5121 = vcvt.s32.f32 %v5113
  %v5122 = vcvt.s32.f32 %v5114
  %5123 = vst [vmem:[#allocation2 + $0x400] sm:$0xff] %v5115
  %5124 = vst [vmem:[#allocation2 + $0x408] sm:$0xff] %v5116
  %5125 = vst [vmem:[#allocation2 + $0x410] sm:$0xff] %v5117
  %5126 = vst [vmem:[#allocation2 + $0x418] sm:$0xff] %v5118
  %5127 = vst [vmem:[#allocation2 + $0x420] sm:$0xff] %v5119
  %5128 = vst [vmem:[#allocation2 + $0x428] sm:$0xff] %v5120
  %5129 = vst [vmem:[#allocation2 + $0x430] sm:$0xff] %v5121
  %5130 = vst [vmem:[#allocation2 + $0x438] sm:$0xff] %v5122
  %v5131 = vmul.f32 %v5091, 0.95
  %v5132 = vmul.f32 %v5092, 0.95
  %v5133 = vmul.f32 %v5093, 0.95
  %v5134 = vmul.f32 %v5094, 0.95
  %v5135 = vmul.f32 %v5095, 0.95
  %v5136 = vmul.f32 %v5096, 0.95
  %v5137 = vmul.f32 %v5097, 0.95
  %v5138 = vmul.f32 %v5098, 0.95
  %v5139 = vadd.f32 %v5131, %v2607
  %v5140 = vadd.f32 %v5132, %v2609
  %v5141 = vadd.f32 %v5133, %v2771
  %v5142 = vadd.f32 %v5134, %v2773
  %v5143 = vadd.f32 %v5135, %v2935
  %v5144 = vadd.f32 %v5136, %v2937
  %v5145 = vadd.f32 %v5137, %v3099
  %v5146 = vadd.f32 %v5138, %v3101
  %v5147 = vsel %vm5099, 1.0, 0.0
  %v5148 = vsel %vm5100, 1.0, 0.0
  %v5149 = vsel %vm5101, 1.0, 0.0
  %v5150 = vsel %vm5102, 1.0, 0.0
  %v5151 = vsel %vm5103, 1.0, 0.0
  %v5152 = vsel %vm5104, 1.0, 0.0
  %v5153 = vsel %vm5105, 1.0, 0.0
  %v5154 = vsel %vm5106, 1.0, 0.0
  %v5155 = vsub.f32 %v5139, %v5147
  %v5156 = vsub.f32 %v5140, %v5148
  %v5157 = vsub.f32 %v5141, %v5149
  %v5158 = vsub.f32 %v5142, %v5150
  %v5159 = vsub.f32 %v5143, %v5151
  %v5160 = vsub.f32 %v5144, %v5152
  %v5161 = vsub.f32 %v5145, %v5153
  %v5162 = vsub.f32 %v5146, %v5154
  %v5163 = vsub.f32 %v5155, -1.0
  %v5164 = vsub.f32 %v5156, -1.0
  %v5165 = vsub.f32 %v5157, -1.0
  %v5166 = vsub.f32 %v5158, -1.0
  %v5167 = vsub.f32 %v5159, -1.0
  %v5168 = vsub.f32 %v5160, -1.0
  %v5169 = vsub.f32 %v5161, -1.0
  %v5170 = vsub.f32 %v5162, -1.0
  %v5171 = vmul.f32 %v5163, 115.90909
  %v5172 = vmul.f32 %v5164, 115.90909
  %v5173 = vmul.f32 %v5165, 115.90909
  %v5174 = vmul.f32 %v5166, 115.90909
  %v5175 = vmul.f32 %v5167, 115.90909
  %v5176 = vmul.f32 %v5168, 115.90909
  %v5177 = vmul.f32 %v5169, 115.90909
  %v5178 = vmul.f32 %v5170, 115.90909
  %v5179 = vround.ne.pseudo %v5171
  %v5180 = vround.ne.pseudo %v5172
  %v5181 = vround.ne.pseudo %v5173
  %v5182 = vround.ne.pseudo %v5174
  %v5183 = vround.ne.pseudo %v5175
  %v5184 = vround.ne.pseudo %v5176
  %v5185 = vround.ne.pseudo %v5177
  %v5186 = vround.ne.pseudo %v5178
  %v5187 = vmax.f32 %v5179, 0.0
  %v5188 = vmax.f32 %v5180, 0.0
  %v5189 = vmax.f32 %v5181, 0.0
  %v5190 = vmax.f32 %v5182, 0.0
  %v5191 = vmax.f32 %v5183, 0.0
  %v5192 = vmax.f32 %v5184, 0.0
  %v5193 = vmax.f32 %v5185, 0.0
  %v5194 = vmax.f32 %v5186, 0.0
  %v5195 = vmin.f32 %v5187, 255.0
  %v5196 = vmin.f32 %v5188, 255.0
  %v5197 = vmin.f32 %v5189, 255.0
  %v5198 = vmin.f32 %v5190, 255.0
  %v5199 = vmin.f32 %v5191, 255.0
  %v5200 = vmin.f32 %v5192, 255.0
  %v5201 = vmin.f32 %v5193, 255.0
  %v5202 = vmin.f32 %v5194, 255.0
  %v5203 = vmul.f32 %v5195, 0.008627451
  %v5204 = vmul.f32 %v5196, 0.008627451
  %v5205 = vmul.f32 %v5197, 0.008627451
  %v5206 = vmul.f32 %v5198, 0.008627451
  %v5207 = vmul.f32 %v5199, 0.008627451
  %v5208 = vmul.f32 %v5200, 0.008627451
  %v5209 = vmul.f32 %v5201, 0.008627451
  %v5210 = vmul.f32 %v5202, 0.008627451
  %v5211 = vadd.f32 %v5203, -1.0
  %v5212 = vadd.f32 %v5204, -1.0
  %v5213 = vadd.f32 %v5205, -1.0
  %v5214 = vadd.f32 %v5206, -1.0
  %v5215 = vadd.f32 %v5207, -1.0
  %v5216 = vadd.f32 %v5208, -1.0
  %v5217 = vadd.f32 %v5209, -1.0
  %v5218 = vadd.f32 %v5210, -1.0
  %vm5219 = vcmp.gt.f32.partialorder %v5211, 1.0
  %vm5220 = vcmp.gt.f32.partialorder %v5212, 1.0
  %vm5221 = vcmp.gt.f32.partialorder %v5213, 1.0
  %vm5222 = vcmp.gt.f32.partialorder %v5214, 1.0
  %vm5223 = vcmp.gt.f32.partialorder %v5215, 1.0
  %vm5224 = vcmp.gt.f32.partialorder %v5216, 1.0
  %vm5225 = vcmp.gt.f32.partialorder %v5217, 1.0
  %vm5226 = vcmp.gt.f32.partialorder %v5218, 1.0
  %v5227 = vsel %vm5219, 1, 0
  %v5228 = vsel %vm5220, 1, 0
  %v5229 = vsel %vm5221, 1, 0
  %v5230 = vsel %vm5222, 1, 0
  %v5231 = vsel %vm5223, 1, 0
  %v5232 = vsel %vm5224, 1, 0
  %v5233 = vsel %vm5225, 1, 0
  %v5234 = vsel %vm5226, 1, 0
  %v5235 = vcvt.s32.f32 %v5227
  %v5236 = vcvt.s32.f32 %v5228
  %v5237 = vcvt.s32.f32 %v5229
  %v5238 = vcvt.s32.f32 %v5230
  %v5239 = vcvt.s32.f32 %v5231
  %v5240 = vcvt.s32.f32 %v5232
  %v5241 = vcvt.s32.f32 %v5233
  %v5242 = vcvt.s32.f32 %v5234
  %5243 = vst [vmem:[#allocation2 + $0x440] sm:$0xff] %v5235
  %5244 = vst [vmem:[#allocation2 + $0x448] sm:$0xff] %v5236
  %5245 = vst [vmem:[#allocation2 + $0x450] sm:$0xff] %v5237
  %5246 = vst [vmem:[#allocation2 + $0x458] sm:$0xff] %v5238
  %5247 = vst [vmem:[#allocation2 + $0x460] sm:$0xff] %v5239
  %5248 = vst [vmem:[#allocation2 + $0x468] sm:$0xff] %v5240
  %5249 = vst [vmem:[#allocation2 + $0x470] sm:$0xff] %v5241
  %5250 = vst [vmem:[#allocation2 + $0x478] sm:$0xff] %v5242
  %v5251 = vmul.f32 %v5211, 0.95
  %v5252 = vmul.f32 %v5212, 0.95
  %v5253 = vmul.f32 %v5213, 0.95
  %v5254 = vmul.f32 %v5214, 0.95
  %v5255 = vmul.f32 %v5215, 0.95
  %v5256 = vmul.f32 %v5216, 0.95
  %v5257 = vmul.f32 %v5217, 0.95
  %v5258 = vmul.f32 %v5218, 0.95
  %v5259 = vadd.f32 %v5251, %v2607
  %v5260 = vadd.f32 %v5252, %v2609
  %v5261 = vadd.f32 %v5253, %v2771
  %v5262 = vadd.f32 %v5254, %v2773
  %v5263 = vadd.f32 %v5255, %v2935
  %v5264 = vadd.f32 %v5256, %v2937
  %v5265 = vadd.f32 %v5257, %v3099
  %v5266 = vadd.f32 %v5258, %v3101
  %v5267 = vsel %vm5219, 1.0, 0.0
  %v5268 = vsel %vm5220, 1.0, 0.0
  %v5269 = vsel %vm5221, 1.0, 0.0
  %v5270 = vsel %vm5222, 1.0, 0.0
  %v5271 = vsel %vm5223, 1.0, 0.0
  %v5272 = vsel %vm5224, 1.0, 0.0
  %v5273 = vsel %vm5225, 1.0, 0.0
  %v5274 = vsel %vm5226, 1.0, 0.0
  %v5275 = vsub.f32 %v5259, %v5267
  %v5276 = vsub.f32 %v5260, %v5268
  %v5277 = vsub.f32 %v5261, %v5269
  %v5278 = vsub.f32 %v5262, %v5270
  %v5279 = vsub.f32 %v5263, %v5271
  %v5280 = vsub.f32 %v5264, %v5272
  %v5281 = vsub.f32 %v5265, %v5273
  %v5282 = vsub.f32 %v5266, %v5274
  %v5283 = vsub.f32 %v5275, -1.0
  %v5284 = vsub.f32 %v5276, -1.0
  %v5285 = vsub.f32 %v5277, -1.0
  %v5286 = vsub.f32 %v5278, -1.0
  %v5287 = vsub.f32 %v5279, -1.0
  %v5288 = vsub.f32 %v5280, -1.0
  %v5289 = vsub.f32 %v5281, -1.0
  %v5290 = vsub.f32 %v5282, -1.0
  %v5291 = vmul.f32 %v5283, 115.90909
  %v5292 = vmul.f32 %v5284, 115.90909
  %v5293 = vmul.f32 %v5285, 115.90909
  %v5294 = vmul.f32 %v5286, 115.90909
  %v5295 = vmul.f32 %v5287, 115.90909
  %v5296 = vmul.f32 %v5288, 115.90909
  %v5297 = vmul.f32 %v5289, 115.90909
  %v5298 = vmul.f32 %v5290, 115.90909
  %v5299 = vround.ne.pseudo %v5291
  %v5300 = vround.ne.pseudo %v5292
  %v5301 = vround.ne.pseudo %v5293
  %v5302 = vround.ne.pseudo %v5294
  %v5303 = vround.ne.pseudo %v5295
  %v5304 = vround.ne.pseudo %v5296
  %v5305 = vround.ne.pseudo %v5297
  %v5306 = vround.ne.pseudo %v5298
  %v5307 = vmax.f32 %v5299, 0.0
  %v5308 = vmax.f32 %v5300, 0.0
  %v5309 = vmax.f32 %v5301, 0.0
  %v5310 = vmax.f32 %v5302, 0.0
  %v5311 = vmax.f32 %v5303, 0.0
  %v5312 = vmax.f32 %v5304, 0.0
  %v5313 = vmax.f32 %v5305, 0.0
  %v5314 = vmax.f32 %v5306, 0.0
  %v5315 = vmin.f32 %v5307, 255.0
  %v5316 = vmin.f32 %v5308, 255.0
  %v5317 = vmin.f32 %v5309, 255.0
  %v5318 = vmin.f32 %v5310, 255.0
  %v5319 = vmin.f32 %v5311, 255.0
  %v5320 = vmin.f32 %v5312, 255.0
  %v5321 = vmin.f32 %v5313, 255.0
  %v5322 = vmin.f32 %v5314, 255.0
  %v5323 = vmul.f32 %v5315, 0.008627451
  %v5324 = vmul.f32 %v5316, 0.008627451
  %v5325 = vmul.f32 %v5317, 0.008627451
  %v5326 = vmul.f32 %v5318, 0.008627451
  %v5327 = vmul.f32 %v5319, 0.008627451
  %v5328 = vmul.f32 %v5320, 0.008627451
  %v5329 = vmul.f32 %v5321, 0.008627451
  %v5330 = vmul.f32 %v5322, 0.008627451
  %v5331 = vadd.f32 %v5323, -1.0
  %v5332 = vadd.f32 %v5324, -1.0
  %v5333 = vadd.f32 %v5325, -1.0
  %v5334 = vadd.f32 %v5326, -1.0
  %v5335 = vadd.f32 %v5327, -1.0
  %v5336 = vadd.f32 %v5328, -1.0
  %v5337 = vadd.f32 %v5329, -1.0
  %v5338 = vadd.f32 %v5330, -1.0
  %vm5339 = vcmp.gt.f32.partialorder %v5331, 1.0
  %vm5340 = vcmp.gt.f32.partialorder %v5332, 1.0
  %vm5341 = vcmp.gt.f32.partialorder %v5333, 1.0
  %vm5342 = vcmp.gt.f32.partialorder %v5334, 1.0
  %vm5343 = vcmp.gt.f32.partialorder %v5335, 1.0
  %vm5344 = vcmp.gt.f32.partialorder %v5336, 1.0
  %vm5345 = vcmp.gt.f32.partialorder %v5337, 1.0
  %vm5346 = vcmp.gt.f32.partialorder %v5338, 1.0
  %v5347 = vsel %vm5339, 1, 0
  %v5348 = vsel %vm5340, 1, 0
  %v5349 = vsel %vm5341, 1, 0
  %v5350 = vsel %vm5342, 1, 0
  %v5351 = vsel %vm5343, 1, 0
  %v5352 = vsel %vm5344, 1, 0
  %v5353 = vsel %vm5345, 1, 0
  %v5354 = vsel %vm5346, 1, 0
  %v5355 = vcvt.s32.f32 %v5347
  %v5356 = vcvt.s32.f32 %v5348
  %v5357 = vcvt.s32.f32 %v5349
  %v5358 = vcvt.s32.f32 %v5350
  %v5359 = vcvt.s32.f32 %v5351
  %v5360 = vcvt.s32.f32 %v5352
  %v5361 = vcvt.s32.f32 %v5353
  %v5362 = vcvt.s32.f32 %v5354
  %5363 = vst [vmem:[#allocation2 + $0x480] sm:$0xff] %v5355
  %5364 = vst [vmem:[#allocation2 + $0x488] sm:$0xff] %v5356
  %5365 = vst [vmem:[#allocation2 + $0x490] sm:$0xff] %v5357
  %5366 = vst [vmem:[#allocation2 + $0x498] sm:$0xff] %v5358
  %5367 = vst [vmem:[#allocation2 + $0x4a0] sm:$0xff] %v5359
  %5368 = vst [vmem:[#allocation2 + $0x4a8] sm:$0xff] %v5360
  %5369 = vst [vmem:[#allocation2 + $0x4b0] sm:$0xff] %v5361
  %5370 = vst [vmem:[#allocation2 + $0x4b8] sm:$0xff] %v5362
  %v5371 = vmul.f32 %v5331, 0.95
  %v5372 = vmul.f32 %v5332, 0.95
  %v5373 = vmul.f32 %v5333, 0.95
  %v5374 = vmul.f32 %v5334, 0.95
  %v5375 = vmul.f32 %v5335, 0.95
  %v5376 = vmul.f32 %v5336, 0.95
  %v5377 = vmul.f32 %v5337, 0.95
  %v5378 = vmul.f32 %v5338, 0.95
  %v5379 = vadd.f32 %v5371, %v2607
  %v5380 = vadd.f32 %v5372, %v2609
  %v5381 = vadd.f32 %v5373, %v2771
  %v5382 = vadd.f32 %v5374, %v2773
  %v5383 = vadd.f32 %v5375, %v2935
  %v5384 = vadd.f32 %v5376, %v2937
  %v5385 = vadd.f32 %v5377, %v3099
  %v5386 = vadd.f32 %v5378, %v3101
  %v5387 = vsel %vm5339, 1.0, 0.0
  %v5388 = vsel %vm5340, 1.0, 0.0
  %v5389 = vsel %vm5341, 1.0, 0.0
  %v5390 = vsel %vm5342, 1.0, 0.0
  %v5391 = vsel %vm5343, 1.0, 0.0
  %v5392 = vsel %vm5344, 1.0, 0.0
  %v5393 = vsel %vm5345, 1.0, 0.0
  %v5394 = vsel %vm5346, 1.0, 0.0
  %v5395 = vsub.f32 %v5379, %v5387
  %v5396 = vsub.f32 %v5380, %v5388
  %v5397 = vsub.f32 %v5381, %v5389
  %v5398 = vsub.f32 %v5382, %v5390
  %v5399 = vsub.f32 %v5383, %v5391
  %v5400 = vsub.f32 %v5384, %v5392
  %v5401 = vsub.f32 %v5385, %v5393
  %v5402 = vsub.f32 %v5386, %v5394
  %v5403 = vsub.f32 %v5395, -1.0
  %v5404 = vsub.f32 %v5396, -1.0
  %v5405 = vsub.f32 %v5397, -1.0
  %v5406 = vsub.f32 %v5398, -1.0
  %v5407 = vsub.f32 %v5399, -1.0
  %v5408 = vsub.f32 %v5400, -1.0
  %v5409 = vsub.f32 %v5401, -1.0
  %v5410 = vsub.f32 %v5402, -1.0
  %v5411 = vmul.f32 %v5403, 115.90909
  %v5412 = vmul.f32 %v5404, 115.90909
  %v5413 = vmul.f32 %v5405, 115.90909
  %v5414 = vmul.f32 %v5406, 115.90909
  %v5415 = vmul.f32 %v5407, 115.90909
  %v5416 = vmul.f32 %v5408, 115.90909
  %v5417 = vmul.f32 %v5409, 115.90909
  %v5418 = vmul.f32 %v5410, 115.90909
  %v5419 = vround.ne.pseudo %v5411
  %v5420 = vround.ne.pseudo %v5412
  %v5421 = vround.ne.pseudo %v5413
  %v5422 = vround.ne.pseudo %v5414
  %v5423 = vround.ne.pseudo %v5415
  %v5424 = vround.ne.pseudo %v5416
  %v5425 = vround.ne.pseudo %v5417
  %v5426 = vround.ne.pseudo %v5418
  %v5427 = vmax.f32 %v5419, 0.0
  %v5428 = vmax.f32 %v5420, 0.0
  %v5429 = vmax.f32 %v5421, 0.0
  %v5430 = vmax.f32 %v5422, 0.0
  %v5431 = vmax.f32 %v5423, 0.0
  %v5432 = vmax.f32 %v5424, 0.0
  %v5433 = vmax.f32 %v5425, 0.0
  %v5434 = vmax.f32 %v5426, 0.0
  %v5435 = vmin.f32 %v5427, 255.0
  %v5436 = vmin.f32 %v5428, 255.0
  %v5437 = vmin.f32 %v5429, 255.0
  %v5438 = vmin.f32 %v5430, 255.0
  %v5439 = vmin.f32 %v5431, 255.0
  %v5440 = vmin.f32 %v5432, 255.0
  %v5441 = vmin.f32 %v5433, 255.0
  %v5442 = vmin.f32 %v5434, 255.0
  %v5443 = vmul.f32 %v5435, 0.008627451
  %v5444 = vmul.f32 %v5436, 0.008627451
  %v5445 = vmul.f32 %v5437, 0.008627451
  %v5446 = vmul.f32 %v5438, 0.008627451
  %v5447 = vmul.f32 %v5439, 0.008627451
  %v5448 = vmul.f32 %v5440, 0.008627451
  %v5449 = vmul.f32 %v5441, 0.008627451
  %v5450 = vmul.f32 %v5442, 0.008627451
  %v5451 = vadd.f32 %v5443, -1.0
  %v5452 = vadd.f32 %v5444, -1.0
  %v5453 = vadd.f32 %v5445, -1.0
  %v5454 = vadd.f32 %v5446, -1.0
  %v5455 = vadd.f32 %v5447, -1.0
  %v5456 = vadd.f32 %v5448, -1.0
  %v5457 = vadd.f32 %v5449, -1.0
  %v5458 = vadd.f32 %v5450, -1.0
  %vm5459 = vcmp.gt.f32.partialorder %v5451, 1.0
  %vm5460 = vcmp.gt.f32.partialorder %v5452, 1.0
  %vm5461 = vcmp.gt.f32.partialorder %v5453, 1.0
  %vm5462 = vcmp.gt.f32.partialorder %v5454, 1.0
  %vm5463 = vcmp.gt.f32.partialorder %v5455, 1.0
  %vm5464 = vcmp.gt.f32.partialorder %v5456, 1.0
  %vm5465 = vcmp.gt.f32.partialorder %v5457, 1.0
  %vm5466 = vcmp.gt.f32.partialorder %v5458, 1.0
  %v5467 = vsel %vm5459, 1, 0
  %v5468 = vsel %vm5460, 1, 0
  %v5469 = vsel %vm5461, 1, 0
  %v5470 = vsel %vm5462, 1, 0
  %v5471 = vsel %vm5463, 1, 0
  %v5472 = vsel %vm5464, 1, 0
  %v5473 = vsel %vm5465, 1, 0
  %v5474 = vsel %vm5466, 1, 0
  %v5475 = vcvt.s32.f32 %v5467
  %v5476 = vcvt.s32.f32 %v5468
  %v5477 = vcvt.s32.f32 %v5469
  %v5478 = vcvt.s32.f32 %v5470
  %v5479 = vcvt.s32.f32 %v5471
  %v5480 = vcvt.s32.f32 %v5472
  %v5481 = vcvt.s32.f32 %v5473
  %v5482 = vcvt.s32.f32 %v5474
  %5483 = vst [vmem:[#allocation2 + $0x4c0] sm:$0xff] %v5475
  %5484 = vst [vmem:[#allocation2 + $0x4c8] sm:$0xff] %v5476
  %5485 = vst [vmem:[#allocation2 + $0x4d0] sm:$0xff] %v5477
  %5486 = vst [vmem:[#allocation2 + $0x4d8] sm:$0xff] %v5478
  %5487 = vst [vmem:[#allocation2 + $0x4e0] sm:$0xff] %v5479
  %5488 = vst [vmem:[#allocation2 + $0x4e8] sm:$0xff] %v5480
  %5489 = vst [vmem:[#allocation2 + $0x4f0] sm:$0xff] %v5481
  %5490 = vst [vmem:[#allocation2 + $0x4f8] sm:$0xff] %v5482
  %v5491 = vmul.f32 %v5451, 0.95
  %v5492 = vmul.f32 %v5452, 0.95
  %v5493 = vmul.f32 %v5453, 0.95
  %v5494 = vmul.f32 %v5454, 0.95
  %v5495 = vmul.f32 %v5455, 0.95
  %v5496 = vmul.f32 %v5456, 0.95
  %v5497 = vmul.f32 %v5457, 0.95
  %v5498 = vmul.f32 %v5458, 0.95
  %v5499 = vadd.f32 %v5491, %v2607
  %v5500 = vadd.f32 %v5492, %v2609
  %v5501 = vadd.f32 %v5493, %v2771
  %v5502 = vadd.f32 %v5494, %v2773
  %v5503 = vadd.f32 %v5495, %v2935
  %v5504 = vadd.f32 %v5496, %v2937
  %v5505 = vadd.f32 %v5497, %v3099
  %v5506 = vadd.f32 %v5498, %v3101
  %v5507 = vsel %vm5459, 1.0, 0.0
  %v5508 = vsel %vm5460, 1.0, 0.0
  %v5509 = vsel %vm5461, 1.0, 0.0
  %v5510 = vsel %vm5462, 1.0, 0.0
  %v5511 = vsel %vm5463, 1.0, 0.0
  %v5512 = vsel %vm5464, 1.0, 0.0
  %v5513 = vsel %vm5465, 1.0, 0.0
  %v5514 = vsel %vm5466, 1.0, 0.0
  %v5515 = vsub.f32 %v5499, %v5507
  %v5516 = vsub.f32 %v5500, %v5508
  %v5517 = vsub.f32 %v5501, %v5509
  %v5518 = vsub.f32 %v5502, %v5510
  %v5519 = vsub.f32 %v5503, %v5511
  %v5520 = vsub.f32 %v5504, %v5512
  %v5521 = vsub.f32 %v5505, %v5513
  %v5522 = vsub.f32 %v5506, %v5514
  %v5523 = vsub.f32 %v5515, -1.0
  %v5524 = vsub.f32 %v5516, -1.0
  %v5525 = vsub.f32 %v5517, -1.0
  %v5526 = vsub.f32 %v5518, -1.0
  %v5527 = vsub.f32 %v5519, -1.0
  %v5528 = vsub.f32 %v5520, -1.0
  %v5529 = vsub.f32 %v5521, -1.0
  %v5530 = vsub.f32 %v5522, -1.0
  %v5531 = vmul.f32 %v5523, 115.90909
  %v5532 = vmul.f32 %v5524, 115.90909
  %v5533 = vmul.f32 %v5525, 115.90909
  %v5534 = vmul.f32 %v5526, 115.90909
  %v5535 = vmul.f32 %v5527, 115.90909
  %v5536 = vmul.f32 %v5528, 115.90909
  %v5537 = vmul.f32 %v5529, 115.90909
  %v5538 = vmul.f32 %v5530, 115.90909
  %v5539 = vround.ne.pseudo %v5531
  %v5540 = vround.ne.pseudo %v5532
  %v5541 = vround.ne.pseudo %v5533
  %v5542 = vround.ne.pseudo %v5534
  %v5543 = vround.ne.pseudo %v5535
  %v5544 = vround.ne.pseudo %v5536
  %v5545 = vround.ne.pseudo %v5537
  %v5546 = vround.ne.pseudo %v5538
  %v5547 = vmax.f32 %v5539, 0.0
  %v5548 = vmax.f32 %v5540, 0.0
  %v5549 = vmax.f32 %v5541, 0.0
  %v5550 = vmax.f32 %v5542, 0.0
  %v5551 = vmax.f32 %v5543, 0.0
  %v5552 = vmax.f32 %v5544, 0.0
  %v5553 = vmax.f32 %v5545, 0.0
  %v5554 = vmax.f32 %v5546, 0.0
  %v5555 = vmin.f32 %v5547, 255.0
  %v5556 = vmin.f32 %v5548, 255.0
  %v5557 = vmin.f32 %v5549, 255.0
  %v5558 = vmin.f32 %v5550, 255.0
  %v5559 = vmin.f32 %v5551, 255.0
  %v5560 = vmin.f32 %v5552, 255.0
  %v5561 = vmin.f32 %v5553, 255.0
  %v5562 = vmin.f32 %v5554, 255.0
  %v5563 = vmul.f32 %v5555, 0.008627451
  %v5564 = vmul.f32 %v5556, 0.008627451
  %v5565 = vmul.f32 %v5557, 0.008627451
  %v5566 = vmul.f32 %v5558, 0.008627451
  %v5567 = vmul.f32 %v5559, 0.008627451
  %v5568 = vmul.f32 %v5560, 0.008627451
  %v5569 = vmul.f32 %v5561, 0.008627451
  %v5570 = vmul.f32 %v5562, 0.008627451
  %v5571 = vadd.f32 %v5563, -1.0
  %v5572 = vadd.f32 %v5564, -1.0
  %v5573 = vadd.f32 %v5565, -1.0
  %v5574 = vadd.f32 %v5566, -1.0
  %v5575 = vadd.f32 %v5567, -1.0
  %v5576 = vadd.f32 %v5568, -1.0
  %v5577 = vadd.f32 %v5569, -1.0
  %v5578 = vadd.f32 %v5570, -1.0
  %vm5579 = vcmp.gt.f32.partialorder %v5571, 1.0
  %vm5580 = vcmp.gt.f32.partialorder %v5572, 1.0
  %vm5581 = vcmp.gt.f32.partialorder %v5573, 1.0
  %vm5582 = vcmp.gt.f32.partialorder %v5574, 1.0
  %vm5583 = vcmp.gt.f32.partialorder %v5575, 1.0
  %vm5584 = vcmp.gt.f32.partialorder %v5576, 1.0
  %vm5585 = vcmp.gt.f32.partialorder %v5577, 1.0
  %vm5586 = vcmp.gt.f32.partialorder %v5578, 1.0
  %v5587 = vsel %vm5579, 1, 0
  %v5588 = vsel %vm5580, 1, 0
  %v5589 = vsel %vm5581, 1, 0
  %v5590 = vsel %vm5582, 1, 0
  %v5591 = vsel %vm5583, 1, 0
  %v5592 = vsel %vm5584, 1, 0
  %v5593 = vsel %vm5585, 1, 0
  %v5594 = vsel %vm5586, 1, 0
  %v5595 = vcvt.s32.f32 %v5587
  %v5596 = vcvt.s32.f32 %v5588
  %v5597 = vcvt.s32.f32 %v5589
  %v5598 = vcvt.s32.f32 %v5590
  %v5599 = vcvt.s32.f32 %v5591
  %v5600 = vcvt.s32.f32 %v5592
  %v5601 = vcvt.s32.f32 %v5593
  %v5602 = vcvt.s32.f32 %v5594
  %5603 = vst [vmem:[#allocation2 + $0x500] sm:$0xff] %v5595
  %5604 = vst [vmem:[#allocation2 + $0x508] sm:$0xff] %v5596
  %5605 = vst [vmem:[#allocation2 + $0x510] sm:$0xff] %v5597
  %5606 = vst [vmem:[#allocation2 + $0x518] sm:$0xff] %v5598
  %5607 = vst [vmem:[#allocation2 + $0x520] sm:$0xff] %v5599
  %5608 = vst [vmem:[#allocation2 + $0x528] sm:$0xff] %v5600
  %5609 = vst [vmem:[#allocation2 + $0x530] sm:$0xff] %v5601
  %5610 = vst [vmem:[#allocation2 + $0x538] sm:$0xff] %v5602
  %v5611 = vmul.f32 %v5571, 0.95
  %v5612 = vmul.f32 %v5572, 0.95
  %v5613 = vmul.f32 %v5573, 0.95
  %v5614 = vmul.f32 %v5574, 0.95
  %v5615 = vmul.f32 %v5575, 0.95
  %v5616 = vmul.f32 %v5576, 0.95
  %v5617 = vmul.f32 %v5577, 0.95
  %v5618 = vmul.f32 %v5578, 0.95
  %v5619 = vadd.f32 %v5611, %v2607
  %v5620 = vadd.f32 %v5612, %v2609
  %v5621 = vadd.f32 %v5613, %v2771
  %v5622 = vadd.f32 %v5614, %v2773
  %v5623 = vadd.f32 %v5615, %v2935
  %v5624 = vadd.f32 %v5616, %v2937
  %v5625 = vadd.f32 %v5617, %v3099
  %v5626 = vadd.f32 %v5618, %v3101
  %v5627 = vsel %vm5579, 1.0, 0.0
  %v5628 = vsel %vm5580, 1.0, 0.0
  %v5629 = vsel %vm5581, 1.0, 0.0
  %v5630 = vsel %vm5582, 1.0, 0.0
  %v5631 = vsel %vm5583, 1.0, 0.0
  %v5632 = vsel %vm5584, 1.0, 0.0
  %v5633 = vsel %vm5585, 1.0, 0.0
  %v5634 = vsel %vm5586, 1.0, 0.0
  %v5635 = vsub.f32 %v5619, %v5627
  %v5636 = vsub.f32 %v5620, %v5628
  %v5637 = vsub.f32 %v5621, %v5629
  %v5638 = vsub.f32 %v5622, %v5630
  %v5639 = vsub.f32 %v5623, %v5631
  %v5640 = vsub.f32 %v5624, %v5632
  %v5641 = vsub.f32 %v5625, %v5633
  %v5642 = vsub.f32 %v5626, %v5634
  %v5643 = vsub.f32 %v5635, -1.0
  %v5644 = vsub.f32 %v5636, -1.0
  %v5645 = vsub.f32 %v5637, -1.0
  %v5646 = vsub.f32 %v5638, -1.0
  %v5647 = vsub.f32 %v5639, -1.0
  %v5648 = vsub.f32 %v5640, -1.0
  %v5649 = vsub.f32 %v5641, -1.0
  %v5650 = vsub.f32 %v5642, -1.0
  %v5651 = vmul.f32 %v5643, 115.90909
  %v5652 = vmul.f32 %v5644, 115.90909
  %v5653 = vmul.f32 %v5645, 115.90909
  %v5654 = vmul.f32 %v5646, 115.90909
  %v5655 = vmul.f32 %v5647, 115.90909
  %v5656 = vmul.f32 %v5648, 115.90909
  %v5657 = vmul.f32 %v5649, 115.90909
  %v5658 = vmul.f32 %v5650, 115.90909
  %v5659 = vround.ne.pseudo %v5651
  %v5660 = vround.ne.pseudo %v5652
  %v5661 = vround.ne.pseudo %v5653
  %v5662 = vround.ne.pseudo %v5654
  %v5663 = vround.ne.pseudo %v5655
  %v5664 = vround.ne.pseudo %v5656
  %v5665 = vround.ne.pseudo %v5657
  %v5666 = vround.ne.pseudo %v5658
  %v5667 = vmax.f32 %v5659, 0.0
  %v5668 = vmax.f32 %v5660, 0.0
  %v5669 = vmax.f32 %v5661, 0.0
  %v5670 = vmax.f32 %v5662, 0.0
  %v5671 = vmax.f32 %v5663, 0.0
  %v5672 = vmax.f32 %v5664, 0.0
  %v5673 = vmax.f32 %v5665, 0.0
  %v5674 = vmax.f32 %v5666, 0.0
  %v5675 = vmin.f32 %v5667, 255.0
  %v5676 = vmin.f32 %v5668, 255.0
  %v5677 = vmin.f32 %v5669, 255.0
  %v5678 = vmin.f32 %v5670, 255.0
  %v5679 = vmin.f32 %v5671, 255.0
  %v5680 = vmin.f32 %v5672, 255.0
  %v5681 = vmin.f32 %v5673, 255.0
  %v5682 = vmin.f32 %v5674, 255.0
  %v5683 = vmul.f32 %v5675, 0.008627451
  %v5684 = vmul.f32 %v5676, 0.008627451
  %v5685 = vmul.f32 %v5677, 0.008627451
  %v5686 = vmul.f32 %v5678, 0.008627451
  %v5687 = vmul.f32 %v5679, 0.008627451
  %v5688 = vmul.f32 %v5680, 0.008627451
  %v5689 = vmul.f32 %v5681, 0.008627451
  %v5690 = vmul.f32 %v5682, 0.008627451
  %v5691 = vadd.f32 %v5683, -1.0
  %v5692 = vadd.f32 %v5684, -1.0
  %v5693 = vadd.f32 %v5685, -1.0
  %v5694 = vadd.f32 %v5686, -1.0
  %v5695 = vadd.f32 %v5687, -1.0
  %v5696 = vadd.f32 %v5688, -1.0
  %v5697 = vadd.f32 %v5689, -1.0
  %v5698 = vadd.f32 %v5690, -1.0
  %vm5699 = vcmp.gt.f32.partialorder %v5691, 1.0
  %vm5700 = vcmp.gt.f32.partialorder %v5692, 1.0
  %vm5701 = vcmp.gt.f32.partialorder %v5693, 1.0
  %vm5702 = vcmp.gt.f32.partialorder %v5694, 1.0
  %vm5703 = vcmp.gt.f32.partialorder %v5695, 1.0
  %vm5704 = vcmp.gt.f32.partialorder %v5696, 1.0
  %vm5705 = vcmp.gt.f32.partialorder %v5697, 1.0
  %vm5706 = vcmp.gt.f32.partialorder %v5698, 1.0
  %v5707 = vsel %vm5699, 1, 0
  %v5708 = vsel %vm5700, 1, 0
  %v5709 = vsel %vm5701, 1, 0
  %v5710 = vsel %vm5702, 1, 0
  %v5711 = vsel %vm5703, 1, 0
  %v5712 = vsel %vm5704, 1, 0
  %v5713 = vsel %vm5705, 1, 0
  %v5714 = vsel %vm5706, 1, 0
  %v5715 = vcvt.s32.f32 %v5707
  %v5716 = vcvt.s32.f32 %v5708
  %v5717 = vcvt.s32.f32 %v5709
  %v5718 = vcvt.s32.f32 %v5710
  %v5719 = vcvt.s32.f32 %v5711
  %v5720 = vcvt.s32.f32 %v5712
  %v5721 = vcvt.s32.f32 %v5713
  %v5722 = vcvt.s32.f32 %v5714
  %5723 = vst [vmem:[#allocation2 + $0x540] sm:$0xff] %v5715
  %5724 = vst [vmem:[#allocation2 + $0x548] sm:$0xff] %v5716
  %5725 = vst [vmem:[#allocation2 + $0x550] sm:$0xff] %v5717
  %5726 = vst [vmem:[#allocation2 + $0x558] sm:$0xff] %v5718
  %5727 = vst [vmem:[#allocation2 + $0x560] sm:$0xff] %v5719
  %5728 = vst [vmem:[#allocation2 + $0x568] sm:$0xff] %v5720
  %5729 = vst [vmem:[#allocation2 + $0x570] sm:$0xff] %v5721
  %5730 = vst [vmem:[#allocation2 + $0x578] sm:$0xff] %v5722
  %v5731 = vmul.f32 %v5691, 0.95
  %v5732 = vmul.f32 %v5692, 0.95
  %v5733 = vmul.f32 %v5693, 0.95
  %v5734 = vmul.f32 %v5694, 0.95
  %v5735 = vmul.f32 %v5695, 0.95
  %v5736 = vmul.f32 %v5696, 0.95
  %v5737 = vmul.f32 %v5697, 0.95
  %v5738 = vmul.f32 %v5698, 0.95
  %v5739 = vadd.f32 %v5731, %v2607
  %v5740 = vadd.f32 %v5732, %v2609
  %v5741 = vadd.f32 %v5733, %v2771
  %v5742 = vadd.f32 %v5734, %v2773
  %v5743 = vadd.f32 %v5735, %v2935
  %v5744 = vadd.f32 %v5736, %v2937
  %v5745 = vadd.f32 %v5737, %v3099
  %v5746 = vadd.f32 %v5738, %v3101
  %v5747 = vsel %vm5699, 1.0, 0.0
  %v5748 = vsel %vm5700, 1.0, 0.0
  %v5749 = vsel %vm5701, 1.0, 0.0
  %v5750 = vsel %vm5702, 1.0, 0.0
  %v5751 = vsel %vm5703, 1.0, 0.0
  %v5752 = vsel %vm5704, 1.0, 0.0
  %v5753 = vsel %vm5705, 1.0, 0.0
  %v5754 = vsel %vm5706, 1.0, 0.0
  %v5755 = vsub.f32 %v5739, %v5747
  %v5756 = vsub.f32 %v5740, %v5748
  %v5757 = vsub.f32 %v5741, %v5749
  %v5758 = vsub.f32 %v5742, %v5750
  %v5759 = vsub.f32 %v5743, %v5751
  %v5760 = vsub.f32 %v5744, %v5752
  %v5761 = vsub.f32 %v5745, %v5753
  %v5762 = vsub.f32 %v5746, %v5754
  %v5763 = vsub.f32 %v5755, -1.0
  %v5764 = vsub.f32 %v5756, -1.0
  %v5765 = vsub.f32 %v5757, -1.0
  %v5766 = vsub.f32 %v5758, -1.0
  %v5767 = vsub.f32 %v5759, -1.0
  %v5768 = vsub.f32 %v5760, -1.0
  %v5769 = vsub.f32 %v5761, -1.0
  %v5770 = vsub.f32 %v5762, -1.0
  %v5771 = vmul.f32 %v5763, 115.90909
  %v5772 = vmul.f32 %v5764, 115.90909
  %v5773 = vmul.f32 %v5765, 115.90909
  %v5774 = vmul.f32 %v5766, 115.90909
  %v5775 = vmul.f32 %v5767, 115.90909
  %v5776 = vmul.f32 %v5768, 115.90909
  %v5777 = vmul.f32 %v5769, 115.90909
  %v5778 = vmul.f32 %v5770, 115.90909
  %v5779 = vround.ne.pseudo %v5771
  %v5780 = vround.ne.pseudo %v5772
  %v5781 = vround.ne.pseudo %v5773
  %v5782 = vround.ne.pseudo %v5774
  %v5783 = vround.ne.pseudo %v5775
  %v5784 = vround.ne.pseudo %v5776
  %v5785 = vround.ne.pseudo %v5777
  %v5786 = vround.ne.pseudo %v5778
  %v5787 = vmax.f32 %v5779, 0.0
  %v5788 = vmax.f32 %v5780, 0.0
  %v5789 = vmax.f32 %v5781, 0.0
  %v5790 = vmax.f32 %v5782, 0.0
  %v5791 = vmax.f32 %v5783, 0.0
  %v5792 = vmax.f32 %v5784, 0.0
  %v5793 = vmax.f32 %v5785, 0.0
  %v5794 = vmax.f32 %v5786, 0.0
  %v5795 = vmin.f32 %v5787, 255.0
  %v5796 = vmin.f32 %v5788, 255.0
  %v5797 = vmin.f32 %v5789, 255.0
  %v5798 = vmin.f32 %v5790, 255.0
  %v5799 = vmin.f32 %v5791, 255.0
  %v5800 = vmin.f32 %v5792, 255.0
  %v5801 = vmin.f32 %v5793, 255.0
  %v5802 = vmin.f32 %v5794, 255.0
  %v5803 = vmul.f32 %v5795, 0.008627451
  %v5804 = vmul.f32 %v5796, 0.008627451
  %v5805 = vmul.f32 %v5797, 0.008627451
  %v5806 = vmul.f32 %v5798, 0.008627451
  %v5807 = vmul.f32 %v5799, 0.008627451
  %v5808 = vmul.f32 %v5800, 0.008627451
  %v5809 = vmul.f32 %v5801, 0.008627451
  %v5810 = vmul.f32 %v5802, 0.008627451
  %v5811 = vadd.f32 %v5803, -1.0
  %v5812 = vadd.f32 %v5804, -1.0
  %v5813 = vadd.f32 %v5805, -1.0
  %v5814 = vadd.f32 %v5806, -1.0
  %v5815 = vadd.f32 %v5807, -1.0
  %v5816 = vadd.f32 %v5808, -1.0
  %v5817 = vadd.f32 %v5809, -1.0
  %v5818 = vadd.f32 %v5810, -1.0
  %vm5819 = vcmp.gt.f32.partialorder %v5811, 1.0
  %vm5820 = vcmp.gt.f32.partialorder %v5812, 1.0
  %vm5821 = vcmp.gt.f32.partialorder %v5813, 1.0
  %vm5822 = vcmp.gt.f32.partialorder %v5814, 1.0
  %vm5823 = vcmp.gt.f32.partialorder %v5815, 1.0
  %vm5824 = vcmp.gt.f32.partialorder %v5816, 1.0
  %vm5825 = vcmp.gt.f32.partialorder %v5817, 1.0
  %vm5826 = vcmp.gt.f32.partialorder %v5818, 1.0
  %v5827 = vsel %vm5819, 1, 0
  %v5828 = vsel %vm5820, 1, 0
  %v5829 = vsel %vm5821, 1, 0
  %v5830 = vsel %vm5822, 1, 0
  %v5831 = vsel %vm5823, 1, 0
  %v5832 = vsel %vm5824, 1, 0
  %v5833 = vsel %vm5825, 1, 0
  %v5834 = vsel %vm5826, 1, 0
  %v5835 = vcvt.s32.f32 %v5827
  %v5836 = vcvt.s32.f32 %v5828
  %v5837 = vcvt.s32.f32 %v5829
  %v5838 = vcvt.s32.f32 %v5830
  %v5839 = vcvt.s32.f32 %v5831
  %v5840 = vcvt.s32.f32 %v5832
  %v5841 = vcvt.s32.f32 %v5833
  %v5842 = vcvt.s32.f32 %v5834
  %5843 = vst [vmem:[#allocation2 + $0x580] sm:$0xff] %v5835
  %5844 = vst [vmem:[#allocation2 + $0x588] sm:$0xff] %v5836
  %5845 = vst [vmem:[#allocation2 + $0x590] sm:$0xff] %v5837
  %5846 = vst [vmem:[#allocation2 + $0x598] sm:$0xff] %v5838
  %5847 = vst [vmem:[#allocation2 + $0x5a0] sm:$0xff] %v5839
  %5848 = vst [vmem:[#allocation2 + $0x5a8] sm:$0xff] %v5840
  %5849 = vst [vmem:[#allocation2 + $0x5b0] sm:$0xff] %v5841
  %5850 = vst [vmem:[#allocation2 + $0x5b8] sm:$0xff] %v5842
  %v5851 = vmul.f32 %v5811, 0.95
  %v5852 = vmul.f32 %v5812, 0.95
  %v5853 = vmul.f32 %v5813, 0.95
  %v5854 = vmul.f32 %v5814, 0.95
  %v5855 = vmul.f32 %v5815, 0.95
  %v5856 = vmul.f32 %v5816, 0.95
  %v5857 = vmul.f32 %v5817, 0.95
  %v5858 = vmul.f32 %v5818, 0.95
  %v5859 = vadd.f32 %v5851, %v2607
  %v5860 = vadd.f32 %v5852, %v2609
  %v5861 = vadd.f32 %v5853, %v2771
  %v5862 = vadd.f32 %v5854, %v2773
  %v5863 = vadd.f32 %v5855, %v2935
  %v5864 = vadd.f32 %v5856, %v2937
  %v5865 = vadd.f32 %v5857, %v3099
  %v5866 = vadd.f32 %v5858, %v3101
  %v5867 = vsel %vm5819, 1.0, 0.0
  %v5868 = vsel %vm5820, 1.0, 0.0
  %v5869 = vsel %vm5821, 1.0, 0.0
  %v5870 = vsel %vm5822, 1.0, 0.0
  %v5871 = vsel %vm5823, 1.0, 0.0
  %v5872 = vsel %vm5824, 1.0, 0.0
  %v5873 = vsel %vm5825, 1.0, 0.0
  %v5874 = vsel %vm5826, 1.0, 0.0
  %v5875 = vsub.f32 %v5859, %v5867
  %v5876 = vsub.f32 %v5860, %v5868
  %v5877 = vsub.f32 %v5861, %v5869
  %v5878 = vsub.f32 %v5862, %v5870
  %v5879 = vsub.f32 %v5863, %v5871
  %v5880 = vsub.f32 %v5864, %v5872
  %v5881 = vsub.f32 %v5865, %v5873
  %v5882 = vsub.f32 %v5866, %v5874
  %v5883 = vsub.f32 %v5875, -1.0
  %v5884 = vsub.f32 %v5876, -1.0
  %v5885 = vsub.f32 %v5877, -1.0
  %v5886 = vsub.f32 %v5878, -1.0
  %v5887 = vsub.f32 %v5879, -1.0
  %v5888 = vsub.f32 %v5880, -1.0
  %v5889 = vsub.f32 %v5881, -1.0
  %v5890 = vsub.f32 %v5882, -1.0
  %v5891 = vmul.f32 %v5883, 115.90909
  %v5892 = vmul.f32 %v5884, 115.90909
  %v5893 = vmul.f32 %v5885, 115.90909
  %v5894 = vmul.f32 %v5886, 115.90909
  %v5895 = vmul.f32 %v5887, 115.90909
  %v5896 = vmul.f32 %v5888, 115.90909
  %v5897 = vmul.f32 %v5889, 115.90909
  %v5898 = vmul.f32 %v5890, 115.90909
  %v5899 = vround.ne.pseudo %v5891
  %v5900 = vround.ne.pseudo %v5892
  %v5901 = vround.ne.pseudo %v5893
  %v5902 = vround.ne.pseudo %v5894
  %v5903 = vround.ne.pseudo %v5895
  %v5904 = vround.ne.pseudo %v5896
  %v5905 = vround.ne.pseudo %v5897
  %v5906 = vround.ne.pseudo %v5898
  %v5907 = vmax.f32 %v5899, 0.0
  %v5908 = vmax.f32 %v5900, 0.0
  %v5909 = vmax.f32 %v5901, 0.0
  %v5910 = vmax.f32 %v5902, 0.0
  %v5911 = vmax.f32 %v5903, 0.0
  %v5912 = vmax.f32 %v5904, 0.0
  %v5913 = vmax.f32 %v5905, 0.0
  %v5914 = vmax.f32 %v5906, 0.0
  %v5915 = vmin.f32 %v5907, 255.0
  %v5916 = vmin.f32 %v5908, 255.0
  %v5917 = vmin.f32 %v5909, 255.0
  %v5918 = vmin.f32 %v5910, 255.0
  %v5919 = vmin.f32 %v5911, 255.0
  %v5920 = vmin.f32 %v5912, 255.0
  %v5921 = vmin.f32 %v5913, 255.0
  %v5922 = vmin.f32 %v5914, 255.0
  %v5923 = vmul.f32 %v5915, 0.008627451
  %v5924 = vmul.f32 %v5916, 0.008627451
  %v5925 = vmul.f32 %v5917, 0.008627451
  %v5926 = vmul.f32 %v5918, 0.008627451
  %v5927 = vmul.f32 %v5919, 0.008627451
  %v5928 = vmul.f32 %v5920, 0.008627451
  %v5929 = vmul.f32 %v5921, 0.008627451
  %v5930 = vmul.f32 %v5922, 0.008627451
  %v5931 = vadd.f32 %v5923, -1.0
  %v5932 = vadd.f32 %v5924, -1.0
  %v5933 = vadd.f32 %v5925, -1.0
  %v5934 = vadd.f32 %v5926, -1.0
  %v5935 = vadd.f32 %v5927, -1.0
  %v5936 = vadd.f32 %v5928, -1.0
  %v5937 = vadd.f32 %v5929, -1.0
  %v5938 = vadd.f32 %v5930, -1.0
  %vm5939 = vcmp.gt.f32.partialorder %v5931, 1.0
  %vm5940 = vcmp.gt.f32.partialorder %v5932, 1.0
  %vm5941 = vcmp.gt.f32.partialorder %v5933, 1.0
  %vm5942 = vcmp.gt.f32.partialorder %v5934, 1.0
  %vm5943 = vcmp.gt.f32.partialorder %v5935, 1.0
  %vm5944 = vcmp.gt.f32.partialorder %v5936, 1.0
  %vm5945 = vcmp.gt.f32.partialorder %v5937, 1.0
  %vm5946 = vcmp.gt.f32.partialorder %v5938, 1.0
  %v5947 = vsel %vm5939, 1, 0
  %v5948 = vsel %vm5940, 1, 0
  %v5949 = vsel %vm5941, 1, 0
  %v5950 = vsel %vm5942, 1, 0
  %v5951 = vsel %vm5943, 1, 0
  %v5952 = vsel %vm5944, 1, 0
  %v5953 = vsel %vm5945, 1, 0
  %v5954 = vsel %vm5946, 1, 0
  %v5955 = vcvt.s32.f32 %v5947
  %v5956 = vcvt.s32.f32 %v5948
  %v5957 = vcvt.s32.f32 %v5949
  %v5958 = vcvt.s32.f32 %v5950
  %v5959 = vcvt.s32.f32 %v5951
  %v5960 = vcvt.s32.f32 %v5952
  %v5961 = vcvt.s32.f32 %v5953
  %v5962 = vcvt.s32.f32 %v5954
  %5963 = vst [vmem:[#allocation2 + $0x5c0] sm:$0xff] %v5955
  %5964 = vst [vmem:[#allocation2 + $0x5c8] sm:$0xff] %v5956
  %5965 = vst [vmem:[#allocation2 + $0x5d0] sm:$0xff] %v5957
  %5966 = vst [vmem:[#allocation2 + $0x5d8] sm:$0xff] %v5958
  %5967 = vst [vmem:[#allocation2 + $0x5e0] sm:$0xff] %v5959
  %5968 = vst [vmem:[#allocation2 + $0x5e8] sm:$0xff] %v5960
  %5969 = vst [vmem:[#allocation2 + $0x5f0] sm:$0xff] %v5961
  %5970 = vst [vmem:[#allocation2 + $0x5f8] sm:$0xff] %v5962
  %v5971 = vmul.f32 %v5931, 0.95
  %v5972 = vmul.f32 %v5932, 0.95
  %v5973 = vmul.f32 %v5933, 0.95
  %v5974 = vmul.f32 %v5934, 0.95
  %v5975 = vmul.f32 %v5935, 0.95
  %v5976 = vmul.f32 %v5936, 0.95
  %v5977 = vmul.f32 %v5937, 0.95
  %v5978 = vmul.f32 %v5938, 0.95
  %v5979 = vadd.f32 %v5971, %v2607
  %v5980 = vadd.f32 %v5972, %v2609
  %v5981 = vadd.f32 %v5973, %v2771
  %v5982 = vadd.f32 %v5974, %v2773
  %v5983 = vadd.f32 %v5975, %v2935
  %v5984 = vadd.f32 %v5976, %v2937
  %v5985 = vadd.f32 %v5977, %v3099
  %v5986 = vadd.f32 %v5978, %v3101
  %v5987 = vsel %vm5939, 1.0, 0.0
  %v5988 = vsel %vm5940, 1.0, 0.0
  %v5989 = vsel %vm5941, 1.0, 0.0
  %v5990 = vsel %vm5942, 1.0, 0.0
  %v5991 = vsel %vm5943, 1.0, 0.0
  %v5992 = vsel %vm5944, 1.0, 0.0
  %v5993 = vsel %vm5945, 1.0, 0.0
  %v5994 = vsel %vm5946, 1.0, 0.0
  %v5995 = vsub.f32 %v5979, %v5987
  %v5996 = vsub.f32 %v5980, %v5988
  %v5997 = vsub.f32 %v5981, %v5989
  %v5998 = vsub.f32 %v5982, %v5990
  %v5999 = vsub.f32 %v5983, %v5991
  %v6000 = vsub.f32 %v5984, %v5992
  %v6001 = vsub.f32 %v5985, %v5993
  %v6002 = vsub.f32 %v5986, %v5994
  %v6003 = vsub.f32 %v5995, -1.0
  %v6004 = vsub.f32 %v5996, -1.0
  %v6005 = vsub.f32 %v5997, -1.0
  %v6006 = vsub.f32 %v5998, -1.0
  %v6007 = vsub.f32 %v5999, -1.0
  %v6008 = vsub.f32 %v6000, -1.0
  %v6009 = vsub.f32 %v6001, -1.0
  %v6010 = vsub.f32 %v6002, -1.0
  %v6011 = vmul.f32 %v6003, 115.90909
  %v6012 = vmul.f32 %v6004, 115.90909
  %v6013 = vmul.f32 %v6005, 115.90909
  %v6014 = vmul.f32 %v6006, 115.90909
  %v6015 = vmul.f32 %v6007, 115.90909
  %v6016 = vmul.f32 %v6008, 115.90909
  %v6017 = vmul.f32 %v6009, 115.90909
  %v6018 = vmul.f32 %v6010, 115.90909
  %v6019 = vround.ne.pseudo %v6011
  %v6020 = vround.ne.pseudo %v6012
  %v6021 = vround.ne.pseudo %v6013
  %v6022 = vround.ne.pseudo %v6014
  %v6023 = vround.ne.pseudo %v6015
  %v6024 = vround.ne.pseudo %v6016
  %v6025 = vround.ne.pseudo %v6017
  %v6026 = vround.ne.pseudo %v6018
  %v6027 = vmax.f32 %v6019, 0.0
  %v6028 = vmax.f32 %v6020, 0.0
  %v6029 = vmax.f32 %v6021, 0.0
  %v6030 = vmax.f32 %v6022, 0.0
  %v6031 = vmax.f32 %v6023, 0.0
  %v6032 = vmax.f32 %v6024, 0.0
  %v6033 = vmax.f32 %v6025, 0.0
  %v6034 = vmax.f32 %v6026, 0.0
  %v6035 = vmin.f32 %v6027, 255.0
  %v6036 = vmin.f32 %v6028, 255.0
  %v6037 = vmin.f32 %v6029, 255.0
  %v6038 = vmin.f32 %v6030, 255.0
  %v6039 = vmin.f32 %v6031, 255.0
  %v6040 = vmin.f32 %v6032, 255.0
  %v6041 = vmin.f32 %v6033, 255.0
  %v6042 = vmin.f32 %v6034, 255.0
  %v6043 = vmul.f32 %v6035, 0.008627451
  %v6044 = vmul.f32 %v6036, 0.008627451
  %v6045 = vmul.f32 %v6037, 0.008627451
  %v6046 = vmul.f32 %v6038, 0.008627451
  %v6047 = vmul.f32 %v6039, 0.008627451
  %v6048 = vmul.f32 %v6040, 0.008627451
  %v6049 = vmul.f32 %v6041, 0.008627451
  %v6050 = vmul.f32 %v6042, 0.008627451
  %v6051 = vadd.f32 %v6043, -1.0
  %v6052 = vadd.f32 %v6044, -1.0
  %v6053 = vadd.f32 %v6045, -1.0
  %v6054 = vadd.f32 %v6046, -1.0
  %v6055 = vadd.f32 %v6047, -1.0
  %v6056 = vadd.f32 %v6048, -1.0
  %v6057 = vadd.f32 %v6049, -1.0
  %v6058 = vadd.f32 %v6050, -1.0
  %vm6059 = vcmp.gt.f32.partialorder %v6051, 1.0
  %vm6060 = vcmp.gt.f32.partialorder %v6052, 1.0
  %vm6061 = vcmp.gt.f32.partialorder %v6053, 1.0
  %vm6062 = vcmp.gt.f32.partialorder %v6054, 1.0
  %vm6063 = vcmp.gt.f32.partialorder %v6055, 1.0
  %vm6064 = vcmp.gt.f32.partialorder %v6056, 1.0
  %vm6065 = vcmp.gt.f32.partialorder %v6057, 1.0
  %vm6066 = vcmp.gt.f32.partialorder %v6058, 1.0
  %v6067 = vsel %vm6059, 1, 0
  %v6068 = vsel %vm6060, 1, 0
  %v6069 = vsel %vm6061, 1, 0
  %v6070 = vsel %vm6062, 1, 0
  %v6071 = vsel %vm6063, 1, 0
  %v6072 = vsel %vm6064, 1, 0
  %v6073 = vsel %vm6065, 1, 0
  %v6074 = vsel %vm6066, 1, 0
  %v6075 = vcvt.s32.f32 %v6067
  %v6076 = vcvt.s32.f32 %v6068
  %v6077 = vcvt.s32.f32 %v6069
  %v6078 = vcvt.s32.f32 %v6070
  %v6079 = vcvt.s32.f32 %v6071
  %v6080 = vcvt.s32.f32 %v6072
  %v6081 = vcvt.s32.f32 %v6073
  %v6082 = vcvt.s32.f32 %v6074
  %6083 = vst [vmem:[#allocation2 + $0x600] sm:$0xff] %v6075
  %6084 = vst [vmem:[#allocation2 + $0x608] sm:$0xff] %v6076
  %6085 = vst [vmem:[#allocation2 + $0x610] sm:$0xff] %v6077
  %6086 = vst [vmem:[#allocation2 + $0x618] sm:$0xff] %v6078
  %6087 = vst [vmem:[#allocation2 + $0x620] sm:$0xff] %v6079
  %6088 = vst [vmem:[#allocation2 + $0x628] sm:$0xff] %v6080
  %6089 = vst [vmem:[#allocation2 + $0x630] sm:$0xff] %v6081
  %6090 = vst [vmem:[#allocation2 + $0x638] sm:$0xff] %v6082
  %v6091 = vld [vmem:[#allocation2] sm:$0xff]
  %v6092 = vld [vmem:[#allocation2 + $0x8] sm:$0xff]
  %v6093 = vld [vmem:[#allocation2 + $0x10] sm:$0xff]
  %v6094 = vld [vmem:[#allocation2 + $0x18] sm:$0xff]
  %v6095 = vld [vmem:[#allocation2 + $0x20] sm:$0xff]
  %v6096 = vld [vmem:[#allocation2 + $0x28] sm:$0xff]
  %v6097 = vld [vmem:[#allocation2 + $0x30] sm:$0xff]
  %v6098 = vld [vmem:[#allocation2 + $0x38] sm:$0xff]
  %v6099 = vld [vmem:[#allocation2 + $0x40] sm:$0xff]
  %v6100 = vld [vmem:[#allocation2 + $0x48] sm:$0xff]
  %v6101 = vld [vmem:[#allocation2 + $0x50] sm:$0xff]
  %v6102 = vld [vmem:[#allocation2 + $0x58] sm:$0xff]
  %v6103 = vld [vmem:[#allocation2 + $0x60] sm:$0xff]
  %v6104 = vld [vmem:[#allocation2 + $0x68] sm:$0xff]
  %v6105 = vld [vmem:[#allocation2 + $0x70] sm:$0xff]
  %v6106 = vld [vmem:[#allocation2 + $0x78] sm:$0xff]
  %v6107 = vld [vmem:[#allocation2 + $0x80] sm:$0xff]
  %v6108 = vld [vmem:[#allocation2 + $0x88] sm:$0xff]
  %v6109 = vld [vmem:[#allocation2 + $0x90] sm:$0xff]
  %v6110 = vld [vmem:[#allocation2 + $0x98] sm:$0xff]
  %v6111 = vld [vmem:[#allocation2 + $0xa0] sm:$0xff]
  %v6112 = vld [vmem:[#allocation2 + $0xa8] sm:$0xff]
  %v6113 = vld [vmem:[#allocation2 + $0xb0] sm:$0xff]
  %v6114 = vld [vmem:[#allocation2 + $0xb8] sm:$0xff]
  %v6115 = vld [vmem:[#allocation2 + $0xc0] sm:$0xff]
  %v6116 = vld [vmem:[#allocation2 + $0xc8] sm:$0xff]
  %v6117 = vld [vmem:[#allocation2 + $0xd0] sm:$0xff]
  %v6118 = vld [vmem:[#allocation2 + $0xd8] sm:$0xff]
  %v6119 = vld [vmem:[#allocation2 + $0xe0] sm:$0xff]
  %v6120 = vld [vmem:[#allocation2 + $0xe8] sm:$0xff]
  %v6121 = vld [vmem:[#allocation2 + $0xf0] sm:$0xff]
  %v6122 = vld [vmem:[#allocation2 + $0xf8] sm:$0xff]
  %v6123 = vld [vmem:[#allocation2 + $0x100] sm:$0xff]
  %v6124 = vld [vmem:[#allocation2 + $0x108] sm:$0xff]
  %v6125 = vld [vmem:[#allocation2 + $0x110] sm:$0xff]
  %v6126 = vld [vmem:[#allocation2 + $0x118] sm:$0xff]
  %v6127 = vld [vmem:[#allocation2 + $0x120] sm:$0xff]
  %v6128 = vld [vmem:[#allocation2 + $0x128] sm:$0xff]
  %v6129 = vld [vmem:[#allocation2 + $0x130] sm:$0xff]
  %v6130 = vld [vmem:[#allocation2 + $0x138] sm:$0xff]
  %v6131 = vld [vmem:[#allocation2 + $0x140] sm:$0xff]
  %v6132 = vld [vmem:[#allocation2 + $0x148] sm:$0xff]
  %v6133 = vld [vmem:[#allocation2 + $0x150] sm:$0xff]
  %v6134 = vld [vmem:[#allocation2 + $0x158] sm:$0xff]
  %v6135 = vld [vmem:[#allocation2 + $0x160] sm:$0xff]
  %v6136 = vld [vmem:[#allocation2 + $0x168] sm:$0xff]
  %v6137 = vld [vmem:[#allocation2 + $0x170] sm:$0xff]
  %v6138 = vld [vmem:[#allocation2 + $0x178] sm:$0xff]
  %v6139 = vld [vmem:[#allocation2 + $0x180] sm:$0xff]
  %v6140 = vld [vmem:[#allocation2 + $0x188] sm:$0xff]
  %v6141 = vld [vmem:[#allocation2 + $0x190] sm:$0xff]
  %v6142 = vld [vmem:[#allocation2 + $0x198] sm:$0xff]
  %v6143 = vld [vmem:[#allocation2 + $0x1a0] sm:$0xff]
  %v6144 = vld [vmem:[#allocation2 + $0x1a8] sm:$0xff]
  %v6145 = vld [vmem:[#allocation2 + $0x1b0] sm:$0xff]
  %v6146 = vld [vmem:[#allocation2 + $0x1b8] sm:$0xff]
  %v6147 = vld [vmem:[#allocation2 + $0x1c0] sm:$0xff]
  %v6148 = vld [vmem:[#allocation2 + $0x1c8] sm:$0xff]
  %v6149 = vld [vmem:[#allocation2 + $0x1d0] sm:$0xff]
  %v6150 = vld [vmem:[#allocation2 + $0x1d8] sm:$0xff]
  %v6151 = vld [vmem:[#allocation2 + $0x1e0] sm:$0xff]
  %v6152 = vld [vmem:[#allocation2 + $0x1e8] sm:$0xff]
  %v6153 = vld [vmem:[#allocation2 + $0x1f0] sm:$0xff]
  %v6154 = vld [vmem:[#allocation2 + $0x1f8] sm:$0xff]
  %v6155 = vld [vmem:[#allocation2 + $0x200] sm:$0xff]
  %v6156 = vld [vmem:[#allocation2 + $0x208] sm:$0xff]
  %v6157 = vld [vmem:[#allocation2 + $0x210] sm:$0xff]
  %v6158 = vld [vmem:[#allocation2 + $0x218] sm:$0xff]
  %v6159 = vld [vmem:[#allocation2 + $0x220] sm:$0xff]
  %v6160 = vld [vmem:[#allocation2 + $0x228] sm:$0xff]
  %v6161 = vld [vmem:[#allocation2 + $0x230] sm:$0xff]
  %v6162 = vld [vmem:[#allocation2 + $0x238] sm:$0xff]
  %v6163 = vld [vmem:[#allocation2 + $0x240] sm:$0xff]
  %v6164 = vld [vmem:[#allocation2 + $0x248] sm:$0xff]
  %v6165 = vld [vmem:[#allocation2 + $0x250] sm:$0xff]
  %v6166 = vld [vmem:[#allocation2 + $0x258] sm:$0xff]
  %v6167 = vld [vmem:[#allocation2 + $0x260] sm:$0xff]
  %v6168 = vld [vmem:[#allocation2 + $0x268] sm:$0xff]
  %v6169 = vld [vmem:[#allocation2 + $0x270] sm:$0xff]
  %v6170 = vld [vmem:[#allocation2 + $0x278] sm:$0xff]
  %v6171 = vld [vmem:[#allocation2 + $0x280] sm:$0xff]
  %v6172 = vld [vmem:[#allocation2 + $0x288] sm:$0xff]
  %v6173 = vld [vmem:[#allocation2 + $0x290] sm:$0xff]
  %v6174 = vld [vmem:[#allocation2 + $0x298] sm:$0xff]
  %v6175 = vld [vmem:[#allocation2 + $0x2a0] sm:$0xff]
  %v6176 = vld [vmem:[#allocation2 + $0x2a8] sm:$0xff]
  %v6177 = vld [vmem:[#allocation2 + $0x2b0] sm:$0xff]
  %v6178 = vld [vmem:[#allocation2 + $0x2b8] sm:$0xff]
  %v6179 = vld [vmem:[#allocation2 + $0x2c0] sm:$0xff]
  %v6180 = vld [vmem:[#allocation2 + $0x2c8] sm:$0xff]
  %v6181 = vld [vmem:[#allocation2 + $0x2d0] sm:$0xff]
  %v6182 = vld [vmem:[#allocation2 + $0x2d8] sm:$0xff]
  %v6183 = vld [vmem:[#allocation2 + $0x2e0] sm:$0xff]
  %v6184 = vld [vmem:[#allocation2 + $0x2e8] sm:$0xff]
  %v6185 = vld [vmem:[#allocation2 + $0x2f0] sm:$0xff]
  %v6186 = vld [vmem:[#allocation2 + $0x2f8] sm:$0xff]
  %v6187 = vld [vmem:[#allocation2 + $0x300] sm:$0xff]
  %v6188 = vld [vmem:[#allocation2 + $0x308] sm:$0xff]
  %v6189 = vld [vmem:[#allocation2 + $0x310] sm:$0xff]
  %v6190 = vld [vmem:[#allocation2 + $0x318] sm:$0xff]
  %v6191 = vld [vmem:[#allocation2 + $0x320] sm:$0xff]
  %v6192 = vld [vmem:[#allocation2 + $0x328] sm:$0xff]
  %v6193 = vld [vmem:[#allocation2 + $0x330] sm:$0xff]
  %v6194 = vld [vmem:[#allocation2 + $0x338] sm:$0xff]
  %v6195 = vld [vmem:[#allocation2 + $0x340] sm:$0xff]
  %v6196 = vld [vmem:[#allocation2 + $0x348] sm:$0xff]
  %v6197 = vld [vmem:[#allocation2 + $0x350] sm:$0xff]
  %v6198 = vld [vmem:[#allocation2 + $0x358] sm:$0xff]
  %v6199 = vld [vmem:[#allocation2 + $0x360] sm:$0xff]
  %v6200 = vld [vmem:[#allocation2 + $0x368] sm:$0xff]
  %v6201 = vld [vmem:[#allocation2 + $0x370] sm:$0xff]
  %v6202 = vld [vmem:[#allocation2 + $0x378] sm:$0xff]
  %v6203 = vld [vmem:[#allocation2 + $0x380] sm:$0xff]
  %v6204 = vld [vmem:[#allocation2 + $0x388] sm:$0xff]
  %v6205 = vld [vmem:[#allocation2 + $0x390] sm:$0xff]
  %v6206 = vld [vmem:[#allocation2 + $0x398] sm:$0xff]
  %v6207 = vld [vmem:[#allocation2 + $0x3a0] sm:$0xff]
  %v6208 = vld [vmem:[#allocation2 + $0x3a8] sm:$0xff]
  %v6209 = vld [vmem:[#allocation2 + $0x3b0] sm:$0xff]
  %v6210 = vld [vmem:[#allocation2 + $0x3b8] sm:$0xff]
  %v6211 = vld [vmem:[#allocation2 + $0x3c0] sm:$0xff]
  %v6212 = vld [vmem:[#allocation2 + $0x3c8] sm:$0xff]
  %v6213 = vld [vmem:[#allocation2 + $0x3d0] sm:$0xff]
  %v6214 = vld [vmem:[#allocation2 + $0x3d8] sm:$0xff]
  %v6215 = vld [vmem:[#allocation2 + $0x3e0] sm:$0xff]
  %v6216 = vld [vmem:[#allocation2 + $0x3e8] sm:$0xff]
  %v6217 = vld [vmem:[#allocation2 + $0x3f0] sm:$0xff]
  %v6218 = vld [vmem:[#allocation2 + $0x3f8] sm:$0xff]
  %v6219 = vld [vmem:[#allocation2 + $0x400] sm:$0xff]
  %v6220 = vld [vmem:[#allocation2 + $0x408] sm:$0xff]
  %v6221 = vld [vmem:[#allocation2 + $0x410] sm:$0xff]
  %v6222 = vld [vmem:[#allocation2 + $0x418] sm:$0xff]
  %v6223 = vld [vmem:[#allocation2 + $0x420] sm:$0xff]
  %v6224 = vld [vmem:[#allocation2 + $0x428] sm:$0xff]
  %v6225 = vld [vmem:[#allocation2 + $0x430] sm:$0xff]
  %v6226 = vld [vmem:[#allocation2 + $0x438] sm:$0xff]
  %v6227 = vld [vmem:[#allocation2 + $0x440] sm:$0xff]
  %v6228 = vld [vmem:[#allocation2 + $0x448] sm:$0xff]
  %v6229 = vld [vmem:[#allocation2 + $0x450] sm:$0xff]
  %v6230 = vld [vmem:[#allocation2 + $0x458] sm:$0xff]
  %v6231 = vld [vmem:[#allocation2 + $0x460] sm:$0xff]
  %v6232 = vld [vmem:[#allocation2 + $0x468] sm:$0xff]
  %v6233 = vld [vmem:[#allocation2 + $0x470] sm:$0xff]
  %v6234 = vld [vmem:[#allocation2 + $0x478] sm:$0xff]
  %v6235 = vld [vmem:[#allocation2 + $0x480] sm:$0xff]
  %v6236 = vld [vmem:[#allocation2 + $0x488] sm:$0xff]
  %v6237 = vld [vmem:[#allocation2 + $0x490] sm:$0xff]
  %v6238 = vld [vmem:[#allocation2 + $0x498] sm:$0xff]
  %v6239 = vld [vmem:[#allocation2 + $0x4a0] sm:$0xff]
  %v6240 = vld [vmem:[#allocation2 + $0x4a8] sm:$0xff]
  %v6241 = vld [vmem:[#allocation2 + $0x4b0] sm:$0xff]
  %v6242 = vld [vmem:[#allocation2 + $0x4b8] sm:$0xff]
  %v6243 = vld [vmem:[#allocation2 + $0x4c0] sm:$0xff]
  %v6244 = vld [vmem:[#allocation2 + $0x4c8] sm:$0xff]
  %v6245 = vld [vmem:[#allocation2 + $0x4d0] sm:$0xff]
  %v6246 = vld [vmem:[#allocation2 + $0x4d8] sm:$0xff]
  %v6247 = vld [vmem:[#allocation2 + $0x4e0] sm:$0xff]
  %v6248 = vld [vmem:[#allocation2 + $0x4e8] sm:$0xff]
  %v6249 = vld [vmem:[#allocation2 + $0x4f0] sm:$0xff]
  %v6250 = vld [vmem:[#allocation2 + $0x4f8] sm:$0xff]
  %v6251 = vld [vmem:[#allocation2 + $0x500] sm:$0xff]
  %v6252 = vld [vmem:[#allocation2 + $0x508] sm:$0xff]
  %v6253 = vld [vmem:[#allocation2 + $0x510] sm:$0xff]
  %v6254 = vld [vmem:[#allocation2 + $0x518] sm:$0xff]
  %v6255 = vld [vmem:[#allocation2 + $0x520] sm:$0xff]
  %v6256 = vld [vmem:[#allocation2 + $0x528] sm:$0xff]
  %v6257 = vld [vmem:[#allocation2 + $0x530] sm:$0xff]
  %v6258 = vld [vmem:[#allocation2 + $0x538] sm:$0xff]
  %v6259 = vld [vmem:[#allocation2 + $0x540] sm:$0xff]
  %v6260 = vld [vmem:[#allocation2 + $0x548] sm:$0xff]
  %v6261 = vld [vmem:[#allocation2 + $0x550] sm:$0xff]
  %v6262 = vld [vmem:[#allocation2 + $0x558] sm:$0xff]
  %v6263 = vld [vmem:[#allocation2 + $0x560] sm:$0xff]
  %v6264 = vld [vmem:[#allocation2 + $0x568] sm:$0xff]
  %v6265 = vld [vmem:[#allocation2 + $0x570] sm:$0xff]
  %v6266 = vld [vmem:[#allocation2 + $0x578] sm:$0xff]
  %v6267 = vld [vmem:[#allocation2 + $0x580] sm:$0xff]
  %v6268 = vld [vmem:[#allocation2 + $0x588] sm:$0xff]
  %v6269 = vld [vmem:[#allocation2 + $0x590] sm:$0xff]
  %v6270 = vld [vmem:[#allocation2 + $0x598] sm:$0xff]
  %v6271 = vld [vmem:[#allocation2 + $0x5a0] sm:$0xff]
  %v6272 = vld [vmem:[#allocation2 + $0x5a8] sm:$0xff]
  %v6273 = vld [vmem:[#allocation2 + $0x5b0] sm:$0xff]
  %v6274 = vld [vmem:[#allocation2 + $0x5b8] sm:$0xff]
  %v6275 = vld [vmem:[#allocation2 + $0x5c0] sm:$0xff]
  %v6276 = vld [vmem:[#allocation2 + $0x5c8] sm:$0xff]
  %v6277 = vld [vmem:[#allocation2 + $0x5d0] sm:$0xff]
  %v6278 = vld [vmem:[#allocation2 + $0x5d8] sm:$0xff]
  %v6279 = vld [vmem:[#allocation2 + $0x5e0] sm:$0xff]
  %v6280 = vld [vmem:[#allocation2 + $0x5e8] sm:$0xff]
  %v6281 = vld [vmem:[#allocation2 + $0x5f0] sm:$0xff]
  %v6282 = vld [vmem:[#allocation2 + $0x5f8] sm:$0xff]
  %v6283 = vld [vmem:[#allocation2 + $0x600] sm:$0xff]
  %v6284 = vld [vmem:[#allocation2 + $0x608] sm:$0xff]
  %v6285 = vld [vmem:[#allocation2 + $0x610] sm:$0xff]
  %v6286 = vld [vmem:[#allocation2 + $0x618] sm:$0xff]
  %v6287 = vld [vmem:[#allocation2 + $0x620] sm:$0xff]
  %v6288 = vld [vmem:[#allocation2 + $0x628] sm:$0xff]
  %v6289 = vld [vmem:[#allocation2 + $0x630] sm:$0xff]
  %v6290 = vld [vmem:[#allocation2 + $0x638] sm:$0xff]
  %v6291 = vpack.c.bf16 %v6099, %v6091
  %v6292 = vpack.c.bf16 %v6100, %v6092
  %v6293 = vpack.c.bf16 %v6101, %v6093
  %v6294 = vpack.c.bf16 %v6102, %v6094
  %v6295 = vpack.c.bf16 %v6103, %v6095
  %v6296 = vpack.c.bf16 %v6104, %v6096
  %v6297 = vpack.c.bf16 %v6105, %v6097
  %v6298 = vpack.c.bf16 %v6106, %v6098
  %v6299 = vpack.c.bf16 %v6115, %v6107
  %v6300 = vpack.c.bf16 %v6116, %v6108
  %v6301 = vpack.c.bf16 %v6117, %v6109
  %v6302 = vpack.c.bf16 %v6118, %v6110
  %v6303 = vpack.c.bf16 %v6119, %v6111
  %v6304 = vpack.c.bf16 %v6120, %v6112
  %v6305 = vpack.c.bf16 %v6121, %v6113
  %v6306 = vpack.c.bf16 %v6122, %v6114
  %v6307 = vpack.c.bf16 %v6131, %v6123
  %v6308 = vpack.c.bf16 %v6132, %v6124
  %v6309 = vpack.c.bf16 %v6133, %v6125
  %v6310 = vpack.c.bf16 %v6134, %v6126
  %v6311 = vpack.c.bf16 %v6135, %v6127
  %v6312 = vpack.c.bf16 %v6136, %v6128
  %v6313 = vpack.c.bf16 %v6137, %v6129
  %v6314 = vpack.c.bf16 %v6138, %v6130
  %v6315 = vpack.c.bf16 %v6147, %v6139
  %v6316 = vpack.c.bf16 %v6148, %v6140
  %v6317 = vpack.c.bf16 %v6149, %v6141
  %v6318 = vpack.c.bf16 %v6150, %v6142
  %v6319 = vpack.c.bf16 %v6151, %v6143
  %v6320 = vpack.c.bf16 %v6152, %v6144
  %v6321 = vpack.c.bf16 %v6153, %v6145
  %v6322 = vpack.c.bf16 %v6154, %v6146
  %v6323 = vpack.c.bf16 %v6163, %v6155
  %v6324 = vpack.c.bf16 %v6164, %v6156
  %v6325 = vpack.c.bf16 %v6165, %v6157
  %v6326 = vpack.c.bf16 %v6166, %v6158
  %v6327 = vpack.c.bf16 %v6167, %v6159
  %v6328 = vpack.c.bf16 %v6168, %v6160
  %v6329 = vpack.c.bf16 %v6169, %v6161
  %v6330 = vpack.c.bf16 %v6170, %v6162
  %v6331 = vpack.c.bf16 %v6179, %v6171
  %v6332 = vpack.c.bf16 %v6180, %v6172
  %v6333 = vpack.c.bf16 %v6181, %v6173
  %v6334 = vpack.c.bf16 %v6182, %v6174
  %v6335 = vpack.c.bf16 %v6183, %v6175
  %v6336 = vpack.c.bf16 %v6184, %v6176
  %v6337 = vpack.c.bf16 %v6185, %v6177
  %v6338 = vpack.c.bf16 %v6186, %v6178
  %v6339 = vpack.c.bf16 %v6195, %v6187
  %v6340 = vpack.c.bf16 %v6196, %v6188
  %v6341 = vpack.c.bf16 %v6197, %v6189
  %v6342 = vpack.c.bf16 %v6198, %v6190
  %v6343 = vpack.c.bf16 %v6199, %v6191
  %v6344 = vpack.c.bf16 %v6200, %v6192
  %v6345 = vpack.c.bf16 %v6201, %v6193
  %v6346 = vpack.c.bf16 %v6202, %v6194
  %v6347 = vpack.c.bf16 %v6211, %v6203
  %v6348 = vpack.c.bf16 %v6212, %v6204
  %v6349 = vpack.c.bf16 %v6213, %v6205
  %v6350 = vpack.c.bf16 %v6214, %v6206
  %v6351 = vpack.c.bf16 %v6215, %v6207
  %v6352 = vpack.c.bf16 %v6216, %v6208
  %v6353 = vpack.c.bf16 %v6217, %v6209
  %v6354 = vpack.c.bf16 %v6218, %v6210
  %v6355 = vpack.c.bf16 %v6227, %v6219
  %v6356 = vpack.c.bf16 %v6228, %v6220
  %v6357 = vpack.c.bf16 %v6229, %v6221
  %v6358 = vpack.c.bf16 %v6230, %v6222
  %v6359 = vpack.c.bf16 %v6231, %v6223
  %v6360 = vpack.c.bf16 %v6232, %v6224
  %v6361 = vpack.c.bf16 %v6233, %v6225
  %v6362 = vpack.c.bf16 %v6234, %v6226
  %v6363 = vpack.c.bf16 %v6243, %v6235
  %v6364 = vpack.c.bf16 %v6244, %v6236
  %v6365 = vpack.c.bf16 %v6245, %v6237
  %v6366 = vpack.c.bf16 %v6246, %v6238
  %v6367 = vpack.c.bf16 %v6247, %v6239
  %v6368 = vpack.c.bf16 %v6248, %v6240
  %v6369 = vpack.c.bf16 %v6249, %v6241
  %v6370 = vpack.c.bf16 %v6250, %v6242
  %v6371 = vpack.c.bf16 %v6259, %v6251
  %v6372 = vpack.c.bf16 %v6260, %v6252
  %v6373 = vpack.c.bf16 %v6261, %v6253
  %v6374 = vpack.c.bf16 %v6262, %v6254
  %v6375 = vpack.c.bf16 %v6263, %v6255
  %v6376 = vpack.c.bf16 %v6264, %v6256
  %v6377 = vpack.c.bf16 %v6265, %v6257
  %v6378 = vpack.c.bf16 %v6266, %v6258
  %v6379 = vpack.c.bf16 %v6275, %v6267
  %v6380 = vpack.c.bf16 %v6276, %v6268
  %v6381 = vpack.c.bf16 %v6277, %v6269
  %v6382 = vpack.c.bf16 %v6278, %v6270
  %v6383 = vpack.c.bf16 %v6279, %v6271
  %v6384 = vpack.c.bf16 %v6280, %v6272
  %v6385 = vpack.c.bf16 %v6281, %v6273
  %v6386 = vpack.c.bf16 %v6282, %v6274
  %v6387 = vpack.c.bf16 %v6283, %v6283
  %v6388 = vpack.c.bf16 %v6284, %v6284
  %v6389 = vpack.c.bf16 %v6285, %v6285
  %v6390 = vpack.c.bf16 %v6286, %v6286
  %v6391 = vpack.c.bf16 %v6287, %v6287
  %v6392 = vpack.c.bf16 %v6288, %v6288
  %v6393 = vpack.c.bf16 %v6289, %v6289
  %v6394 = vpack.c.bf16 %v6290, %v6290
  %v6395 = vld [vmem:[%s3] sm:$0xf]
  %v6396 = vld [vmem:[%s3 + $0x4] sm:$0xf]
  %v6397 = vld [vmem:[%s3 + $0x8] sm:$0xf]
  %v6398 = vld [vmem:[%s3 + $0xc] sm:$0xf]
  %v6399 = vld [vmem:[%s3 + $0x10] sm:$0xf]
  %v6400 = vld [vmem:[%s3 + $0x14] sm:$0xf]
  %v6401 = vld [vmem:[%s3 + $0x18] sm:$0xf]
  %v6402 = vld [vmem:[%s3 + $0x1c] sm:$0xf]
  %v6403 = vld [vmem:[%s3 + $0x20] sm:$0xf]
  %v6404 = vld [vmem:[%s3 + $0x24] sm:$0xf]
  %v6405 = vld [vmem:[%s3 + $0x28] sm:$0xf]
  %v6406 = vld [vmem:[%s3 + $0x2c] sm:$0xf]
  %v6407 = vld [vmem:[%s3 + $0x30] sm:$0xf]
  %v6408 = vld [vmem:[%s3 + $0x34] sm:$0xf]
  %v6409 = vld [vmem:[%s3 + $0x38] sm:$0xf]
  %v6410 = vld [vmem:[%s3 + $0x3c] sm:$0xf]
  %v6411 = vld [vmem:[%s3 + $0x40] sm:$0xf]
  %v6412 = vld [vmem:[%s3 + $0x44] sm:$0xf]
  %v6413 = vld [vmem:[%s3 + $0x48] sm:$0xf]
  %v6414 = vld [vmem:[%s3 + $0x4c] sm:$0xf]
  %v6415 = vld [vmem:[%s3 + $0x50] sm:$0xf]
  %v6416 = vld [vmem:[%s3 + $0x54] sm:$0xf]
  %v6417 = vld [vmem:[%s3 + $0x58] sm:$0xf]
  %v6418 = vld [vmem:[%s3 + $0x5c] sm:$0xf]
  %v6419 = vld [vmem:[%s3 + $0x60] sm:$0xf]
  %v6420 = vld [vmem:[%s3 + $0x64] sm:$0xf]
  %v6421 = vld [vmem:[%s3 + $0x68] sm:$0xf]
  %v6422 = vld [vmem:[%s3 + $0x6c] sm:$0xf]
  %v6423 = vld [vmem:[%s3 + $0x70] sm:$0xf]
  %v6424 = vld [vmem:[%s3 + $0x74] sm:$0xf]
  %v6425 = vld [vmem:[%s3 + $0x78] sm:$0xf]
  %v6426 = vld [vmem:[%s3 + $0x7c] sm:$0xf]
  %v6427 = vld [vmem:[%s3 + $0x80] sm:$0xf]
  %v6428 = vld [vmem:[%s3 + $0x84] sm:$0xf]
  %v6429 = vld [vmem:[%s3 + $0x88] sm:$0xf]
  %v6430 = vld [vmem:[%s3 + $0x8c] sm:$0xf]
  %v6431 = vld [vmem:[%s3 + $0x90] sm:$0xf]
  %v6432 = vld [vmem:[%s3 + $0x94] sm:$0xf]
  %v6433 = vld [vmem:[%s3 + $0x98] sm:$0xf]
  %v6434 = vld [vmem:[%s3 + $0x9c] sm:$0xf]
  %v6435 = vld [vmem:[%s3 + $0xa0] sm:$0xf]
  %v6436 = vld [vmem:[%s3 + $0xa4] sm:$0xf]
  %v6437 = vld [vmem:[%s3 + $0xa8] sm:$0xf]
  %v6438 = vld [vmem:[%s3 + $0xac] sm:$0xf]
  %v6439 = vld [vmem:[%s3 + $0xb0] sm:$0xf]
  %v6440 = vld [vmem:[%s3 + $0xb4] sm:$0xf]
  %v6441 = vld [vmem:[%s3 + $0xb8] sm:$0xf]
  %v6442 = vld [vmem:[%s3 + $0xbc] sm:$0xf]
  %v6443 = vld [vmem:[%s3 + $0xc0] sm:$0xf]
  %v6444 = vld [vmem:[%s3 + $0xc4] sm:$0xf]
  %v6445 = vld [vmem:[%s3 + $0xc8] sm:$0xf]
  %v6446 = vld [vmem:[%s3 + $0xcc] sm:$0xf]
  %v6447 = vld [vmem:[%s3 + $0xd0] sm:$0xf]
  %v6448 = vld [vmem:[%s3 + $0xd4] sm:$0xf]
  %v6449 = vld [vmem:[%s3 + $0xd8] sm:$0xf]
  %v6450 = vld [vmem:[%s3 + $0xdc] sm:$0xf]
  %v6451 = vld [vmem:[%s3 + $0xe0] sm:$0xf]
  %v6452 = vld [vmem:[%s3 + $0xe4] sm:$0xf]
  %v6453 = vld [vmem:[%s3 + $0xe8] sm:$0xf]
  %v6454 = vld [vmem:[%s3 + $0xec] sm:$0xf]
  %v6455 = vld [vmem:[%s3 + $0xf0] sm:$0xf]
  %v6456 = vld [vmem:[%s3 + $0xf4] sm:$0xf]
  %v6457 = vld [vmem:[%s3 + $0xf8] sm:$0xf]
  %v6458 = vld [vmem:[%s3 + $0xfc] sm:$0xf]
  %v6459 = vld [vmem:[%s3 + $0x100] sm:$0xf]
  %v6460 = vld [vmem:[%s3 + $0x104] sm:$0xf]
  %v6461 = vld [vmem:[%s3 + $0x108] sm:$0xf]
  %v6462 = vld [vmem:[%s3 + $0x10c] sm:$0xf]
  %v6463 = vld [vmem:[%s3 + $0x110] sm:$0xf]
  %v6464 = vld [vmem:[%s3 + $0x114] sm:$0xf]
  %v6465 = vld [vmem:[%s3 + $0x118] sm:$0xf]
  %v6466 = vld [vmem:[%s3 + $0x11c] sm:$0xf]
  %v6467 = vld [vmem:[%s3 + $0x120] sm:$0xf]
  %v6468 = vld [vmem:[%s3 + $0x124] sm:$0xf]
  %v6469 = vld [vmem:[%s3 + $0x128] sm:$0xf]
  %v6470 = vld [vmem:[%s3 + $0x12c] sm:$0xf]
  %v6471 = vld [vmem:[%s3 + $0x130] sm:$0xf]
  %v6472 = vld [vmem:[%s3 + $0x134] sm:$0xf]
  %v6473 = vld [vmem:[%s3 + $0x138] sm:$0xf]
  %v6474 = vld [vmem:[%s3 + $0x13c] sm:$0xf]
  %v6475 = vld [vmem:[%s3 + $0x140] sm:$0xf]
  %v6476 = vld [vmem:[%s3 + $0x144] sm:$0xf]
  %v6477 = vld [vmem:[%s3 + $0x148] sm:$0xf]
  %v6478 = vld [vmem:[%s3 + $0x14c] sm:$0xf]
  %v6479 = vld [vmem:[%s3 + $0x150] sm:$0xf]
  %v6480 = vld [vmem:[%s3 + $0x154] sm:$0xf]
  %v6481 = vld [vmem:[%s3 + $0x158] sm:$0xf]
  %v6482 = vld [vmem:[%s3 + $0x15c] sm:$0xf]
  %v6483 = vld [vmem:[%s3 + $0x160] sm:$0xf]
  %v6484 = vld [vmem:[%s3 + $0x164] sm:$0xf]
  %v6485 = vld [vmem:[%s3 + $0x168] sm:$0xf]
  %v6486 = vld [vmem:[%s3 + $0x16c] sm:$0xf]
  %v6487 = vld [vmem:[%s3 + $0x170] sm:$0xf]
  %v6488 = vld [vmem:[%s3 + $0x174] sm:$0xf]
  %v6489 = vld [vmem:[%s3 + $0x178] sm:$0xf]
  %v6490 = vld [vmem:[%s3 + $0x17c] sm:$0xf]
  %v6491 = vld [vmem:[%s3 + $0x180] sm:$0xf]
  %v6492 = vld [vmem:[%s3 + $0x184] sm:$0xf]
  %v6493 = vld [vmem:[%s3 + $0x188] sm:$0xf]
  %v6494 = vld [vmem:[%s3 + $0x18c] sm:$0xf]
  %v6495 = vld [vmem:[%s3 + $0x190] sm:$0xf]
  %v6496 = vld [vmem:[%s3 + $0x194] sm:$0xf]
  %v6497 = vld [vmem:[%s3 + $0x198] sm:$0xf]
  %v6498 = vld [vmem:[%s3 + $0x19c] sm:$0xf]
  %v6499 = vld [vmem:[%s3 + $0x1a0] sm:$0xf]
  %v6500 = vld [vmem:[%s3 + $0x1a4] sm:$0xf]
  %v6501 = vld [vmem:[%s3 + $0x1a8] sm:$0xf]
  %v6502 = vld [vmem:[%s3 + $0x1ac] sm:$0xf]
  %v6503 = vld [vmem:[%s3 + $0x1b0] sm:$0xf]
  %v6504 = vld [vmem:[%s3 + $0x1b4] sm:$0xf]
  %v6505 = vld [vmem:[%s3 + $0x1b8] sm:$0xf]
  %v6506 = vld [vmem:[%s3 + $0x1bc] sm:$0xf]
  %v6507 = vld [vmem:[%s3 + $0x1c0] sm:$0xf]
  %v6508 = vld [vmem:[%s3 + $0x1c4] sm:$0xf]
  %v6509 = vld [vmem:[%s3 + $0x1c8] sm:$0xf]
  %v6510 = vld [vmem:[%s3 + $0x1cc] sm:$0xf]
  %v6511 = vld [vmem:[%s3 + $0x1d0] sm:$0xf]
  %v6512 = vld [vmem:[%s3 + $0x1d4] sm:$0xf]
  %v6513 = vld [vmem:[%s3 + $0x1d8] sm:$0xf]
  %v6514 = vld [vmem:[%s3 + $0x1dc] sm:$0xf]
  %v6515 = vld [vmem:[%s3 + $0x1e0] sm:$0xf]
  %v6516 = vld [vmem:[%s3 + $0x1e4] sm:$0xf]
  %v6517 = vld [vmem:[%s3 + $0x1e8] sm:$0xf]
  %v6518 = vld [vmem:[%s3 + $0x1ec] sm:$0xf]
  %v6519 = vld [vmem:[%s3 + $0x1f0] sm:$0xf]
  %v6520 = vld [vmem:[%s3 + $0x1f4] sm:$0xf]
  %v6521 = vld [vmem:[%s3 + $0x1f8] sm:$0xf]
  %v6522 = vld [vmem:[%s3 + $0x1fc] sm:$0xf]
  %v6523 = vld [vmem:[%s4] sm:$0x1]
  %v6525 = vlaneseq
  %v6526 = vshrl.u32 %v6525, 7
  %v6527 = vsub.s32 0, %v6526
  %v6528 = vrot.slane %v6523, %v6527
  %v6658 = vunpack.c.l.b16 %v6395
  %v6659 = vunpack.c.l.b16 %v6396
  %v6660 = vunpack.c.l.b16 %v6397
  %v6661 = vunpack.c.l.b16 %v6398
  %v6662 = vunpack.c.l.b16 %v6399
  %v6663 = vunpack.c.l.b16 %v6400
  %v6664 = vunpack.c.l.b16 %v6401
  %v6665 = vunpack.c.l.b16 %v6402
  %v6666 = vunpack.c.l.b16 %v6403
  %v6667 = vunpack.c.l.b16 %v6404
  %v6668 = vunpack.c.l.b16 %v6405
  %v6669 = vunpack.c.l.b16 %v6406
  %v6670 = vunpack.c.l.b16 %v6407
  %v6671 = vunpack.c.l.b16 %v6408
  %v6672 = vunpack.c.l.b16 %v6409
  %v6673 = vunpack.c.l.b16 %v6410
  %v6674 = vunpack.c.l.b16 %v6411
  %v6675 = vunpack.c.l.b16 %v6412
  %v6676 = vunpack.c.l.b16 %v6413
  %v6677 = vunpack.c.l.b16 %v6414
  %v6678 = vunpack.c.l.b16 %v6415
  %v6679 = vunpack.c.l.b16 %v6416
  %v6680 = vunpack.c.l.b16 %v6417
  %v6681 = vunpack.c.l.b16 %v6418
  %v6682 = vunpack.c.l.b16 %v6419
  %v6683 = vunpack.c.l.b16 %v6420
  %v6684 = vunpack.c.l.b16 %v6421
  %v6685 = vunpack.c.l.b16 %v6422
  %v6686 = vunpack.c.l.b16 %v6423
  %v6687 = vunpack.c.l.b16 %v6424
  %v6688 = vunpack.c.l.b16 %v6425
  %v6689 = vunpack.c.l.b16 %v6426
  %v6690 = vunpack.c.l.b16 %v6427
  %v6691 = vunpack.c.l.b16 %v6428
  %v6692 = vunpack.c.l.b16 %v6429
  %v6693 = vunpack.c.l.b16 %v6430
  %v6694 = vunpack.c.l.b16 %v6431
  %v6695 = vunpack.c.l.b16 %v6432
  %v6696 = vunpack.c.l.b16 %v6433
  %v6697 = vunpack.c.l.b16 %v6434
  %v6698 = vunpack.c.l.b16 %v6435
  %v6699 = vunpack.c.l.b16 %v6436
  %v6700 = vunpack.c.l.b16 %v6437
  %v6701 = vunpack.c.l.b16 %v6438
  %v6702 = vunpack.c.l.b16 %v6439
  %v6703 = vunpack.c.l.b16 %v6440
  %v6704 = vunpack.c.l.b16 %v6441
  %v6705 = vunpack.c.l.b16 %v6442
  %v6706 = vunpack.c.l.b16 %v6443
  %v6707 = vunpack.c.l.b16 %v6444
  %v6708 = vunpack.c.l.b16 %v6445
  %v6709 = vunpack.c.l.b16 %v6446
  %v6710 = vunpack.c.l.b16 %v6447
  %v6711 = vunpack.c.l.b16 %v6448
  %v6712 = vunpack.c.l.b16 %v6449
  %v6713 = vunpack.c.l.b16 %v6450
  %v6714 = vunpack.c.l.b16 %v6451
  %v6715 = vunpack.c.l.b16 %v6452
  %v6716 = vunpack.c.l.b16 %v6453
  %v6717 = vunpack.c.l.b16 %v6454
  %v6718 = vunpack.c.l.b16 %v6455
  %v6719 = vunpack.c.l.b16 %v6456
  %v6720 = vunpack.c.l.b16 %v6457
  %v6721 = vunpack.c.l.b16 %v6458
  %v6722 = vunpack.c.l.b16 %v6459
  %v6723 = vunpack.c.l.b16 %v6460
  %v6724 = vunpack.c.l.b16 %v6461
  %v6725 = vunpack.c.l.b16 %v6462
  %v6726 = vunpack.c.l.b16 %v6463
  %v6727 = vunpack.c.l.b16 %v6464
  %v6728 = vunpack.c.l.b16 %v6465
  %v6729 = vunpack.c.l.b16 %v6466
  %v6730 = vunpack.c.l.b16 %v6467
  %v6731 = vunpack.c.l.b16 %v6468
  %v6732 = vunpack.c.l.b16 %v6469
  %v6733 = vunpack.c.l.b16 %v6470
  %v6734 = vunpack.c.l.b16 %v6471
  %v6735 = vunpack.c.l.b16 %v6472
  %v6736 = vunpack.c.l.b16 %v6473
  %v6737 = vunpack.c.l.b16 %v6474
  %v6738 = vunpack.c.l.b16 %v6475
  %v6739 = vunpack.c.l.b16 %v6476
  %v6740 = vunpack.c.l.b16 %v6477
  %v6741 = vunpack.c.l.b16 %v6478
  %v6742 = vunpack.c.l.b16 %v6479
  %v6743 = vunpack.c.l.b16 %v6480
  %v6744 = vunpack.c.l.b16 %v6481
  %v6745 = vunpack.c.l.b16 %v6482
  %v6746 = vunpack.c.l.b16 %v6483
  %v6747 = vunpack.c.l.b16 %v6484
  %v6748 = vunpack.c.l.b16 %v6485
  %v6749 = vunpack.c.l.b16 %v6486
  %v6750 = vunpack.c.l.b16 %v6487
  %v6751 = vunpack.c.l.b16 %v6488
  %v6752 = vunpack.c.l.b16 %v6489
  %v6753 = vunpack.c.l.b16 %v6490
  %v6754 = vunpack.c.l.b16 %v6491
  %v6755 = vunpack.c.l.b16 %v6492
  %v6756 = vunpack.c.l.b16 %v6493
  %v6757 = vunpack.c.l.b16 %v6494
  %v6758 = vunpack.c.l.b16 %v6495
  %v6759 = vunpack.c.l.b16 %v6496
  %v6760 = vunpack.c.l.b16 %v6497
  %v6761 = vunpack.c.l.b16 %v6498
  %v6762 = vunpack.c.l.b16 %v6499
  %v6763 = vunpack.c.l.b16 %v6500
  %v6764 = vunpack.c.l.b16 %v6501
  %v6765 = vunpack.c.l.b16 %v6502
  %v6766 = vunpack.c.l.b16 %v6503
  %v6767 = vunpack.c.l.b16 %v6504
  %v6768 = vunpack.c.l.b16 %v6505
  %v6769 = vunpack.c.l.b16 %v6506
  %v6770 = vunpack.c.l.b16 %v6507
  %v6771 = vunpack.c.l.b16 %v6508
  %v6772 = vunpack.c.l.b16 %v6509
  %v6773 = vunpack.c.l.b16 %v6510
  %v6774 = vunpack.c.l.b16 %v6511
  %v6775 = vunpack.c.l.b16 %v6512
  %v6776 = vunpack.c.l.b16 %v6513
  %v6777 = vunpack.c.l.b16 %v6514
  %v6778 = vunpack.c.l.b16 %v6515
  %v6779 = vunpack.c.l.b16 %v6516
  %v6780 = vunpack.c.l.b16 %v6517
  %v6781 = vunpack.c.l.b16 %v6518
  %v6782 = vunpack.c.l.b16 %v6519
  %v6783 = vunpack.c.l.b16 %v6520
  %v6784 = vunpack.c.l.b16 %v6521
  %v6785 = vunpack.c.l.b16 %v6522
  %v6786 = vpack.c.b16 %v6659, %v6658
  %v6787 = vpack.c.b16 %v6661, %v6660
  %v6788 = vpack.c.b16 %v6663, %v6662
  %v6789 = vpack.c.b16 %v6665, %v6664
  %v6790 = vpack.c.b16 %v6667, %v6666
  %v6791 = vpack.c.b16 %v6669, %v6668
  %v6792 = vpack.c.b16 %v6671, %v6670
  %v6793 = vpack.c.b16 %v6673, %v6672
  %v6794 = vpack.c.b16 %v6675, %v6674
  %v6795 = vpack.c.b16 %v6677, %v6676
  %v6796 = vpack.c.b16 %v6679, %v6678
  %v6797 = vpack.c.b16 %v6681, %v6680
  %v6798 = vpack.c.b16 %v6683, %v6682
  %v6799 = vpack.c.b16 %v6685, %v6684
  %v6800 = vpack.c.b16 %v6687, %v6686
  %v6801 = vpack.c.b16 %v6689, %v6688
  %v6802 = vpack.c.b16 %v6691, %v6690
  %v6803 = vpack.c.b16 %v6693, %v6692
  %v6804 = vpack.c.b16 %v6695, %v6694
  %v6805 = vpack.c.b16 %v6697, %v6696
  %v6806 = vpack.c.b16 %v6699, %v6698
  %v6807 = vpack.c.b16 %v6701, %v6700
  %v6808 = vpack.c.b16 %v6703, %v6702
  %v6809 = vpack.c.b16 %v6705, %v6704
  %v6810 = vpack.c.b16 %v6707, %v6706
  %v6811 = vpack.c.b16 %v6709, %v6708
  %v6812 = vpack.c.b16 %v6711, %v6710
  %v6813 = vpack.c.b16 %v6713, %v6712
  %v6814 = vpack.c.b16 %v6715, %v6714
  %v6815 = vpack.c.b16 %v6717, %v6716
  %v6816 = vpack.c.b16 %v6719, %v6718
  %v6817 = vpack.c.b16 %v6721, %v6720
  %v6818 = vpack.c.b16 %v6723, %v6722
  %v6819 = vpack.c.b16 %v6725, %v6724
  %v6820 = vpack.c.b16 %v6727, %v6726
  %v6821 = vpack.c.b16 %v6729, %v6728
  %v6822 = vpack.c.b16 %v6731, %v6730
  %v6823 = vpack.c.b16 %v6733, %v6732
  %v6824 = vpack.c.b16 %v6735, %v6734
  %v6825 = vpack.c.b16 %v6737, %v6736
  %v6826 = vpack.c.b16 %v6739, %v6738
  %v6827 = vpack.c.b16 %v6741, %v6740
  %v6828 = vpack.c.b16 %v6743, %v6742
  %v6829 = vpack.c.b16 %v6745, %v6744
  %v6830 = vpack.c.b16 %v6747, %v6746
  %v6831 = vpack.c.b16 %v6749, %v6748
  %v6832 = vpack.c.b16 %v6751, %v6750
  %v6833 = vpack.c.b16 %v6753, %v6752
  %v6834 = vpack.c.b16 %v6755, %v6754
  %v6835 = vpack.c.b16 %v6757, %v6756
  %v6836 = vpack.c.b16 %v6759, %v6758
  %v6837 = vpack.c.b16 %v6761, %v6760
  %v6838 = vpack.c.b16 %v6763, %v6762
  %v6839 = vpack.c.b16 %v6765, %v6764
  %v6840 = vpack.c.b16 %v6767, %v6766
  %v6841 = vpack.c.b16 %v6769, %v6768
  %v6842 = vpack.c.b16 %v6771, %v6770
  %v6843 = vpack.c.b16 %v6773, %v6772
  %v6844 = vpack.c.b16 %v6775, %v6774
  %v6845 = vpack.c.b16 %v6777, %v6776
  %v6846 = vpack.c.b16 %v6779, %v6778
  %v6847 = vpack.c.b16 %v6781, %v6780
  %v6848 = vpack.c.b16 %v6783, %v6782
  %v6849 = vpack.c.b16 %v6785, %v6784
  %6914 = vmatprep.subr.bf16.mxu0 0
  %6915 = vmatpush1.bf16.msra.mxu0 %v6786
  %6916 = vmatprep.subr.bf16.mxu0 0
  %6917 = vmatpush1.bf16.msra.mxu0 %v6787
  %6918 = vmatprep.subr.bf16.mxu0 0
  %6919 = vmatpush1.bf16.msra.mxu0 %v6788
  %6920 = vmatprep.subr.bf16.mxu0 0
  %6921 = vmatpush1.bf16.msra.mxu0 %v6789
  %6922 = vmatprep.subr.bf16.mxu0 0
  %6923 = vmatpush1.bf16.msra.mxu0 %v6790
  %6924 = vmatprep.subr.bf16.mxu0 0
  %6925 = vmatpush1.bf16.msra.mxu0 %v6791
  %6926 = vmatprep.subr.bf16.mxu0 0
  %6927 = vmatpush1.bf16.msra.mxu0 %v6792
  %6928 = vmatprep.subr.bf16.mxu0 0
  %6929 = vmatpush1.bf16.msra.mxu0 %v6793
  %6930 = vmatprep.subr.bf16.mxu0 0
  %6931 = vmatpush1.bf16.msra.mxu0 %v6794
  %6932 = vmatprep.subr.bf16.mxu0 0
  %6933 = vmatpush1.bf16.msra.mxu0 %v6795
  %6934 = vmatprep.subr.bf16.mxu0 0
  %6935 = vmatpush1.bf16.msra.mxu0 %v6796
  %6936 = vmatprep.subr.bf16.mxu0 0
  %6937 = vmatpush1.bf16.msra.mxu0 %v6797
  %6938 = vmatprep.subr.bf16.mxu0 0
  %6939 = vmatpush1.bf16.msra.mxu0 %v6798
  %6940 = vmatprep.subr.bf16.mxu0 0
  %6941 = vmatpush1.bf16.msra.mxu0 %v6799
  %6942 = vmatprep.subr.bf16.mxu0 0
  %6943 = vmatpush1.bf16.msra.mxu0 %v6800
  %6944 = vmatprep.subr.bf16.mxu0 0
  %6945 = vmatpush1.bf16.msra.mxu0 %v6801
  %6946 = vmatprep.mubr.bf16.mxu0 %v6292
  %6947 = vmatmul.mubr.bf16.gmra.mrb[0].mxu0 %v6291
  %v6948 = vpop.f32.mrb[0].mxu0
  %v6949 = vadd.f32 %v6528, %v6948
  %v6950 = vpop.f32.mrb[0].mxu0
  %v6951 = vpop.f32.mrb[0].mxu0
  %v6952 = vadd.f32 %v6528, %v6951
  %v6953 = vpop.f32.mrb[0].mxu0
  %6954 = vmatprep.mubr.bf16.mxu0 %v6300
  %6955 = vmatmul.mubr.bf16.gmra.mrb[0].mxu0 %v6299
  %v6956 = vpop.f32.mrb[0].mxu0
  %v6957 = vadd.f32 %v6528, %v6956
  %v6958 = vpop.f32.mrb[0].mxu0
  %v6959 = vpop.f32.mrb[0].mxu0
  %v6960 = vadd.f32 %v6528, %v6959
  %v6961 = vpop.f32.mrb[0].mxu0
  %6962 = vmatprep.mubr.bf16.mxu0 %v6308
  %6963 = vmatmul.mubr.bf16.gmra.mrb[0].mxu0 %v6307
  %v6964 = vpop.f32.mrb[0].mxu0
  %v6965 = vadd.f32 %v6528, %v6964
  %v6966 = vpop.f32.mrb[0].mxu0
  %v6967 = vpop.f32.mrb[0].mxu0
  %v6968 = vadd.f32 %v6528, %v6967
  %v6969 = vpop.f32.mrb[0].mxu0
  %6970 = vmatprep.mubr.bf16.mxu0 %v6316
  %6971 = vmatmul.mubr.bf16.gmra.mrb[0].mxu0 %v6315
  %v6972 = vpop.f32.mrb[0].mxu0
  %v6973 = vadd.f32 %v6528, %v6972
  %v6974 = vpop.f32.mrb[0].mxu0
  %v6975 = vpop.f32.mrb[0].mxu0
  %v6976 = vadd.f32 %v6528, %v6975
  %v6977 = vpop.f32.mrb[0].mxu0
  %6978 = vmatprep.mubr.bf16.mxu0 %v6324
  %6979 = vmatmul.mubr.bf16.gmra.mrb[0].mxu0 %v6323
  %v6980 = vpop.f32.mrb[0].mxu0
  %v6981 = vadd.f32 %v6528, %v6980
  %v6982 = vpop.f32.mrb[0].mxu0
  %v6983 = vpop.f32.mrb[0].mxu0
  %v6984 = vadd.f32 %v6528, %v6983
  %v6985 = vpop.f32.mrb[0].mxu0
  %6986 = vmatprep.mubr.bf16.mxu0 %v6332
  %6987 = vmatmul.mubr.bf16.gmra.mrb[0].mxu0 %v6331
  %v6988 = vpop.f32.mrb[0].mxu0
  %v6989 = vadd.f32 %v6528, %v6988
  %v6990 = vpop.f32.mrb[0].mxu0
  %v6991 = vpop.f32.mrb[0].mxu0
  %v6992 = vadd.f32 %v6528, %v6991
  %v6993 = vpop.f32.mrb[0].mxu0
  %6994 = vmatprep.mubr.bf16.mxu0 %v6340
  %6995 = vmatmul.mubr.bf16.gmra.mrb[0].mxu0 %v6339
  %v6996 = vpop.f32.mrb[0].mxu0
  %v6997 = vadd.f32 %v6528, %v6996
  %v6998 = vpop.f32.mrb[0].mxu0
  %v6999 = vpop.f32.mrb[0].mxu0
  %v7000 = vadd.f32 %v6528, %v6999
  %v7001 = vpop.f32.mrb[0].mxu0
  %7002 = vmatprep.mubr.bf16.mxu0 %v6348
  %7003 = vmatmul.mubr.bf16.gmra.mrb[0].mxu0 %v6347
  %v7004 = vpop.f32.mrb[0].mxu0
  %v7005 = vadd.f32 %v6528, %v7004
  %v7006 = vpop.f32.mrb[0].mxu0
  %v7007 = vpop.f32.mrb[0].mxu0
  %v7008 = vadd.f32 %v6528, %v7007
  %v7009 = vpop.f32.mrb[0].mxu0
  %7010 = vmatprep.mubr.bf16.mxu0 %v6356
  %7011 = vmatmul.mubr.bf16.gmra.mrb[0].mxu0 %v6355
  %v7012 = vpop.f32.mrb[0].mxu0
  %v7013 = vadd.f32 %v6528, %v7012
  %v7014 = vpop.f32.mrb[0].mxu0
  %v7015 = vpop.f32.mrb[0].mxu0
  %v7016 = vadd.f32 %v6528, %v7015
  %v7017 = vpop.f32.mrb[0].mxu0
  %7018 = vmatprep.mubr.bf16.mxu0 %v6364
  %7019 = vmatmul.mubr.bf16.gmra.mrb[0].mxu0 %v6363
  %v7020 = vpop.f32.mrb[0].mxu0
  %v7021 = vadd.f32 %v6528, %v7020
  %v7022 = vpop.f32.mrb[0].mxu0
  %v7023 = vpop.f32.mrb[0].mxu0
  %v7024 = vadd.f32 %v6528, %v7023
  %v7025 = vpop.f32.mrb[0].mxu0
  %7026 = vmatprep.mubr.bf16.mxu0 %v6372
  %7027 = vmatmul.mubr.bf16.gmra.mrb[0].mxu0 %v6371
  %v7028 = vpop.f32.mrb[0].mxu0
  %v7029 = vadd.f32 %v6528, %v7028
  %v7030 = vpop.f32.mrb[0].mxu0
  %v7031 = vpop.f32.mrb[0].mxu0
  %v7032 = vadd.f32 %v6528, %v7031
  %v7033 = vpop.f32.mrb[0].mxu0
  %7034 = vmatprep.mubr.bf16.mxu0 %v6380
  %7035 = vmatmul.mubr.bf16.gmra.mrb[0].mxu0 %v6379
  %v7036 = vpop.f32.mrb[0].mxu0
  %v7037 = vadd.f32 %v6528, %v7036
  %v7038 = vpop.f32.mrb[0].mxu0
  %v7039 = vpop.f32.mrb[0].mxu0
  %v7040 = vadd.f32 %v6528, %v7039
  %v7041 = vpop.f32.mrb[0].mxu0
  %7042 = vmatprep.mubr.bf16.mxu0 %v6388
  %7043 = vmatmul.mubr.bf16.gmra.mrb[0].mxu0 %v6387
  %v7044 = vpop.f32.mrb[0].mxu0
  %v7045 = vadd.f32 %v6528, %v7044
  %v7046 = vpop.f32.mrb[0].mxu0
  %v7047 = vpop.f32.mrb[0].mxu0
  %v7048 = vpop.f32.mrb[0].mxu0
  %7049 = vdwg.mxu0
  %7050 = vmatprep.subr.bf16.mxu0 0
  %7051 = vmatpush1.bf16.msra.mxu0 %v6802
  %7052 = vmatprep.subr.bf16.mxu0 0
  %7053 = vmatpush1.bf16.msra.mxu0 %v6803
  %7054 = vmatprep.subr.bf16.mxu0 0
  %7055 = vmatpush1.bf16.msra.mxu0 %v6804
  %7056 = vmatprep.subr.bf16.mxu0 0
  %7057 = vmatpush1.bf16.msra.mxu0 %v6805
  %7058 = vmatprep.subr.bf16.mxu0 0
  %7059 = vmatpush1.bf16.msra.mxu0 %v6806
  %7060 = vmatprep.subr.bf16.mxu0 0
  %7061 = vmatpush1.bf16.msra.mxu0 %v6807
  %7062 = vmatprep.subr.bf16.mxu0 0
  %7063 = vmatpush1.bf16.msra.mxu0 %v6808
  %7064 = vmatprep.subr.bf16.mxu0 0
  %7065 = vmatpush1.bf16.msra.mxu0 %v6809
  %7066 = vmatprep.subr.bf16.mxu0 0
  %7067 = vmatpush1.bf16.msra.mxu0 %v6810
  %7068 = vmatprep.subr.bf16.mxu0 0
  %7069 = vmatpush1.bf16.msra.mxu0 %v6811
  %7070 = vmatprep.subr.bf16.mxu0 0
  %7071 = vmatpush1.bf16.msra.mxu0 %v6812
  %7072 = vmatprep.subr.bf16.mxu0 0
  %7073 = vmatpush1.bf16.msra.mxu0 %v6813
  %7074 = vmatprep.subr.bf16.mxu0 0
  %7075 = vmatpush1.bf16.msra.mxu0 %v6814
  %7076 = vmatprep.subr.bf16.mxu0 0
  %7077 = vmatpush1.bf16.msra.mxu0 %v6815
  %7078 = vmatprep.subr.bf16.mxu0 0
  %7079 = vmatpush1.bf16.msra.mxu0 %v6816
  %7080 = vmatprep.subr.bf16.mxu0 0
  %7081 = vmatpush1.bf16.msra.mxu0 %v6817
  %7082 = vmatprep.mubr.bf16.mxu0 %v6294
  %7083 = vmatmul.mubr.bf16.gmra.mrb[0].mxu0 %v6293
  %v7084 = vpop.f32.mrb[0].mxu0
  %v7085 = vadd.f32 %v6949, %v7084
  %v7086 = vpop.f32.mrb[0].mxu0
  %v7087 = vpop.f32.mrb[0].mxu0
  %v7088 = vadd.f32 %v6952, %v7087
  %v7089 = vpop.f32.mrb[0].mxu0
  %7090 = vmatprep.mubr.bf16.mxu0 %v6302
  %7091 = vmatmul.mubr.bf16.gmra.mrb[0].mxu0 %v6301
  %v7092 = vpop.f32.mrb[0].mxu0
  %v7093 = vadd.f32 %v6957, %v7092
  %v7094 = vpop.f32.mrb[0].mxu0
  %v7095 = vpop.f32.mrb[0].mxu0
  %v7096 = vadd.f32 %v6960, %v7095
  %v7097 = vpop.f32.mrb[0].mxu0
  %7098 = vmatprep.mubr.bf16.mxu0 %v6310
  %7099 = vmatmul.mubr.bf16.gmra.mrb[0].mxu0 %v6309
  %v7100 = vpop.f32.mrb[0].mxu0
  %v7101 = vadd.f32 %v6965, %v7100
  %v7102 = vpop.f32.mrb[0].mxu0
  %v7103 = vpop.f32.mrb[0].mxu0
  %v7104 = vadd.f32 %v6968, %v7103
  %v7105 = vpop.f32.mrb[0].mxu0
  %7106 = vmatprep.mubr.bf16.mxu0 %v6318
  %7107 = vmatmul.mubr.bf16.gmra.mrb[0].mxu0 %v6317
  %v7108 = vpop.f32.mrb[0].mxu0
  %v7109 = vadd.f32 %v6973, %v7108
  %v7110 = vpop.f32.mrb[0].mxu0
  %v7111 = vpop.f32.mrb[0].mxu0
  %v7112 = vadd.f32 %v6976, %v7111
  %v7113 = vpop.f32.mrb[0].mxu0
  %7114 = vmatprep.mubr.bf16.mxu0 %v6326
  %7115 = vmatmul.mubr.bf16.gmra.mrb[0].mxu0 %v6325
  %v7116 = vpop.f32.mrb[0].mxu0
  %v7117 = vadd.f32 %v6981, %v7116
  %v7118 = vpop.f32.mrb[0].mxu0
  %v7119 = vpop.f32.mrb[0].mxu0
  %v7120 = vadd.f32 %v6984, %v7119
  %v7121 = vpop.f32.mrb[0].mxu0
  %7122 = vmatprep.mubr.bf16.mxu0 %v6334
  %7123 = vmatmul.mubr.bf16.gmra.mrb[0].mxu0 %v6333
  %v7124 = vpop.f32.mrb[0].mxu0
  %v7125 = vadd.f32 %v6989, %v7124
  %v7126 = vpop.f32.mrb[0].mxu0
  %v7127 = vpop.f32.mrb[0].mxu0
  %v7128 = vadd.f32 %v6992, %v7127
  %v7129 = vpop.f32.mrb[0].mxu0
  %7130 = vmatprep.mubr.bf16.mxu0 %v6342
  %7131 = vmatmul.mubr.bf16.gmra.mrb[0].mxu0 %v6341
  %v7132 = vpop.f32.mrb[0].mxu0
  %v7133 = vadd.f32 %v6997, %v7132
  %v7134 = vpop.f32.mrb[0].mxu0
  %v7135 = vpop.f32.mrb[0].mxu0
  %v7136 = vadd.f32 %v7000, %v7135
  %v7137 = vpop.f32.mrb[0].mxu0
  %7138 = vmatprep.mubr.bf16.mxu0 %v6350
  %7139 = vmatmul.mubr.bf16.gmra.mrb[0].mxu0 %v6349
  %v7140 = vpop.f32.mrb[0].mxu0
  %v7141 = vadd.f32 %v7005, %v7140
  %v7142 = vpop.f32.mrb[0].mxu0
  %v7143 = vpop.f32.mrb[0].mxu0
  %v7144 = vadd.f32 %v7008, %v7143
  %v7145 = vpop.f32.mrb[0].mxu0
  %7146 = vmatprep.mubr.bf16.mxu0 %v6358
  %7147 = vmatmul.mubr.bf16.gmra.mrb[0].mxu0 %v6357
  %v7148 = vpop.f32.mrb[0].mxu0
  %v7149 = vadd.f32 %v7013, %v7148
  %v7150 = vpop.f32.mrb[0].mxu0
  %v7151 = vpop.f32.mrb[0].mxu0
  %v7152 = vadd.f32 %v7016, %v7151
  %v7153 = vpop.f32.mrb[0].mxu0
  %7154 = vmatprep.mubr.bf16.mxu0 %v6366
  %7155 = vmatmul.mubr.bf16.gmra.mrb[0].mxu0 %v6365
  %v7156 = vpop.f32.mrb[0].mxu0
  %v7157 = vadd.f32 %v7021, %v7156
  %v7158 = vpop.f32.mrb[0].mxu0
  %v7159 = vpop.f32.mrb[0].mxu0
  %v7160 = vadd.f32 %v7024, %v7159
  %v7161 = vpop.f32.mrb[0].mxu0
  %7162 = vmatprep.mubr.bf16.mxu0 %v6374
  %7163 = vmatmul.mubr.bf16.gmra.mrb[0].mxu0 %v6373
  %v7164 = vpop.f32.mrb[0].mxu0
  %v7165 = vadd.f32 %v7029, %v7164
  %v7166 = vpop.f32.mrb[0].mxu0
  %v7167 = vpop.f32.mrb[0].mxu0
  %v7168 = vadd.f32 %v7032, %v7167
  %v7169 = vpop.f32.mrb[0].mxu0
  %7170 = vmatprep.mubr.bf16.mxu0 %v6382
  %7171 = vmatmul.mubr.bf16.gmra.mrb[0].mxu0 %v6381
  %v7172 = vpop.f32.mrb[0].mxu0
  %v7173 = vadd.f32 %v7037, %v7172
  %v7174 = vpop.f32.mrb[0].mxu0
  %v7175 = vpop.f32.mrb[0].mxu0
  %v7176 = vadd.f32 %v7040, %v7175
  %v7177 = vpop.f32.mrb[0].mxu0
  %7178 = vmatprep.mubr.bf16.mxu0 %v6390
  %7179 = vmatmul.mubr.bf16.gmra.mrb[0].mxu0 %v6389
  %v7180 = vpop.f32.mrb[0].mxu0
  %v7181 = vadd.f32 %v7045, %v7180
  %v7182 = vpop.f32.mrb[0].mxu0
  %v7183 = vpop.f32.mrb[0].mxu0
  %v7184 = vpop.f32.mrb[0].mxu0
  %7185 = vdwg.mxu0
  %7186 = vmatprep.subr.bf16.mxu0 0
  %7187 = vmatpush1.bf16.msra.mxu0 %v6818
  %7188 = vmatprep.subr.bf16.mxu0 0
  %7189 = vmatpush1.bf16.msra.mxu0 %v6819
  %7190 = vmatprep.subr.bf16.mxu0 0
  %7191 = vmatpush1.bf16.msra.mxu0 %v6820
  %7192 = vmatprep.subr.bf16.mxu0 0
  %7193 = vmatpush1.bf16.msra.mxu0 %v6821
  %7194 = vmatprep.subr.bf16.mxu0 0
  %7195 = vmatpush1.bf16.msra.mxu0 %v6822
  %7196 = vmatprep.subr.bf16.mxu0 0
  %7197 = vmatpush1.bf16.msra.mxu0 %v6823
  %7198 = vmatprep.subr.bf16.mxu0 0
  %7199 = vmatpush1.bf16.msra.mxu0 %v6824
  %7200 = vmatprep.subr.bf16.mxu0 0
  %7201 = vmatpush1.bf16.msra.mxu0 %v6825
  %7202 = vmatprep.subr.bf16.mxu0 0
  %7203 = vmatpush1.bf16.msra.mxu0 %v6826
  %7204 = vmatprep.subr.bf16.mxu0 0
  %7205 = vmatpush1.bf16.msra.mxu0 %v6827
  %7206 = vmatprep.subr.bf16.mxu0 0
  %7207 = vmatpush1.bf16.msra.mxu0 %v6828
  %7208 = vmatprep.subr.bf16.mxu0 0
  %7209 = vmatpush1.bf16.msra.mxu0 %v6829
  %7210 = vmatprep.subr.bf16.mxu0 0
  %7211 = vmatpush1.bf16.msra.mxu0 %v6830
  %7212 = vmatprep.subr.bf16.mxu0 0
  %7213 = vmatpush1.bf16.msra.mxu0 %v6831
  %7214 = vmatprep.subr.bf16.mxu0 0
  %7215 = vmatpush1.bf16.msra.mxu0 %v6832
  %7216 = vmatprep.subr.bf16.mxu0 0
  %7217 = vmatpush1.bf16.msra.mxu0 %v6833
  %7218 = vmatprep.mubr.bf16.mxu0 %v6296
  %7219 = vmatmul.mubr.bf16.gmra.mrb[0].mxu0 %v6295
  %v7220 = vpop.f32.mrb[0].mxu0
  %v7221 = vadd.f32 %v7085, %v7220
  %v7222 = vpop.f32.mrb[0].mxu0
  %v7223 = vpop.f32.mrb[0].mxu0
  %v7224 = vadd.f32 %v7088, %v7223
  %v7225 = vpop.f32.mrb[0].mxu0
  %7226 = vmatprep.mubr.bf16.mxu0 %v6304
  %7227 = vmatmul.mubr.bf16.gmra.mrb[0].mxu0 %v6303
  %v7228 = vpop.f32.mrb[0].mxu0
  %v7229 = vadd.f32 %v7093, %v7228
  %v7230 = vpop.f32.mrb[0].mxu0
  %v7231 = vpop.f32.mrb[0].mxu0
  %v7232 = vadd.f32 %v7096, %v7231
  %v7233 = vpop.f32.mrb[0].mxu0
  %7234 = vmatprep.mubr.bf16.mxu0 %v6312
  %7235 = vmatmul.mubr.bf16.gmra.mrb[0].mxu0 %v6311
  %v7236 = vpop.f32.mrb[0].mxu0
  %v7237 = vadd.f32 %v7101, %v7236
  %v7238 = vpop.f32.mrb[0].mxu0
  %v7239 = vpop.f32.mrb[0].mxu0
  %v7240 = vadd.f32 %v7104, %v7239
  %v7241 = vpop.f32.mrb[0].mxu0
  %7242 = vmatprep.mubr.bf16.mxu0 %v6320
  %7243 = vmatmul.mubr.bf16.gmra.mrb[0].mxu0 %v6319
  %v7244 = vpop.f32.mrb[0].mxu0
  %v7245 = vadd.f32 %v7109, %v7244
  %v7246 = vpop.f32.mrb[0].mxu0
  %v7247 = vpop.f32.mrb[0].mxu0
  %v7248 = vadd.f32 %v7112, %v7247
  %v7249 = vpop.f32.mrb[0].mxu0
  %7250 = vmatprep.mubr.bf16.mxu0 %v6328
  %7251 = vmatmul.mubr.bf16.gmra.mrb[0].mxu0 %v6327
  %v7252 = vpop.f32.mrb[0].mxu0
  %v7253 = vadd.f32 %v7117, %v7252
  %v7254 = vpop.f32.mrb[0].mxu0
  %v7255 = vpop.f32.mrb[0].mxu0
  %v7256 = vadd.f32 %v7120, %v7255
  %v7257 = vpop.f32.mrb[0].mxu0
  %7258 = vmatprep.mubr.bf16.mxu0 %v6336
  %7259 = vmatmul.mubr.bf16.gmra.mrb[0].mxu0 %v6335
  %v7260 = vpop.f32.mrb[0].mxu0
  %v7261 = vadd.f32 %v7125, %v7260
  %v7262 = vpop.f32.mrb[0].mxu0
  %v7263 = vpop.f32.mrb[0].mxu0
  %v7264 = vadd.f32 %v7128, %v7263
  %v7265 = vpop.f32.mrb[0].mxu0
  %7266 = vmatprep.mubr.bf16.mxu0 %v6344
  %7267 = vmatmul.mubr.bf16.gmra.mrb[0].mxu0 %v6343
  %v7268 = vpop.f32.mrb[0].mxu0
  %v7269 = vadd.f32 %v7133, %v7268
  %v7270 = vpop.f32.mrb[0].mxu0
  %v7271 = vpop.f32.mrb[0].mxu0
  %v7272 = vadd.f32 %v7136, %v7271
  %v7273 = vpop.f32.mrb[0].mxu0
  %7274 = vmatprep.mubr.bf16.mxu0 %v6352
  %7275 = vmatmul.mubr.bf16.gmra.mrb[0].mxu0 %v6351
  %v7276 = vpop.f32.mrb[0].mxu0
  %v7277 = vadd.f32 %v7141, %v7276
  %v7278 = vpop.f32.mrb[0].mxu0
  %v7279 = vpop.f32.mrb[0].mxu0
  %v7280 = vadd.f32 %v7144, %v7279
  %v7281 = vpop.f32.mrb[0].mxu0
  %7282 = vmatprep.mubr.bf16.mxu0 %v6360
  %7283 = vmatmul.mubr.bf16.gmra.mrb[0].mxu0 %v6359
  %v7284 = vpop.f32.mrb[0].mxu0
  %v7285 = vadd.f32 %v7149, %v7284
  %v7286 = vpop.f32.mrb[0].mxu0
  %v7287 = vpop.f32.mrb[0].mxu0
  %v7288 = vadd.f32 %v7152, %v7287
  %v7289 = vpop.f32.mrb[0].mxu0
  %7290 = vmatprep.mubr.bf16.mxu0 %v6368
  %7291 = vmatmul.mubr.bf16.gmra.mrb[0].mxu0 %v6367
  %v7292 = vpop.f32.mrb[0].mxu0
  %v7293 = vadd.f32 %v7157, %v7292
  %v7294 = vpop.f32.mrb[0].mxu0
  %v7295 = vpop.f32.mrb[0].mxu0
  %v7296 = vadd.f32 %v7160, %v7295
  %v7297 = vpop.f32.mrb[0].mxu0
  %7298 = vmatprep.mubr.bf16.mxu0 %v6376
  %7299 = vmatmul.mubr.bf16.gmra.mrb[0].mxu0 %v6375
  %v7300 = vpop.f32.mrb[0].mxu0
  %v7301 = vadd.f32 %v7165, %v7300
  %v7302 = vpop.f32.mrb[0].mxu0
  %v7303 = vpop.f32.mrb[0].mxu0
  %v7304 = vadd.f32 %v7168, %v7303
  %v7305 = vpop.f32.mrb[0].mxu0
  %7306 = vmatprep.mubr.bf16.mxu0 %v6384
  %7307 = vmatmul.mubr.bf16.gmra.mrb[0].mxu0 %v6383
  %v7308 = vpop.f32.mrb[0].mxu0
  %v7309 = vadd.f32 %v7173, %v7308
  %v7310 = vpop.f32.mrb[0].mxu0
  %v7311 = vpop.f32.mrb[0].mxu0
  %v7312 = vadd.f32 %v7176, %v7311
  %v7313 = vpop.f32.mrb[0].mxu0
  %7314 = vmatprep.mubr.bf16.mxu0 %v6392
  %7315 = vmatmul.mubr.bf16.gmra.mrb[0].mxu0 %v6391
  %v7316 = vpop.f32.mrb[0].mxu0
  %v7317 = vadd.f32 %v7181, %v7316
  %v7318 = vpop.f32.mrb[0].mxu0
  %v7319 = vpop.f32.mrb[0].mxu0
  %v7320 = vpop.f32.mrb[0].mxu0
  %7321 = vdwg.mxu0
  %7322 = vmatprep.subr.bf16.mxu0 0
  %7323 = vmatpush1.bf16.msra.mxu0 %v6834
  %7324 = vmatprep.subr.bf16.mxu0 0
  %7325 = vmatpush1.bf16.msra.mxu0 %v6835
  %7326 = vmatprep.subr.bf16.mxu0 0
  %7327 = vmatpush1.bf16.msra.mxu0 %v6836
  %7328 = vmatprep.subr.bf16.mxu0 0
  %7329 = vmatpush1.bf16.msra.mxu0 %v6837
  %7330 = vmatprep.subr.bf16.mxu0 0
  %7331 = vmatpush1.bf16.msra.mxu0 %v6838
  %7332 = vmatprep.subr.bf16.mxu0 0
  %7333 = vmatpush1.bf16.msra.mxu0 %v6839
  %7334 = vmatprep.subr.bf16.mxu0 0
  %7335 = vmatpush1.bf16.msra.mxu0 %v6840
  %7336 = vmatprep.subr.bf16.mxu0 0
  %7337 = vmatpush1.bf16.msra.mxu0 %v6841
  %7338 = vmatprep.subr.bf16.mxu0 0
  %7339 = vmatpush1.bf16.msra.mxu0 %v6842
  %7340 = vmatprep.subr.bf16.mxu0 0
  %7341 = vmatpush1.bf16.msra.mxu0 %v6843
  %7342 = vmatprep.subr.bf16.mxu0 0
  %7343 = vmatpush1.bf16.msra.mxu0 %v6844
  %7344 = vmatprep.subr.bf16.mxu0 0
  %7345 = vmatpush1.bf16.msra.mxu0 %v6845
  %7346 = vmatprep.subr.bf16.mxu0 0
  %7347 = vmatpush1.bf16.msra.mxu0 %v6846
  %7348 = vmatprep.subr.bf16.mxu0 0
  %7349 = vmatpush1.bf16.msra.mxu0 %v6847
  %7350 = vmatprep.subr.bf16.mxu0 0
  %7351 = vmatpush1.bf16.msra.mxu0 %v6848
  %7352 = vmatprep.subr.bf16.mxu0 0
  %7353 = vmatpush1.bf16.msra.mxu0 %v6849
  %7354 = vmatprep.mubr.bf16.mxu0 %v6298
  %7355 = vmatmul.mubr.bf16.gmra.mrb[0].mxu0 %v6297
  %v7356 = vpop.f32.mrb[0].mxu0
  %v7357 = vadd.f32 %v7221, %v7356
  %v7358 = vpop.f32.mrb[0].mxu0
  %v7359 = vpop.f32.mrb[0].mxu0
  %v7360 = vadd.f32 %v7224, %v7359
  %v7361 = vpop.f32.mrb[0].mxu0
  %7362 = vmatprep.mubr.bf16.mxu0 %v6306
  %7363 = vmatmul.mubr.bf16.gmra.mrb[0].mxu0 %v6305
  %v7364 = vpop.f32.mrb[0].mxu0
  %v7365 = vadd.f32 %v7229, %v7364
  %v7366 = vpop.f32.mrb[0].mxu0
  %v7367 = vpop.f32.mrb[0].mxu0
  %v7368 = vadd.f32 %v7232, %v7367
  %v7369 = vpop.f32.mrb[0].mxu0
  %7370 = vmatprep.mubr.bf16.mxu0 %v6314
  %7371 = vmatmul.mubr.bf16.gmra.mrb[0].mxu0 %v6313
  %v7372 = vpop.f32.mrb[0].mxu0
  %v7373 = vadd.f32 %v7237, %v7372
  %v7374 = vpop.f32.mrb[0].mxu0
  %v7375 = vpop.f32.mrb[0].mxu0
  %v7376 = vadd.f32 %v7240, %v7375
  %v7377 = vpop.f32.mrb[0].mxu0
  %7378 = vmatprep.mubr.bf16.mxu0 %v6322
  %7379 = vmatmul.mubr.bf16.gmra.mrb[0].mxu0 %v6321
  %v7380 = vpop.f32.mrb[0].mxu0
  %v7381 = vadd.f32 %v7245, %v7380
  %v7382 = vpop.f32.mrb[0].mxu0
  %v7383 = vpop.f32.mrb[0].mxu0
  %v7384 = vadd.f32 %v7248, %v7383
  %v7385 = vpop.f32.mrb[0].mxu0
  %7386 = vmatprep.mubr.bf16.mxu0 %v6330
  %7387 = vmatmul.mubr.bf16.gmra.mrb[0].mxu0 %v6329
  %v7388 = vpop.f32.mrb[0].mxu0
  %v7389 = vadd.f32 %v7253, %v7388
  %v7390 = vpop.f32.mrb[0].mxu0
  %v7391 = vpop.f32.mrb[0].mxu0
  %v7392 = vadd.f32 %v7256, %v7391
  %v7393 = vpop.f32.mrb[0].mxu0
  %7394 = vmatprep.mubr.bf16.mxu0 %v6338
  %7395 = vmatmul.mubr.bf16.gmra.mrb[0].mxu0 %v6337
  %v7396 = vpop.f32.mrb[0].mxu0
  %v7397 = vadd.f32 %v7261, %v7396
  %v7398 = vpop.f32.mrb[0].mxu0
  %v7399 = vpop.f32.mrb[0].mxu0
  %v7400 = vadd.f32 %v7264, %v7399
  %v7401 = vpop.f32.mrb[0].mxu0
  %7402 = vmatprep.mubr.bf16.mxu0 %v6346
  %7403 = vmatmul.mubr.bf16.gmra.mrb[0].mxu0 %v6345
  %v7404 = vpop.f32.mrb[0].mxu0
  %v7405 = vadd.f32 %v7269, %v7404
  %v7406 = vpop.f32.mrb[0].mxu0
  %v7407 = vpop.f32.mrb[0].mxu0
  %v7408 = vadd.f32 %v7272, %v7407
  %v7409 = vpop.f32.mrb[0].mxu0
  %7410 = vmatprep.mubr.bf16.mxu0 %v6354
  %7411 = vmatmul.mubr.bf16.gmra.mrb[0].mxu0 %v6353
  %v7412 = vpop.f32.mrb[0].mxu0
  %v7413 = vadd.f32 %v7277, %v7412
  %v7414 = vpop.f32.mrb[0].mxu0
  %v7415 = vpop.f32.mrb[0].mxu0
  %v7416 = vadd.f32 %v7280, %v7415
  %v7417 = vpop.f32.mrb[0].mxu0
  %7418 = vmatprep.mubr.bf16.mxu0 %v6362
  %7419 = vmatmul.mubr.bf16.gmra.mrb[0].mxu0 %v6361
  %v7420 = vpop.f32.mrb[0].mxu0
  %v7421 = vadd.f32 %v7285, %v7420
  %v7422 = vpop.f32.mrb[0].mxu0
  %v7423 = vpop.f32.mrb[0].mxu0
  %v7424 = vadd.f32 %v7288, %v7423
  %v7425 = vpop.f32.mrb[0].mxu0
  %7426 = vmatprep.mubr.bf16.mxu0 %v6370
  %7427 = vmatmul.mubr.bf16.gmra.mrb[0].mxu0 %v6369
  %v7428 = vpop.f32.mrb[0].mxu0
  %v7429 = vadd.f32 %v7293, %v7428
  %v7430 = vpop.f32.mrb[0].mxu0
  %v7431 = vpop.f32.mrb[0].mxu0
  %v7432 = vadd.f32 %v7296, %v7431
  %v7433 = vpop.f32.mrb[0].mxu0
  %7434 = vmatprep.mubr.bf16.mxu0 %v6378
  %7435 = vmatmul.mubr.bf16.gmra.mrb[0].mxu0 %v6377
  %v7436 = vpop.f32.mrb[0].mxu0
  %v7437 = vadd.f32 %v7301, %v7436
  %v7438 = vpop.f32.mrb[0].mxu0
  %v7439 = vpop.f32.mrb[0].mxu0
  %v7440 = vadd.f32 %v7304, %v7439
  %v7441 = vpop.f32.mrb[0].mxu0
  %7442 = vmatprep.mubr.bf16.mxu0 %v6386
  %7443 = vmatmul.mubr.bf16.gmra.mrb[0].mxu0 %v6385
  %v7444 = vpop.f32.mrb[0].mxu0
  %v7445 = vadd.f32 %v7309, %v7444
  %v7446 = vpop.f32.mrb[0].mxu0
  %v7447 = vpop.f32.mrb[0].mxu0
  %v7448 = vadd.f32 %v7312, %v7447
  %v7449 = vpop.f32.mrb[0].mxu0
  %7450 = vmatprep.mubr.bf16.mxu0 %v6394
  %7451 = vmatmul.mubr.bf16.gmra.mrb[0].mxu0 %v6393
  %v7452 = vpop.f32.mrb[0].mxu0
  %v7453 = vadd.f32 %v7317, %v7452
  %v7454 = vpop.f32.mrb[0].mxu0
  %v7455 = vpop.f32.mrb[0].mxu0
  %v7456 = vpop.f32.mrb[0].mxu0
  %7457 = vdwg.mxu0
  %7458 = vst [vmem:[#allocation3] sm:$0xff] %v7357
  %7459 = vst [vmem:[#allocation3 + $0x8] sm:$0xff] %v7360
  %7460 = vst [vmem:[#allocation3 + $0x10] sm:$0xff] %v7365
  %7461 = vst [vmem:[#allocation3 + $0x18] sm:$0xff] %v7368
  %7462 = vst [vmem:[#allocation3 + $0x20] sm:$0xff] %v7373
  %7463 = vst [vmem:[#allocation3 + $0x28] sm:$0xff] %v7376
  %7464 = vst [vmem:[#allocation3 + $0x30] sm:$0xff] %v7381
  %7465 = vst [vmem:[#allocation3 + $0x38] sm:$0xff] %v7384
  %7466 = vst [vmem:[#allocation3 + $0x40] sm:$0xff] %v7389
  %7467 = vst [vmem:[#allocation3 + $0x48] sm:$0xff] %v7392
  %7468 = vst [vmem:[#allocation3 + $0x50] sm:$0xff] %v7397
  %7469 = vst [vmem:[#allocation3 + $0x58] sm:$0xff] %v7400
  %7470 = vst [vmem:[#allocation3 + $0x60] sm:$0xff] %v7405
  %7471 = vst [vmem:[#allocation3 + $0x68] sm:$0xff] %v7408
  %7472 = vst [vmem:[#allocation3 + $0x70] sm:$0xff] %v7413
  %7473 = vst [vmem:[#allocation3 + $0x78] sm:$0xff] %v7416
  %7474 = vst [vmem:[#allocation3 + $0x80] sm:$0xff] %v7421
  %7475 = vst [vmem:[#allocation3 + $0x88] sm:$0xff] %v7424
  %7476 = vst [vmem:[#allocation3 + $0x90] sm:$0xff] %v7429
  %7477 = vst [vmem:[#allocation3 + $0x98] sm:$0xff] %v7432
  %7478 = vst [vmem:[#allocation3 + $0xa0] sm:$0xff] %v7437
  %7479 = vst [vmem:[#allocation3 + $0xa8] sm:$0xff] %v7440
  %7480 = vst [vmem:[#allocation3 + $0xb0] sm:$0xff] %v7445
  %7481 = vst [vmem:[#allocation3 + $0xb8] sm:$0xff] %v7448
  %7482 = vst [vmem:[#allocation3 + $0xc0] sm:$0xff] %v7453
  %v7483 = vld [vmem:[#allocation3] sm:$0xff]
  %v7484 = vadd.f32 %v7483, 0.0
  %v7485 = vsub.f32 %v7484, %v3114
  %v7486 = vsub.f32 %v7485, -1.0
  %v7487 = vmul.f32 %v7486, 115.90909
  %v7488 = vround.ne.pseudo %v7487
  %v7489 = vmax.f32 %v7488, 0.0
  %v7490 = vmin.f32 %v7489, 255.0
  %v7491 = vmul.f32 %v7490, 0.008627451
  %v7492 = vadd.f32 %v7491, -1.0
  %vm7493 = vcmp.gt.f32.partialorder %v7492, 1.0
  %v7494 = vsel %vm7493, 1, 0
  %v7495 = vcvt.s32.f32 %v7494
  %7496 = vst [vmem:[%s5] sm:$0xff] %v7495
  %7497 = vst [vmem:[%s6] sm:$0xff] %v7492
  %v7498 = vld [vmem:[#allocation3 + $0x8] sm:$0xff]
  %v7499 = vmul.f32 %v7492, 0.95
  %v7500 = vadd.f32 %v7499, %v7498
  %v7501 = vsel %vm7493, 1.0, 0.0
  %v7502 = vsub.f32 %v7500, %v7501
  %v7503 = vsub.f32 %v7502, -1.0
  %v7504 = vmul.f32 %v7503, 115.90909
  %v7505 = vround.ne.pseudo %v7504
  %v7506 = vmax.f32 %v7505, 0.0
  %v7507 = vmin.f32 %v7506, 255.0
  %v7508 = vmul.f32 %v7507, 0.008627451
  %v7509 = vadd.f32 %v7508, -1.0
  %vm7510 = vcmp.gt.f32.partialorder %v7509, 1.0
  %v7511 = vsel %vm7510, 1, 0
  %v7512 = vcvt.s32.f32 %v7511
  %s7513 = scalar_lea.vmem %s5, 8
  %7514 = vst [vmem:[%s7513] sm:$0xff] %v7512
  %s7515 = scalar_lea.vmem %s6, 8
  %7516 = vst [vmem:[%s7515] sm:$0xff] %v7509
  %v7517 = vld [vmem:[#allocation3 + $0x10] sm:$0xff]
  %v7518 = vmul.f32 %v7509, 0.95
  %v7519 = vadd.f32 %v7518, %v7517
  %v7520 = vsel %vm7510, 1.0, 0.0
  %v7521 = vsub.f32 %v7519, %v7520
  %v7522 = vsub.f32 %v7521, -1.0
  %v7523 = vmul.f32 %v7522, 115.90909
  %v7524 = vround.ne.pseudo %v7523
  %v7525 = vmax.f32 %v7524, 0.0
  %v7526 = vmin.f32 %v7525, 255.0
  %v7527 = vmul.f32 %v7526, 0.008627451
  %v7528 = vadd.f32 %v7527, -1.0
  %vm7529 = vcmp.gt.f32.partialorder %v7528, 1.0
  %v7530 = vsel %vm7529, 1, 0
  %v7531 = vcvt.s32.f32 %v7530
  %s7532 = scalar_lea.vmem %s5, 16
  %7533 = vst [vmem:[%s7532] sm:$0xff] %v7531
  %s7534 = scalar_lea.vmem %s6, 16
  %7535 = vst [vmem:[%s7534] sm:$0xff] %v7528
  %v7536 = vld [vmem:[#allocation3 + $0x18] sm:$0xff]
  %v7537 = vmul.f32 %v7528, 0.95
  %v7538 = vadd.f32 %v7537, %v7536
  %v7539 = vsel %vm7529, 1.0, 0.0
  %v7540 = vsub.f32 %v7538, %v7539
  %v7541 = vsub.f32 %v7540, -1.0
  %v7542 = vmul.f32 %v7541, 115.90909
  %v7543 = vround.ne.pseudo %v7542
  %v7544 = vmax.f32 %v7543, 0.0
  %v7545 = vmin.f32 %v7544, 255.0
  %v7546 = vmul.f32 %v7545, 0.008627451
  %v7547 = vadd.f32 %v7546, -1.0
  %vm7548 = vcmp.gt.f32.partialorder %v7547, 1.0
  %v7549 = vsel %vm7548, 1, 0
  %v7550 = vcvt.s32.f32 %v7549
  %s7551 = scalar_lea.vmem %s5, 24
  %7552 = vst [vmem:[%s7551] sm:$0xff] %v7550
  %s7553 = scalar_lea.vmem %s6, 24
  %7554 = vst [vmem:[%s7553] sm:$0xff] %v7547
  %v7555 = vld [vmem:[#allocation3 + $0x20] sm:$0xff]
  %v7556 = vmul.f32 %v7547, 0.95
  %v7557 = vadd.f32 %v7556, %v7555
  %v7558 = vsel %vm7548, 1.0, 0.0
  %v7559 = vsub.f32 %v7557, %v7558
  %v7560 = vsub.f32 %v7559, -1.0
  %v7561 = vmul.f32 %v7560, 115.90909
  %v7562 = vround.ne.pseudo %v7561
  %v7563 = vmax.f32 %v7562, 0.0
  %v7564 = vmin.f32 %v7563, 255.0
  %v7565 = vmul.f32 %v7564, 0.008627451
  %v7566 = vadd.f32 %v7565, -1.0
  %vm7567 = vcmp.gt.f32.partialorder %v7566, 1.0
  %v7568 = vsel %vm7567, 1, 0
  %v7569 = vcvt.s32.f32 %v7568
  %s7570 = scalar_lea.vmem %s5, 32
  %7571 = vst [vmem:[%s7570] sm:$0xff] %v7569
  %s7572 = scalar_lea.vmem %s6, 32
  %7573 = vst [vmem:[%s7572] sm:$0xff] %v7566
  %v7574 = vld [vmem:[#allocation3 + $0x28] sm:$0xff]
  %v7575 = vmul.f32 %v7566, 0.95
  %v7576 = vadd.f32 %v7575, %v7574
  %v7577 = vsel %vm7567, 1.0, 0.0
  %v7578 = vsub.f32 %v7576, %v7577
  %v7579 = vsub.f32 %v7578, -1.0
  %v7580 = vmul.f32 %v7579, 115.90909
  %v7581 = vround.ne.pseudo %v7580
  %v7582 = vmax.f32 %v7581, 0.0
  %v7583 = vmin.f32 %v7582, 255.0
  %v7584 = vmul.f32 %v7583, 0.008627451
  %v7585 = vadd.f32 %v7584, -1.0
  %vm7586 = vcmp.gt.f32.partialorder %v7585, 1.0
  %v7587 = vsel %vm7586, 1, 0
  %v7588 = vcvt.s32.f32 %v7587
  %s7589 = scalar_lea.vmem %s5, 40
  %7590 = vst [vmem:[%s7589] sm:$0xff] %v7588
  %s7591 = scalar_lea.vmem %s6, 40
  %7592 = vst [vmem:[%s7591] sm:$0xff] %v7585
  %v7593 = vld [vmem:[#allocation3 + $0x30] sm:$0xff]
  %v7594 = vmul.f32 %v7585, 0.95
  %v7595 = vadd.f32 %v7594, %v7593
  %v7596 = vsel %vm7586, 1.0, 0.0
  %v7597 = vsub.f32 %v7595, %v7596
  %v7598 = vsub.f32 %v7597, -1.0
  %v7599 = vmul.f32 %v7598, 115.90909
  %v7600 = vround.ne.pseudo %v7599
  %v7601 = vmax.f32 %v7600, 0.0
  %v7602 = vmin.f32 %v7601, 255.0
  %v7603 = vmul.f32 %v7602, 0.008627451
  %v7604 = vadd.f32 %v7603, -1.0
  %vm7605 = vcmp.gt.f32.partialorder %v7604, 1.0
  %v7606 = vsel %vm7605, 1, 0
  %v7607 = vcvt.s32.f32 %v7606
  %s7608 = scalar_lea.vmem %s5, 48
  %7609 = vst [vmem:[%s7608] sm:$0xff] %v7607
  %s7610 = scalar_lea.vmem %s6, 48
  %7611 = vst [vmem:[%s7610] sm:$0xff] %v7604
  %v7612 = vld [vmem:[#allocation3 + $0x38] sm:$0xff]
  %v7613 = vmul.f32 %v7604, 0.95
  %v7614 = vadd.f32 %v7613, %v7612
  %v7615 = vsel %vm7605, 1.0, 0.0
  %v7616 = vsub.f32 %v7614, %v7615
  %v7617 = vsub.f32 %v7616, -1.0
  %v7618 = vmul.f32 %v7617, 115.90909
  %v7619 = vround.ne.pseudo %v7618
  %v7620 = vmax.f32 %v7619, 0.0
  %v7621 = vmin.f32 %v7620, 255.0
  %v7622 = vmul.f32 %v7621, 0.008627451
  %v7623 = vadd.f32 %v7622, -1.0
  %vm7624 = vcmp.gt.f32.partialorder %v7623, 1.0
  %v7625 = vsel %vm7624, 1, 0
  %v7626 = vcvt.s32.f32 %v7625
  %s7627 = scalar_lea.vmem %s5, 56
  %7628 = vst [vmem:[%s7627] sm:$0xff] %v7626
  %s7629 = scalar_lea.vmem %s6, 56
  %7630 = vst [vmem:[%s7629] sm:$0xff] %v7623
  %v7631 = vld [vmem:[#allocation3 + $0x40] sm:$0xff]
  %v7632 = vmul.f32 %v7623, 0.95
  %v7633 = vadd.f32 %v7632, %v7631
  %v7634 = vsel %vm7624, 1.0, 0.0
  %v7635 = vsub.f32 %v7633, %v7634
  %v7636 = vsub.f32 %v7635, -1.0
  %v7637 = vmul.f32 %v7636, 115.90909
  %v7638 = vround.ne.pseudo %v7637
  %v7639 = vmax.f32 %v7638, 0.0
  %v7640 = vmin.f32 %v7639, 255.0
  %v7641 = vmul.f32 %v7640, 0.008627451
  %v7642 = vadd.f32 %v7641, -1.0
  %vm7643 = vcmp.gt.f32.partialorder %v7642, 1.0
  %v7644 = vsel %vm7643, 1, 0
  %v7645 = vcvt.s32.f32 %v7644
  %s7646 = scalar_lea.vmem %s5, 64
  %7647 = vst [vmem:[%s7646] sm:$0xff] %v7645
  %s7648 = scalar_lea.vmem %s6, 64
  %7649 = vst [vmem:[%s7648] sm:$0xff] %v7642
  %v7650 = vld [vmem:[#allocation3 + $0x48] sm:$0xff]
  %v7651 = vmul.f32 %v7642, 0.95
  %v7652 = vadd.f32 %v7651, %v7650
  %v7653 = vsel %vm7643, 1.0, 0.0
  %v7654 = vsub.f32 %v7652, %v7653
  %v7655 = vsub.f32 %v7654, -1.0
  %v7656 = vmul.f32 %v7655, 115.90909
  %v7657 = vround.ne.pseudo %v7656
  %v7658 = vmax.f32 %v7657, 0.0
  %v7659 = vmin.f32 %v7658, 255.0
  %v7660 = vmul.f32 %v7659, 0.008627451
  %v7661 = vadd.f32 %v7660, -1.0
  %vm7662 = vcmp.gt.f32.partialorder %v7661, 1.0
  %v7663 = vsel %vm7662, 1, 0
  %v7664 = vcvt.s32.f32 %v7663
  %s7665 = scalar_lea.vmem %s5, 72
  %7666 = vst [vmem:[%s7665] sm:$0xff] %v7664
  %s7667 = scalar_lea.vmem %s6, 72
  %7668 = vst [vmem:[%s7667] sm:$0xff] %v7661
  %v7669 = vld [vmem:[#allocation3 + $0x50] sm:$0xff]
  %v7670 = vmul.f32 %v7661, 0.95
  %v7671 = vadd.f32 %v7670, %v7669
  %v7672 = vsel %vm7662, 1.0, 0.0
  %v7673 = vsub.f32 %v7671, %v7672
  %v7674 = vsub.f32 %v7673, -1.0
  %v7675 = vmul.f32 %v7674, 115.90909
  %v7676 = vround.ne.pseudo %v7675
  %v7677 = vmax.f32 %v7676, 0.0
  %v7678 = vmin.f32 %v7677, 255.0
  %v7679 = vmul.f32 %v7678, 0.008627451
  %v7680 = vadd.f32 %v7679, -1.0
  %vm7681 = vcmp.gt.f32.partialorder %v7680, 1.0
  %v7682 = vsel %vm7681, 1, 0
  %v7683 = vcvt.s32.f32 %v7682
  %s7684 = scalar_lea.vmem %s5, 80
  %7685 = vst [vmem:[%s7684] sm:$0xff] %v7683
  %s7686 = scalar_lea.vmem %s6, 80
  %7687 = vst [vmem:[%s7686] sm:$0xff] %v7680
  %v7688 = vld [vmem:[#allocation3 + $0x58] sm:$0xff]
  %v7689 = vmul.f32 %v7680, 0.95
  %v7690 = vadd.f32 %v7689, %v7688
  %v7691 = vsel %vm7681, 1.0, 0.0
  %v7692 = vsub.f32 %v7690, %v7691
  %v7693 = vsub.f32 %v7692, -1.0
  %v7694 = vmul.f32 %v7693, 115.90909
  %v7695 = vround.ne.pseudo %v7694
  %v7696 = vmax.f32 %v7695, 0.0
  %v7697 = vmin.f32 %v7696, 255.0
  %v7698 = vmul.f32 %v7697, 0.008627451
  %v7699 = vadd.f32 %v7698, -1.0
  %vm7700 = vcmp.gt.f32.partialorder %v7699, 1.0
  %v7701 = vsel %vm7700, 1, 0
  %v7702 = vcvt.s32.f32 %v7701
  %s7703 = scalar_lea.vmem %s5, 88
  %7704 = vst [vmem:[%s7703] sm:$0xff] %v7702
  %s7705 = scalar_lea.vmem %s6, 88
  %7706 = vst [vmem:[%s7705] sm:$0xff] %v7699
  %v7707 = vld [vmem:[#allocation3 + $0x60] sm:$0xff]
  %v7708 = vmul.f32 %v7699, 0.95
  %v7709 = vadd.f32 %v7708, %v7707
  %v7710 = vsel %vm7700, 1.0, 0.0
  %v7711 = vsub.f32 %v7709, %v7710
  %v7712 = vsub.f32 %v7711, -1.0
  %v7713 = vmul.f32 %v7712, 115.90909
  %v7714 = vround.ne.pseudo %v7713
  %v7715 = vmax.f32 %v7714, 0.0
  %v7716 = vmin.f32 %v7715, 255.0
  %v7717 = vmul.f32 %v7716, 0.008627451
  %v7718 = vadd.f32 %v7717, -1.0
  %vm7719 = vcmp.gt.f32.partialorder %v7718, 1.0
  %v7720 = vsel %vm7719, 1, 0
  %v7721 = vcvt.s32.f32 %v7720
  %s7722 = scalar_lea.vmem %s5, 96
  %7723 = vst [vmem:[%s7722] sm:$0xff] %v7721
  %s7724 = scalar_lea.vmem %s6, 96
  %7725 = vst [vmem:[%s7724] sm:$0xff] %v7718
  %v7726 = vld [vmem:[#allocation3 + $0x68] sm:$0xff]
  %v7727 = vmul.f32 %v7718, 0.95
  %v7728 = vadd.f32 %v7727, %v7726
  %v7729 = vsel %vm7719, 1.0, 0.0
  %v7730 = vsub.f32 %v7728, %v7729
  %v7731 = vsub.f32 %v7730, -1.0
  %v7732 = vmul.f32 %v7731, 115.90909
  %v7733 = vround.ne.pseudo %v7732
  %v7734 = vmax.f32 %v7733, 0.0
  %v7735 = vmin.f32 %v7734, 255.0
  %v7736 = vmul.f32 %v7735, 0.008627451
  %v7737 = vadd.f32 %v7736, -1.0
  %vm7738 = vcmp.gt.f32.partialorder %v7737, 1.0
  %v7739 = vsel %vm7738, 1, 0
  %v7740 = vcvt.s32.f32 %v7739
  %s7741 = scalar_lea.vmem %s5, 104
  %7742 = vst [vmem:[%s7741] sm:$0xff] %v7740
  %s7743 = scalar_lea.vmem %s6, 104
  %7744 = vst [vmem:[%s7743] sm:$0xff] %v7737
  %v7745 = vld [vmem:[#allocation3 + $0x70] sm:$0xff]
  %v7746 = vmul.f32 %v7737, 0.95
  %v7747 = vadd.f32 %v7746, %v7745
  %v7748 = vsel %vm7738, 1.0, 0.0
  %v7749 = vsub.f32 %v7747, %v7748
  %v7750 = vsub.f32 %v7749, -1.0
  %v7751 = vmul.f32 %v7750, 115.90909
  %v7752 = vround.ne.pseudo %v7751
  %v7753 = vmax.f32 %v7752, 0.0
  %v7754 = vmin.f32 %v7753, 255.0
  %v7755 = vmul.f32 %v7754, 0.008627451
  %v7756 = vadd.f32 %v7755, -1.0
  %vm7757 = vcmp.gt.f32.partialorder %v7756, 1.0
  %v7758 = vsel %vm7757, 1, 0
  %v7759 = vcvt.s32.f32 %v7758
  %s7760 = scalar_lea.vmem %s5, 112
  %7761 = vst [vmem:[%s7760] sm:$0xff] %v7759
  %s7762 = scalar_lea.vmem %s6, 112
  %7763 = vst [vmem:[%s7762] sm:$0xff] %v7756
  %v7764 = vld [vmem:[#allocation3 + $0x78] sm:$0xff]
  %v7765 = vmul.f32 %v7756, 0.95
  %v7766 = vadd.f32 %v7765, %v7764
  %v7767 = vsel %vm7757, 1.0, 0.0
  %v7768 = vsub.f32 %v7766, %v7767
  %v7769 = vsub.f32 %v7768, -1.0
  %v7770 = vmul.f32 %v7769, 115.90909
  %v7771 = vround.ne.pseudo %v7770
  %v7772 = vmax.f32 %v7771, 0.0
  %v7773 = vmin.f32 %v7772, 255.0
  %v7774 = vmul.f32 %v7773, 0.008627451
  %v7775 = vadd.f32 %v7774, -1.0
  %vm7776 = vcmp.gt.f32.partialorder %v7775, 1.0
  %v7777 = vsel %vm7776, 1, 0
  %v7778 = vcvt.s32.f32 %v7777
  %s7779 = scalar_lea.vmem %s5, 120
  %7780 = vst [vmem:[%s7779] sm:$0xff] %v7778
  %s7781 = scalar_lea.vmem %s6, 120
  %7782 = vst [vmem:[%s7781] sm:$0xff] %v7775
  %v7783 = vld [vmem:[#allocation3 + $0x80] sm:$0xff]
  %v7784 = vmul.f32 %v7775, 0.95
  %v7785 = vadd.f32 %v7784, %v7783
  %v7786 = vsel %vm7776, 1.0, 0.0
  %v7787 = vsub.f32 %v7785, %v7786
  %v7788 = vsub.f32 %v7787, -1.0
  %v7789 = vmul.f32 %v7788, 115.90909
  %v7790 = vround.ne.pseudo %v7789
  %v7791 = vmax.f32 %v7790, 0.0
  %v7792 = vmin.f32 %v7791, 255.0
  %v7793 = vmul.f32 %v7792, 0.008627451
  %v7794 = vadd.f32 %v7793, -1.0
  %vm7795 = vcmp.gt.f32.partialorder %v7794, 1.0
  %v7796 = vsel %vm7795, 1, 0
  %v7797 = vcvt.s32.f32 %v7796
  %s7798 = scalar_lea.vmem %s5, 128
  %7799 = vst [vmem:[%s7798] sm:$0xff] %v7797
  %s7800 = scalar_lea.vmem %s6, 128
  %7801 = vst [vmem:[%s7800] sm:$0xff] %v7794
  %v7802 = vld [vmem:[#allocation3 + $0x88] sm:$0xff]
  %v7803 = vmul.f32 %v7794, 0.95
  %v7804 = vadd.f32 %v7803, %v7802
  %v7805 = vsel %vm7795, 1.0, 0.0
  %v7806 = vsub.f32 %v7804, %v7805
  %v7807 = vsub.f32 %v7806, -1.0
  %v7808 = vmul.f32 %v7807, 115.90909
  %v7809 = vround.ne.pseudo %v7808
  %v7810 = vmax.f32 %v7809, 0.0
  %v7811 = vmin.f32 %v7810, 255.0
  %v7812 = vmul.f32 %v7811, 0.008627451
  %v7813 = vadd.f32 %v7812, -1.0
  %vm7814 = vcmp.gt.f32.partialorder %v7813, 1.0
  %v7815 = vsel %vm7814, 1, 0
  %v7816 = vcvt.s32.f32 %v7815
  %s7817 = scalar_lea.vmem %s5, 136
  %7818 = vst [vmem:[%s7817] sm:$0xff] %v7816
  %s7819 = scalar_lea.vmem %s6, 136
  %7820 = vst [vmem:[%s7819] sm:$0xff] %v7813
  %v7821 = vld [vmem:[#allocation3 + $0x90] sm:$0xff]
  %v7822 = vmul.f32 %v7813, 0.95
  %v7823 = vadd.f32 %v7822, %v7821
  %v7824 = vsel %vm7814, 1.0, 0.0
  %v7825 = vsub.f32 %v7823, %v7824
  %v7826 = vsub.f32 %v7825, -1.0
  %v7827 = vmul.f32 %v7826, 115.90909
  %v7828 = vround.ne.pseudo %v7827
  %v7829 = vmax.f32 %v7828, 0.0
  %v7830 = vmin.f32 %v7829, 255.0
  %v7831 = vmul.f32 %v7830, 0.008627451
  %v7832 = vadd.f32 %v7831, -1.0
  %vm7833 = vcmp.gt.f32.partialorder %v7832, 1.0
  %v7834 = vsel %vm7833, 1, 0
  %v7835 = vcvt.s32.f32 %v7834
  %s7836 = scalar_lea.vmem %s5, 144
  %7837 = vst [vmem:[%s7836] sm:$0xff] %v7835
  %s7838 = scalar_lea.vmem %s6, 144
  %7839 = vst [vmem:[%s7838] sm:$0xff] %v7832
  %v7840 = vld [vmem:[#allocation3 + $0x98] sm:$0xff]
  %v7841 = vmul.f32 %v7832, 0.95
  %v7842 = vadd.f32 %v7841, %v7840
  %v7843 = vsel %vm7833, 1.0, 0.0
  %v7844 = vsub.f32 %v7842, %v7843
  %v7845 = vsub.f32 %v7844, -1.0
  %v7846 = vmul.f32 %v7845, 115.90909
  %v7847 = vround.ne.pseudo %v7846
  %v7848 = vmax.f32 %v7847, 0.0
  %v7849 = vmin.f32 %v7848, 255.0
  %v7850 = vmul.f32 %v7849, 0.008627451
  %v7851 = vadd.f32 %v7850, -1.0
  %vm7852 = vcmp.gt.f32.partialorder %v7851, 1.0
  %v7853 = vsel %vm7852, 1, 0
  %v7854 = vcvt.s32.f32 %v7853
  %s7855 = scalar_lea.vmem %s5, 152
  %7856 = vst [vmem:[%s7855] sm:$0xff] %v7854
  %s7857 = scalar_lea.vmem %s6, 152
  %7858 = vst [vmem:[%s7857] sm:$0xff] %v7851
  %v7859 = vld [vmem:[#allocation3 + $0xa0] sm:$0xff]
  %v7860 = vmul.f32 %v7851, 0.95
  %v7861 = vadd.f32 %v7860, %v7859
  %v7862 = vsel %vm7852, 1.0, 0.0
  %v7863 = vsub.f32 %v7861, %v7862
  %v7864 = vsub.f32 %v7863, -1.0
  %v7865 = vmul.f32 %v7864, 115.90909
  %v7866 = vround.ne.pseudo %v7865
  %v7867 = vmax.f32 %v7866, 0.0
  %v7868 = vmin.f32 %v7867, 255.0
  %v7869 = vmul.f32 %v7868, 0.008627451
  %v7870 = vadd.f32 %v7869, -1.0
  %vm7871 = vcmp.gt.f32.partialorder %v7870, 1.0
  %v7872 = vsel %vm7871, 1, 0
  %v7873 = vcvt.s32.f32 %v7872
  %s7874 = scalar_lea.vmem %s5, 160
  %7875 = vst [vmem:[%s7874] sm:$0xff] %v7873
  %s7876 = scalar_lea.vmem %s6, 160
  %7877 = vst [vmem:[%s7876] sm:$0xff] %v7870
  %v7878 = vld [vmem:[#allocation3 + $0xa8] sm:$0xff]
  %v7879 = vmul.f32 %v7870, 0.95
  %v7880 = vadd.f32 %v7879, %v7878
  %v7881 = vsel %vm7871, 1.0, 0.0
  %v7882 = vsub.f32 %v7880, %v7881
  %v7883 = vsub.f32 %v7882, -1.0
  %v7884 = vmul.f32 %v7883, 115.90909
  %v7885 = vround.ne.pseudo %v7884
  %v7886 = vmax.f32 %v7885, 0.0
  %v7887 = vmin.f32 %v7886, 255.0
  %v7888 = vmul.f32 %v7887, 0.008627451
  %v7889 = vadd.f32 %v7888, -1.0
  %vm7890 = vcmp.gt.f32.partialorder %v7889, 1.0
  %v7891 = vsel %vm7890, 1, 0
  %v7892 = vcvt.s32.f32 %v7891
  %s7893 = scalar_lea.vmem %s5, 168
  %7894 = vst [vmem:[%s7893] sm:$0xff] %v7892
  %s7895 = scalar_lea.vmem %s6, 168
  %7896 = vst [vmem:[%s7895] sm:$0xff] %v7889
  %v7897 = vld [vmem:[#allocation3 + $0xb0] sm:$0xff]
  %v7898 = vmul.f32 %v7889, 0.95
  %v7899 = vadd.f32 %v7898, %v7897
  %v7900 = vsel %vm7890, 1.0, 0.0
  %v7901 = vsub.f32 %v7899, %v7900
  %v7902 = vsub.f32 %v7901, -1.0
  %v7903 = vmul.f32 %v7902, 115.90909
  %v7904 = vround.ne.pseudo %v7903
  %v7905 = vmax.f32 %v7904, 0.0
  %v7906 = vmin.f32 %v7905, 255.0
  %v7907 = vmul.f32 %v7906, 0.008627451
  %v7908 = vadd.f32 %v7907, -1.0
  %vm7909 = vcmp.gt.f32.partialorder %v7908, 1.0
  %v7910 = vsel %vm7909, 1, 0
  %v7911 = vcvt.s32.f32 %v7910
  %s7912 = scalar_lea.vmem %s5, 176
  %7913 = vst [vmem:[%s7912] sm:$0xff] %v7911
  %s7914 = scalar_lea.vmem %s6, 176
  %7915 = vst [vmem:[%s7914] sm:$0xff] %v7908
  %v7916 = vld [vmem:[#allocation3 + $0xb8] sm:$0xff]
  %v7917 = vmul.f32 %v7908, 0.95
  %v7918 = vadd.f32 %v7917, %v7916
  %v7919 = vsel %vm7909, 1.0, 0.0
  %v7920 = vsub.f32 %v7918, %v7919
  %v7921 = vsub.f32 %v7920, -1.0
  %v7922 = vmul.f32 %v7921, 115.90909
  %v7923 = vround.ne.pseudo %v7922
  %v7924 = vmax.f32 %v7923, 0.0
  %v7925 = vmin.f32 %v7924, 255.0
  %v7926 = vmul.f32 %v7925, 0.008627451
  %v7927 = vadd.f32 %v7926, -1.0
  %vm7928 = vcmp.gt.f32.partialorder %v7927, 1.0
  %v7929 = vsel %vm7928, 1, 0
  %v7930 = vcvt.s32.f32 %v7929
  %s7931 = scalar_lea.vmem %s5, 184
  %7932 = vst [vmem:[%s7931] sm:$0xff] %v7930
  %s7933 = scalar_lea.vmem %s6, 184
  %7934 = vst [vmem:[%s7933] sm:$0xff] %v7927
  %v7935 = vld [vmem:[#allocation3 + $0xc0] sm:$0xff]
  %v7936 = vmul.f32 %v7927, 0.95
  %v7937 = vadd.f32 %v7936, %v7935
  %v7938 = vsel %vm7928, 1.0, 0.0
  %v7939 = vsub.f32 %v7937, %v7938
  %v7940 = vsub.f32 %v7939, -1.0
  %v7941 = vmul.f32 %v7940, 115.90909
  %v7942 = vround.ne.pseudo %v7941
  %v7943 = vmax.f32 %v7942, 0.0
  %v7944 = vmin.f32 %v7943, 255.0
  %v7945 = vmul.f32 %v7944, 0.008627451
  %v7946 = vadd.f32 %v7945, -1.0
  %vm7947 = vcmp.gt.f32.partialorder %v7946, 1.0
  %v7948 = vsel %vm7947, 1, 0
  %v7949 = vcvt.s32.f32 %v7948
  %s7950 = scalar_lea.vmem %s5, 192
  %7951 = vst [vmem:[%s7950] sm:$0xff] %v7949
  %s7952 = scalar_lea.vmem %s6, 192
  %7953 = vst [vmem:[%s7952] sm:$0xff] %v7946
  // Predicated region
  $region22: #{quantized_snn_forward.1} parent=0 // pred_check
    _
  $region23: #{quantized_snn_forward.1} parent=0 // pred_check_branch
    %7955 = sbr.rel (0) target = $region25
  $region24: #{quantized_snn_forward.1} parent=0 // pred_region
    _
  $region25: #{quantized_snn_forward.1} parent=0 // pred_fallthru
    _
  // Predicated region
  $region26: #{quantized_snn_forward.1} parent=0 // pred_check
    _
  $region27: #{quantized_snn_forward.1} parent=0 // pred_check_branch
    %7957 = sbr.rel (0) target = $region29
  $region28: #{quantized_snn_forward.1} parent=0 // pred_region
    _
  $region29: #{quantized_snn_forward.1} parent=0 // pred_fallthru
    _
  // Predicated region
  $region30: #{quantized_snn_forward.1} parent=0 // pred_check
    _
  $region31: #{quantized_snn_forward.1} parent=0 // pred_check_branch
    %7959 = sbr.rel (0) target = $region33
  $region32: #{quantized_snn_forward.1} parent=0 // pred_region
    _
  $region33: #{quantized_snn_forward.1} parent=0 // pred_fallthru
    _
  // Predicated region
  $region34: #{quantized_snn_forward.1} parent=0 // pred_check
    _
  $region35: #{quantized_snn_forward.1} parent=0 // pred_check_branch
    %7961 = sbr.rel (0) target = $region37
  $region36: #{quantized_snn_forward.1} parent=0 // pred_region
    _
  $region37: #{quantized_snn_forward.1} parent=0 // pred_fallthru
    _

</llo_original>
